<compile_context>
chip_gen: v7x
topology: tpu7x:2x2x1
jax: 0.10.0
libtpu: 0.0.40
codegen_flags: <defaults>
</compile_context>

<pallas_src>
import numpy as np
import jax
import jax.numpy as jnp
from jax.experimental import pallas as pl
from jax.experimental.pallas import tpu as pltpu

# ----------------------------- configuration --------------------------------
SEQ = 8              # bert sequence length (small)
BERT_HIDDEN = 32     # args.bert_hidden_dim (small)
NUM_FTRS = 1000      # resnet34 fc.out_features
NUM_FTRS_PAD = 1024  # padded to a multiple of 128 lanes
SHARED_DIM = 128
SIM_DIM = 64
Z_DIM = 2
NUM_EXPERTS = 4
RANK = 8
BN_EPS = 1e-5

TILE_M = 128         # rows per grid step; >=128 fills v5e MXU rows.  Use 256 on v6e/v7x
                     # when the batch allows (VMEM footprint stays a few MiB either way).

OUT_USED = 3 * SIM_DIM + 2 * SIM_DIM + 2     # tif(192)+image_z(64)+text_z(64)+cls(2)=322
OUT_W = 384                                  # lane-dense output slab (3 x 128)

# ------------------------- packed-operand layouts ----------------------------
_BIAS_SIZES = [
    ("st_b1", 256), ("si_b1", 256), ("stsi_b2", 2 * SHARED_DIM),
    ("taia_b1", 2 * SHARED_DIM), ("taia_b2", 2 * SIM_DIM),
    ("fu_b1", 2 * SIM_DIM), ("fu_b2", SIM_DIM),
    ("sc_b1", SIM_DIM), ("sc_b2", 2),
    ("etei_b1", 2 * SIM_DIM), ("etei_b2", 2 * 2 * Z_DIM),
    ("gm_b", NUM_EXPERTS + NUM_EXPERTS * RANK),
]


def _bias_layout():
    slots, off = {}, 0
    for name, n in _BIAS_SIZES:
        slots[name] = (off, n)
        off += n + ((-n) % 128)          # keep every bias segment 128-lane aligned
    return slots, off


BIAS_SLOTS, BIAS_WIDTH = _bias_layout()          # BIAS_WIDTH == 2048

# narrow "tail" weights packed into one (rows, 128) bf16 slab (one DMA instead of six)
_TAIL_SEGS = [
    ("etei_w2", 2 * SIM_DIM, 2 * 2 * Z_DIM),                    # (128, 8)
    ("gm_w", 3 * SIM_DIM, NUM_EXPERTS * (1 + RANK)),            # (192, 36) [gate | fc1's]
    ("moe_w2", NUM_EXPERTS * RANK, SIM_DIM),                    # (32, 64)
    ("expand_plus", NUM_EXPERTS, NUM_EXPERTS * RANK + SIM_DIM), # (4, 96)  [expand | b2's]
    ("sc_w2", SIM_DIM, 2),                                      # (64, 2)
]
TAIL_W = 128


def _tail_layout():
    slots, off = {}, 0
    for name, r, c in _TAIL_SEGS:
        slots[name] = (off, r, c)
        off += r + ((-r) % 16)           # 16-row aligned (bf16 sublane tile)
    return slots, off


TAIL_SLOTS, TAIL_ROWS = _tail_layout()           # TAIL_ROWS == 432

_W_ORDER = ["st_w1", "si_w1", "stsi_w2", "taia_w1", "taia_w2",
            "fu_w1", "fu_w2", "etei_w1", "sc_w1"]

# ------------------------- parameter initialization -------------------------
_round_bf16 = lambda x: x.astype(jnp.bfloat16).astype(jnp.float32)


def _init_linear(key, fan_in, fan_out):
    k1, k2 = jax.random.split(key)
    bound = 1.0 / np.sqrt(fan_in)
    w = jax.random.uniform(k1, (fan_in, fan_out), jnp.float32, -bound, bound)
    b = jax.random.uniform(k2, (fan_out,), jnp.float32, -bound, bound)
    return w, b


def _init_bn(key, dim):
    k1, k2, k3, k4 = jax.random.split(key, 4)
    gamma = 1.0 + 0.1 * jax.random.normal(k1, (dim,), jnp.float32)
    beta = 0.1 * jax.random.normal(k2, (dim,), jnp.float32)
    r_mean = 0.1 * jax.random.normal(k3, (dim,), jnp.float32)
    r_var = 0.5 + jnp.abs(jax.random.normal(k4, (dim,), jnp.float32)) * 0.5
    return gamma, beta, r_mean, r_var


def _fold_bn(w, b, gamma, beta, r_mean, r_var):
    scale = gamma / jnp.sqrt(r_var + BN_EPS)
    return w * scale[None, :], (b - r_mean) * scale + beta


def make_params(seed=42):
    """Parameters are bf16-rounded at creation (the kernel stores them as bf16)."""
    keys = iter(jax.random.split(jax.random.PRNGKey(seed), 64))
    P = {}

    def add_block(prefix, d_in, d_hid, d_out, bn1=True, bn2=True):
        w1, b1 = _init_linear(next(keys), d_in, d_hid)
        if bn1:
            w1, b1 = _fold_bn(w1, b1, *_init_bn(next(keys), d_hid))
        w2, b2 = _init_linear(next(keys), d_hid, d_out)
        if bn2:
            w2, b2 = _fold_bn(w2, b2, *_init_bn(next(keys), d_out))
        P[prefix + "_w1"], P[prefix + "_b1"] = _round_bf16(w1), _round_bf16(b1).reshape(1, -1)
        P[prefix + "_w2"], P[prefix + "_b2"] = _round_bf16(w2), _round_bf16(b2).reshape(1, -1)

    add_block("st", BERT_HIDDEN, 256, SHARED_DIM)            # shared_text_linear
    add_block("si", NUM_FTRS, 256, SHARED_DIM)               # shared_image
    add_block("ta", SHARED_DIM, SHARED_DIM, SIM_DIM)         # text_aligner
    add_block("ia", SHARED_DIM, SHARED_DIM, SIM_DIM)         # image_aligner
    add_block("fu", 2 * SIM_DIM, 2 * SIM_DIM, SIM_DIM, bn1=True, bn2=False)   # fusion
    add_block("sc", SIM_DIM, SIM_DIM, 2, bn1=True, bn2=False)                 # sim_classifier
    add_block("et", SIM_DIM, SIM_DIM, 2 * Z_DIM, bn1=False, bn2=False)        # encoder_text
    add_block("ei", SIM_DIM, SIM_DIM, 2 * Z_DIM, bn1=False, bn2=False)        # encoder_image

    g_w, g_b = _init_linear(next(keys), 3 * SIM_DIM, NUM_EXPERTS)
    P["g_w"], P["g_b"] = _round_bf16(g_w), _round_bf16(g_b).reshape(1, -1)

    ew1, eb1, ew2, eb2 = [], [], [], []
    for _ in range(NUM_EXPERTS):
        w1, b1 = _init_linear(next(keys), 3 * SIM_DIM, RANK)
        w2, b2 = _init_linear(next(keys), RANK, SIM_DIM)
        ew1.append(_round_bf16(w1)); eb1.append(_round_bf16(b1).reshape(1, -1))
        ew2.append(_round_bf16(w2)); eb2.append(_round_bf16(b2).reshape(1, -1))
    P["ew1"] = jnp.stack(ew1)   # (E, 192, rank)
    P["eb1"] = jnp.stack(eb1)   # (E, 1, rank)
    P["ew2"] = jnp.stack(ew2)   # (E, rank, 64)
    P["eb2"] = jnp.stack(eb2)   # (E, 1, 64)
    return P


def _block_diag(a, b):
    a = np.asarray(a, np.float32); b = np.asarray(b, np.float32)
    out = np.zeros((a.shape[0] + b.shape[0], a.shape[1] + b.shape[1]), np.float32)
    out[:a.shape[0], :a.shape[1]] = a
    out[a.shape[0]:, a.shape[1]:] = b
    return out


def pack_kernel_params(P):
    """Fused / packed / padded bf16 kernel operands + f32 bias slab."""
    W = {}
    W["st_w1"] = np.asarray(P["st_w1"], np.float32)                         # (32, 256)
    W["si_w1"] = np.pad(np.asarray(P["si_w1"], np.float32),
                        ((0, NUM_FTRS_PAD - NUM_FTRS), (0, 0)))             # (1024, 256)
    W["stsi_w2"] = _block_diag(P["st_w2"], P["si_w2"])                      # (512, 256)
    W["taia_w1"] = _block_diag(P["ta_w1"], P["ia_w1"])                      # (256, 256)
    W["taia_w2"] = _block_diag(P["ta_w2"], P["ia_w2"])                      # (256, 128)
    W["fu_w1"] = np.asarray(P["fu_w1"], np.float32)                         # (128, 128)
    W["fu_w2"] = np.asarray(P["fu_w2"], np.float32)                         # (128, 64)
    W["etei_w1"] = _block_diag(P["et_w1"], P["ei_w1"])                      # (128, 128)
    W["sc_w1"] = np.asarray(P["sc_w1"], np.float32)                         # (64, 64)
    # lossless bf16 cast: parameters were bf16-rounded at creation
    weights = [jnp.asarray(W[k], jnp.bfloat16) for k in _W_ORDER]

    # narrow tail weights -> one (TAIL_ROWS, 128) bf16 slab
    expand = np.kron(np.eye(NUM_EXPERTS, dtype=np.float32),
                     np.ones((1, RANK), np.float32))                        # (4, 32)
    tail_vals = {
        "etei_w2": _block_diag(P["et_w2"], P["ei_w2"]),                     # (128, 8)
        "gm_w": np.concatenate(
            [np.asarray(P["g_w"], np.float32)]
            + [np.asarray(P["ew1"][e], np.float32) for e in range(NUM_EXPERTS)], axis=1),
        "moe_w2": np.concatenate(
            [np.asarray(P["ew2"][e], np.float32) for e in range(NUM_EXPERTS)], axis=0),
        "expand_plus": np.concatenate(
            [expand, np.asarray(P["eb2"][:, 0, :], np.float32)], axis=1),   # (4, 96)
        "sc_w2": np.asarray(P["sc_w2"], np.float32),                        # (64, 2)
    }
    tail = np.zeros((TAIL_ROWS, TAIL_W), np.float32)
    for name, (off, r, c) in TAIL_SLOTS.items():
        tail[off:off + r, :c] = tail_vals[name]
    tail_pack = jnp.asarray(tail, jnp.bfloat16)

    # all bias vectors -> one lane-aligned (1, BIAS_WIDTH) f32 slab
    bias_vals = {
        "st_b1": P["st_b1"][0], "si_b1": P["si_b1"][0],
        "stsi_b2": np.concatenate([np.asarray(P["st_b2"][0]), np.asarray(P["si_b2"][0])]),
        "taia_b1": np.concatenate([np.asarray(P["ta_b1"][0]), np.asarray(P["ia_b1"][0])]),
        "taia_b2": np.concatenate([np.asarray(P["ta_b2"][0]), np.asarray(P["ia_b2"][0])]),
        "fu_b1": P["fu_b1"][0], "fu_b2": P["fu_b2"][0],
        "sc_b1": P["sc_b1"][0], "sc_b2": P["sc_b2"][0],
        "etei_b1": np.concatenate([np.asarray(P["et_b1"][0]), np.asarray(P["ei_b1"][0])]),
        "etei_b2": np.concatenate([np.asarray(P["et_b2"][0]), np.asarray(P["ei_b2"][0])]),
        "gm_b": np.concatenate([np.asarray(P["g_b"][0])]
                               + [np.asarray(P["eb1"][e, 0]) for e in range(NUM_EXPERTS)]),
    }
    bias = np.zeros((1, BIAS_WIDTH), np.float32)
    for name, (off, n) in BIAS_SLOTS.items():
        bias[0, off:off + n] = np.asarray(bias_vals[name], np.float32)
    bias_pack = jnp.asarray(bias, jnp.float32)
    return weights, bias_pack, tail_pack


# --------------------------------- kernel ------------------------------------
def cafe_kernel(txt_ref, img_ref, eps_ref, bias_ref,
                st_w1, si_w1, stsi_w2, taia_w1, taia_w2,
                fu_w1, fu_w2, etei_w1, sc_w1, tail_ref,
                out_ref):
    f32, bf16 = jnp.float32, jnp.bfloat16

    def bseg(name):
        off, n = BIAS_SLOTS[name]
        return bias_ref[:, off:off + n]                    # (1, n) f32

    def tseg(name):
        off, r, c = TAIL_SLOTS[name]
        return tail_ref[off:off + r, 0:c]                  # (r, c) bf16

    def mm(x, w):
        # bf16 x bf16 MXU matmul with f32 accumulation (TPU default matmul precision).
        return jnp.dot(x.astype(bf16), w, preferred_element_type=f32)

    relu = lambda x: jnp.maximum(x, 0.0)

    # ---- text / image first layers
    t1 = relu(mm(txt_ref[...], st_w1[...]) + bseg("st_b1"))        # (M, 256)
    im1 = relu(mm(img_ref[...], si_w1[...]) + bseg("si_b1"))       # (M, 256)

    # ---- fused second layers [st_w2 (+) si_w2]  ->  ti = [t | im]
    ti = relu(mm(jnp.concatenate([t1, im1], axis=1), stsi_w2[...]) + bseg("stsi_b2"))  # (M, 256)

    # ---- fused text/image aligners (block-diagonal)
    a = relu(mm(ti, taia_w1[...]) + bseg("taia_b1"))               # (M, 256)
    z = relu(mm(a, taia_w2[...]) + bseg("taia_b2"))                # (M, 128) = [text_z | image_z]
    text_z = z[:, :SIM_DIM]
    image_z = z[:, SIM_DIM:]

    # ---- ambiguity module (two variational encoders fused block-diagonally)
    h = mm(z, etei_w1[...]) + bseg("etei_b1")                      # (M, 128)
    h = jnp.where(h > 0, h, 0.1 * h)                               # LeakyReLU(0.1)
    p = mm(h, tseg("etei_w2")) + bseg("etei_b2")                   # (M, 8) = [mu1|sg1|mu2|sg2]
    mu1 = p[:, 0:Z_DIM]
    s1 = jax.nn.softplus(p[:, Z_DIM:2 * Z_DIM]) + 1e-7
    mu2 = p[:, 2 * Z_DIM:3 * Z_DIM]
    s2 = jax.nn.softplus(p[:, 3 * Z_DIM:4 * Z_DIM]) + 1e-7

    eps = eps_ref[...]                                             # (M, 2*Z)
    z1 = mu1 + s1 * eps[:, :Z_DIM]                                 # rsample
    z2 = mu2 + s2 * eps[:, Z_DIM:]

    def log_prob(zz, mu, s):                                       # Independent(Normal, 1)
        return jnp.sum(-0.5 * ((zz - mu) / s) ** 2 - jnp.log(s)
                       - 0.5 * jnp.log(2.0 * jnp.pi),
                       axis=-1, keepdims=True)

    kl_1_2 = log_prob(z1, mu1, s1) - log_prob(z1, mu2, s2)
    kl_2_1 = log_prob(z2, mu2, s2) - log_prob(z2, mu1, s1)
    skl = jnp.clip(jax.nn.sigmoid(0.5 * (kl_1_2 + kl_2_1)), 0.25, 0.75)   # (M, 1)

    # ---- fusion branch (cat([text_z, image_z]) == z)
    corr = relu(mm(z, fu_w1[...]) + bseg("fu_b1"))                 # (M, 128)
    corr = relu(mm(corr, fu_w2[...]) + bseg("fu_b2"))              # (M, 64)

    w_uni = 1.0 - skl
    tif = jnp.concatenate([w_uni * z, skl * corr], axis=1)         # (M, 192)

    # ---- LoRA-MoE: gate + all expert first layers in ONE matmul
    gh = mm(tif, tseg("gm_w")) + bseg("gm_b")                      # (M, 36) = [gate_logits | h_pre]
    gate = jax.nn.softmax(gh[:, :NUM_EXPERTS], axis=-1)            # (M, 4)
    h_all = relu(gh[:, NUM_EXPERTS:])                              # (M, 32)
    # one matmul produces both gate_rep (first 32 cols) and gate @ stack(b2_e) (last 64)
    grb = mm(gate, tseg("expand_plus"))                            # (M, 96)
    moe = (mm(h_all * grb[:, :NUM_EXPERTS * RANK], tseg("moe_w2"))
           + grb[:, NUM_EXPERTS * RANK:])                          # (M, 64)

    # ---- sim_classifier (final Dropout is identity in eval mode)
    cls = mm(relu(mm(moe, sc_w1[...]) + bseg("sc_b1")), tseg("sc_w2")) + bseg("sc_b2")  # (M, 2)

    # ---- lane-dense output slab: [tif | image_z | text_z | cls | pad]
    pad = jnp.zeros((tif.shape[0], OUT_W - OUT_USED), f32)
    out_ref[...] = jnp.concatenate([tif, image_z, text_z, cls, pad], axis=1)


# --------------------------------- wrapper -----------------------------------
@jax.jit
def cafe_forward(bert_out, image_feats, eps1, eps2, weights, bias_pack, tail_pack):
    b = bert_out.shape[0]
    n_tiles = pl.cdiv(b, TILE_M)
    bp = n_tiles * TILE_M

    last_hidden = jnp.mean(bert_out, axis=1)                         # sequence mean in wrapper
    txt = jnp.pad(last_hidden, ((0, bp - b), (0, 0)))
    img = jnp.pad(image_feats, ((0, bp - b), (0, NUM_FTRS_PAD - NUM_FTRS)))
    eps = jnp.pad(jnp.concatenate([eps1, eps2], axis=1), ((0, bp - b), (0, 0)))

    row_spec = lambda w: pl.BlockSpec((TILE_M, w), lambda i: (i, 0))     # M-tiled
    fixed_spec = lambda shape: pl.BlockSpec(shape, lambda i: (0, 0))     # VMEM-resident weights

    in_specs = ([row_spec(BERT_HIDDEN), row_spec(NUM_FTRS_PAD), row_spec(2 * Z_DIM),
                 fixed_spec(bias_pack.shape)]
                + [fixed_spec(w.shape) for w in weights]
                + [fixed_spec(tail_pack.shape)])

    slab = pl.pallas_call(
        cafe_kernel,
        out_shape=jax.ShapeDtypeStruct((bp, OUT_W), jnp.float32),
        grid=(n_tiles,),
        in_specs=in_specs,
        out_specs=pl.BlockSpec((TILE_M, OUT_W), lambda i: (i, 0)),
        compiler_params=pltpu.CompilerParams(dimension_semantics=("parallel",)),
    )(txt, img, eps, bias_pack, *weights, tail_pack)

    slab = slab[:b]
    tif = slab[:, 0:3 * SIM_DIM]
    image_z = slab[:, 3 * SIM_DIM:4 * SIM_DIM]
    text_z = slab[:, 4 * SIM_DIM:5 * SIM_DIM]
    cls = slab[:, 5 * SIM_DIM:5 * SIM_DIM + 2]
    return cls, tif, image_z, text_z


# ---------------------------- pure-JAX reference -----------------------------
def reference_forward(bert_out, image_feats, eps1, eps2, P):
    # Matmuls evaluated at TPU default (bf16-operand, f32-accumulate) MXU precision,
    # which is what both the kernel and XLA's default f32 dot on TPU use.
    def mm(x, w):
        return jnp.dot(x.astype(jnp.bfloat16), w.astype(jnp.bfloat16),
                       preferred_element_type=jnp.float32)

    def lin(x, w, b): return mm(x, w) + b[0]
    relu = lambda x: jnp.maximum(x, 0.0)

    last = jnp.mean(bert_out, axis=1)
    t = relu(lin(relu(lin(last, P["st_w1"], P["st_b1"])), P["st_w2"], P["st_b2"]))
    text_z = relu(lin(relu(lin(t, P["ta_w1"], P["ta_b1"])), P["ta_w2"], P["ta_b2"]))
    im = relu(lin(relu(lin(image_feats, P["si_w1"], P["si_b1"])), P["si_w2"], P["si_b2"]))
    image_z = relu(lin(relu(lin(im, P["ia_w1"], P["ia_b1"])), P["ia_w2"], P["ia_b2"]))

    def enc(x, pfx):
        h = lin(x, P[pfx + "_w1"], P[pfx + "_b1"])
        h = jnp.where(h > 0, h, 0.1 * h)
        p = lin(h, P[pfx + "_w2"], P[pfx + "_b2"])
        return p[:, :Z_DIM], jax.nn.softplus(p[:, Z_DIM:]) + 1e-7

    mu1, s1 = enc(text_z, "et")
    mu2, s2 = enc(image_z, "ei")
    z1, z2 = mu1 + s1 * eps1, mu2 + s2 * eps2

    def lp(z, mu, s):
        return jnp.sum(-0.5 * ((z - mu) / s) ** 2 - jnp.log(s)
                       - 0.5 * jnp.log(2.0 * jnp.pi), axis=-1, keepdims=True)

    skl = jnp.clip(jax.nn.sigmoid(
        0.5 * ((lp(z1, mu1, s1) - lp(z1, mu2, s2)) +
               (lp(z2, mu2, s2) - lp(z2, mu1, s1)))), 0.25, 0.75)

    corr = relu(lin(relu(lin(jnp.concatenate([text_z, image_z], axis=1),
                             P["fu_w1"], P["fu_b1"])), P["fu_w2"], P["fu_b2"]))
    w_uni = 1.0 - skl
    tif = jnp.concatenate([w_uni * text_z, w_uni * image_z, skl * corr], axis=1)

    gate = jax.nn.softmax(lin(tif, P["g_w"], P["g_b"]), axis=-1)
    moe = jnp.zeros((tif.shape[0], SIM_DIM), jnp.float32)
    for e in range(NUM_EXPERTS):
        h = relu(mm(tif, P["ew1"][e]) + P["eb1"][e, 0])
        o = mm(h, P["ew2"][e]) + P["eb2"][e, 0]
        moe = moe + gate[:, e:e + 1] * o

    cls = lin(relu(lin(moe, P["sc_w1"], P["sc_b1"])), P["sc_w2"], P["sc_b2"])
    return cls, tif, image_z, text_z


# ----------------------------------- main ------------------------------------
if __name__ == "__main__":
    B = 256   # batched per perf review: two 128-row tiles -> parallel grid / megacore

    key = jax.random.PRNGKey(0)
    k_bert, k_img, k_e1, k_e2 = jax.random.split(key, 4)
    bert_out = jax.random.normal(k_bert, (B, SEQ, BERT_HIDDEN), jnp.float32)
    image_feats = jax.random.normal(k_img, (B, NUM_FTRS), jnp.float32)
    eps1 = jax.random.normal(k_e1, (B, Z_DIM), jnp.float32)
    eps2 = jax.random.normal(k_e2, (B, Z_DIM), jnp.float32)

    P = make_params()
    weights, bias_pack, tail_pack = pack_kernel_params(P)

    outs = cafe_forward(bert_out, image_feats, eps1, eps2, weights, bias_pack, tail_pack)
    outs = jax.block_until_ready(outs)

    ref = reference_forward(bert_out, image_feats, eps1, eps2, P)
    # tolerance covers the only structural precision difference (gate applied before vs
    # after the expert fc2 matmul, in bf16); all other paths match to f32 rounding.
    for o, r in zip(outs, ref):
        np.testing.assert_allclose(np.asarray(o), np.asarray(r), rtol=2e-3, atol=2e-3)

    print("KERNEL_OK")
</pallas_src>

<mosaic_0001>
module attributes {stable_mosaic.version = 11 : i64} {
  func.func @cafe_kernel(%arg0: i32, %arg1: memref<128x32xf32, #tpu.memory_space<vmem>>, %arg2: memref<128x1024xf32, #tpu.memory_space<vmem>>, %arg3: memref<128x4xf32, #tpu.memory_space<vmem>>, %arg4: memref<1x2048xf32, #tpu.memory_space<vmem>>, %arg5: memref<32x256xbf16, #tpu.memory_space<vmem>>, %arg6: memref<1024x256xbf16, #tpu.memory_space<vmem>>, %arg7: memref<512x256xbf16, #tpu.memory_space<vmem>>, %arg8: memref<256x256xbf16, #tpu.memory_space<vmem>>, %arg9: memref<256x128xbf16, #tpu.memory_space<vmem>>, %arg10: memref<128x128xbf16, #tpu.memory_space<vmem>>, %arg11: memref<128x64xbf16, #tpu.memory_space<vmem>>, %arg12: memref<128x128xbf16, #tpu.memory_space<vmem>>, %arg13: memref<64x64xbf16, #tpu.memory_space<vmem>>, %arg14: memref<432x128xbf16, #tpu.memory_space<vmem>>, %arg15: memref<128x384xf32, #tpu.memory_space<vmem>>) attributes {dimension_semantics = [#tpu.dimension_semantics<parallel>], iteration_bounds = array<i64: 2>, scalar_prefetch = 0 : i64, scratch_operands = 0 : i64, tpu.core_type = #tpu.core_type<tc>, window_params = [{transform_indices = @transform_0, window_bounds = array<i64: 128, 32>}, {transform_indices = @transform_1, window_bounds = array<i64: 128, 1024>}, {transform_indices = @transform_2, window_bounds = array<i64: 128, 4>}, {pipeline_mode = #tpu.pipeline_mode<synchronous>, transform_indices = @transform_3, window_bounds = array<i64: 1, 2048>}, {pipeline_mode = #tpu.pipeline_mode<synchronous>, transform_indices = @transform_4, window_bounds = array<i64: 32, 256>}, {pipeline_mode = #tpu.pipeline_mode<synchronous>, transform_indices = @transform_5, window_bounds = array<i64: 1024, 256>}, {pipeline_mode = #tpu.pipeline_mode<synchronous>, transform_indices = @transform_6, window_bounds = array<i64: 512, 256>}, {pipeline_mode = #tpu.pipeline_mode<synchronous>, transform_indices = @transform_7, window_bounds = array<i64: 256, 256>}, {pipeline_mode = #tpu.pipeline_mode<synchronous>, transform_indices = @transform_8, window_bounds = array<i64: 256, 128>}, {pipeline_mode = #tpu.pipeline_mode<synchronous>, transform_indices = @transform_9, window_bounds = array<i64: 128, 128>}, {pipeline_mode = #tpu.pipeline_mode<synchronous>, transform_indices = @transform_10, window_bounds = array<i64: 128, 64>}, {pipeline_mode = #tpu.pipeline_mode<synchronous>, transform_indices = @transform_11, window_bounds = array<i64: 128, 128>}, {pipeline_mode = #tpu.pipeline_mode<synchronous>, transform_indices = @transform_12, window_bounds = array<i64: 64, 64>}, {pipeline_mode = #tpu.pipeline_mode<synchronous>, transform_indices = @transform_13, window_bounds = array<i64: 432, 128>}, {transform_indices = @transform_14, window_bounds = array<i64: 128, 384>}]} {
    %c0 = arith.constant 0 : index
    %c0_0 = arith.constant 0 : index
    %0 = vector.load %arg1[%c0, %c0_0] : memref<128x32xf32, #tpu.memory_space<vmem>>, vector<128x32xf32>
    %c0_1 = arith.constant 0 : index
    %c0_2 = arith.constant 0 : index
    %1 = vector.load %arg5[%c0_1, %c0_2] : memref<32x256xbf16, #tpu.memory_space<vmem>>, vector<32x256xbf16>
    %2 = arith.truncf %0 : vector<128x32xf32> to vector<128x32xbf16>
    %cst = arith.constant dense<0.000000e+00> : vector<128x256xf32>
    %3 = tpu.matmul %2, %1, %cst {dimension_numbers = #tpu.dot_dimension_numbers<[1], [0], [0], [1], [0, 0, 1, 1], [], []>} : vector<128x32xbf16>, vector<32x256xbf16>, vector<128x256xf32> -> vector<128x256xf32>
    %c0_3 = arith.constant 0 : index
    %c0_4 = arith.constant 0 : index
    %4 = vector.load %arg4[%c0_3, %c0_4] : memref<1x2048xf32, #tpu.memory_space<vmem>>, vector<1x256xf32>
    %5 = vector.broadcast %4 : vector<1x256xf32> to vector<128x256xf32>
    %6 = arith.addf %3, %5 : vector<128x256xf32>
    %cst_5 = arith.constant 0.000000e+00 : f32
    %7 = vector.broadcast %cst_5 : f32 to vector<128x256xf32>
    %8 = arith.maximumf %6, %7 : vector<128x256xf32>
    %c0_6 = arith.constant 0 : index
    %c0_7 = arith.constant 0 : index
    %9 = vector.load %arg2[%c0_6, %c0_7] : memref<128x1024xf32, #tpu.memory_space<vmem>>, vector<128x1024xf32>
    %c0_8 = arith.constant 0 : index
    %c0_9 = arith.constant 0 : index
    %10 = vector.load %arg6[%c0_8, %c0_9] : memref<1024x256xbf16, #tpu.memory_space<vmem>>, vector<1024x256xbf16>
    %11 = arith.truncf %9 : vector<128x1024xf32> to vector<128x1024xbf16>
    %cst_10 = arith.constant dense<0.000000e+00> : vector<128x256xf32>
    %12 = tpu.matmul %11, %10, %cst_10 {dimension_numbers = #tpu.dot_dimension_numbers<[1], [0], [0], [1], [0, 0, 1, 1], [], []>} : vector<128x1024xbf16>, vector<1024x256xbf16>, vector<128x256xf32> -> vector<128x256xf32>
    %c0_11 = arith.constant 0 : index
    %c256 = arith.constant 256 : index
    %13 = vector.load %arg4[%c0_11, %c256] : memref<1x2048xf32, #tpu.memory_space<vmem>>, vector<1x256xf32>
    %14 = vector.broadcast %13 : vector<1x256xf32> to vector<128x256xf32>
    %15 = arith.addf %12, %14 : vector<128x256xf32>
    %cst_12 = arith.constant 0.000000e+00 : f32
    %16 = vector.broadcast %cst_12 : f32 to vector<128x256xf32>
    %17 = arith.maximumf %15, %16 : vector<128x256xf32>
    %18 = tpu.concatenate %8, %17 in 1 : vector<128x256xf32>, vector<128x256xf32> -> vector<128x512xf32>
    %c0_13 = arith.constant 0 : index
    %c0_14 = arith.constant 0 : index
    %19 = vector.load %arg7[%c0_13, %c0_14] : memref<512x256xbf16, #tpu.memory_space<vmem>>, vector<512x256xbf16>
    %20 = arith.truncf %18 : vector<128x512xf32> to vector<128x512xbf16>
    %cst_15 = arith.constant dense<0.000000e+00> : vector<128x256xf32>
    %21 = tpu.matmul %20, %19, %cst_15 {dimension_numbers = #tpu.dot_dimension_numbers<[1], [0], [0], [1], [0, 0, 1, 1], [], []>} : vector<128x512xbf16>, vector<512x256xbf16>, vector<128x256xf32> -> vector<128x256xf32>
    %c0_16 = arith.constant 0 : index
    %c512 = arith.constant 512 : index
    %22 = vector.load %arg4[%c0_16, %c512] : memref<1x2048xf32, #tpu.memory_space<vmem>>, vector<1x256xf32>
    %23 = vector.broadcast %22 : vector<1x256xf32> to vector<128x256xf32>
    %24 = arith.addf %21, %23 : vector<128x256xf32>
    %cst_17 = arith.constant 0.000000e+00 : f32
    %25 = vector.broadcast %cst_17 : f32 to vector<128x256xf32>
    %26 = arith.maximumf %24, %25 : vector<128x256xf32>
    %c0_18 = arith.constant 0 : index
    %c0_19 = arith.constant 0 : index
    %27 = vector.load %arg8[%c0_18, %c0_19] : memref<256x256xbf16, #tpu.memory_space<vmem>>, vector<256x256xbf16>
    %28 = arith.truncf %26 : vector<128x256xf32> to vector<128x256xbf16>
    %cst_20 = arith.constant dense<0.000000e+00> : vector<128x256xf32>
    %29 = tpu.matmul %28, %27, %cst_20 {dimension_numbers = #tpu.dot_dimension_numbers<[1], [0], [0], [1], [0, 0, 1, 1], [], []>} : vector<128x256xbf16>, vector<256x256xbf16>, vector<128x256xf32> -> vector<128x256xf32>
    %c0_21 = arith.constant 0 : index
    %c768 = arith.constant 768 : index
    %30 = vector.load %arg4[%c0_21, %c768] : memref<1x2048xf32, #tpu.memory_space<vmem>>, vector<1x256xf32>
    %31 = vector.broadcast %30 : vector<1x256xf32> to vector<128x256xf32>
    %32 = arith.addf %29, %31 : vector<128x256xf32>
    %cst_22 = arith.constant 0.000000e+00 : f32
    %33 = vector.broadcast %cst_22 : f32 to vector<128x256xf32>
    %34 = arith.maximumf %32, %33 : vector<128x256xf32>
    %c0_23 = arith.constant 0 : index
    %c0_24 = arith.constant 0 : index
    %35 = vector.load %arg9[%c0_23, %c0_24] : memref<256x128xbf16, #tpu.memory_space<vmem>>, vector<256x128xbf16>
    %36 = arith.truncf %34 : vector<128x256xf32> to vector<128x256xbf16>
    %cst_25 = arith.constant dense<0.000000e+00> : vector<128x128xf32>
    %37 = tpu.matmul %36, %35, %cst_25 {dimension_numbers = #tpu.dot_dimension_numbers<[1], [0], [0], [1], [0, 0, 1, 1], [], []>} : vector<128x256xbf16>, vector<256x128xbf16>, vector<128x128xf32> -> vector<128x128xf32>
    %c0_26 = arith.constant 0 : index
    %c1024 = arith.constant 1024 : index
    %38 = vector.load %arg4[%c0_26, %c1024] : memref<1x2048xf32, #tpu.memory_space<vmem>>, vector<1x128xf32>
    %39 = vector.broadcast %38 : vector<1x128xf32> to vector<128x128xf32>
    %40 = arith.addf %37, %39 : vector<128x128xf32>
    %cst_27 = arith.constant 0.000000e+00 : f32
    %41 = vector.broadcast %cst_27 : f32 to vector<128x128xf32>
    %42 = arith.maximumf %40, %41 : vector<128x128xf32>
    %43 = vector.extract_strided_slice %42 {offsets = [0, 0], sizes = [128, 64], strides = [1, 1]} : vector<128x128xf32> to vector<128x64xf32>
    %44 = vector.extract_strided_slice %42 {offsets = [0, 64], sizes = [128, 64], strides = [1, 1]} : vector<128x128xf32> to vector<128x64xf32>
    %c0_28 = arith.constant 0 : index
    %c0_29 = arith.constant 0 : index
    %45 = vector.load %arg12[%c0_28, %c0_29] : memref<128x128xbf16, #tpu.memory_space<vmem>>, vector<128x128xbf16>
    %46 = arith.truncf %42 : vector<128x128xf32> to vector<128x128xbf16>
    %cst_30 = arith.constant dense<0.000000e+00> : vector<128x128xf32>
    %47 = tpu.matmul %46, %45, %cst_30 {dimension_numbers = #tpu.dot_dimension_numbers<[1], [0], [0], [1], [0, 0, 1, 1], [], []>} : vector<128x128xbf16>, vector<128x128xbf16>, vector<128x128xf32> -> vector<128x128xf32>
    %c0_31 = arith.constant 0 : index
    %c1664 = arith.constant 1664 : index
    %48 = vector.load %arg4[%c0_31, %c1664] : memref<1x2048xf32, #tpu.memory_space<vmem>>, vector<1x128xf32>
    %49 = vector.broadcast %48 : vector<1x128xf32> to vector<128x128xf32>
    %50 = arith.addf %47, %49 : vector<128x128xf32>
    %cst_32 = arith.constant 0.000000e+00 : f32
    %51 = vector.broadcast %cst_32 : f32 to vector<128x128xf32>
    %52 = arith.cmpf ogt, %50, %51 : vector<128x128xf32>
    %cst_33 = arith.constant 1.000000e-01 : f32
    %53 = vector.broadcast %cst_33 : f32 to vector<128x128xf32>
    %54 = arith.mulf %53, %50 : vector<128x128xf32>
    %55 = arith.select %52, %50, %54 : vector<128x128xi1>, vector<128x128xf32>
    %c0_34 = arith.constant 0 : index
    %c0_35 = arith.constant 0 : index
    %56 = vector.load %arg14[%c0_34, %c0_35] : memref<432x128xbf16, #tpu.memory_space<vmem>>, vector<128x8xbf16>
    %57 = arith.truncf %55 : vector<128x128xf32> to vector<128x128xbf16>
    %cst_36 = arith.constant dense<0.000000e+00> : vector<128x8xf32>
    %58 = tpu.matmul %57, %56, %cst_36 {dimension_numbers = #tpu.dot_dimension_numbers<[1], [0], [0], [1], [0, 0, 1, 1], [], []>} : vector<128x128xbf16>, vector<128x8xbf16>, vector<128x8xf32> -> vector<128x8xf32>
    %c0_37 = arith.constant 0 : index
    %c1792 = arith.constant 1792 : index
    %59 = vector.load %arg4[%c0_37, %c1792] : memref<1x2048xf32, #tpu.memory_space<vmem>>, vector<1x8xf32>
    %60 = vector.broadcast %59 : vector<1x8xf32> to vector<128x8xf32>
    %61 = arith.addf %58, %60 : vector<128x8xf32>
    %62 = vector.extract_strided_slice %61 {offsets = [0, 0], sizes = [128, 2], strides = [1, 1]} : vector<128x8xf32> to vector<128x2xf32>
    %63 = vector.extract_strided_slice %61 {offsets = [0, 2], sizes = [128, 2], strides = [1, 1]} : vector<128x8xf32> to vector<128x2xf32>
    %cst_38 = arith.constant 0.000000e+00 : f32
    %64 = vector.broadcast %cst_38 : f32 to vector<128x2xf32>
    %65 = arith.maximumf %63, %64 : vector<128x2xf32>
    %66 = vector.broadcast %cst_38 : f32 to vector<128x2xf32>
    %67 = arith.subf %63, %66 : vector<128x2xf32>
    %68 = arith.cmpf one, %67, %67 : vector<128x2xf32>
    %69 = vector.broadcast %cst_38 : f32 to vector<128x2xf32>
    %70 = arith.addf %63, %69 : vector<128x2xf32>
    %71 = math.absf %67 : vector<128x2xf32>
    %cst_39 = arith.constant 0.000000e+00 : f32
    %72 = vector.broadcast %cst_39 : f32 to vector<128x2xf32>
    %73 = arith.subf %72, %71 : vector<128x2xf32>
    %74 = math.exp %73 : vector<128x2xf32>
    %75 = math.log1p %74 : vector<128x2xf32>
    %76 = arith.addf %65, %75 : vector<128x2xf32>
    %77 = arith.select %68, %70, %76 : vector<128x2xi1>, vector<128x2xf32>
    %cst_40 = arith.constant 1.000000e-07 : f32
    %78 = vector.broadcast %cst_40 : f32 to vector<128x2xf32>
    %79 = arith.addf %77, %78 : vector<128x2xf32>
    %80 = vector.extract_strided_slice %61 {offsets = [0, 4], sizes = [128, 2], strides = [1, 1]} : vector<128x8xf32> to vector<128x2xf32>
    %81 = vector.extract_strided_slice %61 {offsets = [0, 6], sizes = [128, 2], strides = [1, 1]} : vector<128x8xf32> to vector<128x2xf32>
    %cst_41 = arith.constant 0.000000e+00 : f32
    %82 = vector.broadcast %cst_41 : f32 to vector<128x2xf32>
    %83 = arith.maximumf %81, %82 : vector<128x2xf32>
    %84 = vector.broadcast %cst_41 : f32 to vector<128x2xf32>
    %85 = arith.subf %81, %84 : vector<128x2xf32>
    %86 = arith.cmpf one, %85, %85 : vector<128x2xf32>
    %87 = vector.broadcast %cst_41 : f32 to vector<128x2xf32>
    %88 = arith.addf %81, %87 : vector<128x2xf32>
    %89 = math.absf %85 : vector<128x2xf32>
    %cst_42 = arith.constant 0.000000e+00 : f32
    %90 = vector.broadcast %cst_42 : f32 to vector<128x2xf32>
    %91 = arith.subf %90, %89 : vector<128x2xf32>
    %92 = math.exp %91 : vector<128x2xf32>
    %93 = math.log1p %92 : vector<128x2xf32>
    %94 = arith.addf %83, %93 : vector<128x2xf32>
    %95 = arith.select %86, %88, %94 : vector<128x2xi1>, vector<128x2xf32>
    %cst_43 = arith.constant 1.000000e-07 : f32
    %96 = vector.broadcast %cst_43 : f32 to vector<128x2xf32>
    %97 = arith.addf %95, %96 : vector<128x2xf32>
    %c0_44 = arith.constant 0 : index
    %c0_45 = arith.constant 0 : index
    %98 = vector.load %arg3[%c0_44, %c0_45] : memref<128x4xf32, #tpu.memory_space<vmem>>, vector<128x4xf32>
    %99 = vector.extract_strided_slice %98 {offsets = [0, 0], sizes = [128, 2], strides = [1, 1]} : vector<128x4xf32> to vector<128x2xf32>
    %100 = arith.mulf %79, %99 : vector<128x2xf32>
    %101 = arith.addf %62, %100 : vector<128x2xf32>
    %102 = vector.extract_strided_slice %98 {offsets = [0, 2], sizes = [128, 2], strides = [1, 1]} : vector<128x4xf32> to vector<128x2xf32>
    %103 = arith.mulf %97, %102 : vector<128x2xf32>
    %104 = arith.addf %80, %103 : vector<128x2xf32>
    %105 = arith.subf %101, %62 : vector<128x2xf32>
    %106 = arith.divf %105, %79 : vector<128x2xf32>
    %107 = arith.mulf %106, %106 : vector<128x2xf32>
    %cst_46 = arith.constant -5.000000e-01 : f32
    %108 = vector.broadcast %cst_46 : f32 to vector<128x2xf32>
    %109 = arith.mulf %108, %107 : vector<128x2xf32>
    %110 = math.log %79 : vector<128x2xf32>
    %111 = arith.subf %109, %110 : vector<128x2xf32>
    %cst_47 = arith.constant 6.28318548 : f32
    %112 = math.log %cst_47 : f32
    %cst_48 = arith.constant 5.000000e-01 : f32
    %113 = arith.mulf %cst_48, %112 : f32
    %114 = vector.broadcast %113 : f32 to vector<128x2xf32>
    %115 = arith.subf %111, %114 : vector<128x2xf32>
    %cst_49 = arith.constant dense<0.000000e+00> : vector<128xf32>
    %116 = vector.multi_reduction <add>, %115, %cst_49 [1] : vector<128x2xf32> to vector<128xf32>
    %117 = vector.shape_cast %116 : vector<128xf32> to vector<128x1xf32>
    %118 = arith.subf %101, %80 : vector<128x2xf32>
    %119 = arith.divf %118, %97 : vector<128x2xf32>
    %120 = arith.mulf %119, %119 : vector<128x2xf32>
    %cst_50 = arith.constant -5.000000e-01 : f32
    %121 = vector.broadcast %cst_50 : f32 to vector<128x2xf32>
    %122 = arith.mulf %121, %120 : vector<128x2xf32>
    %123 = math.log %97 : vector<128x2xf32>
    %124 = arith.subf %122, %123 : vector<128x2xf32>
    %cst_51 = arith.constant 6.28318548 : f32
    %125 = math.log %cst_51 : f32
    %cst_52 = arith.constant 5.000000e-01 : f32
    %126 = arith.mulf %cst_52, %125 : f32
    %127 = vector.broadcast %126 : f32 to vector<128x2xf32>
    %128 = arith.subf %124, %127 : vector<128x2xf32>
    %cst_53 = arith.constant dense<0.000000e+00> : vector<128xf32>
    %129 = vector.multi_reduction <add>, %128, %cst_53 [1] : vector<128x2xf32> to vector<128xf32>
    %130 = vector.shape_cast %129 : vector<128xf32> to vector<128x1xf32>
    %131 = arith.subf %117, %130 : vector<128x1xf32>
    %132 = arith.subf %104, %80 : vector<128x2xf32>
    %133 = arith.divf %132, %97 : vector<128x2xf32>
    %134 = arith.mulf %133, %133 : vector<128x2xf32>
    %cst_54 = arith.constant -5.000000e-01 : f32
    %135 = vector.broadcast %cst_54 : f32 to vector<128x2xf32>
    %136 = arith.mulf %135, %134 : vector<128x2xf32>
    %137 = math.log %97 : vector<128x2xf32>
    %138 = arith.subf %136, %137 : vector<128x2xf32>
    %cst_55 = arith.constant 6.28318548 : f32
    %139 = math.log %cst_55 : f32
    %cst_56 = arith.constant 5.000000e-01 : f32
    %140 = arith.mulf %cst_56, %139 : f32
    %141 = vector.broadcast %140 : f32 to vector<128x2xf32>
    %142 = arith.subf %138, %141 : vector<128x2xf32>
    %cst_57 = arith.constant dense<0.000000e+00> : vector<128xf32>
    %143 = vector.multi_reduction <add>, %142, %cst_57 [1] : vector<128x2xf32> to vector<128xf32>
    %144 = vector.shape_cast %143 : vector<128xf32> to vector<128x1xf32>
    %145 = arith.subf %104, %62 : vector<128x2xf32>
    %146 = arith.divf %145, %79 : vector<128x2xf32>
    %147 = arith.mulf %146, %146 : vector<128x2xf32>
    %cst_58 = arith.constant -5.000000e-01 : f32
    %148 = vector.broadcast %cst_58 : f32 to vector<128x2xf32>
    %149 = arith.mulf %148, %147 : vector<128x2xf32>
    %150 = math.log %79 : vector<128x2xf32>
    %151 = arith.subf %149, %150 : vector<128x2xf32>
    %cst_59 = arith.constant 6.28318548 : f32
    %152 = math.log %cst_59 : f32
    %cst_60 = arith.constant 5.000000e-01 : f32
    %153 = arith.mulf %cst_60, %152 : f32
    %154 = vector.broadcast %153 : f32 to vector<128x2xf32>
    %155 = arith.subf %151, %154 : vector<128x2xf32>
    %cst_61 = arith.constant dense<0.000000e+00> : vector<128xf32>
    %156 = vector.multi_reduction <add>, %155, %cst_61 [1] : vector<128x2xf32> to vector<128xf32>
    %157 = vector.shape_cast %156 : vector<128xf32> to vector<128x1xf32>
    %158 = arith.subf %144, %157 : vector<128x1xf32>
    %159 = arith.addf %131, %158 : vector<128x1xf32>
    %cst_62 = arith.constant 5.000000e-01 : f32
    %160 = vector.broadcast %cst_62 : f32 to vector<128x1xf32>
    %161 = arith.mulf %160, %159 : vector<128x1xf32>
    %162 = arith.negf %161 : vector<128x1xf32>
    %163 = math.exp %162 : vector<128x1xf32>
    %cst_63 = arith.constant 1.000000e+00 : f32
    %164 = vector.broadcast %cst_63 : f32 to vector<128x1xf32>
    %165 = arith.addf %164, %163 : vector<128x1xf32>
    %166 = arith.divf %164, %165 : vector<128x1xf32>
    %cst_64 = arith.constant 2.500000e-01 : f32
    %cst_65 = arith.constant 7.500000e-01 : f32
    %167 = vector.broadcast %cst_64 : f32 to vector<128x1xf32>
    %168 = arith.maximumf %167, %166 : vector<128x1xf32>
    %169 = vector.broadcast %cst_65 : f32 to vector<128x1xf32>
    %170 = arith.minimumf %169, %168 : vector<128x1xf32>
    %c0_66 = arith.constant 0 : index
    %c0_67 = arith.constant 0 : index
    %171 = vector.load %arg10[%c0_66, %c0_67] : memref<128x128xbf16, #tpu.memory_space<vmem>>, vector<128x128xbf16>
    %172 = arith.truncf %42 : vector<128x128xf32> to vector<128x128xbf16>
    %cst_68 = arith.constant dense<0.000000e+00> : vector<128x128xf32>
    %173 = tpu.matmul %172, %171, %cst_68 {dimension_numbers = #tpu.dot_dimension_numbers<[1], [0], [0], [1], [0, 0, 1, 1], [], []>} : vector<128x128xbf16>, vector<128x128xbf16>, vector<128x128xf32> -> vector<128x128xf32>
    %c0_69 = arith.constant 0 : index
    %c1152 = arith.constant 1152 : index
    %174 = vector.load %arg4[%c0_69, %c1152] : memref<1x2048xf32, #tpu.memory_space<vmem>>, vector<1x128xf32>
    %175 = vector.broadcast %174 : vector<1x128xf32> to vector<128x128xf32>
    %176 = arith.addf %173, %175 : vector<128x128xf32>
    %cst_70 = arith.constant 0.000000e+00 : f32
    %177 = vector.broadcast %cst_70 : f32 to vector<128x128xf32>
    %178 = arith.maximumf %176, %177 : vector<128x128xf32>
    %c0_71 = arith.constant 0 : index
    %c0_72 = arith.constant 0 : index
    %179 = vector.load %arg11[%c0_71, %c0_72] : memref<128x64xbf16, #tpu.memory_space<vmem>>, vector<128x64xbf16>
    %180 = arith.truncf %178 : vector<128x128xf32> to vector<128x128xbf16>
    %cst_73 = arith.constant dense<0.000000e+00> : vector<128x64xf32>
    %181 = tpu.matmul %180, %179, %cst_73 {dimension_numbers = #tpu.dot_dimension_numbers<[1], [0], [0], [1], [0, 0, 1, 1], [], []>} : vector<128x128xbf16>, vector<128x64xbf16>, vector<128x64xf32> -> vector<128x64xf32>
    %c0_74 = arith.constant 0 : index
    %c1280 = arith.constant 1280 : index
    %182 = vector.load %arg4[%c0_74, %c1280] : memref<1x2048xf32, #tpu.memory_space<vmem>>, vector<1x64xf32>
    %183 = vector.broadcast %182 : vector<1x64xf32> to vector<128x64xf32>
    %184 = arith.addf %181, %183 : vector<128x64xf32>
    %cst_75 = arith.constant 0.000000e+00 : f32
    %185 = vector.broadcast %cst_75 : f32 to vector<128x64xf32>
    %186 = arith.maximumf %184, %185 : vector<128x64xf32>
    %cst_76 = arith.constant 1.000000e+00 : f32
    %187 = vector.broadcast %cst_76 : f32 to vector<128x1xf32>
    %188 = arith.subf %187, %170 : vector<128x1xf32>
    %189 = vector.broadcast %188 : vector<128x1xf32> to vector<128x128xf32>
    %190 = arith.mulf %189, %42 : vector<128x128xf32>
    %191 = vector.broadcast %170 : vector<128x1xf32> to vector<128x64xf32>
    %192 = arith.mulf %191, %186 : vector<128x64xf32>
    %193 = tpu.concatenate %190, %192 in 1 : vector<128x128xf32>, vector<128x64xf32> -> vector<128x192xf32>
    %c128 = arith.constant 128 : index
    %c0_77 = arith.constant 0 : index
    %194 = vector.load %arg14[%c128, %c0_77] : memref<432x128xbf16, #tpu.memory_space<vmem>>, vector<192x36xbf16>
    %195 = arith.truncf %193 : vector<128x192xf32> to vector<128x192xbf16>
    %cst_78 = arith.constant dense<0.000000e+00> : vector<128x36xf32>
    %196 = tpu.matmul %195, %194, %cst_78 {dimension_numbers = #tpu.dot_dimension_numbers<[1], [0], [0], [1], [0, 0, 1, 1], [], []>} : vector<128x192xbf16>, vector<192x36xbf16>, vector<128x36xf32> -> vector<128x36xf32>
    %c0_79 = arith.constant 0 : index
    %c1920 = arith.constant 1920 : index
    %197 = vector.load %arg4[%c0_79, %c1920] : memref<1x2048xf32, #tpu.memory_space<vmem>>, vector<1x36xf32>
    %198 = vector.broadcast %197 : vector<1x36xf32> to vector<128x36xf32>
    %199 = arith.addf %196, %198 : vector<128x36xf32>
    %200 = vector.extract_strided_slice %199 {offsets = [0, 0], sizes = [128, 4], strides = [1, 1]} : vector<128x36xf32> to vector<128x4xf32>
    %cst_80 = arith.constant dense<0xFF800000> : vector<128xf32>
    %201 = vector.multi_reduction <maximumf>, %200, %cst_80 [1] : vector<128x4xf32> to vector<128xf32>
    %cst_81 = arith.constant 0xFF800000 : f32
    %202 = vector.broadcast %cst_81 : f32 to vector<128xf32>
    %203 = arith.maximumf %202, %201 : vector<128xf32>
    %204 = vector.shape_cast %203 : vector<128xf32> to vector<128x1xf32>
    %205 = vector.broadcast %204 : vector<128x1xf32> to vector<128x4xf32>
    %206 = arith.subf %200, %205 : vector<128x4xf32>
    %207 = math.exp %206 : vector<128x4xf32>
    %cst_82 = arith.constant dense<0.000000e+00> : vector<128xf32>
    %208 = vector.multi_reduction <add>, %207, %cst_82 [1] : vector<128x4xf32> to vector<128xf32>
    %209 = vector.shape_cast %208 : vector<128xf32> to vector<128x1xf32>
    %210 = vector.broadcast %209 : vector<128x1xf32> to vector<128x4xf32>
    %211 = arith.divf %207, %210 : vector<128x4xf32>
    %212 = vector.extract_strided_slice %199 {offsets = [0, 4], sizes = [128, 32], strides = [1, 1]} : vector<128x36xf32> to vector<128x32xf32>
    %cst_83 = arith.constant 0.000000e+00 : f32
    %213 = vector.broadcast %cst_83 : f32 to vector<128x32xf32>
    %214 = arith.maximumf %212, %213 : vector<128x32xf32>
    %c352 = arith.constant 352 : index
    %c0_84 = arith.constant 0 : index
    %215 = vector.load %arg14[%c352, %c0_84] : memref<432x128xbf16, #tpu.memory_space<vmem>>, vector<4x96xbf16>
    %216 = arith.truncf %211 : vector<128x4xf32> to vector<128x4xbf16>
    %cst_85 = arith.constant dense<0.000000e+00> : vector<128x96xf32>
    %217 = tpu.matmul %216, %215, %cst_85 {dimension_numbers = #tpu.dot_dimension_numbers<[1], [0], [0], [1], [0, 0, 1, 1], [], []>} : vector<128x4xbf16>, vector<4x96xbf16>, vector<128x96xf32> -> vector<128x96xf32>
    %218 = vector.extract_strided_slice %217 {offsets = [0, 0], sizes = [128, 32], strides = [1, 1]} : vector<128x96xf32> to vector<128x32xf32>
    %219 = arith.mulf %214, %218 : vector<128x32xf32>
    %c320 = arith.constant 320 : index
    %c0_86 = arith.constant 0 : index
    %220 = vector.load %arg14[%c320, %c0_86] : memref<432x128xbf16, #tpu.memory_space<vmem>>, vector<32x64xbf16>
    %221 = arith.truncf %219 : vector<128x32xf32> to vector<128x32xbf16>
    %cst_87 = arith.constant dense<0.000000e+00> : vector<128x64xf32>
    %222 = tpu.matmul %221, %220, %cst_87 {dimension_numbers = #tpu.dot_dimension_numbers<[1], [0], [0], [1], [0, 0, 1, 1], [], []>} : vector<128x32xbf16>, vector<32x64xbf16>, vector<128x64xf32> -> vector<128x64xf32>
    %223 = vector.extract_strided_slice %217 {offsets = [0, 32], sizes = [128, 64], strides = [1, 1]} : vector<128x96xf32> to vector<128x64xf32>
    %224 = arith.addf %222, %223 : vector<128x64xf32>
    %c0_88 = arith.constant 0 : index
    %c0_89 = arith.constant 0 : index
    %225 = vector.load %arg13[%c0_88, %c0_89] : memref<64x64xbf16, #tpu.memory_space<vmem>>, vector<64x64xbf16>
    %226 = arith.truncf %224 : vector<128x64xf32> to vector<128x64xbf16>
    %cst_90 = arith.constant dense<0.000000e+00> : vector<128x64xf32>
    %227 = tpu.matmul %226, %225, %cst_90 {dimension_numbers = #tpu.dot_dimension_numbers<[1], [0], [0], [1], [0, 0, 1, 1], [], []>} : vector<128x64xbf16>, vector<64x64xbf16>, vector<128x64xf32> -> vector<128x64xf32>
    %c0_91 = arith.constant 0 : index
    %c1408 = arith.constant 1408 : index
    %228 = vector.load %arg4[%c0_91, %c1408] : memref<1x2048xf32, #tpu.memory_space<vmem>>, vector<1x64xf32>
    %229 = vector.broadcast %228 : vector<1x64xf32> to vector<128x64xf32>
    %230 = arith.addf %227, %229 : vector<128x64xf32>
    %cst_92 = arith.constant 0.000000e+00 : f32
    %231 = vector.broadcast %cst_92 : f32 to vector<128x64xf32>
    %232 = arith.maximumf %230, %231 : vector<128x64xf32>
    %c368 = arith.constant 368 : index
    %c0_93 = arith.constant 0 : index
    %233 = vector.load %arg14[%c368, %c0_93] : memref<432x128xbf16, #tpu.memory_space<vmem>>, vector<64x2xbf16>
    %234 = arith.truncf %232 : vector<128x64xf32> to vector<128x64xbf16>
    %cst_94 = arith.constant dense<0.000000e+00> : vector<128x2xf32>
    %235 = tpu.matmul %234, %233, %cst_94 {dimension_numbers = #tpu.dot_dimension_numbers<[1], [0], [0], [1], [0, 0, 1, 1], [], []>} : vector<128x64xbf16>, vector<64x2xbf16>, vector<128x2xf32> -> vector<128x2xf32>
    %c0_95 = arith.constant 0 : index
    %c1536 = arith.constant 1536 : index
    %236 = vector.load %arg4[%c0_95, %c1536] : memref<1x2048xf32, #tpu.memory_space<vmem>>, vector<1x2xf32>
    %237 = vector.broadcast %236 : vector<1x2xf32> to vector<128x2xf32>
    %238 = arith.addf %235, %237 : vector<128x2xf32>
    %cst_96 = arith.constant 0.000000e+00 : f32
    %239 = vector.broadcast %cst_96 : f32 to vector<128x62xf32>
    %240 = tpu.concatenate %193, %44, %43, %238, %239 in 1 : vector<128x192xf32>, vector<128x64xf32>, vector<128x64xf32>, vector<128x2xf32>, vector<128x62xf32> -> vector<128x384xf32>
    %c0_97 = arith.constant 0 : index
    %c0_98 = arith.constant 0 : index
    %241 = vector.load %arg15[%c0_97, %c0_98] : memref<128x384xf32, #tpu.memory_space<vmem>>, vector<128x384xf32>
    tpu.vector_store %arg15[%c0_97, %c0_98], %240 {strides = array<i32>} : memref<128x384xf32, #tpu.memory_space<vmem>>, vector<128x384xf32>,
    return
  }
  func.func @transform_0(%arg0: i32) -> (i32, i32) {
    %c0_i32 = arith.constant 0 : i32
    %c0_i32_0 = arith.constant 0 : i32
    return %arg0, %c0_i32 : i32, i32
  }
  func.func @transform_1(%arg0: i32) -> (i32, i32) {
    %c0_i32 = arith.constant 0 : i32
    %c0_i32_0 = arith.constant 0 : i32
    return %arg0, %c0_i32 : i32, i32
  }
  func.func @transform_2(%arg0: i32) -> (i32, i32) {
    %c0_i32 = arith.constant 0 : i32
    %c0_i32_0 = arith.constant 0 : i32
    return %arg0, %c0_i32 : i32, i32
  }
  func.func @transform_3(%arg0: i32) -> (i32, i32) {
    %c0_i32 = arith.constant 0 : i32
    %c0_i32_0 = arith.constant 0 : i32
    %c0_i32_1 = arith.constant 0 : i32
    return %c0_i32, %c0_i32_0 : i32, i32
  }
  func.func @transform_4(%arg0: i32) -> (i32, i32) {
    %c0_i32 = arith.constant 0 : i32
    %c0_i32_0 = arith.constant 0 : i32
    %c0_i32_1 = arith.constant 0 : i32
    return %c0_i32, %c0_i32_0 : i32, i32
  }
  func.func @transform_5(%arg0: i32) -> (i32, i32) {
    %c0_i32 = arith.constant 0 : i32
    %c0_i32_0 = arith.constant 0 : i32
    %c0_i32_1 = arith.constant 0 : i32
    return %c0_i32, %c0_i32_0 : i32, i32
  }
  func.func @transform_6(%arg0: i32) -> (i32, i32) {
    %c0_i32 = arith.constant 0 : i32
    %c0_i32_0 = arith.constant 0 : i32
    %c0_i32_1 = arith.constant 0 : i32
    return %c0_i32, %c0_i32_0 : i32, i32
  }
  func.func @transform_7(%arg0: i32) -> (i32, i32) {
    %c0_i32 = arith.constant 0 : i32
    %c0_i32_0 = arith.constant 0 : i32
    %c0_i32_1 = arith.constant 0 : i32
    return %c0_i32, %c0_i32_0 : i32, i32
  }
  func.func @transform_8(%arg0: i32) -> (i32, i32) {
    %c0_i32 = arith.constant 0 : i32
    %c0_i32_0 = arith.constant 0 : i32
    %c0_i32_1 = arith.constant 0 : i32
    return %c0_i32, %c0_i32_0 : i32, i32
  }
  func.func @transform_9(%arg0: i32) -> (i32, i32) {
    %c0_i32 = arith.constant 0 : i32
    %c0_i32_0 = arith.constant 0 : i32
    %c0_i32_1 = arith.constant 0 : i32
    return %c0_i32, %c0_i32_0 : i32, i32
  }
  func.func @transform_10(%arg0: i32) -> (i32, i32) {
    %c0_i32 = arith.constant 0 : i32
    %c0_i32_0 = arith.constant 0 : i32
    %c0_i32_1 = arith.constant 0 : i32
    return %c0_i32, %c0_i32_0 : i32, i32
  }
  func.func @transform_11(%arg0: i32) -> (i32, i32) {
    %c0_i32 = arith.constant 0 : i32
    %c0_i32_0 = arith.constant 0 : i32
    %c0_i32_1 = arith.constant 0 : i32
    return %c0_i32, %c0_i32_0 : i32, i32
  }
  func.func @transform_12(%arg0: i32) -> (i32, i32) {
    %c0_i32 = arith.constant 0 : i32
    %c0_i32_0 = arith.constant 0 : i32
    %c0_i32_1 = arith.constant 0 : i32
    return %c0_i32, %c0_i32_0 : i32, i32
  }
  func.func @transform_13(%arg0: i32) -> (i32, i32) {
    %c0_i32 = arith.constant 0 : i32
    %c0_i32_0 = arith.constant 0 : i32
    %c0_i32_1 = arith.constant 0 : i32
    return %c0_i32, %c0_i32_0 : i32, i32
  }
  func.func @transform_14(%arg0: i32) -> (i32, i32) {
    %c0_i32 = arith.constant 0 : i32
    %c0_i32_0 = arith.constant 0 : i32
    return %arg0, %c0_i32 : i32, i32
  }
}

</mosaic_0001>

<llo_original>
// kernel: cafe_forward.1
$region0: #{cafe_forward.1}
  #allocation0 [shape = 'u32[]', space=smem, size = 0x4, offset = 0x4, fixed_abs, tag = 'smem constant byte address 0x4 - core index']
  #allocation1 [shape = 'u32[144,128]{1,0:T(1,128)}', space=vmem, size = 0x12000, scoped, tag = 'internal scratch']
  %s0 = inlined_call_operand.vmem [shape: f32[256,32], index: 0, kind: input, shape index: {}]
  %s1 = inlined_call_operand.vmem [shape: f32[256,1024], index: 1, kind: input, shape index: {}]
  %s2 = inlined_call_operand.vmem [shape: f32[256,4], index: 2, kind: input, shape index: {}]
  %s3 = inlined_call_operand.vmem [shape: f32[1,2048], index: 3, kind: input, shape index: {}]
  %s4 = inlined_call_operand.vmem [shape: bf16[32,256], index: 4, kind: input, shape index: {}]
  %s5 = inlined_call_operand.vmem [shape: bf16[1024,256], index: 5, kind: input, shape index: {}]
  %s6 = inlined_call_operand.vmem [shape: bf16[512,256], index: 6, kind: input, shape index: {}]
  %s7 = inlined_call_operand.vmem [shape: bf16[256,256], index: 7, kind: input, shape index: {}]
  %s8 = inlined_call_operand.vmem [shape: bf16[256,128], index: 8, kind: input, shape index: {}]
  %s9 = inlined_call_operand.vmem [shape: bf16[128,128], index: 9, kind: input, shape index: {}]
  %s10 = inlined_call_operand.vmem [shape: bf16[128,64], index: 10, kind: input, shape index: {}]
  %s11 = inlined_call_operand.vmem [shape: bf16[128,128], index: 11, kind: input, shape index: {}]
  %s12 = inlined_call_operand.vmem [shape: bf16[64,64], index: 12, kind: input, shape index: {}]
  %s13 = inlined_call_operand.vmem [shape: bf16[432,128], index: 13, kind: input, shape index: {}]
  %s14 = inlined_call_operand.vmem [shape: f32[256,384], index: 14, kind: output, shape index: {}]
  %s15 = sld [smem:[#allocation0]]
  $region89: #{cafe_forward.1} parent=0
    _
  %s17 = ssub.s32 1, %s15
  %s18 = scalar_select 0, %s17, %s15
  loop: start=0, step=1, limit=4
  $region2: #{cafe_forward.1} parent=0 // loop_pre_header
    _
  $region3: #{cafe_forward.1} parent=0 // loop_header
    %s20 = sphi 0, %s24
    %p21 = scmp.ge.s32.totalorder %s20, 4
    %s30 = sphi 0, %s32
    %s33 = sphi 0, %s30
    %s34 = sphi 0, %s33
    %s50 = sphi 0, %s34
    %s56 = sphi 0, %s58
    %s59 = sphi 0, %s56
    %s60 = sphi 0, %s59
    %s76 = sphi 0, %s60
    %s82 = sphi 0, %s84
    %s85 = sphi 0, %s82
    %s86 = sphi 0, %s85
    %s102 = sphi 0, %s86
    %s106 = sphi 0, %s106
    %s108 = sphi 0, %s106
    %s109 = sphi 0, %s108
    %s123 = sphi 0, %s109
    %s127 = sphi 0, %s127
    %s129 = sphi 0, %s127
    %s130 = sphi 0, %s129
    %s144 = sphi 0, %s130
    %s148 = sphi 0, %s148
    %s150 = sphi 0, %s148
    %s151 = sphi 0, %s150
    %s165 = sphi 0, %s151
    %s169 = sphi 0, %s169
    %s171 = sphi 0, %s169
    %s172 = sphi 0, %s171
    %s186 = sphi 0, %s172
    %s190 = sphi 0, %s190
    %s192 = sphi 0, %s190
    %s193 = sphi 0, %s192
    %s207 = sphi 0, %s193
    %s211 = sphi 0, %s211
    %s213 = sphi 0, %s211
    %s214 = sphi 0, %s213
    %s228 = sphi 0, %s214
    %s232 = sphi 0, %s232
    %s234 = sphi 0, %s232
    %s235 = sphi 0, %s234
    %s249 = sphi 0, %s235
    %s253 = sphi 0, %s253
    %s255 = sphi 0, %s253
    %s256 = sphi 0, %s255
    %s270 = sphi 0, %s256
    %s274 = sphi 0, %s274
    %s276 = sphi 0, %s274
    %s277 = sphi 0, %s276
    %s291 = sphi 0, %s277
    %s295 = sphi 0, %s295
    %s297 = sphi 0, %s295
    %s298 = sphi 0, %s297
    %s312 = sphi 0, %s298
    %s316 = sphi 0, %s316
    %s318 = sphi 0, %s316
    %s319 = sphi 0, %s318
    %s333 = sphi 0, %s319
    %s339 = sphi 0, %s341
    %s342 = sphi 0, %s339
    %s343 = sphi 0, %s342
    %s359 = sphi 0, %s343
  $region4: #{cafe_forward.1} parent=0 // loop_header_branch
    %23 = sbr.rel (%p21) target = $region8
  $region5: #{cafe_forward.1} parent=0 // loop_body
    %s25 = ssub.s32 %s20, 1
    %s26 = ssub.s32 %s20, 2
    %s27 = sadd.s32 %s20, 1
    %s28 = ssub.s32 %s20, %s27
    %p29 = scmp.eq.s32.totalorder %s28, 0
    %s31 = sadd.s32 %s30, 1
    %s32 = scalar_select %p29, %s30, %s31
    %p35 = pneg %p29
    %p36 = scmp.eq.s32.totalorder %s20, 1
    %p37 = por %p35, %p36
    %p38 = scmp.ne.s32.totalorder %s30, %s33
    %p39 = scmp.eq.s32.totalorder %s20, 0
    %p40 = por %p38, %p39
    %p41 = scmp.ne.s32.totalorder %s30, %s33
    %p42 = scmp.eq.s32.totalorder %s25, 1
    %p43 = por %p41, %p42
    %p44 = scmp.ne.s32.totalorder %s33, %s34
    %p45 = scmp.eq.s32.totalorder %s25, 0
    %p46 = por %p44, %p45
    %p47 = scmp.ne.s32.totalorder %s33, %s34
    %p48 = scmp.eq.s32.totalorder %s26, 1
    %p49 = por %p47, %p48
    %p51 = scmp.ne.s32.totalorder %s34, %s50
    %p52 = scmp.eq.s32.totalorder %s26, 0
    %p53 = por %p51, %p52
    %s54 = ssub.s32 %s20, %s27
    %p55 = scmp.eq.s32.totalorder %s54, 0
    %s57 = sadd.s32 %s56, 1
    %s58 = scalar_select %p55, %s56, %s57
    %p61 = pneg %p55
    %p62 = scmp.eq.s32.totalorder %s20, 1
    %p63 = por %p61, %p62
    %p64 = scmp.ne.s32.totalorder %s56, %s59
    %p65 = scmp.eq.s32.totalorder %s20, 0
    %p66 = por %p64, %p65
    %p67 = scmp.ne.s32.totalorder %s56, %s59
    %p68 = scmp.eq.s32.totalorder %s25, 1
    %p69 = por %p67, %p68
    %p70 = scmp.ne.s32.totalorder %s59, %s60
    %p71 = scmp.eq.s32.totalorder %s25, 0
    %p72 = por %p70, %p71
    %p73 = scmp.ne.s32.totalorder %s59, %s60
    %p74 = scmp.eq.s32.totalorder %s26, 1
    %p75 = por %p73, %p74
    %p77 = scmp.ne.s32.totalorder %s60, %s76
    %p78 = scmp.eq.s32.totalorder %s26, 0
    %p79 = por %p77, %p78
    %s80 = ssub.s32 %s20, %s27
    %p81 = scmp.eq.s32.totalorder %s80, 0
    %s83 = sadd.s32 %s82, 1
    %s84 = scalar_select %p81, %s82, %s83
    %p87 = pneg %p81
    %p88 = scmp.eq.s32.totalorder %s20, 1
    %p89 = por %p87, %p88
    %p90 = scmp.ne.s32.totalorder %s82, %s85
    %p91 = scmp.eq.s32.totalorder %s20, 0
    %p92 = por %p90, %p91
    %p93 = scmp.ne.s32.totalorder %s82, %s85
    %p94 = scmp.eq.s32.totalorder %s25, 1
    %p95 = por %p93, %p94
    %p96 = scmp.ne.s32.totalorder %s85, %s86
    %p97 = scmp.eq.s32.totalorder %s25, 0
    %p98 = por %p96, %p97
    %p99 = scmp.ne.s32.totalorder %s85, %s86
    %p100 = scmp.eq.s32.totalorder %s26, 1
    %p101 = por %p99, %p100
    %p103 = scmp.ne.s32.totalorder %s86, %s102
    %p104 = scmp.eq.s32.totalorder %s26, 0
    %p105 = por %p103, %p104
    %s107 = sadd.s32 %s106, 1
    %p110 = scmp.eq.s32.totalorder %s20, 1
    %p111 = scmp.ne.s32.totalorder %s106, %s108
    %p112 = scmp.eq.s32.totalorder %s20, 0
    %p113 = por %p111, %p112
    %p114 = scmp.ne.s32.totalorder %s106, %s108
    %p115 = scmp.eq.s32.totalorder %s25, 1
    %p116 = por %p114, %p115
    %p117 = scmp.ne.s32.totalorder %s108, %s109
    %p118 = scmp.eq.s32.totalorder %s25, 0
    %p119 = por %p117, %p118
    %p120 = scmp.ne.s32.totalorder %s108, %s109
    %p121 = scmp.eq.s32.totalorder %s26, 1
    %p122 = por %p120, %p121
    %p124 = scmp.ne.s32.totalorder %s109, %s123
    %p125 = scmp.eq.s32.totalorder %s26, 0
    %p126 = por %p124, %p125
    %s128 = sadd.s32 %s127, 1
    %p131 = scmp.eq.s32.totalorder %s20, 1
    %p132 = scmp.ne.s32.totalorder %s127, %s129
    %p133 = scmp.eq.s32.totalorder %s20, 0
    %p134 = por %p132, %p133
    %p135 = scmp.ne.s32.totalorder %s127, %s129
    %p136 = scmp.eq.s32.totalorder %s25, 1
    %p137 = por %p135, %p136
    %p138 = scmp.ne.s32.totalorder %s129, %s130
    %p139 = scmp.eq.s32.totalorder %s25, 0
    %p140 = por %p138, %p139
    %p141 = scmp.ne.s32.totalorder %s129, %s130
    %p142 = scmp.eq.s32.totalorder %s26, 1
    %p143 = por %p141, %p142
    %p145 = scmp.ne.s32.totalorder %s130, %s144
    %p146 = scmp.eq.s32.totalorder %s26, 0
    %p147 = por %p145, %p146
    %s149 = sadd.s32 %s148, 1
    %p152 = scmp.eq.s32.totalorder %s20, 1
    %p153 = scmp.ne.s32.totalorder %s148, %s150
    %p154 = scmp.eq.s32.totalorder %s20, 0
    %p155 = por %p153, %p154
    %p156 = scmp.ne.s32.totalorder %s148, %s150
    %p157 = scmp.eq.s32.totalorder %s25, 1
    %p158 = por %p156, %p157
    %p159 = scmp.ne.s32.totalorder %s150, %s151
    %p160 = scmp.eq.s32.totalorder %s25, 0
    %p161 = por %p159, %p160
    %p162 = scmp.ne.s32.totalorder %s150, %s151
    %p163 = scmp.eq.s32.totalorder %s26, 1
    %p164 = por %p162, %p163
    %p166 = scmp.ne.s32.totalorder %s151, %s165
    %p167 = scmp.eq.s32.totalorder %s26, 0
    %p168 = por %p166, %p167
    %s170 = sadd.s32 %s169, 1
    %p173 = scmp.eq.s32.totalorder %s20, 1
    %p174 = scmp.ne.s32.totalorder %s169, %s171
    %p175 = scmp.eq.s32.totalorder %s20, 0
    %p176 = por %p174, %p175
    %p177 = scmp.ne.s32.totalorder %s169, %s171
    %p178 = scmp.eq.s32.totalorder %s25, 1
    %p179 = por %p177, %p178
    %p180 = scmp.ne.s32.totalorder %s171, %s172
    %p181 = scmp.eq.s32.totalorder %s25, 0
    %p182 = por %p180, %p181
    %p183 = scmp.ne.s32.totalorder %s171, %s172
    %p184 = scmp.eq.s32.totalorder %s26, 1
    %p185 = por %p183, %p184
    %p187 = scmp.ne.s32.totalorder %s172, %s186
    %p188 = scmp.eq.s32.totalorder %s26, 0
    %p189 = por %p187, %p188
    %s191 = sadd.s32 %s190, 1
    %p194 = scmp.eq.s32.totalorder %s20, 1
    %p195 = scmp.ne.s32.totalorder %s190, %s192
    %p196 = scmp.eq.s32.totalorder %s20, 0
    %p197 = por %p195, %p196
    %p198 = scmp.ne.s32.totalorder %s190, %s192
    %p199 = scmp.eq.s32.totalorder %s25, 1
    %p200 = por %p198, %p199
    %p201 = scmp.ne.s32.totalorder %s192, %s193
    %p202 = scmp.eq.s32.totalorder %s25, 0
    %p203 = por %p201, %p202
    %p204 = scmp.ne.s32.totalorder %s192, %s193
    %p205 = scmp.eq.s32.totalorder %s26, 1
    %p206 = por %p204, %p205
    %p208 = scmp.ne.s32.totalorder %s193, %s207
    %p209 = scmp.eq.s32.totalorder %s26, 0
    %p210 = por %p208, %p209
    %s212 = sadd.s32 %s211, 1
    %p215 = scmp.eq.s32.totalorder %s20, 1
    %p216 = scmp.ne.s32.totalorder %s211, %s213
    %p217 = scmp.eq.s32.totalorder %s20, 0
    %p218 = por %p216, %p217
    %p219 = scmp.ne.s32.totalorder %s211, %s213
    %p220 = scmp.eq.s32.totalorder %s25, 1
    %p221 = por %p219, %p220
    %p222 = scmp.ne.s32.totalorder %s213, %s214
    %p223 = scmp.eq.s32.totalorder %s25, 0
    %p224 = por %p222, %p223
    %p225 = scmp.ne.s32.totalorder %s213, %s214
    %p226 = scmp.eq.s32.totalorder %s26, 1
    %p227 = por %p225, %p226
    %p229 = scmp.ne.s32.totalorder %s214, %s228
    %p230 = scmp.eq.s32.totalorder %s26, 0
    %p231 = por %p229, %p230
    %s233 = sadd.s32 %s232, 1
    %p236 = scmp.eq.s32.totalorder %s20, 1
    %p237 = scmp.ne.s32.totalorder %s232, %s234
    %p238 = scmp.eq.s32.totalorder %s20, 0
    %p239 = por %p237, %p238
    %p240 = scmp.ne.s32.totalorder %s232, %s234
    %p241 = scmp.eq.s32.totalorder %s25, 1
    %p242 = por %p240, %p241
    %p243 = scmp.ne.s32.totalorder %s234, %s235
    %p244 = scmp.eq.s32.totalorder %s25, 0
    %p245 = por %p243, %p244
    %p246 = scmp.ne.s32.totalorder %s234, %s235
    %p247 = scmp.eq.s32.totalorder %s26, 1
    %p248 = por %p246, %p247
    %p250 = scmp.ne.s32.totalorder %s235, %s249
    %p251 = scmp.eq.s32.totalorder %s26, 0
    %p252 = por %p250, %p251
    %s254 = sadd.s32 %s253, 1
    %p257 = scmp.eq.s32.totalorder %s20, 1
    %p258 = scmp.ne.s32.totalorder %s253, %s255
    %p259 = scmp.eq.s32.totalorder %s20, 0
    %p260 = por %p258, %p259
    %p261 = scmp.ne.s32.totalorder %s253, %s255
    %p262 = scmp.eq.s32.totalorder %s25, 1
    %p263 = por %p261, %p262
    %p264 = scmp.ne.s32.totalorder %s255, %s256
    %p265 = scmp.eq.s32.totalorder %s25, 0
    %p266 = por %p264, %p265
    %p267 = scmp.ne.s32.totalorder %s255, %s256
    %p268 = scmp.eq.s32.totalorder %s26, 1
    %p269 = por %p267, %p268
    %p271 = scmp.ne.s32.totalorder %s256, %s270
    %p272 = scmp.eq.s32.totalorder %s26, 0
    %p273 = por %p271, %p272
    %s275 = sadd.s32 %s274, 1
    %p278 = scmp.eq.s32.totalorder %s20, 1
    %p279 = scmp.ne.s32.totalorder %s274, %s276
    %p280 = scmp.eq.s32.totalorder %s20, 0
    %p281 = por %p279, %p280
    %p282 = scmp.ne.s32.totalorder %s274, %s276
    %p283 = scmp.eq.s32.totalorder %s25, 1
    %p284 = por %p282, %p283
    %p285 = scmp.ne.s32.totalorder %s276, %s277
    %p286 = scmp.eq.s32.totalorder %s25, 0
    %p287 = por %p285, %p286
    %p288 = scmp.ne.s32.totalorder %s276, %s277
    %p289 = scmp.eq.s32.totalorder %s26, 1
    %p290 = por %p288, %p289
    %p292 = scmp.ne.s32.totalorder %s277, %s291
    %p293 = scmp.eq.s32.totalorder %s26, 0
    %p294 = por %p292, %p293
    %s296 = sadd.s32 %s295, 1
    %p299 = scmp.eq.s32.totalorder %s20, 1
    %p300 = scmp.ne.s32.totalorder %s295, %s297
    %p301 = scmp.eq.s32.totalorder %s20, 0
    %p302 = por %p300, %p301
    %p303 = scmp.ne.s32.totalorder %s295, %s297
    %p304 = scmp.eq.s32.totalorder %s25, 1
    %p305 = por %p303, %p304
    %p306 = scmp.ne.s32.totalorder %s297, %s298
    %p307 = scmp.eq.s32.totalorder %s25, 0
    %p308 = por %p306, %p307
    %p309 = scmp.ne.s32.totalorder %s297, %s298
    %p310 = scmp.eq.s32.totalorder %s26, 1
    %p311 = por %p309, %p310
    %p313 = scmp.ne.s32.totalorder %s298, %s312
    %p314 = scmp.eq.s32.totalorder %s26, 0
    %p315 = por %p313, %p314
    %s317 = sadd.s32 %s316, 1
    %p320 = scmp.eq.s32.totalorder %s20, 1
    %p321 = scmp.ne.s32.totalorder %s316, %s318
    %p322 = scmp.eq.s32.totalorder %s20, 0
    %p323 = por %p321, %p322
    %p324 = scmp.ne.s32.totalorder %s316, %s318
    %p325 = scmp.eq.s32.totalorder %s25, 1
    %p326 = por %p324, %p325
    %p327 = scmp.ne.s32.totalorder %s318, %s319
    %p328 = scmp.eq.s32.totalorder %s25, 0
    %p329 = por %p327, %p328
    %p330 = scmp.ne.s32.totalorder %s318, %s319
    %p331 = scmp.eq.s32.totalorder %s26, 1
    %p332 = por %p330, %p331
    %p334 = scmp.ne.s32.totalorder %s319, %s333
    %p335 = scmp.eq.s32.totalorder %s26, 0
    %p336 = por %p334, %p335
    %s337 = ssub.s32 %s20, %s27
    %p338 = scmp.eq.s32.totalorder %s337, 0
    %s340 = sadd.s32 %s339, 1
    %s341 = scalar_select %p338, %s339, %s340
    %p344 = pneg %p338
    %p345 = scmp.eq.s32.totalorder %s20, 1
    %p346 = por %p344, %p345
    %p347 = scmp.ne.s32.totalorder %s339, %s342
    %p348 = scmp.eq.s32.totalorder %s20, 0
    %p349 = por %p347, %p348
    %p350 = scmp.ne.s32.totalorder %s339, %s342
    %p351 = scmp.eq.s32.totalorder %s25, 1
    %p352 = por %p350, %p351
    %p353 = scmp.ne.s32.totalorder %s342, %s343
    %p354 = scmp.eq.s32.totalorder %s25, 0
    %p355 = por %p353, %p354
    %p356 = scmp.ne.s32.totalorder %s342, %s343
    %p357 = scmp.eq.s32.totalorder %s26, 1
    %p358 = por %p356, %p357
    %p360 = scmp.ne.s32.totalorder %s343, %s359
    %p361 = scmp.eq.s32.totalorder %s26, 0
    %p362 = por %p360, %p361
    %p363 = scmp.le.s32.totalorder 1, %s20
    %p364 = scmp.lt.s32.totalorder %s20, 3
    %p365 = pnand %p363, %p364
    %p366 = pneg %p365
    // Predicated region
    $region9: #{cafe_forward.1} parent=5 // pred_check
      _
    $region10: #{cafe_forward.1} parent=5 // pred_check_branch
      %368 = sbr.rel (%p365) target = $region12
    $region11: #{cafe_forward.1} parent=5 // pred_region
      %s369 = ssub.s32 %s20, 1
      // Predicated region
      $region13: #{cafe_forward.1} parent=11 // pred_check
        %p370 = pneg %p119
      $region14: #{cafe_forward.1} parent=11 // pred_check_branch
        %372 = sbr.rel (%p370) target = $region16
      $region15: #{cafe_forward.1} parent=11 // pred_region
        _
      $region16: #{cafe_forward.1} parent=11 // pred_fallthru
        _
      // Predicated region
      $region17: #{cafe_forward.1} parent=11 // pred_check
        %p373 = pneg %p140
      $region18: #{cafe_forward.1} parent=11 // pred_check_branch
        %375 = sbr.rel (%p373) target = $region20
      $region19: #{cafe_forward.1} parent=11 // pred_region
        _
      $region20: #{cafe_forward.1} parent=11 // pred_fallthru
        _
      // Predicated region
      $region21: #{cafe_forward.1} parent=11 // pred_check
        %p376 = pneg %p161
      $region22: #{cafe_forward.1} parent=11 // pred_check_branch
        %378 = sbr.rel (%p376) target = $region24
      $region23: #{cafe_forward.1} parent=11 // pred_region
        _
      $region24: #{cafe_forward.1} parent=11 // pred_fallthru
        _
      // Predicated region
      $region25: #{cafe_forward.1} parent=11 // pred_check
        %p379 = pneg %p182
      $region26: #{cafe_forward.1} parent=11 // pred_check_branch
        %381 = sbr.rel (%p379) target = $region28
      $region27: #{cafe_forward.1} parent=11 // pred_region
        _
      $region28: #{cafe_forward.1} parent=11 // pred_fallthru
        _
      // Predicated region
      $region29: #{cafe_forward.1} parent=11 // pred_check
        %p382 = pneg %p203
      $region30: #{cafe_forward.1} parent=11 // pred_check_branch
        %384 = sbr.rel (%p382) target = $region32
      $region31: #{cafe_forward.1} parent=11 // pred_region
        _
      $region32: #{cafe_forward.1} parent=11 // pred_fallthru
        _
      // Predicated region
      $region33: #{cafe_forward.1} parent=11 // pred_check
        %p385 = pneg %p224
      $region34: #{cafe_forward.1} parent=11 // pred_check_branch
        %387 = sbr.rel (%p385) target = $region36
      $region35: #{cafe_forward.1} parent=11 // pred_region
        _
      $region36: #{cafe_forward.1} parent=11 // pred_fallthru
        _
      // Predicated region
      $region37: #{cafe_forward.1} parent=11 // pred_check
        %p388 = pneg %p245
      $region38: #{cafe_forward.1} parent=11 // pred_check_branch
        %390 = sbr.rel (%p388) target = $region40
      $region39: #{cafe_forward.1} parent=11 // pred_region
        _
      $region40: #{cafe_forward.1} parent=11 // pred_fallthru
        _
      // Predicated region
      $region41: #{cafe_forward.1} parent=11 // pred_check
        %p391 = pneg %p266
      $region42: #{cafe_forward.1} parent=11 // pred_check_branch
        %393 = sbr.rel (%p391) target = $region44
      $region43: #{cafe_forward.1} parent=11 // pred_region
        _
      $region44: #{cafe_forward.1} parent=11 // pred_fallthru
        _
      // Predicated region
      $region45: #{cafe_forward.1} parent=11 // pred_check
        %p394 = pneg %p287
      $region46: #{cafe_forward.1} parent=11 // pred_check_branch
        %396 = sbr.rel (%p394) target = $region48
      $region47: #{cafe_forward.1} parent=11 // pred_region
        _
      $region48: #{cafe_forward.1} parent=11 // pred_fallthru
        _
      // Predicated region
      $region49: #{cafe_forward.1} parent=11 // pred_check
        %p397 = pneg %p308
      $region50: #{cafe_forward.1} parent=11 // pred_check_branch
        %399 = sbr.rel (%p397) target = $region52
      $region51: #{cafe_forward.1} parent=11 // pred_region
        _
      $region52: #{cafe_forward.1} parent=11 // pred_fallthru
        _
      // Predicated region
      $region53: #{cafe_forward.1} parent=11 // pred_check
        %p400 = pneg %p329
      $region54: #{cafe_forward.1} parent=11 // pred_check_branch
        %402 = sbr.rel (%p400) target = $region56
      $region55: #{cafe_forward.1} parent=11 // pred_region
        _
      $region56: #{cafe_forward.1} parent=11 // pred_fallthru
        _
    $region12: #{cafe_forward.1} parent=5 // pred_fallthru
      _
    %p403 = scmp.lt.s32.totalorder %s20, 2
    // Predicated region
    $region57: #{cafe_forward.1} parent=5 // pred_check
      %p404 = pneg %p403
    $region58: #{cafe_forward.1} parent=5 // pred_check_branch
      %406 = sbr.rel (%p404) target = $region60
    $region59: #{cafe_forward.1} parent=5 // pred_region
      // Predicated region
      $region61: #{cafe_forward.1} parent=59 // pred_check
        %p407 = pneg %p40
      $region62: #{cafe_forward.1} parent=59 // pred_check_branch
        %409 = sbr.rel (%p407) target = $region64
      $region63: #{cafe_forward.1} parent=59 // pred_region
        %s410 = smul.u32 16, %s20
        %p411 = scmp.lt.s32.totalorder %s410, 31
        %s412 = scalar_select %p411, %s410, 31
        %s413 = smul.addr %s412, 8
        %s414 = scalar_lea.vmem %s0, %s413
        %s415 = smul.u32 16, %s20
      $region64: #{cafe_forward.1} parent=59 // pred_fallthru
        _
      // Predicated region
      $region65: #{cafe_forward.1} parent=59 // pred_check
        %p416 = pneg %p66
      $region66: #{cafe_forward.1} parent=59 // pred_check_branch
        %418 = sbr.rel (%p416) target = $region68
      $region67: #{cafe_forward.1} parent=59 // pred_region
        %s419 = smul.u32 16, %s20
        %p420 = scmp.lt.s32.totalorder %s419, 31
        %s421 = scalar_select %p420, %s419, 31
        %s422 = smul.addr %s421, 8
        %s423 = smul.addr %s422, 8
        %s424 = scalar_lea.vmem %s1, %s423
        %s425 = smul.u32 16, %s20
      $region68: #{cafe_forward.1} parent=59 // pred_fallthru
        _
      // Predicated region
      $region69: #{cafe_forward.1} parent=59 // pred_check
        %p426 = pneg %p92
      $region70: #{cafe_forward.1} parent=59 // pred_check_branch
        %428 = sbr.rel (%p426) target = $region72
      $region71: #{cafe_forward.1} parent=59 // pred_region
        %s429 = smul.u32 16, %s20
        %p430 = scmp.lt.s32.totalorder %s429, 31
        %s431 = scalar_select %p430, %s429, 31
        %s432 = smul.addr %s431, 8
        %s433 = scalar_lea.vmem %s2, %s432
        %s434 = smul.u32 16, %s20
      $region72: #{cafe_forward.1} parent=59 // pred_fallthru
        _
    $region60: #{cafe_forward.1} parent=5 // pred_fallthru
      _
    %p435 = scmp.le.s32.totalorder 1, %s20
    %p436 = scmp.lt.s32.totalorder %s20, 3
    %p437 = pnand %p435, %p436
    %p438 = pneg %p437
    // Predicated region
    $region73: #{cafe_forward.1} parent=5 // pred_check
      _
    $region74: #{cafe_forward.1} parent=5 // pred_check_branch
      %440 = sbr.rel (%p437) target = $region76
    $region75: #{cafe_forward.1} parent=5 // pred_region
      %s441 = ssub.s32 %s20, 1
      %s442 = smul.u32 16, %s25
      %p443 = scmp.lt.s32.totalorder %s442, 31
      %s444 = scalar_select %p443, %s442, 31
      %s445 = smul.addr %s444, 8
      %s446 = scalar_lea.vmem %s0, %s445
      %p447 = pneg %p46
      %p448 = pneg %p43
      %s449 = smul.u32 16, %s25
      %p450 = scmp.lt.s32.totalorder %s449, 31
      %s451 = scalar_select %p450, %s449, 31
      %s452 = smul.addr %s451, 8
      %s453 = smul.addr %s452, 8
      %s454 = scalar_lea.vmem %s1, %s453
      %p455 = pneg %p72
      %p456 = pneg %p69
      %s457 = smul.u32 16, %s25
      %p458 = scmp.lt.s32.totalorder %s457, 31
      %s459 = scalar_select %p458, %s457, 31
      %s460 = smul.addr %s459, 8
      %s461 = scalar_lea.vmem %s2, %s460
      %p462 = pneg %p98
      %p463 = pneg %p95
      %p464 = pneg %p119
      %p465 = pneg %p116
      %p466 = pneg %p140
      %p467 = pneg %p137
      %p468 = pneg %p161
      %p469 = pneg %p158
      %p470 = pneg %p182
      %p471 = pneg %p179
      %p472 = pneg %p203
      %p473 = pneg %p200
      %p474 = pneg %p224
      %p475 = pneg %p221
      %p476 = pneg %p245
      %p477 = pneg %p242
      %p478 = pneg %p266
      %p479 = pneg %p263
      %p480 = pneg %p287
      %p481 = pneg %p284
      %p482 = pneg %p308
      %p483 = pneg %p305
      %p484 = pneg %p329
      %p485 = pneg %p326
      %p486 = pneg %p355
      %p487 = pneg %p352
      %s488 = smul.u32 16, %s25
      %p489 = scmp.lt.s32.totalorder %s488, 31
      %s490 = scalar_select %p489, %s488, 31
      %s491 = smul.addr %s490, 3
      %s492 = smul.addr %s491, 8
      %s493 = scalar_lea.vmem %s14, %s492
      %s494 = smul.u32 16, %s25
      %p495 = scmp.lt.s32.totalorder %s494, 31
      %s496 = scalar_select %p495, %s494, 31
      %s497 = smul.addr %s496, 8
      %s498 = scalar_lea.vmem %s0, %s497
      %s499 = smul.u32 16, %s25
      %s500 = smul.u32 16, %s25
      %p501 = scmp.lt.s32.totalorder %s500, 31
      %s502 = scalar_select %p501, %s500, 31
      %s503 = smul.addr %s502, 8
      %s504 = smul.addr %s503, 8
      %s505 = scalar_lea.vmem %s1, %s504
      %s506 = smul.u32 16, %s25
      %s507 = smul.u32 16, %s25
      %p508 = scmp.lt.s32.totalorder %s507, 31
      %s509 = scalar_select %p508, %s507, 31
      %s510 = smul.addr %s509, 8
      %s511 = scalar_lea.vmem %s2, %s510
      %s512 = smul.u32 16, %s25
      %s513 = smul.u32 16, %s25
      %p514 = scmp.lt.s32.totalorder %s513, 31
      %s515 = scalar_select %p514, %s513, 31
      %s516 = smul.addr %s515, 3
      %s517 = smul.addr %s516, 8
      %s518 = scalar_lea.vmem %s14, %s517
      %s519 = smul.u32 16, %s25
      %v521 = vld [vmem:[%s498] sm:$0xff]
      %v522 = vld [vmem:[%s498 + $0x8] sm:$0xff]
      %v523 = vld [vmem:[%s498 + $0x10] sm:$0xff]
      %v524 = vld [vmem:[%s498 + $0x18] sm:$0xff]
      %v525 = vld [vmem:[%s498 + $0x20] sm:$0xff]
      %v526 = vld [vmem:[%s498 + $0x28] sm:$0xff]
      %v527 = vld [vmem:[%s498 + $0x30] sm:$0xff]
      %v528 = vld [vmem:[%s498 + $0x38] sm:$0xff]
      %v529 = vld [vmem:[%s498 + $0x40] sm:$0xff]
      %v530 = vld [vmem:[%s498 + $0x48] sm:$0xff]
      %v531 = vld [vmem:[%s498 + $0x50] sm:$0xff]
      %v532 = vld [vmem:[%s498 + $0x58] sm:$0xff]
      %v533 = vld [vmem:[%s498 + $0x60] sm:$0xff]
      %v534 = vld [vmem:[%s498 + $0x68] sm:$0xff]
      %v535 = vld [vmem:[%s498 + $0x70] sm:$0xff]
      %v536 = vld [vmem:[%s498 + $0x78] sm:$0xff]
      %v537 = vld [vmem:[%s4] sm:$0xff]
      %v538 = vld [vmem:[%s4 + $0x8] sm:$0xff]
      %v539 = vld [vmem:[%s4 + $0x10] sm:$0xff]
      %v540 = vld [vmem:[%s4 + $0x18] sm:$0xff]
      %v541 = vpack.c.bf16 %v522, %v521
      %v542 = vpack.c.bf16 %v524, %v523
      %v543 = vpack.c.bf16 %v526, %v525
      %v544 = vpack.c.bf16 %v528, %v527
      %v545 = vpack.c.bf16 %v530, %v529
      %v546 = vpack.c.bf16 %v532, %v531
      %v547 = vpack.c.bf16 %v534, %v533
      %v548 = vpack.c.bf16 %v536, %v535
      %v549 = vld [vmem:[%s3] sm:$0x3]
      %v551 = vlaneseq
      %v552 = vshrl.u32 %v551, 7
      %v553 = vsub.s32 0, %v552
      %v554 = vrot.slane %v549, %v553
      %v555 = vlaneseq
      %v556 = vshrl.u32 %v555, 7
      %v557 = vsub.s32 1, %v556
      %v558 = vrot.slane %v549, %v557
      %v565 = vunpack.c.l.b16 %v537
      %v566 = vunpack.c.h.b16 %v537
      %v567 = vunpack.c.l.b16 %v538
      %v568 = vunpack.c.h.b16 %v538
      %v569 = vunpack.c.l.b16 %v539
      %v570 = vunpack.c.h.b16 %v539
      %v571 = vunpack.c.l.b16 %v540
      %v572 = vunpack.c.h.b16 %v540
      %v573 = vpack.c.b16 %v567, %v565
      %v574 = vpack.c.b16 %v568, %v566
      %v575 = vpack.c.b16 %v571, %v569
      %v576 = vpack.c.b16 %v572, %v570
      %vm581 = vcmask 261120
      %v583 = vsel %vm581, %v541, 0
      %v586 = vsel %vm581, %v542, 0
      %v589 = vsel %vm581, %v543, 0
      %v592 = vsel %vm581, %v544, 0
      %v595 = vsel %vm581, %v545, 0
      %v598 = vsel %vm581, %v546, 0
      %v601 = vsel %vm581, %v547, 0
      %v604 = vsel %vm581, %v548, 0
      %606 = vmatprep.subr.bf16.mxu0 %v574
      %607 = vmatpush1.bf16.msra.mxu0 %v573
      %608 = vmatprep.subr.bf16.mxu0 %v576
      %609 = vmatpush1.bf16.msra.mxu0 %v575
      %610 = vmatprep.subr.bf16.mxu0 0
      %611 = vmatpush1.bf16.msra.mxu0 0
      %612 = vmatprep.subr.bf16.mxu0 0
      %613 = vmatpush1.bf16.msra.mxu0 0
      %614 = vmatprep.subr.bf16.mxu0 0
      %615 = vmatpush1.bf16.msra.mxu0 0
      %616 = vmatprep.subr.bf16.mxu0 0
      %617 = vmatpush1.bf16.msra.mxu0 0
      %618 = vmatprep.subr.bf16.mxu0 0
      %619 = vmatpush1.bf16.msra.mxu0 0
      %620 = vmatprep.subr.bf16.mxu0 0
      %621 = vmatpush1.bf16.msra.mxu0 0
      %622 = vmatprep.subr.bf16.mxu0 0
      %623 = vmatpush1.bf16.msra.mxu0 0
      %624 = vmatprep.subr.bf16.mxu0 0
      %625 = vmatpush1.bf16.msra.mxu0 0
      %626 = vmatprep.subr.bf16.mxu0 0
      %627 = vmatpush1.bf16.msra.mxu0 0
      %628 = vmatprep.subr.bf16.mxu0 0
      %629 = vmatpush1.bf16.msra.mxu0 0
      %630 = vmatprep.subr.bf16.mxu0 0
      %631 = vmatpush1.bf16.msra.mxu0 0
      %632 = vmatprep.subr.bf16.mxu0 0
      %633 = vmatpush1.bf16.msra.mxu0 0
      %634 = vmatprep.subr.bf16.mxu0 0
      %635 = vmatpush1.bf16.msra.mxu0 0
      %636 = vmatprep.subr.bf16.mxu0 0
      %637 = vmatpush1.bf16.msra.mxu0 0
      %638 = vmatprep.mubr.bf16.mxu0 0
      %639 = vmatmul.mubr.bf16.gmra.mrb[0].mxu0 %v583
      %v640 = vpop.f32.mrb[0].mxu0
      %v641 = vadd.f32 %v554, %v640
      %v642 = vpop.f32.mrb[0].mxu0
      %v643 = vadd.f32 %v558, %v642
      %v644 = vpop.f32.mrb[0].mxu0
      %v645 = vadd.f32 %v554, %v644
      %v646 = vpop.f32.mrb[0].mxu0
      %v647 = vadd.f32 %v558, %v646
      %648 = vmatprep.mubr.bf16.mxu0 0
      %649 = vmatmul.mubr.bf16.gmra.mrb[0].mxu0 %v586
      %v650 = vpop.f32.mrb[0].mxu0
      %v651 = vadd.f32 %v554, %v650
      %v652 = vpop.f32.mrb[0].mxu0
      %v653 = vadd.f32 %v558, %v652
      %v654 = vpop.f32.mrb[0].mxu0
      %v655 = vadd.f32 %v554, %v654
      %v656 = vpop.f32.mrb[0].mxu0
      %v657 = vadd.f32 %v558, %v656
      %658 = vmatprep.mubr.bf16.mxu0 0
      %659 = vmatmul.mubr.bf16.gmra.mrb[0].mxu0 %v589
      %v660 = vpop.f32.mrb[0].mxu0
      %v661 = vadd.f32 %v554, %v660
      %v662 = vpop.f32.mrb[0].mxu0
      %v663 = vadd.f32 %v558, %v662
      %v664 = vpop.f32.mrb[0].mxu0
      %v665 = vadd.f32 %v554, %v664
      %v666 = vpop.f32.mrb[0].mxu0
      %v667 = vadd.f32 %v558, %v666
      %668 = vmatprep.mubr.bf16.mxu0 0
      %669 = vmatmul.mubr.bf16.gmra.mrb[0].mxu0 %v592
      %v670 = vpop.f32.mrb[0].mxu0
      %v671 = vadd.f32 %v554, %v670
      %v672 = vpop.f32.mrb[0].mxu0
      %v673 = vadd.f32 %v558, %v672
      %v674 = vpop.f32.mrb[0].mxu0
      %v675 = vadd.f32 %v554, %v674
      %v676 = vpop.f32.mrb[0].mxu0
      %v677 = vadd.f32 %v558, %v676
      %678 = vmatprep.mubr.bf16.mxu0 0
      %679 = vmatmul.mubr.bf16.gmra.mrb[0].mxu0 %v595
      %v680 = vpop.f32.mrb[0].mxu0
      %v681 = vadd.f32 %v554, %v680
      %v682 = vpop.f32.mrb[0].mxu0
      %v683 = vadd.f32 %v558, %v682
      %v684 = vpop.f32.mrb[0].mxu0
      %v685 = vadd.f32 %v554, %v684
      %v686 = vpop.f32.mrb[0].mxu0
      %v687 = vadd.f32 %v558, %v686
      %688 = vmatprep.mubr.bf16.mxu0 0
      %689 = vmatmul.mubr.bf16.gmra.mrb[0].mxu0 %v598
      %v690 = vpop.f32.mrb[0].mxu0
      %v691 = vadd.f32 %v554, %v690
      %v692 = vpop.f32.mrb[0].mxu0
      %v693 = vadd.f32 %v558, %v692
      %v694 = vpop.f32.mrb[0].mxu0
      %v695 = vadd.f32 %v554, %v694
      %v696 = vpop.f32.mrb[0].mxu0
      %v697 = vadd.f32 %v558, %v696
      %698 = vmatprep.mubr.bf16.mxu0 0
      %699 = vmatmul.mubr.bf16.gmra.mrb[0].mxu0 %v601
      %v700 = vpop.f32.mrb[0].mxu0
      %v701 = vadd.f32 %v554, %v700
      %v702 = vpop.f32.mrb[0].mxu0
      %v703 = vadd.f32 %v558, %v702
      %v704 = vpop.f32.mrb[0].mxu0
      %v705 = vadd.f32 %v554, %v704
      %v706 = vpop.f32.mrb[0].mxu0
      %v707 = vadd.f32 %v558, %v706
      %708 = vmatprep.mubr.bf16.mxu0 0
      %709 = vmatmul.mubr.bf16.gmra.mrb[0].mxu0 %v604
      %v710 = vpop.f32.mrb[0].mxu0
      %v711 = vadd.f32 %v554, %v710
      %v712 = vpop.f32.mrb[0].mxu0
      %v713 = vadd.f32 %v558, %v712
      %v714 = vpop.f32.mrb[0].mxu0
      %v715 = vadd.f32 %v554, %v714
      %v716 = vpop.f32.mrb[0].mxu0
      %v717 = vadd.f32 %v558, %v716
      %718 = vdwg.mxu0
      %v719 = vmax.f32 %v641, 0.0
      %v720 = vmax.f32 %v643, 0.0
      %v721 = vmax.f32 %v645, 0.0
      %v722 = vmax.f32 %v647, 0.0
      %v723 = vmax.f32 %v651, 0.0
      %v724 = vmax.f32 %v653, 0.0
      %v725 = vmax.f32 %v655, 0.0
      %v726 = vmax.f32 %v657, 0.0
      %v727 = vmax.f32 %v661, 0.0
      %v728 = vmax.f32 %v663, 0.0
      %v729 = vmax.f32 %v665, 0.0
      %v730 = vmax.f32 %v667, 0.0
      %v731 = vmax.f32 %v671, 0.0
      %v732 = vmax.f32 %v673, 0.0
      %v733 = vmax.f32 %v675, 0.0
      %v734 = vmax.f32 %v677, 0.0
      %v735 = vmax.f32 %v681, 0.0
      %v736 = vmax.f32 %v683, 0.0
      %v737 = vmax.f32 %v685, 0.0
      %v738 = vmax.f32 %v687, 0.0
      %v739 = vmax.f32 %v691, 0.0
      %v740 = vmax.f32 %v693, 0.0
      %v741 = vmax.f32 %v695, 0.0
      %v742 = vmax.f32 %v697, 0.0
      %v743 = vmax.f32 %v701, 0.0
      %v744 = vmax.f32 %v703, 0.0
      %v745 = vmax.f32 %v705, 0.0
      %v746 = vmax.f32 %v707, 0.0
      %v747 = vmax.f32 %v711, 0.0
      %v748 = vmax.f32 %v713, 0.0
      %v749 = vmax.f32 %v715, 0.0
      %v750 = vmax.f32 %v717, 0.0
      %v751 = vld [vmem:[%s505] sm:$0xff]
      %v752 = vld [vmem:[%s505 + $0x8] sm:$0xff]
      %v753 = vld [vmem:[%s505 + $0x10] sm:$0xff]
      %v754 = vld [vmem:[%s505 + $0x18] sm:$0xff]
      %v755 = vld [vmem:[%s505 + $0x20] sm:$0xff]
      %v756 = vld [vmem:[%s505 + $0x28] sm:$0xff]
      %v757 = vld [vmem:[%s505 + $0x30] sm:$0xff]
      %v758 = vld [vmem:[%s505 + $0x38] sm:$0xff]
      %v759 = vld [vmem:[%s505 + $0x40] sm:$0xff]
      %v760 = vld [vmem:[%s505 + $0x48] sm:$0xff]
      %v761 = vld [vmem:[%s505 + $0x50] sm:$0xff]
      %v762 = vld [vmem:[%s505 + $0x58] sm:$0xff]
      %v763 = vld [vmem:[%s505 + $0x60] sm:$0xff]
      %v764 = vld [vmem:[%s505 + $0x68] sm:$0xff]
      %v765 = vld [vmem:[%s505 + $0x70] sm:$0xff]
      %v766 = vld [vmem:[%s505 + $0x78] sm:$0xff]
      %v767 = vld [vmem:[%s505 + $0x80] sm:$0xff]
      %v768 = vld [vmem:[%s505 + $0x88] sm:$0xff]
      %v769 = vld [vmem:[%s505 + $0x90] sm:$0xff]
      %v770 = vld [vmem:[%s505 + $0x98] sm:$0xff]
      %v771 = vld [vmem:[%s505 + $0xa0] sm:$0xff]
      %v772 = vld [vmem:[%s505 + $0xa8] sm:$0xff]
      %v773 = vld [vmem:[%s505 + $0xb0] sm:$0xff]
      %v774 = vld [vmem:[%s505 + $0xb8] sm:$0xff]
      %v775 = vld [vmem:[%s505 + $0xc0] sm:$0xff]
      %v776 = vld [vmem:[%s505 + $0xc8] sm:$0xff]
      %v777 = vld [vmem:[%s505 + $0xd0] sm:$0xff]
      %v778 = vld [vmem:[%s505 + $0xd8] sm:$0xff]
      %v779 = vld [vmem:[%s505 + $0xe0] sm:$0xff]
      %v780 = vld [vmem:[%s505 + $0xe8] sm:$0xff]
      %v781 = vld [vmem:[%s505 + $0xf0] sm:$0xff]
      %v782 = vld [vmem:[%s505 + $0xf8] sm:$0xff]
      %v783 = vld [vmem:[%s505 + $0x100] sm:$0xff]
      %v784 = vld [vmem:[%s505 + $0x108] sm:$0xff]
      %v785 = vld [vmem:[%s505 + $0x110] sm:$0xff]
      %v786 = vld [vmem:[%s505 + $0x118] sm:$0xff]
      %v787 = vld [vmem:[%s505 + $0x120] sm:$0xff]
      %v788 = vld [vmem:[%s505 + $0x128] sm:$0xff]
      %v789 = vld [vmem:[%s505 + $0x130] sm:$0xff]
      %v790 = vld [vmem:[%s505 + $0x138] sm:$0xff]
      %v791 = vld [vmem:[%s505 + $0x140] sm:$0xff]
      %v792 = vld [vmem:[%s505 + $0x148] sm:$0xff]
      %v793 = vld [vmem:[%s505 + $0x150] sm:$0xff]
      %v794 = vld [vmem:[%s505 + $0x158] sm:$0xff]
      %v795 = vld [vmem:[%s505 + $0x160] sm:$0xff]
      %v796 = vld [vmem:[%s505 + $0x168] sm:$0xff]
      %v797 = vld [vmem:[%s505 + $0x170] sm:$0xff]
      %v798 = vld [vmem:[%s505 + $0x178] sm:$0xff]
      %v799 = vld [vmem:[%s505 + $0x180] sm:$0xff]
      %v800 = vld [vmem:[%s505 + $0x188] sm:$0xff]
      %v801 = vld [vmem:[%s505 + $0x190] sm:$0xff]
      %v802 = vld [vmem:[%s505 + $0x198] sm:$0xff]
      %v803 = vld [vmem:[%s505 + $0x1a0] sm:$0xff]
      %v804 = vld [vmem:[%s505 + $0x1a8] sm:$0xff]
      %v805 = vld [vmem:[%s505 + $0x1b0] sm:$0xff]
      %v806 = vld [vmem:[%s505 + $0x1b8] sm:$0xff]
      %v807 = vld [vmem:[%s505 + $0x1c0] sm:$0xff]
      %v808 = vld [vmem:[%s505 + $0x1c8] sm:$0xff]
      %v809 = vld [vmem:[%s505 + $0x1d0] sm:$0xff]
      %v810 = vld [vmem:[%s505 + $0x1d8] sm:$0xff]
      %v811 = vld [vmem:[%s505 + $0x1e0] sm:$0xff]
      %v812 = vld [vmem:[%s505 + $0x1e8] sm:$0xff]
      %v813 = vld [vmem:[%s505 + $0x1f0] sm:$0xff]
      %v814 = vld [vmem:[%s505 + $0x1f8] sm:$0xff]
      %v815 = vld [vmem:[%s505 + $0x200] sm:$0xff]
      %v816 = vld [vmem:[%s505 + $0x208] sm:$0xff]
      %v817 = vld [vmem:[%s505 + $0x210] sm:$0xff]
      %v818 = vld [vmem:[%s505 + $0x218] sm:$0xff]
      %v819 = vld [vmem:[%s505 + $0x220] sm:$0xff]
      %v820 = vld [vmem:[%s505 + $0x228] sm:$0xff]
      %v821 = vld [vmem:[%s505 + $0x230] sm:$0xff]
      %v822 = vld [vmem:[%s505 + $0x238] sm:$0xff]
      %v823 = vld [vmem:[%s505 + $0x240] sm:$0xff]
      %v824 = vld [vmem:[%s505 + $0x248] sm:$0xff]
      %v825 = vld [vmem:[%s505 + $0x250] sm:$0xff]
      %v826 = vld [vmem:[%s505 + $0x258] sm:$0xff]
      %v827 = vld [vmem:[%s505 + $0x260] sm:$0xff]
      %v828 = vld [vmem:[%s505 + $0x268] sm:$0xff]
      %v829 = vld [vmem:[%s505 + $0x270] sm:$0xff]
      %v830 = vld [vmem:[%s505 + $0x278] sm:$0xff]
      %v831 = vld [vmem:[%s505 + $0x280] sm:$0xff]
      %v832 = vld [vmem:[%s505 + $0x288] sm:$0xff]
      %v833 = vld [vmem:[%s505 + $0x290] sm:$0xff]
      %v834 = vld [vmem:[%s505 + $0x298] sm:$0xff]
      %v835 = vld [vmem:[%s505 + $0x2a0] sm:$0xff]
      %v836 = vld [vmem:[%s505 + $0x2a8] sm:$0xff]
      %v837 = vld [vmem:[%s505 + $0x2b0] sm:$0xff]
      %v838 = vld [vmem:[%s505 + $0x2b8] sm:$0xff]
      %v839 = vld [vmem:[%s505 + $0x2c0] sm:$0xff]
      %v840 = vld [vmem:[%s505 + $0x2c8] sm:$0xff]
      %v841 = vld [vmem:[%s505 + $0x2d0] sm:$0xff]
      %v842 = vld [vmem:[%s505 + $0x2d8] sm:$0xff]
      %v843 = vld [vmem:[%s505 + $0x2e0] sm:$0xff]
      %v844 = vld [vmem:[%s505 + $0x2e8] sm:$0xff]
      %v845 = vld [vmem:[%s505 + $0x2f0] sm:$0xff]
      %v846 = vld [vmem:[%s505 + $0x2f8] sm:$0xff]
      %v847 = vld [vmem:[%s505 + $0x300] sm:$0xff]
      %v848 = vld [vmem:[%s505 + $0x308] sm:$0xff]
      %v849 = vld [vmem:[%s505 + $0x310] sm:$0xff]
      %v850 = vld [vmem:[%s505 + $0x318] sm:$0xff]
      %v851 = vld [vmem:[%s505 + $0x320] sm:$0xff]
      %v852 = vld [vmem:[%s505 + $0x328] sm:$0xff]
      %v853 = vld [vmem:[%s505 + $0x330] sm:$0xff]
      %v854 = vld [vmem:[%s505 + $0x338] sm:$0xff]
      %v855 = vld [vmem:[%s505 + $0x340] sm:$0xff]
      %v856 = vld [vmem:[%s505 + $0x348] sm:$0xff]
      %v857 = vld [vmem:[%s505 + $0x350] sm:$0xff]
      %v858 = vld [vmem:[%s505 + $0x358] sm:$0xff]
      %v859 = vld [vmem:[%s505 + $0x360] sm:$0xff]
      %v860 = vld [vmem:[%s505 + $0x368] sm:$0xff]
      %v861 = vld [vmem:[%s505 + $0x370] sm:$0xff]
      %v862 = vld [vmem:[%s505 + $0x378] sm:$0xff]
      %v863 = vld [vmem:[%s505 + $0x380] sm:$0xff]
      %v864 = vld [vmem:[%s505 + $0x388] sm:$0xff]
      %v865 = vld [vmem:[%s505 + $0x390] sm:$0xff]
      %v866 = vld [vmem:[%s505 + $0x398] sm:$0xff]
      %v867 = vld [vmem:[%s505 + $0x3a0] sm:$0xff]
      %v868 = vld [vmem:[%s505 + $0x3a8] sm:$0xff]
      %v869 = vld [vmem:[%s505 + $0x3b0] sm:$0xff]
      %v870 = vld [vmem:[%s505 + $0x3b8] sm:$0xff]
      %v871 = vld [vmem:[%s505 + $0x3c0] sm:$0xff]
      %v872 = vld [vmem:[%s505 + $0x3c8] sm:$0xff]
      %v873 = vld [vmem:[%s505 + $0x3d0] sm:$0xff]
      %v874 = vld [vmem:[%s505 + $0x3d8] sm:$0xff]
      %v875 = vld [vmem:[%s505 + $0x3e0] sm:$0xff]
      %v876 = vld [vmem:[%s505 + $0x3e8] sm:$0xff]
      %v877 = vld [vmem:[%s505 + $0x3f0] sm:$0xff]
      %v878 = vld [vmem:[%s505 + $0x3f8] sm:$0xff]
      %v879 = vld [vmem:[%s5] sm:$0xff]
      %v880 = vld [vmem:[%s5 + $0x8] sm:$0xff]
      %v881 = vld [vmem:[%s5 + $0x10] sm:$0xff]
      %v882 = vld [vmem:[%s5 + $0x18] sm:$0xff]
      %v883 = vld [vmem:[%s5 + $0x20] sm:$0xff]
      %v884 = vld [vmem:[%s5 + $0x28] sm:$0xff]
      %v885 = vld [vmem:[%s5 + $0x30] sm:$0xff]
      %v886 = vld [vmem:[%s5 + $0x38] sm:$0xff]
      %v887 = vld [vmem:[%s5 + $0x40] sm:$0xff]
      %v888 = vld [vmem:[%s5 + $0x48] sm:$0xff]
      %v889 = vld [vmem:[%s5 + $0x50] sm:$0xff]
      %v890 = vld [vmem:[%s5 + $0x58] sm:$0xff]
      %v891 = vld [vmem:[%s5 + $0x60] sm:$0xff]
      %v892 = vld [vmem:[%s5 + $0x68] sm:$0xff]
      %v893 = vld [vmem:[%s5 + $0x70] sm:$0xff]
      %v894 = vld [vmem:[%s5 + $0x78] sm:$0xff]
      %v895 = vld [vmem:[%s5 + $0x80] sm:$0xff]
      %v896 = vld [vmem:[%s5 + $0x88] sm:$0xff]
      %v897 = vld [vmem:[%s5 + $0x90] sm:$0xff]
      %v898 = vld [vmem:[%s5 + $0x98] sm:$0xff]
      %v899 = vld [vmem:[%s5 + $0xa0] sm:$0xff]
      %v900 = vld [vmem:[%s5 + $0xa8] sm:$0xff]
      %v901 = vld [vmem:[%s5 + $0xb0] sm:$0xff]
      %v902 = vld [vmem:[%s5 + $0xb8] sm:$0xff]
      %v903 = vld [vmem:[%s5 + $0xc0] sm:$0xff]
      %v904 = vld [vmem:[%s5 + $0xc8] sm:$0xff]
      %v905 = vld [vmem:[%s5 + $0xd0] sm:$0xff]
      %v906 = vld [vmem:[%s5 + $0xd8] sm:$0xff]
      %v907 = vld [vmem:[%s5 + $0xe0] sm:$0xff]
      %v908 = vld [vmem:[%s5 + $0xe8] sm:$0xff]
      %v909 = vld [vmem:[%s5 + $0xf0] sm:$0xff]
      %v910 = vld [vmem:[%s5 + $0xf8] sm:$0xff]
      %v911 = vld [vmem:[%s5 + $0x100] sm:$0xff]
      %v912 = vld [vmem:[%s5 + $0x108] sm:$0xff]
      %v913 = vld [vmem:[%s5 + $0x110] sm:$0xff]
      %v914 = vld [vmem:[%s5 + $0x118] sm:$0xff]
      %v915 = vld [vmem:[%s5 + $0x120] sm:$0xff]
      %v916 = vld [vmem:[%s5 + $0x128] sm:$0xff]
      %v917 = vld [vmem:[%s5 + $0x130] sm:$0xff]
      %v918 = vld [vmem:[%s5 + $0x138] sm:$0xff]
      %v919 = vld [vmem:[%s5 + $0x140] sm:$0xff]
      %v920 = vld [vmem:[%s5 + $0x148] sm:$0xff]
      %v921 = vld [vmem:[%s5 + $0x150] sm:$0xff]
      %v922 = vld [vmem:[%s5 + $0x158] sm:$0xff]
      %v923 = vld [vmem:[%s5 + $0x160] sm:$0xff]
      %v924 = vld [vmem:[%s5 + $0x168] sm:$0xff]
      %v925 = vld [vmem:[%s5 + $0x170] sm:$0xff]
      %v926 = vld [vmem:[%s5 + $0x178] sm:$0xff]
      %v927 = vld [vmem:[%s5 + $0x180] sm:$0xff]
      %v928 = vld [vmem:[%s5 + $0x188] sm:$0xff]
      %v929 = vld [vmem:[%s5 + $0x190] sm:$0xff]
      %v930 = vld [vmem:[%s5 + $0x198] sm:$0xff]
      %v931 = vld [vmem:[%s5 + $0x1a0] sm:$0xff]
      %v932 = vld [vmem:[%s5 + $0x1a8] sm:$0xff]
      %v933 = vld [vmem:[%s5 + $0x1b0] sm:$0xff]
      %v934 = vld [vmem:[%s5 + $0x1b8] sm:$0xff]
      %v935 = vld [vmem:[%s5 + $0x1c0] sm:$0xff]
      %v936 = vld [vmem:[%s5 + $0x1c8] sm:$0xff]
      %v937 = vld [vmem:[%s5 + $0x1d0] sm:$0xff]
      %v938 = vld [vmem:[%s5 + $0x1d8] sm:$0xff]
      %v939 = vld [vmem:[%s5 + $0x1e0] sm:$0xff]
      %v940 = vld [vmem:[%s5 + $0x1e8] sm:$0xff]
      %v941 = vld [vmem:[%s5 + $0x1f0] sm:$0xff]
      %v942 = vld [vmem:[%s5 + $0x1f8] sm:$0xff]
      %v943 = vld [vmem:[%s5 + $0x200] sm:$0xff]
      %v944 = vld [vmem:[%s5 + $0x208] sm:$0xff]
      %v945 = vld [vmem:[%s5 + $0x210] sm:$0xff]
      %v946 = vld [vmem:[%s5 + $0x218] sm:$0xff]
      %v947 = vld [vmem:[%s5 + $0x220] sm:$0xff]
      %v948 = vld [vmem:[%s5 + $0x228] sm:$0xff]
      %v949 = vld [vmem:[%s5 + $0x230] sm:$0xff]
      %v950 = vld [vmem:[%s5 + $0x238] sm:$0xff]
      %v951 = vld [vmem:[%s5 + $0x240] sm:$0xff]
      %v952 = vld [vmem:[%s5 + $0x248] sm:$0xff]
      %v953 = vld [vmem:[%s5 + $0x250] sm:$0xff]
      %v954 = vld [vmem:[%s5 + $0x258] sm:$0xff]
      %v955 = vld [vmem:[%s5 + $0x260] sm:$0xff]
      %v956 = vld [vmem:[%s5 + $0x268] sm:$0xff]
      %v957 = vld [vmem:[%s5 + $0x270] sm:$0xff]
      %v958 = vld [vmem:[%s5 + $0x278] sm:$0xff]
      %v959 = vld [vmem:[%s5 + $0x280] sm:$0xff]
      %v960 = vld [vmem:[%s5 + $0x288] sm:$0xff]
      %v961 = vld [vmem:[%s5 + $0x290] sm:$0xff]
      %v962 = vld [vmem:[%s5 + $0x298] sm:$0xff]
      %v963 = vld [vmem:[%s5 + $0x2a0] sm:$0xff]
      %v964 = vld [vmem:[%s5 + $0x2a8] sm:$0xff]
      %v965 = vld [vmem:[%s5 + $0x2b0] sm:$0xff]
      %v966 = vld [vmem:[%s5 + $0x2b8] sm:$0xff]
      %v967 = vld [vmem:[%s5 + $0x2c0] sm:$0xff]
      %v968 = vld [vmem:[%s5 + $0x2c8] sm:$0xff]
      %v969 = vld [vmem:[%s5 + $0x2d0] sm:$0xff]
      %v970 = vld [vmem:[%s5 + $0x2d8] sm:$0xff]
      %v971 = vld [vmem:[%s5 + $0x2e0] sm:$0xff]
      %v972 = vld [vmem:[%s5 + $0x2e8] sm:$0xff]
      %v973 = vld [vmem:[%s5 + $0x2f0] sm:$0xff]
      %v974 = vld [vmem:[%s5 + $0x2f8] sm:$0xff]
      %v975 = vld [vmem:[%s5 + $0x300] sm:$0xff]
      %v976 = vld [vmem:[%s5 + $0x308] sm:$0xff]
      %v977 = vld [vmem:[%s5 + $0x310] sm:$0xff]
      %v978 = vld [vmem:[%s5 + $0x318] sm:$0xff]
      %v979 = vld [vmem:[%s5 + $0x320] sm:$0xff]
      %v980 = vld [vmem:[%s5 + $0x328] sm:$0xff]
      %v981 = vld [vmem:[%s5 + $0x330] sm:$0xff]
      %v982 = vld [vmem:[%s5 + $0x338] sm:$0xff]
      %v983 = vld [vmem:[%s5 + $0x340] sm:$0xff]
      %v984 = vld [vmem:[%s5 + $0x348] sm:$0xff]
      %v985 = vld [vmem:[%s5 + $0x350] sm:$0xff]
      %v986 = vld [vmem:[%s5 + $0x358] sm:$0xff]
      %v987 = vld [vmem:[%s5 + $0x360] sm:$0xff]
      %v988 = vld [vmem:[%s5 + $0x368] sm:$0xff]
      %v989 = vld [vmem:[%s5 + $0x370] sm:$0xff]
      %v990 = vld [vmem:[%s5 + $0x378] sm:$0xff]
      %v991 = vld [vmem:[%s5 + $0x380] sm:$0xff]
      %v992 = vld [vmem:[%s5 + $0x388] sm:$0xff]
      %v993 = vld [vmem:[%s5 + $0x390] sm:$0xff]
      %v994 = vld [vmem:[%s5 + $0x398] sm:$0xff]
      %v995 = vld [vmem:[%s5 + $0x3a0] sm:$0xff]
      %v996 = vld [vmem:[%s5 + $0x3a8] sm:$0xff]
      %v997 = vld [vmem:[%s5 + $0x3b0] sm:$0xff]
      %v998 = vld [vmem:[%s5 + $0x3b8] sm:$0xff]
      %v999 = vld [vmem:[%s5 + $0x3c0] sm:$0xff]
      %v1000 = vld [vmem:[%s5 + $0x3c8] sm:$0xff]
      %v1001 = vld [vmem:[%s5 + $0x3d0] sm:$0xff]
      %v1002 = vld [vmem:[%s5 + $0x3d8] sm:$0xff]
      %v1003 = vld [vmem:[%s5 + $0x3e0] sm:$0xff]
      %v1004 = vld [vmem:[%s5 + $0x3e8] sm:$0xff]
      %v1005 = vld [vmem:[%s5 + $0x3f0] sm:$0xff]
      %v1006 = vld [vmem:[%s5 + $0x3f8] sm:$0xff]
      %v1007 = vpack.c.bf16 %v759, %v751
      %v1008 = vpack.c.bf16 %v760, %v752
      %v1009 = vpack.c.bf16 %v761, %v753
      %v1010 = vpack.c.bf16 %v762, %v754
      %v1011 = vpack.c.bf16 %v763, %v755
      %v1012 = vpack.c.bf16 %v764, %v756
      %v1013 = vpack.c.bf16 %v765, %v757
      %v1014 = vpack.c.bf16 %v766, %v758
      %v1015 = vpack.c.bf16 %v775, %v767
      %v1016 = vpack.c.bf16 %v776, %v768
      %v1017 = vpack.c.bf16 %v777, %v769
      %v1018 = vpack.c.bf16 %v778, %v770
      %v1019 = vpack.c.bf16 %v779, %v771
      %v1020 = vpack.c.bf16 %v780, %v772
      %v1021 = vpack.c.bf16 %v781, %v773
      %v1022 = vpack.c.bf16 %v782, %v774
      %v1023 = vpack.c.bf16 %v791, %v783
      %v1024 = vpack.c.bf16 %v792, %v784
      %v1025 = vpack.c.bf16 %v793, %v785
      %v1026 = vpack.c.bf16 %v794, %v786
      %v1027 = vpack.c.bf16 %v795, %v787
      %v1028 = vpack.c.bf16 %v796, %v788
      %v1029 = vpack.c.bf16 %v797, %v789
      %v1030 = vpack.c.bf16 %v798, %v790
      %v1031 = vpack.c.bf16 %v807, %v799
      %v1032 = vpack.c.bf16 %v808, %v800
      %v1033 = vpack.c.bf16 %v809, %v801
      %v1034 = vpack.c.bf16 %v810, %v802
      %v1035 = vpack.c.bf16 %v811, %v803
      %v1036 = vpack.c.bf16 %v812, %v804
      %v1037 = vpack.c.bf16 %v813, %v805
      %v1038 = vpack.c.bf16 %v814, %v806
      %v1039 = vpack.c.bf16 %v823, %v815
      %v1040 = vpack.c.bf16 %v824, %v816
      %v1041 = vpack.c.bf16 %v825, %v817
      %v1042 = vpack.c.bf16 %v826, %v818
      %v1043 = vpack.c.bf16 %v827, %v819
      %v1044 = vpack.c.bf16 %v828, %v820
      %v1045 = vpack.c.bf16 %v829, %v821
      %v1046 = vpack.c.bf16 %v830, %v822
      %v1047 = vpack.c.bf16 %v839, %v831
      %v1048 = vpack.c.bf16 %v840, %v832
      %v1049 = vpack.c.bf16 %v841, %v833
      %v1050 = vpack.c.bf16 %v842, %v834
      %v1051 = vpack.c.bf16 %v843, %v835
      %v1052 = vpack.c.bf16 %v844, %v836
      %v1053 = vpack.c.bf16 %v845, %v837
      %v1054 = vpack.c.bf16 %v846, %v838
      %v1055 = vpack.c.bf16 %v855, %v847
      %v1056 = vpack.c.bf16 %v856, %v848
      %v1057 = vpack.c.bf16 %v857, %v849
      %v1058 = vpack.c.bf16 %v858, %v850
      %v1059 = vpack.c.bf16 %v859, %v851
      %v1060 = vpack.c.bf16 %v860, %v852
      %v1061 = vpack.c.bf16 %v861, %v853
      %v1062 = vpack.c.bf16 %v862, %v854
      %v1063 = vpack.c.bf16 %v871, %v863
      %v1064 = vpack.c.bf16 %v872, %v864
      %v1065 = vpack.c.bf16 %v873, %v865
      %v1066 = vpack.c.bf16 %v874, %v866
      %v1067 = vpack.c.bf16 %v875, %v867
      %v1068 = vpack.c.bf16 %v876, %v868
      %v1069 = vpack.c.bf16 %v877, %v869
      %v1070 = vpack.c.bf16 %v878, %v870
      %v1071 = vld [vmem:[%s3 + $0x2] sm:$0x3]
      %v1073 = vlaneseq
      %v1074 = vshrl.u32 %v1073, 7
      %v1075 = vsub.s32 0, %v1074
      %v1076 = vrot.slane %v1071, %v1075
      %v1077 = vlaneseq
      %v1078 = vshrl.u32 %v1077, 7
      %v1079 = vsub.s32 1, %v1078
      %v1080 = vrot.slane %v1071, %v1079
      %v1211 = vunpack.c.l.b16 %v879
      %v1212 = vunpack.c.h.b16 %v879
      %v1213 = vunpack.c.l.b16 %v880
      %v1214 = vunpack.c.h.b16 %v880
      %v1215 = vunpack.c.l.b16 %v881
      %v1216 = vunpack.c.h.b16 %v881
      %v1217 = vunpack.c.l.b16 %v882
      %v1218 = vunpack.c.h.b16 %v882
      %v1219 = vunpack.c.l.b16 %v883
      %v1220 = vunpack.c.h.b16 %v883
      %v1221 = vunpack.c.l.b16 %v884
      %v1222 = vunpack.c.h.b16 %v884
      %v1223 = vunpack.c.l.b16 %v885
      %v1224 = vunpack.c.h.b16 %v885
      %v1225 = vunpack.c.l.b16 %v886
      %v1226 = vunpack.c.h.b16 %v886
      %v1227 = vunpack.c.l.b16 %v887
      %v1228 = vunpack.c.h.b16 %v887
      %v1229 = vunpack.c.l.b16 %v888
      %v1230 = vunpack.c.h.b16 %v888
      %v1231 = vunpack.c.l.b16 %v889
      %v1232 = vunpack.c.h.b16 %v889
      %v1233 = vunpack.c.l.b16 %v890
      %v1234 = vunpack.c.h.b16 %v890
      %v1235 = vunpack.c.l.b16 %v891
      %v1236 = vunpack.c.h.b16 %v891
      %v1237 = vunpack.c.l.b16 %v892
      %v1238 = vunpack.c.h.b16 %v892
      %v1239 = vunpack.c.l.b16 %v893
      %v1240 = vunpack.c.h.b16 %v893
      %v1241 = vunpack.c.l.b16 %v894
      %v1242 = vunpack.c.h.b16 %v894
      %v1243 = vunpack.c.l.b16 %v895
      %v1244 = vunpack.c.h.b16 %v895
      %v1245 = vunpack.c.l.b16 %v896
      %v1246 = vunpack.c.h.b16 %v896
      %v1247 = vunpack.c.l.b16 %v897
      %v1248 = vunpack.c.h.b16 %v897
      %v1249 = vunpack.c.l.b16 %v898
      %v1250 = vunpack.c.h.b16 %v898
      %v1251 = vunpack.c.l.b16 %v899
      %v1252 = vunpack.c.h.b16 %v899
      %v1253 = vunpack.c.l.b16 %v900
      %v1254 = vunpack.c.h.b16 %v900
      %v1255 = vunpack.c.l.b16 %v901
      %v1256 = vunpack.c.h.b16 %v901
      %v1257 = vunpack.c.l.b16 %v902
      %v1258 = vunpack.c.h.b16 %v902
      %v1259 = vunpack.c.l.b16 %v903
      %v1260 = vunpack.c.h.b16 %v903
      %v1261 = vunpack.c.l.b16 %v904
      %v1262 = vunpack.c.h.b16 %v904
      %v1263 = vunpack.c.l.b16 %v905
      %v1264 = vunpack.c.h.b16 %v905
      %v1265 = vunpack.c.l.b16 %v906
      %v1266 = vunpack.c.h.b16 %v906
      %v1267 = vunpack.c.l.b16 %v907
      %v1268 = vunpack.c.h.b16 %v907
      %v1269 = vunpack.c.l.b16 %v908
      %v1270 = vunpack.c.h.b16 %v908
      %v1271 = vunpack.c.l.b16 %v909
      %v1272 = vunpack.c.h.b16 %v909
      %v1273 = vunpack.c.l.b16 %v910
      %v1274 = vunpack.c.h.b16 %v910
      %v1275 = vunpack.c.l.b16 %v911
      %v1276 = vunpack.c.h.b16 %v911
      %v1277 = vunpack.c.l.b16 %v912
      %v1278 = vunpack.c.h.b16 %v912
      %v1279 = vunpack.c.l.b16 %v913
      %v1280 = vunpack.c.h.b16 %v913
      %v1281 = vunpack.c.l.b16 %v914
      %v1282 = vunpack.c.h.b16 %v914
      %v1283 = vunpack.c.l.b16 %v915
      %v1284 = vunpack.c.h.b16 %v915
      %v1285 = vunpack.c.l.b16 %v916
      %v1286 = vunpack.c.h.b16 %v916
      %v1287 = vunpack.c.l.b16 %v917
      %v1288 = vunpack.c.h.b16 %v917
      %v1289 = vunpack.c.l.b16 %v918
      %v1290 = vunpack.c.h.b16 %v918
      %v1291 = vunpack.c.l.b16 %v919
      %v1292 = vunpack.c.h.b16 %v919
      %v1293 = vunpack.c.l.b16 %v920
      %v1294 = vunpack.c.h.b16 %v920
      %v1295 = vunpack.c.l.b16 %v921
      %v1296 = vunpack.c.h.b16 %v921
      %v1297 = vunpack.c.l.b16 %v922
      %v1298 = vunpack.c.h.b16 %v922
      %v1299 = vunpack.c.l.b16 %v923
      %v1300 = vunpack.c.h.b16 %v923
      %v1301 = vunpack.c.l.b16 %v924
      %v1302 = vunpack.c.h.b16 %v924
      %v1303 = vunpack.c.l.b16 %v925
      %v1304 = vunpack.c.h.b16 %v925
      %v1305 = vunpack.c.l.b16 %v926
      %v1306 = vunpack.c.h.b16 %v926
      %v1307 = vunpack.c.l.b16 %v927
      %v1308 = vunpack.c.h.b16 %v927
      %v1309 = vunpack.c.l.b16 %v928
      %v1310 = vunpack.c.h.b16 %v928
      %v1311 = vunpack.c.l.b16 %v929
      %v1312 = vunpack.c.h.b16 %v929
      %v1313 = vunpack.c.l.b16 %v930
      %v1314 = vunpack.c.h.b16 %v930
      %v1315 = vunpack.c.l.b16 %v931
      %v1316 = vunpack.c.h.b16 %v931
      %v1317 = vunpack.c.l.b16 %v932
      %v1318 = vunpack.c.h.b16 %v932
      %v1319 = vunpack.c.l.b16 %v933
      %v1320 = vunpack.c.h.b16 %v933
      %v1321 = vunpack.c.l.b16 %v934
      %v1322 = vunpack.c.h.b16 %v934
      %v1323 = vunpack.c.l.b16 %v935
      %v1324 = vunpack.c.h.b16 %v935
      %v1325 = vunpack.c.l.b16 %v936
      %v1326 = vunpack.c.h.b16 %v936
      %v1327 = vunpack.c.l.b16 %v937
      %v1328 = vunpack.c.h.b16 %v937
      %v1329 = vunpack.c.l.b16 %v938
      %v1330 = vunpack.c.h.b16 %v938
      %v1331 = vunpack.c.l.b16 %v939
      %v1332 = vunpack.c.h.b16 %v939
      %v1333 = vunpack.c.l.b16 %v940
      %v1334 = vunpack.c.h.b16 %v940
      %v1335 = vunpack.c.l.b16 %v941
      %v1336 = vunpack.c.h.b16 %v941
      %v1337 = vunpack.c.l.b16 %v942
      %v1338 = vunpack.c.h.b16 %v942
      %v1339 = vunpack.c.l.b16 %v943
      %v1340 = vunpack.c.h.b16 %v943
      %v1341 = vunpack.c.l.b16 %v944
      %v1342 = vunpack.c.h.b16 %v944
      %v1343 = vunpack.c.l.b16 %v945
      %v1344 = vunpack.c.h.b16 %v945
      %v1345 = vunpack.c.l.b16 %v946
      %v1346 = vunpack.c.h.b16 %v946
      %v1347 = vunpack.c.l.b16 %v947
      %v1348 = vunpack.c.h.b16 %v947
      %v1349 = vunpack.c.l.b16 %v948
      %v1350 = vunpack.c.h.b16 %v948
      %v1351 = vunpack.c.l.b16 %v949
      %v1352 = vunpack.c.h.b16 %v949
      %v1353 = vunpack.c.l.b16 %v950
      %v1354 = vunpack.c.h.b16 %v950
      %v1355 = vunpack.c.l.b16 %v951
      %v1356 = vunpack.c.h.b16 %v951
      %v1357 = vunpack.c.l.b16 %v952
      %v1358 = vunpack.c.h.b16 %v952
      %v1359 = vunpack.c.l.b16 %v953
      %v1360 = vunpack.c.h.b16 %v953
      %v1361 = vunpack.c.l.b16 %v954
      %v1362 = vunpack.c.h.b16 %v954
      %v1363 = vunpack.c.l.b16 %v955
      %v1364 = vunpack.c.h.b16 %v955
      %v1365 = vunpack.c.l.b16 %v956
      %v1366 = vunpack.c.h.b16 %v956
      %v1367 = vunpack.c.l.b16 %v957
      %v1368 = vunpack.c.h.b16 %v957
      %v1369 = vunpack.c.l.b16 %v958
      %v1370 = vunpack.c.h.b16 %v958
      %v1371 = vunpack.c.l.b16 %v959
      %v1372 = vunpack.c.h.b16 %v959
      %v1373 = vunpack.c.l.b16 %v960
      %v1374 = vunpack.c.h.b16 %v960
      %v1375 = vunpack.c.l.b16 %v961
      %v1376 = vunpack.c.h.b16 %v961
      %v1377 = vunpack.c.l.b16 %v962
      %v1378 = vunpack.c.h.b16 %v962
      %v1379 = vunpack.c.l.b16 %v963
      %v1380 = vunpack.c.h.b16 %v963
      %v1381 = vunpack.c.l.b16 %v964
      %v1382 = vunpack.c.h.b16 %v964
      %v1383 = vunpack.c.l.b16 %v965
      %v1384 = vunpack.c.h.b16 %v965
      %v1385 = vunpack.c.l.b16 %v966
      %v1386 = vunpack.c.h.b16 %v966
      %v1387 = vunpack.c.l.b16 %v967
      %v1388 = vunpack.c.h.b16 %v967
      %v1389 = vunpack.c.l.b16 %v968
      %v1390 = vunpack.c.h.b16 %v968
      %v1391 = vunpack.c.l.b16 %v969
      %v1392 = vunpack.c.h.b16 %v969
      %v1393 = vunpack.c.l.b16 %v970
      %v1394 = vunpack.c.h.b16 %v970
      %v1395 = vunpack.c.l.b16 %v971
      %v1396 = vunpack.c.h.b16 %v971
      %v1397 = vunpack.c.l.b16 %v972
      %v1398 = vunpack.c.h.b16 %v972
      %v1399 = vunpack.c.l.b16 %v973
      %v1400 = vunpack.c.h.b16 %v973
      %v1401 = vunpack.c.l.b16 %v974
      %v1402 = vunpack.c.h.b16 %v974
      %v1403 = vunpack.c.l.b16 %v975
      %v1404 = vunpack.c.h.b16 %v975
      %v1405 = vunpack.c.l.b16 %v976
      %v1406 = vunpack.c.h.b16 %v976
      %v1407 = vunpack.c.l.b16 %v977
      %v1408 = vunpack.c.h.b16 %v977
      %v1409 = vunpack.c.l.b16 %v978
      %v1410 = vunpack.c.h.b16 %v978
      %v1411 = vunpack.c.l.b16 %v979
      %v1412 = vunpack.c.h.b16 %v979
      %v1413 = vunpack.c.l.b16 %v980
      %v1414 = vunpack.c.h.b16 %v980
      %v1415 = vunpack.c.l.b16 %v981
      %v1416 = vunpack.c.h.b16 %v981
      %v1417 = vunpack.c.l.b16 %v982
      %v1418 = vunpack.c.h.b16 %v982
      %v1419 = vunpack.c.l.b16 %v983
      %v1420 = vunpack.c.h.b16 %v983
      %v1421 = vunpack.c.l.b16 %v984
      %v1422 = vunpack.c.h.b16 %v984
      %v1423 = vunpack.c.l.b16 %v985
      %v1424 = vunpack.c.h.b16 %v985
      %v1425 = vunpack.c.l.b16 %v986
      %v1426 = vunpack.c.h.b16 %v986
      %v1427 = vunpack.c.l.b16 %v987
      %v1428 = vunpack.c.h.b16 %v987
      %v1429 = vunpack.c.l.b16 %v988
      %v1430 = vunpack.c.h.b16 %v988
      %v1431 = vunpack.c.l.b16 %v989
      %v1432 = vunpack.c.h.b16 %v989
      %v1433 = vunpack.c.l.b16 %v990
      %v1434 = vunpack.c.h.b16 %v990
      %v1435 = vunpack.c.l.b16 %v991
      %v1436 = vunpack.c.h.b16 %v991
      %v1437 = vunpack.c.l.b16 %v992
      %v1438 = vunpack.c.h.b16 %v992
      %v1439 = vunpack.c.l.b16 %v993
      %v1440 = vunpack.c.h.b16 %v993
      %v1441 = vunpack.c.l.b16 %v994
      %v1442 = vunpack.c.h.b16 %v994
      %v1443 = vunpack.c.l.b16 %v995
      %v1444 = vunpack.c.h.b16 %v995
      %v1445 = vunpack.c.l.b16 %v996
      %v1446 = vunpack.c.h.b16 %v996
      %v1447 = vunpack.c.l.b16 %v997
      %v1448 = vunpack.c.h.b16 %v997
      %v1449 = vunpack.c.l.b16 %v998
      %v1450 = vunpack.c.h.b16 %v998
      %v1451 = vunpack.c.l.b16 %v999
      %v1452 = vunpack.c.h.b16 %v999
      %v1453 = vunpack.c.l.b16 %v1000
      %v1454 = vunpack.c.h.b16 %v1000
      %v1455 = vunpack.c.l.b16 %v1001
      %v1456 = vunpack.c.h.b16 %v1001
      %v1457 = vunpack.c.l.b16 %v1002
      %v1458 = vunpack.c.h.b16 %v1002
      %v1459 = vunpack.c.l.b16 %v1003
      %v1460 = vunpack.c.h.b16 %v1003
      %v1461 = vunpack.c.l.b16 %v1004
      %v1462 = vunpack.c.h.b16 %v1004
      %v1463 = vunpack.c.l.b16 %v1005
      %v1464 = vunpack.c.h.b16 %v1005
      %v1465 = vunpack.c.l.b16 %v1006
      %v1466 = vunpack.c.h.b16 %v1006
      %v1467 = vpack.c.b16 %v1213, %v1211
      %v1468 = vpack.c.b16 %v1214, %v1212
      %v1469 = vpack.c.b16 %v1217, %v1215
      %v1470 = vpack.c.b16 %v1218, %v1216
      %v1471 = vpack.c.b16 %v1221, %v1219
      %v1472 = vpack.c.b16 %v1222, %v1220
      %v1473 = vpack.c.b16 %v1225, %v1223
      %v1474 = vpack.c.b16 %v1226, %v1224
      %v1475 = vpack.c.b16 %v1229, %v1227
      %v1476 = vpack.c.b16 %v1230, %v1228
      %v1477 = vpack.c.b16 %v1233, %v1231
      %v1478 = vpack.c.b16 %v1234, %v1232
      %v1479 = vpack.c.b16 %v1237, %v1235
      %v1480 = vpack.c.b16 %v1238, %v1236
      %v1481 = vpack.c.b16 %v1241, %v1239
      %v1482 = vpack.c.b16 %v1242, %v1240
      %v1483 = vpack.c.b16 %v1245, %v1243
      %v1484 = vpack.c.b16 %v1246, %v1244
      %v1485 = vpack.c.b16 %v1249, %v1247
      %v1486 = vpack.c.b16 %v1250, %v1248
      %v1487 = vpack.c.b16 %v1253, %v1251
      %v1488 = vpack.c.b16 %v1254, %v1252
      %v1489 = vpack.c.b16 %v1257, %v1255
      %v1490 = vpack.c.b16 %v1258, %v1256
      %v1491 = vpack.c.b16 %v1261, %v1259
      %v1492 = vpack.c.b16 %v1262, %v1260
      %v1493 = vpack.c.b16 %v1265, %v1263
      %v1494 = vpack.c.b16 %v1266, %v1264
      %v1495 = vpack.c.b16 %v1269, %v1267
      %v1496 = vpack.c.b16 %v1270, %v1268
      %v1497 = vpack.c.b16 %v1273, %v1271
      %v1498 = vpack.c.b16 %v1274, %v1272
      %v1499 = vpack.c.b16 %v1277, %v1275
      %v1500 = vpack.c.b16 %v1278, %v1276
      %v1501 = vpack.c.b16 %v1281, %v1279
      %v1502 = vpack.c.b16 %v1282, %v1280
      %v1503 = vpack.c.b16 %v1285, %v1283
      %v1504 = vpack.c.b16 %v1286, %v1284
      %v1505 = vpack.c.b16 %v1289, %v1287
      %v1506 = vpack.c.b16 %v1290, %v1288
      %v1507 = vpack.c.b16 %v1293, %v1291
      %v1508 = vpack.c.b16 %v1294, %v1292
      %v1509 = vpack.c.b16 %v1297, %v1295
      %v1510 = vpack.c.b16 %v1298, %v1296
      %v1511 = vpack.c.b16 %v1301, %v1299
      %v1512 = vpack.c.b16 %v1302, %v1300
      %v1513 = vpack.c.b16 %v1305, %v1303
      %v1514 = vpack.c.b16 %v1306, %v1304
      %v1515 = vpack.c.b16 %v1309, %v1307
      %v1516 = vpack.c.b16 %v1310, %v1308
      %v1517 = vpack.c.b16 %v1313, %v1311
      %v1518 = vpack.c.b16 %v1314, %v1312
      %v1519 = vpack.c.b16 %v1317, %v1315
      %v1520 = vpack.c.b16 %v1318, %v1316
      %v1521 = vpack.c.b16 %v1321, %v1319
      %v1522 = vpack.c.b16 %v1322, %v1320
      %v1523 = vpack.c.b16 %v1325, %v1323
      %v1524 = vpack.c.b16 %v1326, %v1324
      %v1525 = vpack.c.b16 %v1329, %v1327
      %v1526 = vpack.c.b16 %v1330, %v1328
      %v1527 = vpack.c.b16 %v1333, %v1331
      %v1528 = vpack.c.b16 %v1334, %v1332
      %v1529 = vpack.c.b16 %v1337, %v1335
      %v1530 = vpack.c.b16 %v1338, %v1336
      %v1531 = vpack.c.b16 %v1341, %v1339
      %v1532 = vpack.c.b16 %v1342, %v1340
      %v1533 = vpack.c.b16 %v1345, %v1343
      %v1534 = vpack.c.b16 %v1346, %v1344
      %v1535 = vpack.c.b16 %v1349, %v1347
      %v1536 = vpack.c.b16 %v1350, %v1348
      %v1537 = vpack.c.b16 %v1353, %v1351
      %v1538 = vpack.c.b16 %v1354, %v1352
      %v1539 = vpack.c.b16 %v1357, %v1355
      %v1540 = vpack.c.b16 %v1358, %v1356
      %v1541 = vpack.c.b16 %v1361, %v1359
      %v1542 = vpack.c.b16 %v1362, %v1360
      %v1543 = vpack.c.b16 %v1365, %v1363
      %v1544 = vpack.c.b16 %v1366, %v1364
      %v1545 = vpack.c.b16 %v1369, %v1367
      %v1546 = vpack.c.b16 %v1370, %v1368
      %v1547 = vpack.c.b16 %v1373, %v1371
      %v1548 = vpack.c.b16 %v1374, %v1372
      %v1549 = vpack.c.b16 %v1377, %v1375
      %v1550 = vpack.c.b16 %v1378, %v1376
      %v1551 = vpack.c.b16 %v1381, %v1379
      %v1552 = vpack.c.b16 %v1382, %v1380
      %v1553 = vpack.c.b16 %v1385, %v1383
      %v1554 = vpack.c.b16 %v1386, %v1384
      %v1555 = vpack.c.b16 %v1389, %v1387
      %v1556 = vpack.c.b16 %v1390, %v1388
      %v1557 = vpack.c.b16 %v1393, %v1391
      %v1558 = vpack.c.b16 %v1394, %v1392
      %v1559 = vpack.c.b16 %v1397, %v1395
      %v1560 = vpack.c.b16 %v1398, %v1396
      %v1561 = vpack.c.b16 %v1401, %v1399
      %v1562 = vpack.c.b16 %v1402, %v1400
      %v1563 = vpack.c.b16 %v1405, %v1403
      %v1564 = vpack.c.b16 %v1406, %v1404
      %v1565 = vpack.c.b16 %v1409, %v1407
      %v1566 = vpack.c.b16 %v1410, %v1408
      %v1567 = vpack.c.b16 %v1413, %v1411
      %v1568 = vpack.c.b16 %v1414, %v1412
      %v1569 = vpack.c.b16 %v1417, %v1415
      %v1570 = vpack.c.b16 %v1418, %v1416
      %v1571 = vpack.c.b16 %v1421, %v1419
      %v1572 = vpack.c.b16 %v1422, %v1420
      %v1573 = vpack.c.b16 %v1425, %v1423
      %v1574 = vpack.c.b16 %v1426, %v1424
      %v1575 = vpack.c.b16 %v1429, %v1427
      %v1576 = vpack.c.b16 %v1430, %v1428
      %v1577 = vpack.c.b16 %v1433, %v1431
      %v1578 = vpack.c.b16 %v1434, %v1432
      %v1579 = vpack.c.b16 %v1437, %v1435
      %v1580 = vpack.c.b16 %v1438, %v1436
      %v1581 = vpack.c.b16 %v1441, %v1439
      %v1582 = vpack.c.b16 %v1442, %v1440
      %v1583 = vpack.c.b16 %v1445, %v1443
      %v1584 = vpack.c.b16 %v1446, %v1444
      %v1585 = vpack.c.b16 %v1449, %v1447
      %v1586 = vpack.c.b16 %v1450, %v1448
      %v1587 = vpack.c.b16 %v1453, %v1451
      %v1588 = vpack.c.b16 %v1454, %v1452
      %v1589 = vpack.c.b16 %v1457, %v1455
      %v1590 = vpack.c.b16 %v1458, %v1456
      %v1591 = vpack.c.b16 %v1461, %v1459
      %v1592 = vpack.c.b16 %v1462, %v1460
      %v1593 = vpack.c.b16 %v1465, %v1463
      %v1594 = vpack.c.b16 %v1466, %v1464
      %1723 = vmatprep.subr.bf16.mxu0 %v1468
      %1724 = vmatpush1.bf16.msra.mxu0 %v1467
      %1725 = vmatprep.subr.bf16.mxu0 %v1470
      %1726 = vmatpush1.bf16.msra.mxu0 %v1469
      %1727 = vmatprep.subr.bf16.mxu0 %v1472
      %1728 = vmatpush1.bf16.msra.mxu0 %v1471
      %1729 = vmatprep.subr.bf16.mxu0 %v1474
      %1730 = vmatpush1.bf16.msra.mxu0 %v1473
      %1731 = vmatprep.subr.bf16.mxu0 %v1476
      %1732 = vmatpush1.bf16.msra.mxu0 %v1475
      %1733 = vmatprep.subr.bf16.mxu0 %v1478
      %1734 = vmatpush1.bf16.msra.mxu0 %v1477
      %1735 = vmatprep.subr.bf16.mxu0 %v1480
      %1736 = vmatpush1.bf16.msra.mxu0 %v1479
      %1737 = vmatprep.subr.bf16.mxu0 %v1482
      %1738 = vmatpush1.bf16.msra.mxu0 %v1481
      %1739 = vmatprep.subr.bf16.mxu0 %v1484
      %1740 = vmatpush1.bf16.msra.mxu0 %v1483
      %1741 = vmatprep.subr.bf16.mxu0 %v1486
      %1742 = vmatpush1.bf16.msra.mxu0 %v1485
      %1743 = vmatprep.subr.bf16.mxu0 %v1488
      %1744 = vmatpush1.bf16.msra.mxu0 %v1487
      %1745 = vmatprep.subr.bf16.mxu0 %v1490
      %1746 = vmatpush1.bf16.msra.mxu0 %v1489
      %1747 = vmatprep.subr.bf16.mxu0 %v1492
      %1748 = vmatpush1.bf16.msra.mxu0 %v1491
      %1749 = vmatprep.subr.bf16.mxu0 %v1494
      %1750 = vmatpush1.bf16.msra.mxu0 %v1493
      %1751 = vmatprep.subr.bf16.mxu0 %v1496
      %1752 = vmatpush1.bf16.msra.mxu0 %v1495
      %1753 = vmatprep.subr.bf16.mxu0 %v1498
      %1754 = vmatpush1.bf16.msra.mxu0 %v1497
      %1755 = vmatprep.mubr.bf16.mxu0 %v1008
      %1756 = vmatmul.mubr.bf16.gmra.mrb[0].mxu0 %v1007
      %v1757 = vpop.f32.mrb[0].mxu0
      %v1758 = vadd.f32 %v1076, %v1757
      %v1759 = vpop.f32.mrb[0].mxu0
      %v1760 = vadd.f32 %v1080, %v1759
      %v1761 = vpop.f32.mrb[0].mxu0
      %v1762 = vadd.f32 %v1076, %v1761
      %v1763 = vpop.f32.mrb[0].mxu0
      %v1764 = vadd.f32 %v1080, %v1763
      %1765 = vmatprep.mubr.bf16.mxu0 %v1016
      %1766 = vmatmul.mubr.bf16.gmra.mrb[0].mxu0 %v1015
      %v1767 = vpop.f32.mrb[0].mxu0
      %v1768 = vadd.f32 %v1076, %v1767
      %v1769 = vpop.f32.mrb[0].mxu0
      %v1770 = vadd.f32 %v1080, %v1769
      %v1771 = vpop.f32.mrb[0].mxu0
      %v1772 = vadd.f32 %v1076, %v1771
      %v1773 = vpop.f32.mrb[0].mxu0
      %v1774 = vadd.f32 %v1080, %v1773
      %1775 = vmatprep.mubr.bf16.mxu0 %v1024
      %1776 = vmatmul.mubr.bf16.gmra.mrb[0].mxu0 %v1023
      %v1777 = vpop.f32.mrb[0].mxu0
      %v1778 = vadd.f32 %v1076, %v1777
      %v1779 = vpop.f32.mrb[0].mxu0
      %v1780 = vadd.f32 %v1080, %v1779
      %v1781 = vpop.f32.mrb[0].mxu0
      %v1782 = vadd.f32 %v1076, %v1781
      %v1783 = vpop.f32.mrb[0].mxu0
      %v1784 = vadd.f32 %v1080, %v1783
      %1785 = vmatprep.mubr.bf16.mxu0 %v1032
      %1786 = vmatmul.mubr.bf16.gmra.mrb[0].mxu0 %v1031
      %v1787 = vpop.f32.mrb[0].mxu0
      %v1788 = vadd.f32 %v1076, %v1787
      %v1789 = vpop.f32.mrb[0].mxu0
      %v1790 = vadd.f32 %v1080, %v1789
      %v1791 = vpop.f32.mrb[0].mxu0
      %v1792 = vadd.f32 %v1076, %v1791
      %v1793 = vpop.f32.mrb[0].mxu0
      %v1794 = vadd.f32 %v1080, %v1793
      %1795 = vmatprep.mubr.bf16.mxu0 %v1040
      %1796 = vmatmul.mubr.bf16.gmra.mrb[0].mxu0 %v1039
      %v1797 = vpop.f32.mrb[0].mxu0
      %v1798 = vadd.f32 %v1076, %v1797
      %v1799 = vpop.f32.mrb[0].mxu0
      %v1800 = vadd.f32 %v1080, %v1799
      %v1801 = vpop.f32.mrb[0].mxu0
      %v1802 = vadd.f32 %v1076, %v1801
      %v1803 = vpop.f32.mrb[0].mxu0
      %v1804 = vadd.f32 %v1080, %v1803
      %1805 = vmatprep.mubr.bf16.mxu0 %v1048
      %1806 = vmatmul.mubr.bf16.gmra.mrb[0].mxu0 %v1047
      %v1807 = vpop.f32.mrb[0].mxu0
      %v1808 = vadd.f32 %v1076, %v1807
      %v1809 = vpop.f32.mrb[0].mxu0
      %v1810 = vadd.f32 %v1080, %v1809
      %v1811 = vpop.f32.mrb[0].mxu0
      %v1812 = vadd.f32 %v1076, %v1811
      %v1813 = vpop.f32.mrb[0].mxu0
      %v1814 = vadd.f32 %v1080, %v1813
      %1815 = vmatprep.mubr.bf16.mxu0 %v1056
      %1816 = vmatmul.mubr.bf16.gmra.mrb[0].mxu0 %v1055
      %v1817 = vpop.f32.mrb[0].mxu0
      %v1818 = vadd.f32 %v1076, %v1817
      %v1819 = vpop.f32.mrb[0].mxu0
      %v1820 = vadd.f32 %v1080, %v1819
      %v1821 = vpop.f32.mrb[0].mxu0
      %v1822 = vadd.f32 %v1076, %v1821
      %v1823 = vpop.f32.mrb[0].mxu0
      %v1824 = vadd.f32 %v1080, %v1823
      %1825 = vmatprep.mubr.bf16.mxu0 %v1064
      %1826 = vmatmul.mubr.bf16.gmra.mrb[0].mxu0 %v1063
      %v1827 = vpop.f32.mrb[0].mxu0
      %v1828 = vadd.f32 %v1076, %v1827
      %v1829 = vpop.f32.mrb[0].mxu0
      %v1830 = vadd.f32 %v1080, %v1829
      %v1831 = vpop.f32.mrb[0].mxu0
      %v1832 = vadd.f32 %v1076, %v1831
      %v1833 = vpop.f32.mrb[0].mxu0
      %v1834 = vadd.f32 %v1080, %v1833
      %1835 = vdwg.mxu0
      %1836 = vmatprep.subr.bf16.mxu0 %v1500
      %1837 = vmatpush1.bf16.msra.mxu0 %v1499
      %1838 = vmatprep.subr.bf16.mxu0 %v1502
      %1839 = vmatpush1.bf16.msra.mxu0 %v1501
      %1840 = vmatprep.subr.bf16.mxu0 %v1504
      %1841 = vmatpush1.bf16.msra.mxu0 %v1503
      %1842 = vmatprep.subr.bf16.mxu0 %v1506
      %1843 = vmatpush1.bf16.msra.mxu0 %v1505
      %1844 = vmatprep.subr.bf16.mxu0 %v1508
      %1845 = vmatpush1.bf16.msra.mxu0 %v1507
      %1846 = vmatprep.subr.bf16.mxu0 %v1510
      %1847 = vmatpush1.bf16.msra.mxu0 %v1509
      %1848 = vmatprep.subr.bf16.mxu0 %v1512
      %1849 = vmatpush1.bf16.msra.mxu0 %v1511
      %1850 = vmatprep.subr.bf16.mxu0 %v1514
      %1851 = vmatpush1.bf16.msra.mxu0 %v1513
      %1852 = vmatprep.subr.bf16.mxu0 %v1516
      %1853 = vmatpush1.bf16.msra.mxu0 %v1515
      %1854 = vmatprep.subr.bf16.mxu0 %v1518
      %1855 = vmatpush1.bf16.msra.mxu0 %v1517
      %1856 = vmatprep.subr.bf16.mxu0 %v1520
      %1857 = vmatpush1.bf16.msra.mxu0 %v1519
      %1858 = vmatprep.subr.bf16.mxu0 %v1522
      %1859 = vmatpush1.bf16.msra.mxu0 %v1521
      %1860 = vmatprep.subr.bf16.mxu0 %v1524
      %1861 = vmatpush1.bf16.msra.mxu0 %v1523
      %1862 = vmatprep.subr.bf16.mxu0 %v1526
      %1863 = vmatpush1.bf16.msra.mxu0 %v1525
      %1864 = vmatprep.subr.bf16.mxu0 %v1528
      %1865 = vmatpush1.bf16.msra.mxu0 %v1527
      %1866 = vmatprep.subr.bf16.mxu0 %v1530
      %1867 = vmatpush1.bf16.msra.mxu0 %v1529
      %1868 = vmatprep.mubr.bf16.mxu0 %v1010
      %1869 = vmatmul.mubr.bf16.gmra.mrb[0].mxu0 %v1009
      %v1870 = vpop.f32.mrb[0].mxu0
      %v1871 = vadd.f32 %v1758, %v1870
      %v1872 = vpop.f32.mrb[0].mxu0
      %v1873 = vadd.f32 %v1760, %v1872
      %v1874 = vpop.f32.mrb[0].mxu0
      %v1875 = vadd.f32 %v1762, %v1874
      %v1876 = vpop.f32.mrb[0].mxu0
      %v1877 = vadd.f32 %v1764, %v1876
      %1878 = vmatprep.mubr.bf16.mxu0 %v1018
      %1879 = vmatmul.mubr.bf16.gmra.mrb[0].mxu0 %v1017
      %v1880 = vpop.f32.mrb[0].mxu0
      %v1881 = vadd.f32 %v1768, %v1880
      %v1882 = vpop.f32.mrb[0].mxu0
      %v1883 = vadd.f32 %v1770, %v1882
      %v1884 = vpop.f32.mrb[0].mxu0
      %v1885 = vadd.f32 %v1772, %v1884
      %v1886 = vpop.f32.mrb[0].mxu0
      %v1887 = vadd.f32 %v1774, %v1886
      %1888 = vmatprep.mubr.bf16.mxu0 %v1026
      %1889 = vmatmul.mubr.bf16.gmra.mrb[0].mxu0 %v1025
      %v1890 = vpop.f32.mrb[0].mxu0
      %v1891 = vadd.f32 %v1778, %v1890
      %v1892 = vpop.f32.mrb[0].mxu0
      %v1893 = vadd.f32 %v1780, %v1892
      %v1894 = vpop.f32.mrb[0].mxu0
      %v1895 = vadd.f32 %v1782, %v1894
      %v1896 = vpop.f32.mrb[0].mxu0
      %v1897 = vadd.f32 %v1784, %v1896
      %1898 = vmatprep.mubr.bf16.mxu0 %v1034
      %1899 = vmatmul.mubr.bf16.gmra.mrb[0].mxu0 %v1033
      %v1900 = vpop.f32.mrb[0].mxu0
      %v1901 = vadd.f32 %v1788, %v1900
      %v1902 = vpop.f32.mrb[0].mxu0
      %v1903 = vadd.f32 %v1790, %v1902
      %v1904 = vpop.f32.mrb[0].mxu0
      %v1905 = vadd.f32 %v1792, %v1904
      %v1906 = vpop.f32.mrb[0].mxu0
      %v1907 = vadd.f32 %v1794, %v1906
      %1908 = vmatprep.mubr.bf16.mxu0 %v1042
      %1909 = vmatmul.mubr.bf16.gmra.mrb[0].mxu0 %v1041
      %v1910 = vpop.f32.mrb[0].mxu0
      %v1911 = vadd.f32 %v1798, %v1910
      %v1912 = vpop.f32.mrb[0].mxu0
      %v1913 = vadd.f32 %v1800, %v1912
      %v1914 = vpop.f32.mrb[0].mxu0
      %v1915 = vadd.f32 %v1802, %v1914
      %v1916 = vpop.f32.mrb[0].mxu0
      %v1917 = vadd.f32 %v1804, %v1916
      %1918 = vmatprep.mubr.bf16.mxu0 %v1050
      %1919 = vmatmul.mubr.bf16.gmra.mrb[0].mxu0 %v1049
      %v1920 = vpop.f32.mrb[0].mxu0
      %v1921 = vadd.f32 %v1808, %v1920
      %v1922 = vpop.f32.mrb[0].mxu0
      %v1923 = vadd.f32 %v1810, %v1922
      %v1924 = vpop.f32.mrb[0].mxu0
      %v1925 = vadd.f32 %v1812, %v1924
      %v1926 = vpop.f32.mrb[0].mxu0
      %v1927 = vadd.f32 %v1814, %v1926
      %1928 = vmatprep.mubr.bf16.mxu0 %v1058
      %1929 = vmatmul.mubr.bf16.gmra.mrb[0].mxu0 %v1057
      %v1930 = vpop.f32.mrb[0].mxu0
      %v1931 = vadd.f32 %v1818, %v1930
      %v1932 = vpop.f32.mrb[0].mxu0
      %v1933 = vadd.f32 %v1820, %v1932
      %v1934 = vpop.f32.mrb[0].mxu0
      %v1935 = vadd.f32 %v1822, %v1934
      %v1936 = vpop.f32.mrb[0].mxu0
      %v1937 = vadd.f32 %v1824, %v1936
      %1938 = vmatprep.mubr.bf16.mxu0 %v1066
      %1939 = vmatmul.mubr.bf16.gmra.mrb[0].mxu0 %v1065
      %v1940 = vpop.f32.mrb[0].mxu0
      %v1941 = vadd.f32 %v1828, %v1940
      %v1942 = vpop.f32.mrb[0].mxu0
      %v1943 = vadd.f32 %v1830, %v1942
      %v1944 = vpop.f32.mrb[0].mxu0
      %v1945 = vadd.f32 %v1832, %v1944
      %v1946 = vpop.f32.mrb[0].mxu0
      %v1947 = vadd.f32 %v1834, %v1946
      %1948 = vdwg.mxu0
      %1949 = vmatprep.subr.bf16.mxu0 %v1532
      %1950 = vmatpush1.bf16.msra.mxu0 %v1531
      %1951 = vmatprep.subr.bf16.mxu0 %v1534
      %1952 = vmatpush1.bf16.msra.mxu0 %v1533
      %1953 = vmatprep.subr.bf16.mxu0 %v1536
      %1954 = vmatpush1.bf16.msra.mxu0 %v1535
      %1955 = vmatprep.subr.bf16.mxu0 %v1538
      %1956 = vmatpush1.bf16.msra.mxu0 %v1537
      %1957 = vmatprep.subr.bf16.mxu0 %v1540
      %1958 = vmatpush1.bf16.msra.mxu0 %v1539
      %1959 = vmatprep.subr.bf16.mxu0 %v1542
      %1960 = vmatpush1.bf16.msra.mxu0 %v1541
      %1961 = vmatprep.subr.bf16.mxu0 %v1544
      %1962 = vmatpush1.bf16.msra.mxu0 %v1543
      %1963 = vmatprep.subr.bf16.mxu0 %v1546
      %1964 = vmatpush1.bf16.msra.mxu0 %v1545
      %1965 = vmatprep.subr.bf16.mxu0 %v1548
      %1966 = vmatpush1.bf16.msra.mxu0 %v1547
      %1967 = vmatprep.subr.bf16.mxu0 %v1550
      %1968 = vmatpush1.bf16.msra.mxu0 %v1549
      %1969 = vmatprep.subr.bf16.mxu0 %v1552
      %1970 = vmatpush1.bf16.msra.mxu0 %v1551
      %1971 = vmatprep.subr.bf16.mxu0 %v1554
      %1972 = vmatpush1.bf16.msra.mxu0 %v1553
      %1973 = vmatprep.subr.bf16.mxu0 %v1556
      %1974 = vmatpush1.bf16.msra.mxu0 %v1555
      %1975 = vmatprep.subr.bf16.mxu0 %v1558
      %1976 = vmatpush1.bf16.msra.mxu0 %v1557
      %1977 = vmatprep.subr.bf16.mxu0 %v1560
      %1978 = vmatpush1.bf16.msra.mxu0 %v1559
      %1979 = vmatprep.subr.bf16.mxu0 %v1562
      %1980 = vmatpush1.bf16.msra.mxu0 %v1561
      %1981 = vmatprep.mubr.bf16.mxu0 %v1012
      %1982 = vmatmul.mubr.bf16.gmra.mrb[0].mxu0 %v1011
      %v1983 = vpop.f32.mrb[0].mxu0
      %v1984 = vadd.f32 %v1871, %v1983
      %v1985 = vpop.f32.mrb[0].mxu0
      %v1986 = vadd.f32 %v1873, %v1985
      %v1987 = vpop.f32.mrb[0].mxu0
      %v1988 = vadd.f32 %v1875, %v1987
      %v1989 = vpop.f32.mrb[0].mxu0
      %v1990 = vadd.f32 %v1877, %v1989
      %1991 = vmatprep.mubr.bf16.mxu0 %v1020
      %1992 = vmatmul.mubr.bf16.gmra.mrb[0].mxu0 %v1019
      %v1993 = vpop.f32.mrb[0].mxu0
      %v1994 = vadd.f32 %v1881, %v1993
      %v1995 = vpop.f32.mrb[0].mxu0
      %v1996 = vadd.f32 %v1883, %v1995
      %v1997 = vpop.f32.mrb[0].mxu0
      %v1998 = vadd.f32 %v1885, %v1997
      %v1999 = vpop.f32.mrb[0].mxu0
      %v2000 = vadd.f32 %v1887, %v1999
      %2001 = vmatprep.mubr.bf16.mxu0 %v1028
      %2002 = vmatmul.mubr.bf16.gmra.mrb[0].mxu0 %v1027
      %v2003 = vpop.f32.mrb[0].mxu0
      %v2004 = vadd.f32 %v1891, %v2003
      %v2005 = vpop.f32.mrb[0].mxu0
      %v2006 = vadd.f32 %v1893, %v2005
      %v2007 = vpop.f32.mrb[0].mxu0
      %v2008 = vadd.f32 %v1895, %v2007
      %v2009 = vpop.f32.mrb[0].mxu0
      %v2010 = vadd.f32 %v1897, %v2009
      %2011 = vmatprep.mubr.bf16.mxu0 %v1036
      %2012 = vmatmul.mubr.bf16.gmra.mrb[0].mxu0 %v1035
      %v2013 = vpop.f32.mrb[0].mxu0
      %v2014 = vadd.f32 %v1901, %v2013
      %v2015 = vpop.f32.mrb[0].mxu0
      %v2016 = vadd.f32 %v1903, %v2015
      %v2017 = vpop.f32.mrb[0].mxu0
      %v2018 = vadd.f32 %v1905, %v2017
      %v2019 = vpop.f32.mrb[0].mxu0
      %v2020 = vadd.f32 %v1907, %v2019
      %2021 = vmatprep.mubr.bf16.mxu0 %v1044
      %2022 = vmatmul.mubr.bf16.gmra.mrb[0].mxu0 %v1043
      %v2023 = vpop.f32.mrb[0].mxu0
      %v2024 = vadd.f32 %v1911, %v2023
      %v2025 = vpop.f32.mrb[0].mxu0
      %v2026 = vadd.f32 %v1913, %v2025
      %v2027 = vpop.f32.mrb[0].mxu0
      %v2028 = vadd.f32 %v1915, %v2027
      %v2029 = vpop.f32.mrb[0].mxu0
      %v2030 = vadd.f32 %v1917, %v2029
      %2031 = vmatprep.mubr.bf16.mxu0 %v1052
      %2032 = vmatmul.mubr.bf16.gmra.mrb[0].mxu0 %v1051
      %v2033 = vpop.f32.mrb[0].mxu0
      %v2034 = vadd.f32 %v1921, %v2033
      %v2035 = vpop.f32.mrb[0].mxu0
      %v2036 = vadd.f32 %v1923, %v2035
      %v2037 = vpop.f32.mrb[0].mxu0
      %v2038 = vadd.f32 %v1925, %v2037
      %v2039 = vpop.f32.mrb[0].mxu0
      %v2040 = vadd.f32 %v1927, %v2039
      %2041 = vmatprep.mubr.bf16.mxu0 %v1060
      %2042 = vmatmul.mubr.bf16.gmra.mrb[0].mxu0 %v1059
      %v2043 = vpop.f32.mrb[0].mxu0
      %v2044 = vadd.f32 %v1931, %v2043
      %v2045 = vpop.f32.mrb[0].mxu0
      %v2046 = vadd.f32 %v1933, %v2045
      %v2047 = vpop.f32.mrb[0].mxu0
      %v2048 = vadd.f32 %v1935, %v2047
      %v2049 = vpop.f32.mrb[0].mxu0
      %v2050 = vadd.f32 %v1937, %v2049
      %2051 = vmatprep.mubr.bf16.mxu0 %v1068
      %2052 = vmatmul.mubr.bf16.gmra.mrb[0].mxu0 %v1067
      %v2053 = vpop.f32.mrb[0].mxu0
      %v2054 = vadd.f32 %v1941, %v2053
      %v2055 = vpop.f32.mrb[0].mxu0
      %v2056 = vadd.f32 %v1943, %v2055
      %v2057 = vpop.f32.mrb[0].mxu0
      %v2058 = vadd.f32 %v1945, %v2057
      %v2059 = vpop.f32.mrb[0].mxu0
      %v2060 = vadd.f32 %v1947, %v2059
      %2061 = vdwg.mxu0
      %2062 = vmatprep.subr.bf16.mxu0 %v1564
      %2063 = vmatpush1.bf16.msra.mxu0 %v1563
      %2064 = vmatprep.subr.bf16.mxu0 %v1566
      %2065 = vmatpush1.bf16.msra.mxu0 %v1565
      %2066 = vmatprep.subr.bf16.mxu0 %v1568
      %2067 = vmatpush1.bf16.msra.mxu0 %v1567
      %2068 = vmatprep.subr.bf16.mxu0 %v1570
      %2069 = vmatpush1.bf16.msra.mxu0 %v1569
      %2070 = vmatprep.subr.bf16.mxu0 %v1572
      %2071 = vmatpush1.bf16.msra.mxu0 %v1571
      %2072 = vmatprep.subr.bf16.mxu0 %v1574
      %2073 = vmatpush1.bf16.msra.mxu0 %v1573
      %2074 = vmatprep.subr.bf16.mxu0 %v1576
      %2075 = vmatpush1.bf16.msra.mxu0 %v1575
      %2076 = vmatprep.subr.bf16.mxu0 %v1578
      %2077 = vmatpush1.bf16.msra.mxu0 %v1577
      %2078 = vmatprep.subr.bf16.mxu0 %v1580
      %2079 = vmatpush1.bf16.msra.mxu0 %v1579
      %2080 = vmatprep.subr.bf16.mxu0 %v1582
      %2081 = vmatpush1.bf16.msra.mxu0 %v1581
      %2082 = vmatprep.subr.bf16.mxu0 %v1584
      %2083 = vmatpush1.bf16.msra.mxu0 %v1583
      %2084 = vmatprep.subr.bf16.mxu0 %v1586
      %2085 = vmatpush1.bf16.msra.mxu0 %v1585
      %2086 = vmatprep.subr.bf16.mxu0 %v1588
      %2087 = vmatpush1.bf16.msra.mxu0 %v1587
      %2088 = vmatprep.subr.bf16.mxu0 %v1590
      %2089 = vmatpush1.bf16.msra.mxu0 %v1589
      %2090 = vmatprep.subr.bf16.mxu0 %v1592
      %2091 = vmatpush1.bf16.msra.mxu0 %v1591
      %2092 = vmatprep.subr.bf16.mxu0 %v1594
      %2093 = vmatpush1.bf16.msra.mxu0 %v1593
      %2094 = vmatprep.mubr.bf16.mxu0 %v1014
      %2095 = vmatmul.mubr.bf16.gmra.mrb[0].mxu0 %v1013
      %v2096 = vpop.f32.mrb[0].mxu0
      %v2097 = vadd.f32 %v1984, %v2096
      %v2098 = vpop.f32.mrb[0].mxu0
      %v2099 = vadd.f32 %v1986, %v2098
      %v2100 = vpop.f32.mrb[0].mxu0
      %v2101 = vadd.f32 %v1988, %v2100
      %v2102 = vpop.f32.mrb[0].mxu0
      %v2103 = vadd.f32 %v1990, %v2102
      %2104 = vmatprep.mubr.bf16.mxu0 %v1022
      %2105 = vmatmul.mubr.bf16.gmra.mrb[0].mxu0 %v1021
      %v2106 = vpop.f32.mrb[0].mxu0
      %v2107 = vadd.f32 %v1994, %v2106
      %v2108 = vpop.f32.mrb[0].mxu0
      %v2109 = vadd.f32 %v1996, %v2108
      %v2110 = vpop.f32.mrb[0].mxu0
      %v2111 = vadd.f32 %v1998, %v2110
      %v2112 = vpop.f32.mrb[0].mxu0
      %v2113 = vadd.f32 %v2000, %v2112
      %2114 = vmatprep.mubr.bf16.mxu0 %v1030
      %2115 = vmatmul.mubr.bf16.gmra.mrb[0].mxu0 %v1029
      %v2116 = vpop.f32.mrb[0].mxu0
      %v2117 = vadd.f32 %v2004, %v2116
      %v2118 = vpop.f32.mrb[0].mxu0
      %v2119 = vadd.f32 %v2006, %v2118
      %v2120 = vpop.f32.mrb[0].mxu0
      %v2121 = vadd.f32 %v2008, %v2120
      %v2122 = vpop.f32.mrb[0].mxu0
      %v2123 = vadd.f32 %v2010, %v2122
      %2124 = vmatprep.mubr.bf16.mxu0 %v1038
      %2125 = vmatmul.mubr.bf16.gmra.mrb[0].mxu0 %v1037
      %v2126 = vpop.f32.mrb[0].mxu0
      %v2127 = vadd.f32 %v2014, %v2126
      %v2128 = vpop.f32.mrb[0].mxu0
      %v2129 = vadd.f32 %v2016, %v2128
      %v2130 = vpop.f32.mrb[0].mxu0
      %v2131 = vadd.f32 %v2018, %v2130
      %v2132 = vpop.f32.mrb[0].mxu0
      %v2133 = vadd.f32 %v2020, %v2132
      %2134 = vmatprep.mubr.bf16.mxu0 %v1046
      %2135 = vmatmul.mubr.bf16.gmra.mrb[0].mxu0 %v1045
      %v2136 = vpop.f32.mrb[0].mxu0
      %v2137 = vadd.f32 %v2024, %v2136
      %v2138 = vpop.f32.mrb[0].mxu0
      %v2139 = vadd.f32 %v2026, %v2138
      %v2140 = vpop.f32.mrb[0].mxu0
      %v2141 = vadd.f32 %v2028, %v2140
      %v2142 = vpop.f32.mrb[0].mxu0
      %v2143 = vadd.f32 %v2030, %v2142
      %2144 = vmatprep.mubr.bf16.mxu0 %v1054
      %2145 = vmatmul.mubr.bf16.gmra.mrb[0].mxu0 %v1053
      %v2146 = vpop.f32.mrb[0].mxu0
      %v2147 = vadd.f32 %v2034, %v2146
      %v2148 = vpop.f32.mrb[0].mxu0
      %v2149 = vadd.f32 %v2036, %v2148
      %v2150 = vpop.f32.mrb[0].mxu0
      %v2151 = vadd.f32 %v2038, %v2150
      %v2152 = vpop.f32.mrb[0].mxu0
      %v2153 = vadd.f32 %v2040, %v2152
      %2154 = vmatprep.mubr.bf16.mxu0 %v1062
      %2155 = vmatmul.mubr.bf16.gmra.mrb[0].mxu0 %v1061
      %v2156 = vpop.f32.mrb[0].mxu0
      %v2157 = vadd.f32 %v2044, %v2156
      %v2158 = vpop.f32.mrb[0].mxu0
      %v2159 = vadd.f32 %v2046, %v2158
      %v2160 = vpop.f32.mrb[0].mxu0
      %v2161 = vadd.f32 %v2048, %v2160
      %v2162 = vpop.f32.mrb[0].mxu0
      %v2163 = vadd.f32 %v2050, %v2162
      %2164 = vmatprep.mubr.bf16.mxu0 %v1070
      %2165 = vmatmul.mubr.bf16.gmra.mrb[0].mxu0 %v1069
      %v2166 = vpop.f32.mrb[0].mxu0
      %v2167 = vadd.f32 %v2054, %v2166
      %v2168 = vpop.f32.mrb[0].mxu0
      %v2169 = vadd.f32 %v2056, %v2168
      %v2170 = vpop.f32.mrb[0].mxu0
      %v2171 = vadd.f32 %v2058, %v2170
      %v2172 = vpop.f32.mrb[0].mxu0
      %v2173 = vadd.f32 %v2060, %v2172
      %2174 = vdwg.mxu0
      %v2175 = vmax.f32 %v2097, 0.0
      %v2176 = vmax.f32 %v2099, 0.0
      %v2177 = vmax.f32 %v2101, 0.0
      %v2178 = vmax.f32 %v2103, 0.0
      %v2179 = vmax.f32 %v2107, 0.0
      %v2180 = vmax.f32 %v2109, 0.0
      %v2181 = vmax.f32 %v2111, 0.0
      %v2182 = vmax.f32 %v2113, 0.0
      %v2183 = vmax.f32 %v2117, 0.0
      %v2184 = vmax.f32 %v2119, 0.0
      %v2185 = vmax.f32 %v2121, 0.0
      %v2186 = vmax.f32 %v2123, 0.0
      %v2187 = vmax.f32 %v2127, 0.0
      %v2188 = vmax.f32 %v2129, 0.0
      %v2189 = vmax.f32 %v2131, 0.0
      %v2190 = vmax.f32 %v2133, 0.0
      %v2191 = vmax.f32 %v2137, 0.0
      %v2192 = vmax.f32 %v2139, 0.0
      %v2193 = vmax.f32 %v2141, 0.0
      %v2194 = vmax.f32 %v2143, 0.0
      %v2195 = vmax.f32 %v2147, 0.0
      %v2196 = vmax.f32 %v2149, 0.0
      %v2197 = vmax.f32 %v2151, 0.0
      %v2198 = vmax.f32 %v2153, 0.0
      %v2199 = vmax.f32 %v2157, 0.0
      %v2200 = vmax.f32 %v2159, 0.0
      %v2201 = vmax.f32 %v2161, 0.0
      %v2202 = vmax.f32 %v2163, 0.0
      %v2203 = vmax.f32 %v2167, 0.0
      %v2204 = vmax.f32 %v2169, 0.0
      %v2205 = vmax.f32 %v2171, 0.0
      %v2206 = vmax.f32 %v2173, 0.0
      %v2207 = vld [vmem:[%s6] sm:$0xff]
      %v2208 = vld [vmem:[%s6 + $0x8] sm:$0xff]
      %v2209 = vld [vmem:[%s6 + $0x10] sm:$0xff]
      %v2210 = vld [vmem:[%s6 + $0x18] sm:$0xff]
      %v2211 = vld [vmem:[%s6 + $0x20] sm:$0xff]
      %v2212 = vld [vmem:[%s6 + $0x28] sm:$0xff]
      %v2213 = vld [vmem:[%s6 + $0x30] sm:$0xff]
      %v2214 = vld [vmem:[%s6 + $0x38] sm:$0xff]
      %v2215 = vld [vmem:[%s6 + $0x40] sm:$0xff]
      %v2216 = vld [vmem:[%s6 + $0x48] sm:$0xff]
      %v2217 = vld [vmem:[%s6 + $0x50] sm:$0xff]
      %v2218 = vld [vmem:[%s6 + $0x58] sm:$0xff]
      %v2219 = vld [vmem:[%s6 + $0x60] sm:$0xff]
      %v2220 = vld [vmem:[%s6 + $0x68] sm:$0xff]
      %v2221 = vld [vmem:[%s6 + $0x70] sm:$0xff]
      %v2222 = vld [vmem:[%s6 + $0x78] sm:$0xff]
      %v2223 = vld [vmem:[%s6 + $0x80] sm:$0xff]
      %v2224 = vld [vmem:[%s6 + $0x88] sm:$0xff]
      %v2225 = vld [vmem:[%s6 + $0x90] sm:$0xff]
      %v2226 = vld [vmem:[%s6 + $0x98] sm:$0xff]
      %v2227 = vld [vmem:[%s6 + $0xa0] sm:$0xff]
      %v2228 = vld [vmem:[%s6 + $0xa8] sm:$0xff]
      %v2229 = vld [vmem:[%s6 + $0xb0] sm:$0xff]
      %v2230 = vld [vmem:[%s6 + $0xb8] sm:$0xff]
      %v2231 = vld [vmem:[%s6 + $0xc0] sm:$0xff]
      %v2232 = vld [vmem:[%s6 + $0xc8] sm:$0xff]
      %v2233 = vld [vmem:[%s6 + $0xd0] sm:$0xff]
      %v2234 = vld [vmem:[%s6 + $0xd8] sm:$0xff]
      %v2235 = vld [vmem:[%s6 + $0xe0] sm:$0xff]
      %v2236 = vld [vmem:[%s6 + $0xe8] sm:$0xff]
      %v2237 = vld [vmem:[%s6 + $0xf0] sm:$0xff]
      %v2238 = vld [vmem:[%s6 + $0xf8] sm:$0xff]
      %v2239 = vld [vmem:[%s6 + $0x100] sm:$0xff]
      %v2240 = vld [vmem:[%s6 + $0x108] sm:$0xff]
      %v2241 = vld [vmem:[%s6 + $0x110] sm:$0xff]
      %v2242 = vld [vmem:[%s6 + $0x118] sm:$0xff]
      %v2243 = vld [vmem:[%s6 + $0x120] sm:$0xff]
      %v2244 = vld [vmem:[%s6 + $0x128] sm:$0xff]
      %v2245 = vld [vmem:[%s6 + $0x130] sm:$0xff]
      %v2246 = vld [vmem:[%s6 + $0x138] sm:$0xff]
      %v2247 = vld [vmem:[%s6 + $0x140] sm:$0xff]
      %v2248 = vld [vmem:[%s6 + $0x148] sm:$0xff]
      %v2249 = vld [vmem:[%s6 + $0x150] sm:$0xff]
      %v2250 = vld [vmem:[%s6 + $0x158] sm:$0xff]
      %v2251 = vld [vmem:[%s6 + $0x160] sm:$0xff]
      %v2252 = vld [vmem:[%s6 + $0x168] sm:$0xff]
      %v2253 = vld [vmem:[%s6 + $0x170] sm:$0xff]
      %v2254 = vld [vmem:[%s6 + $0x178] sm:$0xff]
      %v2255 = vld [vmem:[%s6 + $0x180] sm:$0xff]
      %v2256 = vld [vmem:[%s6 + $0x188] sm:$0xff]
      %v2257 = vld [vmem:[%s6 + $0x190] sm:$0xff]
      %v2258 = vld [vmem:[%s6 + $0x198] sm:$0xff]
      %v2259 = vld [vmem:[%s6 + $0x1a0] sm:$0xff]
      %v2260 = vld [vmem:[%s6 + $0x1a8] sm:$0xff]
      %v2261 = vld [vmem:[%s6 + $0x1b0] sm:$0xff]
      %v2262 = vld [vmem:[%s6 + $0x1b8] sm:$0xff]
      %v2263 = vld [vmem:[%s6 + $0x1c0] sm:$0xff]
      %v2264 = vld [vmem:[%s6 + $0x1c8] sm:$0xff]
      %v2265 = vld [vmem:[%s6 + $0x1d0] sm:$0xff]
      %v2266 = vld [vmem:[%s6 + $0x1d8] sm:$0xff]
      %v2267 = vld [vmem:[%s6 + $0x1e0] sm:$0xff]
      %v2268 = vld [vmem:[%s6 + $0x1e8] sm:$0xff]
      %v2269 = vld [vmem:[%s6 + $0x1f0] sm:$0xff]
      %v2270 = vld [vmem:[%s6 + $0x1f8] sm:$0xff]
      %v2271 = vpack.c.bf16 %v721, %v719
      %v2272 = vpack.c.bf16 %v722, %v720
      %v2273 = vpack.c.bf16 %v2177, %v2175
      %v2274 = vpack.c.bf16 %v2178, %v2176
      %v2275 = vpack.c.bf16 %v725, %v723
      %v2276 = vpack.c.bf16 %v726, %v724
      %v2277 = vpack.c.bf16 %v2181, %v2179
      %v2278 = vpack.c.bf16 %v2182, %v2180
      %v2279 = vpack.c.bf16 %v729, %v727
      %v2280 = vpack.c.bf16 %v730, %v728
      %v2281 = vpack.c.bf16 %v2185, %v2183
      %v2282 = vpack.c.bf16 %v2186, %v2184
      %v2283 = vpack.c.bf16 %v733, %v731
      %v2284 = vpack.c.bf16 %v734, %v732
      %v2285 = vpack.c.bf16 %v2189, %v2187
      %v2286 = vpack.c.bf16 %v2190, %v2188
      %v2287 = vpack.c.bf16 %v737, %v735
      %v2288 = vpack.c.bf16 %v738, %v736
      %v2289 = vpack.c.bf16 %v2193, %v2191
      %v2290 = vpack.c.bf16 %v2194, %v2192
      %v2291 = vpack.c.bf16 %v741, %v739
      %v2292 = vpack.c.bf16 %v742, %v740
      %v2293 = vpack.c.bf16 %v2197, %v2195
      %v2294 = vpack.c.bf16 %v2198, %v2196
      %v2295 = vpack.c.bf16 %v745, %v743
      %v2296 = vpack.c.bf16 %v746, %v744
      %v2297 = vpack.c.bf16 %v2201, %v2199
      %v2298 = vpack.c.bf16 %v2202, %v2200
      %v2299 = vpack.c.bf16 %v749, %v747
      %v2300 = vpack.c.bf16 %v750, %v748
      %v2301 = vpack.c.bf16 %v2205, %v2203
      %v2302 = vpack.c.bf16 %v2206, %v2204
      %v2303 = vld [vmem:[%s3 + $0x4] sm:$0x3]
      %v2305 = vlaneseq
      %v2306 = vshrl.u32 %v2305, 7
      %v2307 = vsub.s32 0, %v2306
      %v2308 = vrot.slane %v2303, %v2307
      %v2309 = vlaneseq
      %v2310 = vshrl.u32 %v2309, 7
      %v2311 = vsub.s32 1, %v2310
      %v2312 = vrot.slane %v2303, %v2311
      %v2379 = vunpack.c.l.b16 %v2207
      %v2380 = vunpack.c.h.b16 %v2207
      %v2381 = vunpack.c.l.b16 %v2208
      %v2382 = vunpack.c.h.b16 %v2208
      %v2383 = vunpack.c.l.b16 %v2209
      %v2384 = vunpack.c.h.b16 %v2209
      %v2385 = vunpack.c.l.b16 %v2210
      %v2386 = vunpack.c.h.b16 %v2210
      %v2387 = vunpack.c.l.b16 %v2211
      %v2388 = vunpack.c.h.b16 %v2211
      %v2389 = vunpack.c.l.b16 %v2212
      %v2390 = vunpack.c.h.b16 %v2212
      %v2391 = vunpack.c.l.b16 %v2213
      %v2392 = vunpack.c.h.b16 %v2213
      %v2393 = vunpack.c.l.b16 %v2214
      %v2394 = vunpack.c.h.b16 %v2214
      %v2395 = vunpack.c.l.b16 %v2215
      %v2396 = vunpack.c.h.b16 %v2215
      %v2397 = vunpack.c.l.b16 %v2216
      %v2398 = vunpack.c.h.b16 %v2216
      %v2399 = vunpack.c.l.b16 %v2217
      %v2400 = vunpack.c.h.b16 %v2217
      %v2401 = vunpack.c.l.b16 %v2218
      %v2402 = vunpack.c.h.b16 %v2218
      %v2403 = vunpack.c.l.b16 %v2219
      %v2404 = vunpack.c.h.b16 %v2219
      %v2405 = vunpack.c.l.b16 %v2220
      %v2406 = vunpack.c.h.b16 %v2220
      %v2407 = vunpack.c.l.b16 %v2221
      %v2408 = vunpack.c.h.b16 %v2221
      %v2409 = vunpack.c.l.b16 %v2222
      %v2410 = vunpack.c.h.b16 %v2222
      %v2411 = vunpack.c.l.b16 %v2223
      %v2412 = vunpack.c.h.b16 %v2223
      %v2413 = vunpack.c.l.b16 %v2224
      %v2414 = vunpack.c.h.b16 %v2224
      %v2415 = vunpack.c.l.b16 %v2225
      %v2416 = vunpack.c.h.b16 %v2225
      %v2417 = vunpack.c.l.b16 %v2226
      %v2418 = vunpack.c.h.b16 %v2226
      %v2419 = vunpack.c.l.b16 %v2227
      %v2420 = vunpack.c.h.b16 %v2227
      %v2421 = vunpack.c.l.b16 %v2228
      %v2422 = vunpack.c.h.b16 %v2228
      %v2423 = vunpack.c.l.b16 %v2229
      %v2424 = vunpack.c.h.b16 %v2229
      %v2425 = vunpack.c.l.b16 %v2230
      %v2426 = vunpack.c.h.b16 %v2230
      %v2427 = vunpack.c.l.b16 %v2231
      %v2428 = vunpack.c.h.b16 %v2231
      %v2429 = vunpack.c.l.b16 %v2232
      %v2430 = vunpack.c.h.b16 %v2232
      %v2431 = vunpack.c.l.b16 %v2233
      %v2432 = vunpack.c.h.b16 %v2233
      %v2433 = vunpack.c.l.b16 %v2234
      %v2434 = vunpack.c.h.b16 %v2234
      %v2435 = vunpack.c.l.b16 %v2235
      %v2436 = vunpack.c.h.b16 %v2235
      %v2437 = vunpack.c.l.b16 %v2236
      %v2438 = vunpack.c.h.b16 %v2236
      %v2439 = vunpack.c.l.b16 %v2237
      %v2440 = vunpack.c.h.b16 %v2237
      %v2441 = vunpack.c.l.b16 %v2238
      %v2442 = vunpack.c.h.b16 %v2238
      %v2443 = vunpack.c.l.b16 %v2239
      %v2444 = vunpack.c.h.b16 %v2239
      %v2445 = vunpack.c.l.b16 %v2240
      %v2446 = vunpack.c.h.b16 %v2240
      %v2447 = vunpack.c.l.b16 %v2241
      %v2448 = vunpack.c.h.b16 %v2241
      %v2449 = vunpack.c.l.b16 %v2242
      %v2450 = vunpack.c.h.b16 %v2242
      %v2451 = vunpack.c.l.b16 %v2243
      %v2452 = vunpack.c.h.b16 %v2243
      %v2453 = vunpack.c.l.b16 %v2244
      %v2454 = vunpack.c.h.b16 %v2244
      %v2455 = vunpack.c.l.b16 %v2245
      %v2456 = vunpack.c.h.b16 %v2245
      %v2457 = vunpack.c.l.b16 %v2246
      %v2458 = vunpack.c.h.b16 %v2246
      %v2459 = vunpack.c.l.b16 %v2247
      %v2460 = vunpack.c.h.b16 %v2247
      %v2461 = vunpack.c.l.b16 %v2248
      %v2462 = vunpack.c.h.b16 %v2248
      %v2463 = vunpack.c.l.b16 %v2249
      %v2464 = vunpack.c.h.b16 %v2249
      %v2465 = vunpack.c.l.b16 %v2250
      %v2466 = vunpack.c.h.b16 %v2250
      %v2467 = vunpack.c.l.b16 %v2251
      %v2468 = vunpack.c.h.b16 %v2251
      %v2469 = vunpack.c.l.b16 %v2252
      %v2470 = vunpack.c.h.b16 %v2252
      %v2471 = vunpack.c.l.b16 %v2253
      %v2472 = vunpack.c.h.b16 %v2253
      %v2473 = vunpack.c.l.b16 %v2254
      %v2474 = vunpack.c.h.b16 %v2254
      %v2475 = vunpack.c.l.b16 %v2255
      %v2476 = vunpack.c.h.b16 %v2255
      %v2477 = vunpack.c.l.b16 %v2256
      %v2478 = vunpack.c.h.b16 %v2256
      %v2479 = vunpack.c.l.b16 %v2257
      %v2480 = vunpack.c.h.b16 %v2257
      %v2481 = vunpack.c.l.b16 %v2258
      %v2482 = vunpack.c.h.b16 %v2258
      %v2483 = vunpack.c.l.b16 %v2259
      %v2484 = vunpack.c.h.b16 %v2259
      %v2485 = vunpack.c.l.b16 %v2260
      %v2486 = vunpack.c.h.b16 %v2260
      %v2487 = vunpack.c.l.b16 %v2261
      %v2488 = vunpack.c.h.b16 %v2261
      %v2489 = vunpack.c.l.b16 %v2262
      %v2490 = vunpack.c.h.b16 %v2262
      %v2491 = vunpack.c.l.b16 %v2263
      %v2492 = vunpack.c.h.b16 %v2263
      %v2493 = vunpack.c.l.b16 %v2264
      %v2494 = vunpack.c.h.b16 %v2264
      %v2495 = vunpack.c.l.b16 %v2265
      %v2496 = vunpack.c.h.b16 %v2265
      %v2497 = vunpack.c.l.b16 %v2266
      %v2498 = vunpack.c.h.b16 %v2266
      %v2499 = vunpack.c.l.b16 %v2267
      %v2500 = vunpack.c.h.b16 %v2267
      %v2501 = vunpack.c.l.b16 %v2268
      %v2502 = vunpack.c.h.b16 %v2268
      %v2503 = vunpack.c.l.b16 %v2269
      %v2504 = vunpack.c.h.b16 %v2269
      %v2505 = vunpack.c.l.b16 %v2270
      %v2506 = vunpack.c.h.b16 %v2270
      %v2507 = vpack.c.b16 %v2381, %v2379
      %v2508 = vpack.c.b16 %v2382, %v2380
      %v2509 = vpack.c.b16 %v2385, %v2383
      %v2510 = vpack.c.b16 %v2386, %v2384
      %v2511 = vpack.c.b16 %v2389, %v2387
      %v2512 = vpack.c.b16 %v2390, %v2388
      %v2513 = vpack.c.b16 %v2393, %v2391
      %v2514 = vpack.c.b16 %v2394, %v2392
      %v2515 = vpack.c.b16 %v2397, %v2395
      %v2516 = vpack.c.b16 %v2398, %v2396
      %v2517 = vpack.c.b16 %v2401, %v2399
      %v2518 = vpack.c.b16 %v2402, %v2400
      %v2519 = vpack.c.b16 %v2405, %v2403
      %v2520 = vpack.c.b16 %v2406, %v2404
      %v2521 = vpack.c.b16 %v2409, %v2407
      %v2522 = vpack.c.b16 %v2410, %v2408
      %v2523 = vpack.c.b16 %v2413, %v2411
      %v2524 = vpack.c.b16 %v2414, %v2412
      %v2525 = vpack.c.b16 %v2417, %v2415
      %v2526 = vpack.c.b16 %v2418, %v2416
      %v2527 = vpack.c.b16 %v2421, %v2419
      %v2528 = vpack.c.b16 %v2422, %v2420
      %v2529 = vpack.c.b16 %v2425, %v2423
      %v2530 = vpack.c.b16 %v2426, %v2424
      %v2531 = vpack.c.b16 %v2429, %v2427
      %v2532 = vpack.c.b16 %v2430, %v2428
      %v2533 = vpack.c.b16 %v2433, %v2431
      %v2534 = vpack.c.b16 %v2434, %v2432
      %v2535 = vpack.c.b16 %v2437, %v2435
      %v2536 = vpack.c.b16 %v2438, %v2436
      %v2537 = vpack.c.b16 %v2441, %v2439
      %v2538 = vpack.c.b16 %v2442, %v2440
      %v2539 = vpack.c.b16 %v2445, %v2443
      %v2540 = vpack.c.b16 %v2446, %v2444
      %v2541 = vpack.c.b16 %v2449, %v2447
      %v2542 = vpack.c.b16 %v2450, %v2448
      %v2543 = vpack.c.b16 %v2453, %v2451
      %v2544 = vpack.c.b16 %v2454, %v2452
      %v2545 = vpack.c.b16 %v2457, %v2455
      %v2546 = vpack.c.b16 %v2458, %v2456
      %v2547 = vpack.c.b16 %v2461, %v2459
      %v2548 = vpack.c.b16 %v2462, %v2460
      %v2549 = vpack.c.b16 %v2465, %v2463
      %v2550 = vpack.c.b16 %v2466, %v2464
      %v2551 = vpack.c.b16 %v2469, %v2467
      %v2552 = vpack.c.b16 %v2470, %v2468
      %v2553 = vpack.c.b16 %v2473, %v2471
      %v2554 = vpack.c.b16 %v2474, %v2472
      %v2555 = vpack.c.b16 %v2477, %v2475
      %v2556 = vpack.c.b16 %v2478, %v2476
      %v2557 = vpack.c.b16 %v2481, %v2479
      %v2558 = vpack.c.b16 %v2482, %v2480
      %v2559 = vpack.c.b16 %v2485, %v2483
      %v2560 = vpack.c.b16 %v2486, %v2484
      %v2561 = vpack.c.b16 %v2489, %v2487
      %v2562 = vpack.c.b16 %v2490, %v2488
      %v2563 = vpack.c.b16 %v2493, %v2491
      %v2564 = vpack.c.b16 %v2494, %v2492
      %v2565 = vpack.c.b16 %v2497, %v2495
      %v2566 = vpack.c.b16 %v2498, %v2496
      %v2567 = vpack.c.b16 %v2501, %v2499
      %v2568 = vpack.c.b16 %v2502, %v2500
      %v2569 = vpack.c.b16 %v2505, %v2503
      %v2570 = vpack.c.b16 %v2506, %v2504
      %2635 = vmatprep.subr.bf16.mxu0 %v2508
      %2636 = vmatpush1.bf16.msra.mxu0 %v2507
      %2637 = vmatprep.subr.bf16.mxu0 %v2510
      %2638 = vmatpush1.bf16.msra.mxu0 %v2509
      %2639 = vmatprep.subr.bf16.mxu0 %v2512
      %2640 = vmatpush1.bf16.msra.mxu0 %v2511
      %2641 = vmatprep.subr.bf16.mxu0 %v2514
      %2642 = vmatpush1.bf16.msra.mxu0 %v2513
      %2643 = vmatprep.subr.bf16.mxu0 %v2516
      %2644 = vmatpush1.bf16.msra.mxu0 %v2515
      %2645 = vmatprep.subr.bf16.mxu0 %v2518
      %2646 = vmatpush1.bf16.msra.mxu0 %v2517
      %2647 = vmatprep.subr.bf16.mxu0 %v2520
      %2648 = vmatpush1.bf16.msra.mxu0 %v2519
      %2649 = vmatprep.subr.bf16.mxu0 %v2522
      %2650 = vmatpush1.bf16.msra.mxu0 %v2521
      %2651 = vmatprep.subr.bf16.mxu0 %v2524
      %2652 = vmatpush1.bf16.msra.mxu0 %v2523
      %2653 = vmatprep.subr.bf16.mxu0 %v2526
      %2654 = vmatpush1.bf16.msra.mxu0 %v2525
      %2655 = vmatprep.subr.bf16.mxu0 %v2528
      %2656 = vmatpush1.bf16.msra.mxu0 %v2527
      %2657 = vmatprep.subr.bf16.mxu0 %v2530
      %2658 = vmatpush1.bf16.msra.mxu0 %v2529
      %2659 = vmatprep.subr.bf16.mxu0 %v2532
      %2660 = vmatpush1.bf16.msra.mxu0 %v2531
      %2661 = vmatprep.subr.bf16.mxu0 %v2534
      %2662 = vmatpush1.bf16.msra.mxu0 %v2533
      %2663 = vmatprep.subr.bf16.mxu0 %v2536
      %2664 = vmatpush1.bf16.msra.mxu0 %v2535
      %2665 = vmatprep.subr.bf16.mxu0 %v2538
      %2666 = vmatpush1.bf16.msra.mxu0 %v2537
      %2667 = vmatprep.mubr.bf16.mxu0 %v2272
      %2668 = vmatmul.mubr.bf16.gmra.mrb[0].mxu0 %v2271
      %v2669 = vpop.f32.mrb[0].mxu0
      %v2670 = vadd.f32 %v2308, %v2669
      %v2671 = vpop.f32.mrb[0].mxu0
      %v2672 = vadd.f32 %v2312, %v2671
      %v2673 = vpop.f32.mrb[0].mxu0
      %v2674 = vadd.f32 %v2308, %v2673
      %v2675 = vpop.f32.mrb[0].mxu0
      %v2676 = vadd.f32 %v2312, %v2675
      %2677 = vmatprep.mubr.bf16.mxu0 %v2276
      %2678 = vmatmul.mubr.bf16.gmra.mrb[0].mxu0 %v2275
      %v2679 = vpop.f32.mrb[0].mxu0
      %v2680 = vadd.f32 %v2308, %v2679
      %v2681 = vpop.f32.mrb[0].mxu0
      %v2682 = vadd.f32 %v2312, %v2681
      %v2683 = vpop.f32.mrb[0].mxu0
      %v2684 = vadd.f32 %v2308, %v2683
      %v2685 = vpop.f32.mrb[0].mxu0
      %v2686 = vadd.f32 %v2312, %v2685
      %2687 = vmatprep.mubr.bf16.mxu0 %v2280
      %2688 = vmatmul.mubr.bf16.gmra.mrb[0].mxu0 %v2279
      %v2689 = vpop.f32.mrb[0].mxu0
      %v2690 = vadd.f32 %v2308, %v2689
      %v2691 = vpop.f32.mrb[0].mxu0
      %v2692 = vadd.f32 %v2312, %v2691
      %v2693 = vpop.f32.mrb[0].mxu0
      %v2694 = vadd.f32 %v2308, %v2693
      %v2695 = vpop.f32.mrb[0].mxu0
      %v2696 = vadd.f32 %v2312, %v2695
      %2697 = vmatprep.mubr.bf16.mxu0 %v2284
      %2698 = vmatmul.mubr.bf16.gmra.mrb[0].mxu0 %v2283
      %v2699 = vpop.f32.mrb[0].mxu0
      %v2700 = vadd.f32 %v2308, %v2699
      %v2701 = vpop.f32.mrb[0].mxu0
      %v2702 = vadd.f32 %v2312, %v2701
      %v2703 = vpop.f32.mrb[0].mxu0
      %v2704 = vadd.f32 %v2308, %v2703
      %v2705 = vpop.f32.mrb[0].mxu0
      %v2706 = vadd.f32 %v2312, %v2705
      %2707 = vmatprep.mubr.bf16.mxu0 %v2288
      %2708 = vmatmul.mubr.bf16.gmra.mrb[0].mxu0 %v2287
      %v2709 = vpop.f32.mrb[0].mxu0
      %v2710 = vadd.f32 %v2308, %v2709
      %v2711 = vpop.f32.mrb[0].mxu0
      %v2712 = vadd.f32 %v2312, %v2711
      %v2713 = vpop.f32.mrb[0].mxu0
      %v2714 = vadd.f32 %v2308, %v2713
      %v2715 = vpop.f32.mrb[0].mxu0
      %v2716 = vadd.f32 %v2312, %v2715
      %2717 = vmatprep.mubr.bf16.mxu0 %v2292
      %2718 = vmatmul.mubr.bf16.gmra.mrb[0].mxu0 %v2291
      %v2719 = vpop.f32.mrb[0].mxu0
      %v2720 = vadd.f32 %v2308, %v2719
      %v2721 = vpop.f32.mrb[0].mxu0
      %v2722 = vadd.f32 %v2312, %v2721
      %v2723 = vpop.f32.mrb[0].mxu0
      %v2724 = vadd.f32 %v2308, %v2723
      %v2725 = vpop.f32.mrb[0].mxu0
      %v2726 = vadd.f32 %v2312, %v2725
      %2727 = vmatprep.mubr.bf16.mxu0 %v2296
      %2728 = vmatmul.mubr.bf16.gmra.mrb[0].mxu0 %v2295
      %v2729 = vpop.f32.mrb[0].mxu0
      %v2730 = vadd.f32 %v2308, %v2729
      %v2731 = vpop.f32.mrb[0].mxu0
      %v2732 = vadd.f32 %v2312, %v2731
      %v2733 = vpop.f32.mrb[0].mxu0
      %v2734 = vadd.f32 %v2308, %v2733
      %v2735 = vpop.f32.mrb[0].mxu0
      %v2736 = vadd.f32 %v2312, %v2735
      %2737 = vmatprep.mubr.bf16.mxu0 %v2300
      %2738 = vmatmul.mubr.bf16.gmra.mrb[0].mxu0 %v2299
      %v2739 = vpop.f32.mrb[0].mxu0
      %v2740 = vadd.f32 %v2308, %v2739
      %v2741 = vpop.f32.mrb[0].mxu0
      %v2742 = vadd.f32 %v2312, %v2741
      %v2743 = vpop.f32.mrb[0].mxu0
      %v2744 = vadd.f32 %v2308, %v2743
      %v2745 = vpop.f32.mrb[0].mxu0
      %v2746 = vadd.f32 %v2312, %v2745
      %2747 = vdwg.mxu0
      %2748 = vmatprep.subr.bf16.mxu0 %v2540
      %2749 = vmatpush1.bf16.msra.mxu0 %v2539
      %2750 = vmatprep.subr.bf16.mxu0 %v2542
      %2751 = vmatpush1.bf16.msra.mxu0 %v2541
      %2752 = vmatprep.subr.bf16.mxu0 %v2544
      %2753 = vmatpush1.bf16.msra.mxu0 %v2543
      %2754 = vmatprep.subr.bf16.mxu0 %v2546
      %2755 = vmatpush1.bf16.msra.mxu0 %v2545
      %2756 = vmatprep.subr.bf16.mxu0 %v2548
      %2757 = vmatpush1.bf16.msra.mxu0 %v2547
      %2758 = vmatprep.subr.bf16.mxu0 %v2550
      %2759 = vmatpush1.bf16.msra.mxu0 %v2549
      %2760 = vmatprep.subr.bf16.mxu0 %v2552
      %2761 = vmatpush1.bf16.msra.mxu0 %v2551
      %2762 = vmatprep.subr.bf16.mxu0 %v2554
      %2763 = vmatpush1.bf16.msra.mxu0 %v2553
      %2764 = vmatprep.subr.bf16.mxu0 %v2556
      %2765 = vmatpush1.bf16.msra.mxu0 %v2555
      %2766 = vmatprep.subr.bf16.mxu0 %v2558
      %2767 = vmatpush1.bf16.msra.mxu0 %v2557
      %2768 = vmatprep.subr.bf16.mxu0 %v2560
      %2769 = vmatpush1.bf16.msra.mxu0 %v2559
      %2770 = vmatprep.subr.bf16.mxu0 %v2562
      %2771 = vmatpush1.bf16.msra.mxu0 %v2561
      %2772 = vmatprep.subr.bf16.mxu0 %v2564
      %2773 = vmatpush1.bf16.msra.mxu0 %v2563
      %2774 = vmatprep.subr.bf16.mxu0 %v2566
      %2775 = vmatpush1.bf16.msra.mxu0 %v2565
      %2776 = vmatprep.subr.bf16.mxu0 %v2568
      %2777 = vmatpush1.bf16.msra.mxu0 %v2567
      %2778 = vmatprep.subr.bf16.mxu0 %v2570
      %2779 = vmatpush1.bf16.msra.mxu0 %v2569
      %2780 = vmatprep.mubr.bf16.mxu0 %v2274
      %2781 = vmatmul.mubr.bf16.gmra.mrb[0].mxu0 %v2273
      %v2782 = vpop.f32.mrb[0].mxu0
      %v2783 = vadd.f32 %v2670, %v2782
      %v2784 = vpop.f32.mrb[0].mxu0
      %v2785 = vadd.f32 %v2672, %v2784
      %v2786 = vpop.f32.mrb[0].mxu0
      %v2787 = vadd.f32 %v2674, %v2786
      %v2788 = vpop.f32.mrb[0].mxu0
      %v2789 = vadd.f32 %v2676, %v2788
      %2790 = vmatprep.mubr.bf16.mxu0 %v2278
      %2791 = vmatmul.mubr.bf16.gmra.mrb[0].mxu0 %v2277
      %v2792 = vpop.f32.mrb[0].mxu0
      %v2793 = vadd.f32 %v2680, %v2792
      %v2794 = vpop.f32.mrb[0].mxu0
      %v2795 = vadd.f32 %v2682, %v2794
      %v2796 = vpop.f32.mrb[0].mxu0
      %v2797 = vadd.f32 %v2684, %v2796
      %v2798 = vpop.f32.mrb[0].mxu0
      %v2799 = vadd.f32 %v2686, %v2798
      %2800 = vmatprep.mubr.bf16.mxu0 %v2282
      %2801 = vmatmul.mubr.bf16.gmra.mrb[0].mxu0 %v2281
      %v2802 = vpop.f32.mrb[0].mxu0
      %v2803 = vadd.f32 %v2690, %v2802
      %v2804 = vpop.f32.mrb[0].mxu0
      %v2805 = vadd.f32 %v2692, %v2804
      %v2806 = vpop.f32.mrb[0].mxu0
      %v2807 = vadd.f32 %v2694, %v2806
      %v2808 = vpop.f32.mrb[0].mxu0
      %v2809 = vadd.f32 %v2696, %v2808
      %2810 = vmatprep.mubr.bf16.mxu0 %v2286
      %2811 = vmatmul.mubr.bf16.gmra.mrb[0].mxu0 %v2285
      %v2812 = vpop.f32.mrb[0].mxu0
      %v2813 = vadd.f32 %v2700, %v2812
      %v2814 = vpop.f32.mrb[0].mxu0
      %v2815 = vadd.f32 %v2702, %v2814
      %v2816 = vpop.f32.mrb[0].mxu0
      %v2817 = vadd.f32 %v2704, %v2816
      %v2818 = vpop.f32.mrb[0].mxu0
      %v2819 = vadd.f32 %v2706, %v2818
      %2820 = vmatprep.mubr.bf16.mxu0 %v2290
      %2821 = vmatmul.mubr.bf16.gmra.mrb[0].mxu0 %v2289
      %v2822 = vpop.f32.mrb[0].mxu0
      %v2823 = vadd.f32 %v2710, %v2822
      %v2824 = vpop.f32.mrb[0].mxu0
      %v2825 = vadd.f32 %v2712, %v2824
      %v2826 = vpop.f32.mrb[0].mxu0
      %v2827 = vadd.f32 %v2714, %v2826
      %v2828 = vpop.f32.mrb[0].mxu0
      %v2829 = vadd.f32 %v2716, %v2828
      %2830 = vmatprep.mubr.bf16.mxu0 %v2294
      %2831 = vmatmul.mubr.bf16.gmra.mrb[0].mxu0 %v2293
      %v2832 = vpop.f32.mrb[0].mxu0
      %v2833 = vadd.f32 %v2720, %v2832
      %v2834 = vpop.f32.mrb[0].mxu0
      %v2835 = vadd.f32 %v2722, %v2834
      %v2836 = vpop.f32.mrb[0].mxu0
      %v2837 = vadd.f32 %v2724, %v2836
      %v2838 = vpop.f32.mrb[0].mxu0
      %v2839 = vadd.f32 %v2726, %v2838
      %2840 = vmatprep.mubr.bf16.mxu0 %v2298
      %2841 = vmatmul.mubr.bf16.gmra.mrb[0].mxu0 %v2297
      %v2842 = vpop.f32.mrb[0].mxu0
      %v2843 = vadd.f32 %v2730, %v2842
      %v2844 = vpop.f32.mrb[0].mxu0
      %v2845 = vadd.f32 %v2732, %v2844
      %v2846 = vpop.f32.mrb[0].mxu0
      %v2847 = vadd.f32 %v2734, %v2846
      %v2848 = vpop.f32.mrb[0].mxu0
      %v2849 = vadd.f32 %v2736, %v2848
      %2850 = vmatprep.mubr.bf16.mxu0 %v2302
      %2851 = vmatmul.mubr.bf16.gmra.mrb[0].mxu0 %v2301
      %v2852 = vpop.f32.mrb[0].mxu0
      %v2853 = vadd.f32 %v2740, %v2852
      %v2854 = vpop.f32.mrb[0].mxu0
      %v2855 = vadd.f32 %v2742, %v2854
      %v2856 = vpop.f32.mrb[0].mxu0
      %v2857 = vadd.f32 %v2744, %v2856
      %v2858 = vpop.f32.mrb[0].mxu0
      %v2859 = vadd.f32 %v2746, %v2858
      %2860 = vdwg.mxu0
      %v2861 = vmax.f32 %v2783, 0.0
      %v2862 = vmax.f32 %v2785, 0.0
      %v2863 = vmax.f32 %v2787, 0.0
      %v2864 = vmax.f32 %v2789, 0.0
      %v2865 = vmax.f32 %v2793, 0.0
      %v2866 = vmax.f32 %v2795, 0.0
      %v2867 = vmax.f32 %v2797, 0.0
      %v2868 = vmax.f32 %v2799, 0.0
      %v2869 = vmax.f32 %v2803, 0.0
      %v2870 = vmax.f32 %v2805, 0.0
      %v2871 = vmax.f32 %v2807, 0.0
      %v2872 = vmax.f32 %v2809, 0.0
      %v2873 = vmax.f32 %v2813, 0.0
      %v2874 = vmax.f32 %v2815, 0.0
      %v2875 = vmax.f32 %v2817, 0.0
      %v2876 = vmax.f32 %v2819, 0.0
      %v2877 = vmax.f32 %v2823, 0.0
      %v2878 = vmax.f32 %v2825, 0.0
      %v2879 = vmax.f32 %v2827, 0.0
      %v2880 = vmax.f32 %v2829, 0.0
      %v2881 = vmax.f32 %v2833, 0.0
      %v2882 = vmax.f32 %v2835, 0.0
      %v2883 = vmax.f32 %v2837, 0.0
      %v2884 = vmax.f32 %v2839, 0.0
      %v2885 = vmax.f32 %v2843, 0.0
      %v2886 = vmax.f32 %v2845, 0.0
      %v2887 = vmax.f32 %v2847, 0.0
      %v2888 = vmax.f32 %v2849, 0.0
      %v2889 = vmax.f32 %v2853, 0.0
      %v2890 = vmax.f32 %v2855, 0.0
      %v2891 = vmax.f32 %v2857, 0.0
      %v2892 = vmax.f32 %v2859, 0.0
      %v2893 = vld [vmem:[%s7] sm:$0xff]
      %v2894 = vld [vmem:[%s7 + $0x8] sm:$0xff]
      %v2895 = vld [vmem:[%s7 + $0x10] sm:$0xff]
      %v2896 = vld [vmem:[%s7 + $0x18] sm:$0xff]
      %v2897 = vld [vmem:[%s7 + $0x20] sm:$0xff]
      %v2898 = vld [vmem:[%s7 + $0x28] sm:$0xff]
      %v2899 = vld [vmem:[%s7 + $0x30] sm:$0xff]
      %v2900 = vld [vmem:[%s7 + $0x38] sm:$0xff]
      %v2901 = vld [vmem:[%s7 + $0x40] sm:$0xff]
      %v2902 = vld [vmem:[%s7 + $0x48] sm:$0xff]
      %v2903 = vld [vmem:[%s7 + $0x50] sm:$0xff]
      %v2904 = vld [vmem:[%s7 + $0x58] sm:$0xff]
      %v2905 = vld [vmem:[%s7 + $0x60] sm:$0xff]
      %v2906 = vld [vmem:[%s7 + $0x68] sm:$0xff]
      %v2907 = vld [vmem:[%s7 + $0x70] sm:$0xff]
      %v2908 = vld [vmem:[%s7 + $0x78] sm:$0xff]
      %v2909 = vld [vmem:[%s7 + $0x80] sm:$0xff]
      %v2910 = vld [vmem:[%s7 + $0x88] sm:$0xff]
      %v2911 = vld [vmem:[%s7 + $0x90] sm:$0xff]
      %v2912 = vld [vmem:[%s7 + $0x98] sm:$0xff]
      %v2913 = vld [vmem:[%s7 + $0xa0] sm:$0xff]
      %v2914 = vld [vmem:[%s7 + $0xa8] sm:$0xff]
      %v2915 = vld [vmem:[%s7 + $0xb0] sm:$0xff]
      %v2916 = vld [vmem:[%s7 + $0xb8] sm:$0xff]
      %v2917 = vld [vmem:[%s7 + $0xc0] sm:$0xff]
      %v2918 = vld [vmem:[%s7 + $0xc8] sm:$0xff]
      %v2919 = vld [vmem:[%s7 + $0xd0] sm:$0xff]
      %v2920 = vld [vmem:[%s7 + $0xd8] sm:$0xff]
      %v2921 = vld [vmem:[%s7 + $0xe0] sm:$0xff]
      %v2922 = vld [vmem:[%s7 + $0xe8] sm:$0xff]
      %v2923 = vld [vmem:[%s7 + $0xf0] sm:$0xff]
      %v2924 = vld [vmem:[%s7 + $0xf8] sm:$0xff]
      %v2925 = vpack.c.bf16 %v2863, %v2861
      %v2926 = vpack.c.bf16 %v2864, %v2862
      %v2927 = vpack.c.bf16 %v2867, %v2865
      %v2928 = vpack.c.bf16 %v2868, %v2866
      %v2929 = vpack.c.bf16 %v2871, %v2869
      %v2930 = vpack.c.bf16 %v2872, %v2870
      %v2931 = vpack.c.bf16 %v2875, %v2873
      %v2932 = vpack.c.bf16 %v2876, %v2874
      %v2933 = vpack.c.bf16 %v2879, %v2877
      %v2934 = vpack.c.bf16 %v2880, %v2878
      %v2935 = vpack.c.bf16 %v2883, %v2881
      %v2936 = vpack.c.bf16 %v2884, %v2882
      %v2937 = vpack.c.bf16 %v2887, %v2885
      %v2938 = vpack.c.bf16 %v2888, %v2886
      %v2939 = vpack.c.bf16 %v2891, %v2889
      %v2940 = vpack.c.bf16 %v2892, %v2890
      %v2941 = vld [vmem:[%s3 + $0x6] sm:$0x3]
      %v2943 = vlaneseq
      %v2944 = vshrl.u32 %v2943, 7
      %v2945 = vsub.s32 0, %v2944
      %v2946 = vrot.slane %v2941, %v2945
      %v2947 = vlaneseq
      %v2948 = vshrl.u32 %v2947, 7
      %v2949 = vsub.s32 1, %v2948
      %v2950 = vrot.slane %v2941, %v2949
      %v2985 = vunpack.c.l.b16 %v2893
      %v2986 = vunpack.c.h.b16 %v2893
      %v2987 = vunpack.c.l.b16 %v2894
      %v2988 = vunpack.c.h.b16 %v2894
      %v2989 = vunpack.c.l.b16 %v2895
      %v2990 = vunpack.c.h.b16 %v2895
      %v2991 = vunpack.c.l.b16 %v2896
      %v2992 = vunpack.c.h.b16 %v2896
      %v2993 = vunpack.c.l.b16 %v2897
      %v2994 = vunpack.c.h.b16 %v2897
      %v2995 = vunpack.c.l.b16 %v2898
      %v2996 = vunpack.c.h.b16 %v2898
      %v2997 = vunpack.c.l.b16 %v2899
      %v2998 = vunpack.c.h.b16 %v2899
      %v2999 = vunpack.c.l.b16 %v2900
      %v3000 = vunpack.c.h.b16 %v2900
      %v3001 = vunpack.c.l.b16 %v2901
      %v3002 = vunpack.c.h.b16 %v2901
      %v3003 = vunpack.c.l.b16 %v2902
      %v3004 = vunpack.c.h.b16 %v2902
      %v3005 = vunpack.c.l.b16 %v2903
      %v3006 = vunpack.c.h.b16 %v2903
      %v3007 = vunpack.c.l.b16 %v2904
      %v3008 = vunpack.c.h.b16 %v2904
      %v3009 = vunpack.c.l.b16 %v2905
      %v3010 = vunpack.c.h.b16 %v2905
      %v3011 = vunpack.c.l.b16 %v2906
      %v3012 = vunpack.c.h.b16 %v2906
      %v3013 = vunpack.c.l.b16 %v2907
      %v3014 = vunpack.c.h.b16 %v2907
      %v3015 = vunpack.c.l.b16 %v2908
      %v3016 = vunpack.c.h.b16 %v2908
      %v3017 = vunpack.c.l.b16 %v2909
      %v3018 = vunpack.c.h.b16 %v2909
      %v3019 = vunpack.c.l.b16 %v2910
      %v3020 = vunpack.c.h.b16 %v2910
      %v3021 = vunpack.c.l.b16 %v2911
      %v3022 = vunpack.c.h.b16 %v2911
      %v3023 = vunpack.c.l.b16 %v2912
      %v3024 = vunpack.c.h.b16 %v2912
      %v3025 = vunpack.c.l.b16 %v2913
      %v3026 = vunpack.c.h.b16 %v2913
      %v3027 = vunpack.c.l.b16 %v2914
      %v3028 = vunpack.c.h.b16 %v2914
      %v3029 = vunpack.c.l.b16 %v2915
      %v3030 = vunpack.c.h.b16 %v2915
      %v3031 = vunpack.c.l.b16 %v2916
      %v3032 = vunpack.c.h.b16 %v2916
      %v3033 = vunpack.c.l.b16 %v2917
      %v3034 = vunpack.c.h.b16 %v2917
      %v3035 = vunpack.c.l.b16 %v2918
      %v3036 = vunpack.c.h.b16 %v2918
      %v3037 = vunpack.c.l.b16 %v2919
      %v3038 = vunpack.c.h.b16 %v2919
      %v3039 = vunpack.c.l.b16 %v2920
      %v3040 = vunpack.c.h.b16 %v2920
      %v3041 = vunpack.c.l.b16 %v2921
      %v3042 = vunpack.c.h.b16 %v2921
      %v3043 = vunpack.c.l.b16 %v2922
      %v3044 = vunpack.c.h.b16 %v2922
      %v3045 = vunpack.c.l.b16 %v2923
      %v3046 = vunpack.c.h.b16 %v2923
      %v3047 = vunpack.c.l.b16 %v2924
      %v3048 = vunpack.c.h.b16 %v2924
      %v3049 = vpack.c.b16 %v2987, %v2985
      %v3050 = vpack.c.b16 %v2988, %v2986
      %v3051 = vpack.c.b16 %v2991, %v2989
      %v3052 = vpack.c.b16 %v2992, %v2990
      %v3053 = vpack.c.b16 %v2995, %v2993
      %v3054 = vpack.c.b16 %v2996, %v2994
      %v3055 = vpack.c.b16 %v2999, %v2997
      %v3056 = vpack.c.b16 %v3000, %v2998
      %v3057 = vpack.c.b16 %v3003, %v3001
      %v3058 = vpack.c.b16 %v3004, %v3002
      %v3059 = vpack.c.b16 %v3007, %v3005
      %v3060 = vpack.c.b16 %v3008, %v3006
      %v3061 = vpack.c.b16 %v3011, %v3009
      %v3062 = vpack.c.b16 %v3012, %v3010
      %v3063 = vpack.c.b16 %v3015, %v3013
      %v3064 = vpack.c.b16 %v3016, %v3014
      %v3065 = vpack.c.b16 %v3019, %v3017
      %v3066 = vpack.c.b16 %v3020, %v3018
      %v3067 = vpack.c.b16 %v3023, %v3021
      %v3068 = vpack.c.b16 %v3024, %v3022
      %v3069 = vpack.c.b16 %v3027, %v3025
      %v3070 = vpack.c.b16 %v3028, %v3026
      %v3071 = vpack.c.b16 %v3031, %v3029
      %v3072 = vpack.c.b16 %v3032, %v3030
      %v3073 = vpack.c.b16 %v3035, %v3033
      %v3074 = vpack.c.b16 %v3036, %v3034
      %v3075 = vpack.c.b16 %v3039, %v3037
      %v3076 = vpack.c.b16 %v3040, %v3038
      %v3077 = vpack.c.b16 %v3043, %v3041
      %v3078 = vpack.c.b16 %v3044, %v3042
      %v3079 = vpack.c.b16 %v3047, %v3045
      %v3080 = vpack.c.b16 %v3048, %v3046
      %3113 = vmatprep.subr.bf16.mxu0 %v3050
      %3114 = vmatpush1.bf16.msra.mxu0 %v3049
      %3115 = vmatprep.subr.bf16.mxu0 %v3052
      %3116 = vmatpush1.bf16.msra.mxu0 %v3051
      %3117 = vmatprep.subr.bf16.mxu0 %v3054
      %3118 = vmatpush1.bf16.msra.mxu0 %v3053
      %3119 = vmatprep.subr.bf16.mxu0 %v3056
      %3120 = vmatpush1.bf16.msra.mxu0 %v3055
      %3121 = vmatprep.subr.bf16.mxu0 %v3058
      %3122 = vmatpush1.bf16.msra.mxu0 %v3057
      %3123 = vmatprep.subr.bf16.mxu0 %v3060
      %3124 = vmatpush1.bf16.msra.mxu0 %v3059
      %3125 = vmatprep.subr.bf16.mxu0 %v3062
      %3126 = vmatpush1.bf16.msra.mxu0 %v3061
      %3127 = vmatprep.subr.bf16.mxu0 %v3064
      %3128 = vmatpush1.bf16.msra.mxu0 %v3063
      %3129 = vmatprep.subr.bf16.mxu0 %v3066
      %3130 = vmatpush1.bf16.msra.mxu0 %v3065
      %3131 = vmatprep.subr.bf16.mxu0 %v3068
      %3132 = vmatpush1.bf16.msra.mxu0 %v3067
      %3133 = vmatprep.subr.bf16.mxu0 %v3070
      %3134 = vmatpush1.bf16.msra.mxu0 %v3069
      %3135 = vmatprep.subr.bf16.mxu0 %v3072
      %3136 = vmatpush1.bf16.msra.mxu0 %v3071
      %3137 = vmatprep.subr.bf16.mxu0 %v3074
      %3138 = vmatpush1.bf16.msra.mxu0 %v3073
      %3139 = vmatprep.subr.bf16.mxu0 %v3076
      %3140 = vmatpush1.bf16.msra.mxu0 %v3075
      %3141 = vmatprep.subr.bf16.mxu0 %v3078
      %3142 = vmatpush1.bf16.msra.mxu0 %v3077
      %3143 = vmatprep.subr.bf16.mxu0 %v3080
      %3144 = vmatpush1.bf16.msra.mxu0 %v3079
      %3145 = vmatprep.mubr.bf16.mxu0 %v2926
      %3146 = vmatmul.mubr.bf16.gmra.mrb[0].mxu0 %v2925
      %v3147 = vpop.f32.mrb[0].mxu0
      %v3148 = vadd.f32 %v2946, %v3147
      %v3149 = vpop.f32.mrb[0].mxu0
      %v3150 = vadd.f32 %v2950, %v3149
      %v3151 = vpop.f32.mrb[0].mxu0
      %v3152 = vadd.f32 %v2946, %v3151
      %v3153 = vpop.f32.mrb[0].mxu0
      %v3154 = vadd.f32 %v2950, %v3153
      %3155 = vmatprep.mubr.bf16.mxu0 %v2928
      %3156 = vmatmul.mubr.bf16.gmra.mrb[0].mxu0 %v2927
      %v3157 = vpop.f32.mrb[0].mxu0
      %v3158 = vadd.f32 %v2946, %v3157
      %v3159 = vpop.f32.mrb[0].mxu0
      %v3160 = vadd.f32 %v2950, %v3159
      %v3161 = vpop.f32.mrb[0].mxu0
      %v3162 = vadd.f32 %v2946, %v3161
      %v3163 = vpop.f32.mrb[0].mxu0
      %v3164 = vadd.f32 %v2950, %v3163
      %3165 = vmatprep.mubr.bf16.mxu0 %v2930
      %3166 = vmatmul.mubr.bf16.gmra.mrb[0].mxu0 %v2929
      %v3167 = vpop.f32.mrb[0].mxu0
      %v3168 = vadd.f32 %v2946, %v3167
      %v3169 = vpop.f32.mrb[0].mxu0
      %v3170 = vadd.f32 %v2950, %v3169
      %v3171 = vpop.f32.mrb[0].mxu0
      %v3172 = vadd.f32 %v2946, %v3171
      %v3173 = vpop.f32.mrb[0].mxu0
      %v3174 = vadd.f32 %v2950, %v3173
      %3175 = vmatprep.mubr.bf16.mxu0 %v2932
      %3176 = vmatmul.mubr.bf16.gmra.mrb[0].mxu0 %v2931
      %v3177 = vpop.f32.mrb[0].mxu0
      %v3178 = vadd.f32 %v2946, %v3177
      %v3179 = vpop.f32.mrb[0].mxu0
      %v3180 = vadd.f32 %v2950, %v3179
      %v3181 = vpop.f32.mrb[0].mxu0
      %v3182 = vadd.f32 %v2946, %v3181
      %v3183 = vpop.f32.mrb[0].mxu0
      %v3184 = vadd.f32 %v2950, %v3183
      %3185 = vmatprep.mubr.bf16.mxu0 %v2934
      %3186 = vmatmul.mubr.bf16.gmra.mrb[0].mxu0 %v2933
      %v3187 = vpop.f32.mrb[0].mxu0
      %v3188 = vadd.f32 %v2946, %v3187
      %v3189 = vpop.f32.mrb[0].mxu0
      %v3190 = vadd.f32 %v2950, %v3189
      %v3191 = vpop.f32.mrb[0].mxu0
      %v3192 = vadd.f32 %v2946, %v3191
      %v3193 = vpop.f32.mrb[0].mxu0
      %v3194 = vadd.f32 %v2950, %v3193
      %3195 = vmatprep.mubr.bf16.mxu0 %v2936
      %3196 = vmatmul.mubr.bf16.gmra.mrb[0].mxu0 %v2935
      %v3197 = vpop.f32.mrb[0].mxu0
      %v3198 = vadd.f32 %v2946, %v3197
      %v3199 = vpop.f32.mrb[0].mxu0
      %v3200 = vadd.f32 %v2950, %v3199
      %v3201 = vpop.f32.mrb[0].mxu0
      %v3202 = vadd.f32 %v2946, %v3201
      %v3203 = vpop.f32.mrb[0].mxu0
      %v3204 = vadd.f32 %v2950, %v3203
      %3205 = vmatprep.mubr.bf16.mxu0 %v2938
      %3206 = vmatmul.mubr.bf16.gmra.mrb[0].mxu0 %v2937
      %v3207 = vpop.f32.mrb[0].mxu0
      %v3208 = vadd.f32 %v2946, %v3207
      %v3209 = vpop.f32.mrb[0].mxu0
      %v3210 = vadd.f32 %v2950, %v3209
      %v3211 = vpop.f32.mrb[0].mxu0
      %v3212 = vadd.f32 %v2946, %v3211
      %v3213 = vpop.f32.mrb[0].mxu0
      %v3214 = vadd.f32 %v2950, %v3213
      %3215 = vmatprep.mubr.bf16.mxu0 %v2940
      %3216 = vmatmul.mubr.bf16.gmra.mrb[0].mxu0 %v2939
      %v3217 = vpop.f32.mrb[0].mxu0
      %v3218 = vadd.f32 %v2946, %v3217
      %v3219 = vpop.f32.mrb[0].mxu0
      %v3220 = vadd.f32 %v2950, %v3219
      %v3221 = vpop.f32.mrb[0].mxu0
      %v3222 = vadd.f32 %v2946, %v3221
      %v3223 = vpop.f32.mrb[0].mxu0
      %v3224 = vadd.f32 %v2950, %v3223
      %3225 = vdwg.mxu0
      %v3226 = vmax.f32 %v3148, 0.0
      %v3227 = vmax.f32 %v3150, 0.0
      %v3228 = vmax.f32 %v3152, 0.0
      %v3229 = vmax.f32 %v3154, 0.0
      %v3230 = vmax.f32 %v3158, 0.0
      %v3231 = vmax.f32 %v3160, 0.0
      %v3232 = vmax.f32 %v3162, 0.0
      %v3233 = vmax.f32 %v3164, 0.0
      %v3234 = vmax.f32 %v3168, 0.0
      %v3235 = vmax.f32 %v3170, 0.0
      %v3236 = vmax.f32 %v3172, 0.0
      %v3237 = vmax.f32 %v3174, 0.0
      %v3238 = vmax.f32 %v3178, 0.0
      %v3239 = vmax.f32 %v3180, 0.0
      %v3240 = vmax.f32 %v3182, 0.0
      %v3241 = vmax.f32 %v3184, 0.0
      %v3242 = vmax.f32 %v3188, 0.0
      %v3243 = vmax.f32 %v3190, 0.0
      %v3244 = vmax.f32 %v3192, 0.0
      %v3245 = vmax.f32 %v3194, 0.0
      %v3246 = vmax.f32 %v3198, 0.0
      %v3247 = vmax.f32 %v3200, 0.0
      %v3248 = vmax.f32 %v3202, 0.0
      %v3249 = vmax.f32 %v3204, 0.0
      %v3250 = vmax.f32 %v3208, 0.0
      %v3251 = vmax.f32 %v3210, 0.0
      %v3252 = vmax.f32 %v3212, 0.0
      %v3253 = vmax.f32 %v3214, 0.0
      %v3254 = vmax.f32 %v3218, 0.0
      %v3255 = vmax.f32 %v3220, 0.0
      %v3256 = vmax.f32 %v3222, 0.0
      %v3257 = vmax.f32 %v3224, 0.0
      %v3258 = vld [vmem:[%s8] sm:$0xf]
      %v3259 = vld [vmem:[%s8 + $0x4] sm:$0xf]
      %v3260 = vld [vmem:[%s8 + $0x8] sm:$0xf]
      %v3261 = vld [vmem:[%s8 + $0xc] sm:$0xf]
      %v3262 = vld [vmem:[%s8 + $0x10] sm:$0xf]
      %v3263 = vld [vmem:[%s8 + $0x14] sm:$0xf]
      %v3264 = vld [vmem:[%s8 + $0x18] sm:$0xf]
      %v3265 = vld [vmem:[%s8 + $0x1c] sm:$0xf]
      %v3266 = vld [vmem:[%s8 + $0x20] sm:$0xf]
      %v3267 = vld [vmem:[%s8 + $0x24] sm:$0xf]
      %v3268 = vld [vmem:[%s8 + $0x28] sm:$0xf]
      %v3269 = vld [vmem:[%s8 + $0x2c] sm:$0xf]
      %v3270 = vld [vmem:[%s8 + $0x30] sm:$0xf]
      %v3271 = vld [vmem:[%s8 + $0x34] sm:$0xf]
      %v3272 = vld [vmem:[%s8 + $0x38] sm:$0xf]
      %v3273 = vld [vmem:[%s8 + $0x3c] sm:$0xf]
      %v3274 = vld [vmem:[%s8 + $0x40] sm:$0xf]
      %v3275 = vld [vmem:[%s8 + $0x44] sm:$0xf]
      %v3276 = vld [vmem:[%s8 + $0x48] sm:$0xf]
      %v3277 = vld [vmem:[%s8 + $0x4c] sm:$0xf]
      %v3278 = vld [vmem:[%s8 + $0x50] sm:$0xf]
      %v3279 = vld [vmem:[%s8 + $0x54] sm:$0xf]
      %v3280 = vld [vmem:[%s8 + $0x58] sm:$0xf]
      %v3281 = vld [vmem:[%s8 + $0x5c] sm:$0xf]
      %v3282 = vld [vmem:[%s8 + $0x60] sm:$0xf]
      %v3283 = vld [vmem:[%s8 + $0x64] sm:$0xf]
      %v3284 = vld [vmem:[%s8 + $0x68] sm:$0xf]
      %v3285 = vld [vmem:[%s8 + $0x6c] sm:$0xf]
      %v3286 = vld [vmem:[%s8 + $0x70] sm:$0xf]
      %v3287 = vld [vmem:[%s8 + $0x74] sm:$0xf]
      %v3288 = vld [vmem:[%s8 + $0x78] sm:$0xf]
      %v3289 = vld [vmem:[%s8 + $0x7c] sm:$0xf]
      %v3290 = vpack.c.bf16 %v3228, %v3226
      %v3291 = vpack.c.bf16 %v3229, %v3227
      %v3292 = vpack.c.bf16 %v3232, %v3230
      %v3293 = vpack.c.bf16 %v3233, %v3231
      %v3294 = vpack.c.bf16 %v3236, %v3234
      %v3295 = vpack.c.bf16 %v3237, %v3235
      %v3296 = vpack.c.bf16 %v3240, %v3238
      %v3297 = vpack.c.bf16 %v3241, %v3239
      %v3298 = vpack.c.bf16 %v3244, %v3242
      %v3299 = vpack.c.bf16 %v3245, %v3243
      %v3300 = vpack.c.bf16 %v3248, %v3246
      %v3301 = vpack.c.bf16 %v3249, %v3247
      %v3302 = vpack.c.bf16 %v3252, %v3250
      %v3303 = vpack.c.bf16 %v3253, %v3251
      %v3304 = vpack.c.bf16 %v3256, %v3254
      %v3305 = vpack.c.bf16 %v3257, %v3255
      %v3306 = vld [vmem:[%s3 + $0x8] sm:$0x1]
      %v3308 = vlaneseq
      %v3309 = vshrl.u32 %v3308, 7
      %v3310 = vsub.s32 0, %v3309
      %v3311 = vrot.slane %v3306, %v3310
      %v3345 = vunpack.c.l.b16 %v3258
      %v3346 = vunpack.c.l.b16 %v3259
      %v3347 = vunpack.c.l.b16 %v3260
      %v3348 = vunpack.c.l.b16 %v3261
      %v3349 = vunpack.c.l.b16 %v3262
      %v3350 = vunpack.c.l.b16 %v3263
      %v3351 = vunpack.c.l.b16 %v3264
      %v3352 = vunpack.c.l.b16 %v3265
      %v3353 = vunpack.c.l.b16 %v3266
      %v3354 = vunpack.c.l.b16 %v3267
      %v3355 = vunpack.c.l.b16 %v3268
      %v3356 = vunpack.c.l.b16 %v3269
      %v3357 = vunpack.c.l.b16 %v3270
      %v3358 = vunpack.c.l.b16 %v3271
      %v3359 = vunpack.c.l.b16 %v3272
      %v3360 = vunpack.c.l.b16 %v3273
      %v3361 = vunpack.c.l.b16 %v3274
      %v3362 = vunpack.c.l.b16 %v3275
      %v3363 = vunpack.c.l.b16 %v3276
      %v3364 = vunpack.c.l.b16 %v3277
      %v3365 = vunpack.c.l.b16 %v3278
      %v3366 = vunpack.c.l.b16 %v3279
      %v3367 = vunpack.c.l.b16 %v3280
      %v3368 = vunpack.c.l.b16 %v3281
      %v3369 = vunpack.c.l.b16 %v3282
      %v3370 = vunpack.c.l.b16 %v3283
      %v3371 = vunpack.c.l.b16 %v3284
      %v3372 = vunpack.c.l.b16 %v3285
      %v3373 = vunpack.c.l.b16 %v3286
      %v3374 = vunpack.c.l.b16 %v3287
      %v3375 = vunpack.c.l.b16 %v3288
      %v3376 = vunpack.c.l.b16 %v3289
      %v3377 = vpack.c.b16 %v3346, %v3345
      %v3378 = vpack.c.b16 %v3348, %v3347
      %v3379 = vpack.c.b16 %v3350, %v3349
      %v3380 = vpack.c.b16 %v3352, %v3351
      %v3381 = vpack.c.b16 %v3354, %v3353
      %v3382 = vpack.c.b16 %v3356, %v3355
      %v3383 = vpack.c.b16 %v3358, %v3357
      %v3384 = vpack.c.b16 %v3360, %v3359
      %v3385 = vpack.c.b16 %v3362, %v3361
      %v3386 = vpack.c.b16 %v3364, %v3363
      %v3387 = vpack.c.b16 %v3366, %v3365
      %v3388 = vpack.c.b16 %v3368, %v3367
      %v3389 = vpack.c.b16 %v3370, %v3369
      %v3390 = vpack.c.b16 %v3372, %v3371
      %v3391 = vpack.c.b16 %v3374, %v3373
      %v3392 = vpack.c.b16 %v3376, %v3375
      %3409 = vmatprep.subr.bf16.mxu0 0
      %3410 = vmatpush1.bf16.msra.mxu0 %v3377
      %3411 = vmatprep.subr.bf16.mxu0 0
      %3412 = vmatpush1.bf16.msra.mxu0 %v3378
      %3413 = vmatprep.subr.bf16.mxu0 0
      %3414 = vmatpush1.bf16.msra.mxu0 %v3379
      %3415 = vmatprep.subr.bf16.mxu0 0
      %3416 = vmatpush1.bf16.msra.mxu0 %v3380
      %3417 = vmatprep.subr.bf16.mxu0 0
      %3418 = vmatpush1.bf16.msra.mxu0 %v3381
      %3419 = vmatprep.subr.bf16.mxu0 0
      %3420 = vmatpush1.bf16.msra.mxu0 %v3382
      %3421 = vmatprep.subr.bf16.mxu0 0
      %3422 = vmatpush1.bf16.msra.mxu0 %v3383
      %3423 = vmatprep.subr.bf16.mxu0 0
      %3424 = vmatpush1.bf16.msra.mxu0 %v3384
      %3425 = vmatprep.subr.bf16.mxu0 0
      %3426 = vmatpush1.bf16.msra.mxu0 %v3385
      %3427 = vmatprep.subr.bf16.mxu0 0
      %3428 = vmatpush1.bf16.msra.mxu0 %v3386
      %3429 = vmatprep.subr.bf16.mxu0 0
      %3430 = vmatpush1.bf16.msra.mxu0 %v3387
      %3431 = vmatprep.subr.bf16.mxu0 0
      %3432 = vmatpush1.bf16.msra.mxu0 %v3388
      %3433 = vmatprep.subr.bf16.mxu0 0
      %3434 = vmatpush1.bf16.msra.mxu0 %v3389
      %3435 = vmatprep.subr.bf16.mxu0 0
      %3436 = vmatpush1.bf16.msra.mxu0 %v3390
      %3437 = vmatprep.subr.bf16.mxu0 0
      %3438 = vmatpush1.bf16.msra.mxu0 %v3391
      %3439 = vmatprep.subr.bf16.mxu0 0
      %3440 = vmatpush1.bf16.msra.mxu0 %v3392
      %3441 = vmatprep.mubr.bf16.mxu0 %v3291
      %3442 = vmatmul.mubr.bf16.gmra.mrb[0].mxu0 %v3290
      %v3443 = vpop.f32.mrb[0].mxu0
      %v3444 = vadd.f32 %v3311, %v3443
      %v3445 = vpop.f32.mrb[0].mxu0
      %v3446 = vpop.f32.mrb[0].mxu0
      %v3447 = vadd.f32 %v3311, %v3446
      %v3448 = vpop.f32.mrb[0].mxu0
      %3449 = vmatprep.mubr.bf16.mxu0 %v3293
      %3450 = vmatmul.mubr.bf16.gmra.mrb[0].mxu0 %v3292
      %v3451 = vpop.f32.mrb[0].mxu0
      %v3452 = vadd.f32 %v3311, %v3451
      %v3453 = vpop.f32.mrb[0].mxu0
      %v3454 = vpop.f32.mrb[0].mxu0
      %v3455 = vadd.f32 %v3311, %v3454
      %v3456 = vpop.f32.mrb[0].mxu0
      %3457 = vmatprep.mubr.bf16.mxu0 %v3295
      %3458 = vmatmul.mubr.bf16.gmra.mrb[0].mxu0 %v3294
      %v3459 = vpop.f32.mrb[0].mxu0
      %v3460 = vadd.f32 %v3311, %v3459
      %v3461 = vpop.f32.mrb[0].mxu0
      %v3462 = vpop.f32.mrb[0].mxu0
      %v3463 = vadd.f32 %v3311, %v3462
      %v3464 = vpop.f32.mrb[0].mxu0
      %3465 = vmatprep.mubr.bf16.mxu0 %v3297
      %3466 = vmatmul.mubr.bf16.gmra.mrb[0].mxu0 %v3296
      %v3467 = vpop.f32.mrb[0].mxu0
      %v3468 = vadd.f32 %v3311, %v3467
      %v3469 = vpop.f32.mrb[0].mxu0
      %v3470 = vpop.f32.mrb[0].mxu0
      %v3471 = vadd.f32 %v3311, %v3470
      %v3472 = vpop.f32.mrb[0].mxu0
      %3473 = vmatprep.mubr.bf16.mxu0 %v3299
      %3474 = vmatmul.mubr.bf16.gmra.mrb[0].mxu0 %v3298
      %v3475 = vpop.f32.mrb[0].mxu0
      %v3476 = vadd.f32 %v3311, %v3475
      %v3477 = vpop.f32.mrb[0].mxu0
      %v3478 = vpop.f32.mrb[0].mxu0
      %v3479 = vadd.f32 %v3311, %v3478
      %v3480 = vpop.f32.mrb[0].mxu0
      %3481 = vmatprep.mubr.bf16.mxu0 %v3301
      %3482 = vmatmul.mubr.bf16.gmra.mrb[0].mxu0 %v3300
      %v3483 = vpop.f32.mrb[0].mxu0
      %v3484 = vadd.f32 %v3311, %v3483
      %v3485 = vpop.f32.mrb[0].mxu0
      %v3486 = vpop.f32.mrb[0].mxu0
      %v3487 = vadd.f32 %v3311, %v3486
      %v3488 = vpop.f32.mrb[0].mxu0
      %3489 = vmatprep.mubr.bf16.mxu0 %v3303
      %3490 = vmatmul.mubr.bf16.gmra.mrb[0].mxu0 %v3302
      %v3491 = vpop.f32.mrb[0].mxu0
      %v3492 = vadd.f32 %v3311, %v3491
      %v3493 = vpop.f32.mrb[0].mxu0
      %v3494 = vpop.f32.mrb[0].mxu0
      %v3495 = vadd.f32 %v3311, %v3494
      %v3496 = vpop.f32.mrb[0].mxu0
      %3497 = vmatprep.mubr.bf16.mxu0 %v3305
      %3498 = vmatmul.mubr.bf16.gmra.mrb[0].mxu0 %v3304
      %v3499 = vpop.f32.mrb[0].mxu0
      %v3500 = vadd.f32 %v3311, %v3499
      %v3501 = vpop.f32.mrb[0].mxu0
      %v3502 = vpop.f32.mrb[0].mxu0
      %v3503 = vadd.f32 %v3311, %v3502
      %v3504 = vpop.f32.mrb[0].mxu0
      %3505 = vdwg.mxu0
      %v3506 = vmax.f32 %v3444, 0.0
      %v3507 = vmax.f32 %v3447, 0.0
      %v3508 = vmax.f32 %v3452, 0.0
      %v3509 = vmax.f32 %v3455, 0.0
      %v3510 = vmax.f32 %v3460, 0.0
      %v3511 = vmax.f32 %v3463, 0.0
      %v3512 = vmax.f32 %v3468, 0.0
      %v3513 = vmax.f32 %v3471, 0.0
      %v3514 = vmax.f32 %v3476, 0.0
      %v3515 = vmax.f32 %v3479, 0.0
      %v3516 = vmax.f32 %v3484, 0.0
      %v3517 = vmax.f32 %v3487, 0.0
      %v3518 = vmax.f32 %v3492, 0.0
      %v3519 = vmax.f32 %v3495, 0.0
      %v3520 = vmax.f32 %v3500, 0.0
      %v3521 = vmax.f32 %v3503, 0.0
      %v3522 = vld [vmem:[%s11] sm:$0xf]
      %v3523 = vld [vmem:[%s11 + $0x4] sm:$0xf]
      %v3524 = vld [vmem:[%s11 + $0x8] sm:$0xf]
      %v3525 = vld [vmem:[%s11 + $0xc] sm:$0xf]
      %v3526 = vld [vmem:[%s11 + $0x10] sm:$0xf]
      %v3527 = vld [vmem:[%s11 + $0x14] sm:$0xf]
      %v3528 = vld [vmem:[%s11 + $0x18] sm:$0xf]
      %v3529 = vld [vmem:[%s11 + $0x1c] sm:$0xf]
      %v3530 = vld [vmem:[%s11 + $0x20] sm:$0xf]
      %v3531 = vld [vmem:[%s11 + $0x24] sm:$0xf]
      %v3532 = vld [vmem:[%s11 + $0x28] sm:$0xf]
      %v3533 = vld [vmem:[%s11 + $0x2c] sm:$0xf]
      %v3534 = vld [vmem:[%s11 + $0x30] sm:$0xf]
      %v3535 = vld [vmem:[%s11 + $0x34] sm:$0xf]
      %v3536 = vld [vmem:[%s11 + $0x38] sm:$0xf]
      %v3537 = vld [vmem:[%s11 + $0x3c] sm:$0xf]
      %v3538 = vpack.c.bf16 %v3507, %v3506
      %v3539 = vpack.c.bf16 %v3509, %v3508
      %v3540 = vpack.c.bf16 %v3511, %v3510
      %v3541 = vpack.c.bf16 %v3513, %v3512
      %v3542 = vpack.c.bf16 %v3515, %v3514
      %v3543 = vpack.c.bf16 %v3517, %v3516
      %v3544 = vpack.c.bf16 %v3519, %v3518
      %v3545 = vpack.c.bf16 %v3521, %v3520
      %v3546 = vld [vmem:[%s3 + $0xd] sm:$0x1]
      %v3548 = vlaneseq
      %v3549 = vshrl.u32 %v3548, 7
      %v3550 = vsub.s32 0, %v3549
      %v3551 = vrot.slane %v3546, %v3550
      %v3569 = vunpack.c.l.b16 %v3522
      %v3570 = vunpack.c.l.b16 %v3523
      %v3571 = vunpack.c.l.b16 %v3524
      %v3572 = vunpack.c.l.b16 %v3525
      %v3573 = vunpack.c.l.b16 %v3526
      %v3574 = vunpack.c.l.b16 %v3527
      %v3575 = vunpack.c.l.b16 %v3528
      %v3576 = vunpack.c.l.b16 %v3529
      %v3577 = vunpack.c.l.b16 %v3530
      %v3578 = vunpack.c.l.b16 %v3531
      %v3579 = vunpack.c.l.b16 %v3532
      %v3580 = vunpack.c.l.b16 %v3533
      %v3581 = vunpack.c.l.b16 %v3534
      %v3582 = vunpack.c.l.b16 %v3535
      %v3583 = vunpack.c.l.b16 %v3536
      %v3584 = vunpack.c.l.b16 %v3537
      %v3585 = vpack.c.b16 %v3570, %v3569
      %v3586 = vpack.c.b16 %v3572, %v3571
      %v3587 = vpack.c.b16 %v3574, %v3573
      %v3588 = vpack.c.b16 %v3576, %v3575
      %v3589 = vpack.c.b16 %v3578, %v3577
      %v3590 = vpack.c.b16 %v3580, %v3579
      %v3591 = vpack.c.b16 %v3582, %v3581
      %v3592 = vpack.c.b16 %v3584, %v3583
      %3601 = vmatprep.subr.bf16.mxu0 0
      %3602 = vmatpush1.bf16.msra.mxu0 %v3585
      %3603 = vmatprep.subr.bf16.mxu0 0
      %3604 = vmatpush1.bf16.msra.mxu0 %v3586
      %3605 = vmatprep.subr.bf16.mxu0 0
      %3606 = vmatpush1.bf16.msra.mxu0 %v3587
      %3607 = vmatprep.subr.bf16.mxu0 0
      %3608 = vmatpush1.bf16.msra.mxu0 %v3588
      %3609 = vmatprep.subr.bf16.mxu0 0
      %3610 = vmatpush1.bf16.msra.mxu0 %v3589
      %3611 = vmatprep.subr.bf16.mxu0 0
      %3612 = vmatpush1.bf16.msra.mxu0 %v3590
      %3613 = vmatprep.subr.bf16.mxu0 0
      %3614 = vmatpush1.bf16.msra.mxu0 %v3591
      %3615 = vmatprep.subr.bf16.mxu0 0
      %3616 = vmatpush1.bf16.msra.mxu0 %v3592
      %3617 = vmatprep.subr.bf16.mxu0 0
      %3618 = vmatpush1.bf16.msra.mxu0 0
      %3619 = vmatprep.subr.bf16.mxu0 0
      %3620 = vmatpush1.bf16.msra.mxu0 0
      %3621 = vmatprep.subr.bf16.mxu0 0
      %3622 = vmatpush1.bf16.msra.mxu0 0
      %3623 = vmatprep.subr.bf16.mxu0 0
      %3624 = vmatpush1.bf16.msra.mxu0 0
      %3625 = vmatprep.subr.bf16.mxu0 0
      %3626 = vmatpush1.bf16.msra.mxu0 0
      %3627 = vmatprep.subr.bf16.mxu0 0
      %3628 = vmatpush1.bf16.msra.mxu0 0
      %3629 = vmatprep.subr.bf16.mxu0 0
      %3630 = vmatpush1.bf16.msra.mxu0 0
      %3631 = vmatprep.subr.bf16.mxu0 0
      %3632 = vmatpush1.bf16.msra.mxu0 0
      %3633 = vmatprep.mubr.bf16.mxu0 0
      %3634 = vmatmul.mubr.bf16.gmra.mrb[0].mxu0 %v3538
      %v3635 = vpop.f32.mrb[0].mxu0
      %v3636 = vadd.f32 %v3551, %v3635
      %v3637 = vpop.f32.mrb[0].mxu0
      %v3638 = vpop.f32.mrb[0].mxu0
      %v3639 = vadd.f32 %v3551, %v3638
      %v3640 = vpop.f32.mrb[0].mxu0
      %3641 = vmatprep.mubr.bf16.mxu0 0
      %3642 = vmatmul.mubr.bf16.gmra.mrb[0].mxu0 %v3539
      %v3643 = vpop.f32.mrb[0].mxu0
      %v3644 = vadd.f32 %v3551, %v3643
      %v3645 = vpop.f32.mrb[0].mxu0
      %v3646 = vpop.f32.mrb[0].mxu0
      %v3647 = vadd.f32 %v3551, %v3646
      %v3648 = vpop.f32.mrb[0].mxu0
      %3649 = vmatprep.mubr.bf16.mxu0 0
      %3650 = vmatmul.mubr.bf16.gmra.mrb[0].mxu0 %v3540
      %v3651 = vpop.f32.mrb[0].mxu0
      %v3652 = vadd.f32 %v3551, %v3651
      %v3653 = vpop.f32.mrb[0].mxu0
      %v3654 = vpop.f32.mrb[0].mxu0
      %v3655 = vadd.f32 %v3551, %v3654
      %v3656 = vpop.f32.mrb[0].mxu0
      %3657 = vmatprep.mubr.bf16.mxu0 0
      %3658 = vmatmul.mubr.bf16.gmra.mrb[0].mxu0 %v3541
      %v3659 = vpop.f32.mrb[0].mxu0
      %v3660 = vadd.f32 %v3551, %v3659
      %v3661 = vpop.f32.mrb[0].mxu0
      %v3662 = vpop.f32.mrb[0].mxu0
      %v3663 = vadd.f32 %v3551, %v3662
      %v3664 = vpop.f32.mrb[0].mxu0
      %3665 = vmatprep.mubr.bf16.mxu0 0
      %3666 = vmatmul.mubr.bf16.gmra.mrb[0].mxu0 %v3542
      %v3667 = vpop.f32.mrb[0].mxu0
      %v3668 = vadd.f32 %v3551, %v3667
      %v3669 = vpop.f32.mrb[0].mxu0
      %v3670 = vpop.f32.mrb[0].mxu0
      %v3671 = vadd.f32 %v3551, %v3670
      %v3672 = vpop.f32.mrb[0].mxu0
      %3673 = vmatprep.mubr.bf16.mxu0 0
      %3674 = vmatmul.mubr.bf16.gmra.mrb[0].mxu0 %v3543
      %v3675 = vpop.f32.mrb[0].mxu0
      %v3676 = vadd.f32 %v3551, %v3675
      %v3677 = vpop.f32.mrb[0].mxu0
      %v3678 = vpop.f32.mrb[0].mxu0
      %v3679 = vadd.f32 %v3551, %v3678
      %v3680 = vpop.f32.mrb[0].mxu0
      %3681 = vmatprep.mubr.bf16.mxu0 0
      %3682 = vmatmul.mubr.bf16.gmra.mrb[0].mxu0 %v3544
      %v3683 = vpop.f32.mrb[0].mxu0
      %v3684 = vadd.f32 %v3551, %v3683
      %v3685 = vpop.f32.mrb[0].mxu0
      %v3686 = vpop.f32.mrb[0].mxu0
      %v3687 = vadd.f32 %v3551, %v3686
      %v3688 = vpop.f32.mrb[0].mxu0
      %3689 = vmatprep.mubr.bf16.mxu0 0
      %3690 = vmatmul.mubr.bf16.gmra.mrb[0].mxu0 %v3545
      %v3691 = vpop.f32.mrb[0].mxu0
      %v3692 = vadd.f32 %v3551, %v3691
      %v3693 = vpop.f32.mrb[0].mxu0
      %v3694 = vpop.f32.mrb[0].mxu0
      %v3695 = vadd.f32 %v3551, %v3694
      %v3696 = vpop.f32.mrb[0].mxu0
      %3697 = vdwg.mxu0
      %vm3698 = vcmp.gt.f32.partialorder %v3636, 0.0
      %vm3699 = vcmp.gt.f32.partialorder %v3639, 0.0
      %vm3700 = vcmp.gt.f32.partialorder %v3644, 0.0
      %vm3701 = vcmp.gt.f32.partialorder %v3647, 0.0
      %vm3702 = vcmp.gt.f32.partialorder %v3652, 0.0
      %vm3703 = vcmp.gt.f32.partialorder %v3655, 0.0
      %vm3704 = vcmp.gt.f32.partialorder %v3660, 0.0
      %vm3705 = vcmp.gt.f32.partialorder %v3663, 0.0
      %vm3706 = vcmp.gt.f32.partialorder %v3668, 0.0
      %vm3707 = vcmp.gt.f32.partialorder %v3671, 0.0
      %vm3708 = vcmp.gt.f32.partialorder %v3676, 0.0
      %vm3709 = vcmp.gt.f32.partialorder %v3679, 0.0
      %vm3710 = vcmp.gt.f32.partialorder %v3684, 0.0
      %vm3711 = vcmp.gt.f32.partialorder %v3687, 0.0
      %vm3712 = vcmp.gt.f32.partialorder %v3692, 0.0
      %vm3713 = vcmp.gt.f32.partialorder %v3695, 0.0
      %v3714 = vmul.f32 %v3636, 0.1
      %v3715 = vmul.f32 %v3639, 0.1
      %v3716 = vmul.f32 %v3644, 0.1
      %v3717 = vmul.f32 %v3647, 0.1
      %v3718 = vmul.f32 %v3652, 0.1
      %v3719 = vmul.f32 %v3655, 0.1
      %v3720 = vmul.f32 %v3660, 0.1
      %v3721 = vmul.f32 %v3663, 0.1
      %v3722 = vmul.f32 %v3668, 0.1
      %v3723 = vmul.f32 %v3671, 0.1
      %v3724 = vmul.f32 %v3676, 0.1
      %v3725 = vmul.f32 %v3679, 0.1
      %v3726 = vmul.f32 %v3684, 0.1
      %v3727 = vmul.f32 %v3687, 0.1
      %v3728 = vmul.f32 %v3692, 0.1
      %v3729 = vmul.f32 %v3695, 0.1
      %v3730 = vsel %vm3698, %v3636, %v3714
      %v3731 = vsel %vm3699, %v3639, %v3715
      %v3732 = vsel %vm3700, %v3644, %v3716
      %v3733 = vsel %vm3701, %v3647, %v3717
      %v3734 = vsel %vm3702, %v3652, %v3718
      %v3735 = vsel %vm3703, %v3655, %v3719
      %v3736 = vsel %vm3704, %v3660, %v3720
      %v3737 = vsel %vm3705, %v3663, %v3721
      %v3738 = vsel %vm3706, %v3668, %v3722
      %v3739 = vsel %vm3707, %v3671, %v3723
      %v3740 = vsel %vm3708, %v3676, %v3724
      %v3741 = vsel %vm3709, %v3679, %v3725
      %v3742 = vsel %vm3710, %v3684, %v3726
      %v3743 = vsel %vm3711, %v3687, %v3727
      %v3744 = vsel %vm3712, %v3692, %v3728
      %v3745 = vsel %vm3713, %v3695, %v3729
      %v3746 = vld [vmem:[%s13] sm:$0xf]
      %v3747 = vld [vmem:[%s13 + $0x4] sm:$0xf]
      %v3748 = vld [vmem:[%s13 + $0x8] sm:$0xf]
      %v3749 = vld [vmem:[%s13 + $0xc] sm:$0xf]
      %v3750 = vld [vmem:[%s13 + $0x10] sm:$0xf]
      %v3751 = vld [vmem:[%s13 + $0x14] sm:$0xf]
      %v3752 = vld [vmem:[%s13 + $0x18] sm:$0xf]
      %v3753 = vld [vmem:[%s13 + $0x1c] sm:$0xf]
      %v3754 = vld [vmem:[%s13 + $0x20] sm:$0xf]
      %v3755 = vld [vmem:[%s13 + $0x24] sm:$0xf]
      %v3756 = vld [vmem:[%s13 + $0x28] sm:$0xf]
      %v3757 = vld [vmem:[%s13 + $0x2c] sm:$0xf]
      %v3758 = vld [vmem:[%s13 + $0x30] sm:$0xf]
      %v3759 = vld [vmem:[%s13 + $0x34] sm:$0xf]
      %v3760 = vld [vmem:[%s13 + $0x38] sm:$0xf]
      %v3761 = vld [vmem:[%s13 + $0x3c] sm:$0xf]
      %v3762 = vpack.c.bf16 %v3731, %v3730
      %v3763 = vpack.c.bf16 %v3733, %v3732
      %v3764 = vpack.c.bf16 %v3735, %v3734
      %v3765 = vpack.c.bf16 %v3737, %v3736
      %v3766 = vpack.c.bf16 %v3739, %v3738
      %v3767 = vpack.c.bf16 %v3741, %v3740
      %v3768 = vpack.c.bf16 %v3743, %v3742
      %v3769 = vpack.c.bf16 %v3745, %v3744
      %v3770 = vld [vmem:[%s3 + $0xe] sm:$0x1]
      %v3772 = vlaneseq
      %v3773 = vshrl.u32 %v3772, 7
      %v3774 = vsub.s32 0, %v3773
      %v3775 = vrot.slane %v3770, %v3774
      %v3793 = vunpack.c.l.b16 %v3746
      %v3794 = vunpack.c.l.b16 %v3747
      %v3795 = vunpack.c.l.b16 %v3748
      %v3796 = vunpack.c.l.b16 %v3749
      %v3797 = vunpack.c.l.b16 %v3750
      %v3798 = vunpack.c.l.b16 %v3751
      %v3799 = vunpack.c.l.b16 %v3752
      %v3800 = vunpack.c.l.b16 %v3753
      %v3801 = vunpack.c.l.b16 %v3754
      %v3802 = vunpack.c.l.b16 %v3755
      %v3803 = vunpack.c.l.b16 %v3756
      %v3804 = vunpack.c.l.b16 %v3757
      %v3805 = vunpack.c.l.b16 %v3758
      %v3806 = vunpack.c.l.b16 %v3759
      %v3807 = vunpack.c.l.b16 %v3760
      %v3808 = vunpack.c.l.b16 %v3761
      %v3809 = vpack.c.b16 %v3794, %v3793
      %v3810 = vpack.c.b16 %v3796, %v3795
      %v3811 = vpack.c.b16 %v3798, %v3797
      %v3812 = vpack.c.b16 %v3800, %v3799
      %v3813 = vpack.c.b16 %v3802, %v3801
      %v3814 = vpack.c.b16 %v3804, %v3803
      %v3815 = vpack.c.b16 %v3806, %v3805
      %v3816 = vpack.c.b16 %v3808, %v3807
      %3825 = vmatprep.subr.bf16.mxu0 0
      %3826 = vmatpush1.bf16.msra.mxu0 %v3809
      %3827 = vmatprep.subr.bf16.mxu0 0
      %3828 = vmatpush1.bf16.msra.mxu0 %v3810
      %3829 = vmatprep.subr.bf16.mxu0 0
      %3830 = vmatpush1.bf16.msra.mxu0 %v3811
      %3831 = vmatprep.subr.bf16.mxu0 0
      %3832 = vmatpush1.bf16.msra.mxu0 %v3812
      %3833 = vmatprep.subr.bf16.mxu0 0
      %3834 = vmatpush1.bf16.msra.mxu0 %v3813
      %3835 = vmatprep.subr.bf16.mxu0 0
      %3836 = vmatpush1.bf16.msra.mxu0 %v3814
      %3837 = vmatprep.subr.bf16.mxu0 0
      %3838 = vmatpush1.bf16.msra.mxu0 %v3815
      %3839 = vmatprep.subr.bf16.mxu0 0
      %3840 = vmatpush1.bf16.msra.mxu0 %v3816
      %3841 = vmatprep.subr.bf16.mxu0 0
      %3842 = vmatpush1.bf16.msra.mxu0 0
      %3843 = vmatprep.subr.bf16.mxu0 0
      %3844 = vmatpush1.bf16.msra.mxu0 0
      %3845 = vmatprep.subr.bf16.mxu0 0
      %3846 = vmatpush1.bf16.msra.mxu0 0
      %3847 = vmatprep.subr.bf16.mxu0 0
      %3848 = vmatpush1.bf16.msra.mxu0 0
      %3849 = vmatprep.subr.bf16.mxu0 0
      %3850 = vmatpush1.bf16.msra.mxu0 0
      %3851 = vmatprep.subr.bf16.mxu0 0
      %3852 = vmatpush1.bf16.msra.mxu0 0
      %3853 = vmatprep.subr.bf16.mxu0 0
      %3854 = vmatpush1.bf16.msra.mxu0 0
      %3855 = vmatprep.subr.bf16.mxu0 0
      %3856 = vmatpush1.bf16.msra.mxu0 0
      %3857 = vmatprep.mubr.bf16.mxu0 0
      %3858 = vmatmul.mubr.bf16.gmra.mrb[0].mxu0 %v3762
      %v3859 = vpop.f32.mrb[0].mxu0
      %v3860 = vadd.f32 %v3775, %v3859
      %v3861 = vpop.f32.mrb[0].mxu0
      %v3862 = vpop.f32.mrb[0].mxu0
      %v3863 = vadd.f32 %v3775, %v3862
      %v3864 = vpop.f32.mrb[0].mxu0
      %3865 = vmatprep.mubr.bf16.mxu0 0
      %3866 = vmatmul.mubr.bf16.gmra.mrb[0].mxu0 %v3763
      %v3867 = vpop.f32.mrb[0].mxu0
      %v3868 = vadd.f32 %v3775, %v3867
      %v3869 = vpop.f32.mrb[0].mxu0
      %v3870 = vpop.f32.mrb[0].mxu0
      %v3871 = vadd.f32 %v3775, %v3870
      %v3872 = vpop.f32.mrb[0].mxu0
      %3873 = vmatprep.mubr.bf16.mxu0 0
      %3874 = vmatmul.mubr.bf16.gmra.mrb[0].mxu0 %v3764
      %v3875 = vpop.f32.mrb[0].mxu0
      %v3876 = vadd.f32 %v3775, %v3875
      %v3877 = vpop.f32.mrb[0].mxu0
      %v3878 = vpop.f32.mrb[0].mxu0
      %v3879 = vadd.f32 %v3775, %v3878
      %v3880 = vpop.f32.mrb[0].mxu0
      %3881 = vmatprep.mubr.bf16.mxu0 0
      %3882 = vmatmul.mubr.bf16.gmra.mrb[0].mxu0 %v3765
      %v3883 = vpop.f32.mrb[0].mxu0
      %v3884 = vadd.f32 %v3775, %v3883
      %v3885 = vpop.f32.mrb[0].mxu0
      %v3886 = vpop.f32.mrb[0].mxu0
      %v3887 = vadd.f32 %v3775, %v3886
      %v3888 = vpop.f32.mrb[0].mxu0
      %3889 = vmatprep.mubr.bf16.mxu0 0
      %3890 = vmatmul.mubr.bf16.gmra.mrb[0].mxu0 %v3766
      %v3891 = vpop.f32.mrb[0].mxu0
      %v3892 = vadd.f32 %v3775, %v3891
      %v3893 = vpop.f32.mrb[0].mxu0
      %v3894 = vpop.f32.mrb[0].mxu0
      %v3895 = vadd.f32 %v3775, %v3894
      %v3896 = vpop.f32.mrb[0].mxu0
      %3897 = vmatprep.mubr.bf16.mxu0 0
      %3898 = vmatmul.mubr.bf16.gmra.mrb[0].mxu0 %v3767
      %v3899 = vpop.f32.mrb[0].mxu0
      %v3900 = vadd.f32 %v3775, %v3899
      %v3901 = vpop.f32.mrb[0].mxu0
      %v3902 = vpop.f32.mrb[0].mxu0
      %v3903 = vadd.f32 %v3775, %v3902
      %v3904 = vpop.f32.mrb[0].mxu0
      %3905 = vmatprep.mubr.bf16.mxu0 0
      %3906 = vmatmul.mubr.bf16.gmra.mrb[0].mxu0 %v3768
      %v3907 = vpop.f32.mrb[0].mxu0
      %v3908 = vadd.f32 %v3775, %v3907
      %v3909 = vpop.f32.mrb[0].mxu0
      %v3910 = vpop.f32.mrb[0].mxu0
      %v3911 = vadd.f32 %v3775, %v3910
      %v3912 = vpop.f32.mrb[0].mxu0
      %3913 = vmatprep.mubr.bf16.mxu0 0
      %3914 = vmatmul.mubr.bf16.gmra.mrb[0].mxu0 %v3769
      %v3915 = vpop.f32.mrb[0].mxu0
      %v3916 = vadd.f32 %v3775, %v3915
      %v3917 = vpop.f32.mrb[0].mxu0
      %v3918 = vpop.f32.mrb[0].mxu0
      %v3919 = vadd.f32 %v3775, %v3918
      %v3920 = vpop.f32.mrb[0].mxu0
      %3921 = vdwg.mxu0
      %v3922 = vmax.f32 %v3860, 0.0
      %v3923 = vmax.f32 %v3863, 0.0
      %v3924 = vmax.f32 %v3868, 0.0
      %v3925 = vmax.f32 %v3871, 0.0
      %v3926 = vmax.f32 %v3876, 0.0
      %v3927 = vmax.f32 %v3879, 0.0
      %v3928 = vmax.f32 %v3884, 0.0
      %v3929 = vmax.f32 %v3887, 0.0
      %v3930 = vmax.f32 %v3892, 0.0
      %v3931 = vmax.f32 %v3895, 0.0
      %v3932 = vmax.f32 %v3900, 0.0
      %v3933 = vmax.f32 %v3903, 0.0
      %v3934 = vmax.f32 %v3908, 0.0
      %v3935 = vmax.f32 %v3911, 0.0
      %v3936 = vmax.f32 %v3916, 0.0
      %v3937 = vmax.f32 %v3919, 0.0
      %vm3938 = vcmp.ne.f32.partialorder %v3860, %v3860
      %vm3939 = vcmp.ne.f32.partialorder %v3863, %v3863
      %vm3940 = vcmp.ne.f32.partialorder %v3868, %v3868
      %vm3941 = vcmp.ne.f32.partialorder %v3871, %v3871
      %vm3942 = vcmp.ne.f32.partialorder %v3876, %v3876
      %vm3943 = vcmp.ne.f32.partialorder %v3879, %v3879
      %vm3944 = vcmp.ne.f32.partialorder %v3884, %v3884
      %vm3945 = vcmp.ne.f32.partialorder %v3887, %v3887
      %vm3946 = vcmp.ne.f32.partialorder %v3892, %v3892
      %vm3947 = vcmp.ne.f32.partialorder %v3895, %v3895
      %vm3948 = vcmp.ne.f32.partialorder %v3900, %v3900
      %vm3949 = vcmp.ne.f32.partialorder %v3903, %v3903
      %vm3950 = vcmp.ne.f32.partialorder %v3908, %v3908
      %vm3951 = vcmp.ne.f32.partialorder %v3911, %v3911
      %vm3952 = vcmp.ne.f32.partialorder %v3916, %v3916
      %vm3953 = vcmp.ne.f32.partialorder %v3919, %v3919
      %v3954 = vadd.f32 %v3860, 0.0
      %v3955 = vadd.f32 %v3863, 0.0
      %v3956 = vadd.f32 %v3868, 0.0
      %v3957 = vadd.f32 %v3871, 0.0
      %v3958 = vadd.f32 %v3876, 0.0
      %v3959 = vadd.f32 %v3879, 0.0
      %v3960 = vadd.f32 %v3884, 0.0
      %v3961 = vadd.f32 %v3887, 0.0
      %v3962 = vadd.f32 %v3892, 0.0
      %v3963 = vadd.f32 %v3895, 0.0
      %v3964 = vadd.f32 %v3900, 0.0
      %v3965 = vadd.f32 %v3903, 0.0
      %v3966 = vadd.f32 %v3908, 0.0
      %v3967 = vadd.f32 %v3911, 0.0
      %v3968 = vadd.f32 %v3916, 0.0
      %v3969 = vadd.f32 %v3919, 0.0
      %v3970 = vand.u32 2147483647, %v3860
      %v3971 = vand.u32 2147483647, %v3863
      %v3972 = vand.u32 2147483647, %v3868
      %v3973 = vand.u32 2147483647, %v3871
      %v3974 = vand.u32 2147483647, %v3876
      %v3975 = vand.u32 2147483647, %v3879
      %v3976 = vand.u32 2147483647, %v3884
      %v3977 = vand.u32 2147483647, %v3887
      %v3978 = vand.u32 2147483647, %v3892
      %v3979 = vand.u32 2147483647, %v3895
      %v3980 = vand.u32 2147483647, %v3900
      %v3981 = vand.u32 2147483647, %v3903
      %v3982 = vand.u32 2147483647, %v3908
      %v3983 = vand.u32 2147483647, %v3911
      %v3984 = vand.u32 2147483647, %v3916
      %v3985 = vand.u32 2147483647, %v3919
      %v3986 = vsub.f32 0.0, %v3970
      %v3987 = vsub.f32 0.0, %v3971
      %v3988 = vsub.f32 0.0, %v3972
      %v3989 = vsub.f32 0.0, %v3973
      %v3990 = vsub.f32 0.0, %v3974
      %v3991 = vsub.f32 0.0, %v3975
      %v3992 = vsub.f32 0.0, %v3976
      %v3993 = vsub.f32 0.0, %v3977
      %v3994 = vsub.f32 0.0, %v3978
      %v3995 = vsub.f32 0.0, %v3979
      %v3996 = vsub.f32 0.0, %v3980
      %v3997 = vsub.f32 0.0, %v3981
      %v3998 = vsub.f32 0.0, %v3982
      %v3999 = vsub.f32 0.0, %v3983
      %v4000 = vsub.f32 0.0, %v3984
      %v4001 = vsub.f32 0.0, %v3985
      %v4002 = vmul.f32 %v3986, 1.442695
      %v4003 = vpow.pop %v4002
      %v4004 = vmul.f32 %v3987, 1.442695
      %v4005 = vpow.pop %v4004
      %v4006 = vmul.f32 %v3988, 1.442695
      %v4007 = vpow.pop %v4006
      %v4008 = vmul.f32 %v3989, 1.442695
      %v4009 = vpow.pop %v4008
      %v4010 = vmul.f32 %v3990, 1.442695
      %v4011 = vpow.pop %v4010
      %v4012 = vmul.f32 %v3991, 1.442695
      %v4013 = vpow.pop %v4012
      %v4014 = vmul.f32 %v3992, 1.442695
      %v4015 = vpow.pop %v4014
      %v4016 = vmul.f32 %v3993, 1.442695
      %v4017 = vpow.pop %v4016
      %v4018 = vmul.f32 %v3994, 1.442695
      %v4019 = vpow.pop %v4018
      %v4020 = vmul.f32 %v3995, 1.442695
      %v4021 = vpow.pop %v4020
      %v4022 = vmul.f32 %v3996, 1.442695
      %v4023 = vpow.pop %v4022
      %v4024 = vmul.f32 %v3997, 1.442695
      %v4025 = vpow.pop %v4024
      %v4026 = vmul.f32 %v3998, 1.442695
      %v4027 = vpow.pop %v4026
      %v4028 = vmul.f32 %v3999, 1.442695
      %v4029 = vpow.pop %v4028
      %v4030 = vmul.f32 %v4000, 1.442695
      %v4031 = vpow.pop %v4030
      %v4032 = vmul.f32 %v4001, 1.442695
      %v4033 = vpow.pop %v4032
      %v4034 = vadd.f32 %v4003, 1.0
      %v4035 = vlog2.pop %v4034
      %v4036 = vmul.f32 %v4035, 0.6931472
      %v4037 = vmul.f32 -0.5, %v4003
      %v4038 = vadd.f32 %v4037, 1.0
      %v4039 = vmul.f32 %v4038, %v4003
      %v4040 = vand.u32 2147483647, %v4003
      %vm4041 = vcmp.lt.f32.partialorder %v4040, 0.0004427343
      %v4042 = vsel %vm4041, %v4039, %v4036
      %v4043 = vadd.f32 %v4005, 1.0
      %v4044 = vlog2.pop %v4043
      %v4045 = vmul.f32 %v4044, 0.6931472
      %v4046 = vmul.f32 -0.5, %v4005
      %v4047 = vadd.f32 %v4046, 1.0
      %v4048 = vmul.f32 %v4047, %v4005
      %v4049 = vand.u32 2147483647, %v4005
      %vm4050 = vcmp.lt.f32.partialorder %v4049, 0.0004427343
      %v4051 = vsel %vm4050, %v4048, %v4045
      %v4052 = vadd.f32 %v4007, 1.0
      %v4053 = vlog2.pop %v4052
      %v4054 = vmul.f32 %v4053, 0.6931472
      %v4055 = vmul.f32 -0.5, %v4007
      %v4056 = vadd.f32 %v4055, 1.0
      %v4057 = vmul.f32 %v4056, %v4007
      %v4058 = vand.u32 2147483647, %v4007
      %vm4059 = vcmp.lt.f32.partialorder %v4058, 0.0004427343
      %v4060 = vsel %vm4059, %v4057, %v4054
      %v4061 = vadd.f32 %v4009, 1.0
      %v4062 = vlog2.pop %v4061
      %v4063 = vmul.f32 %v4062, 0.6931472
      %v4064 = vmul.f32 -0.5, %v4009
      %v4065 = vadd.f32 %v4064, 1.0
      %v4066 = vmul.f32 %v4065, %v4009
      %v4067 = vand.u32 2147483647, %v4009
      %vm4068 = vcmp.lt.f32.partialorder %v4067, 0.0004427343
      %v4069 = vsel %vm4068, %v4066, %v4063
      %v4070 = vadd.f32 %v4011, 1.0
      %v4071 = vlog2.pop %v4070
      %v4072 = vmul.f32 %v4071, 0.6931472
      %v4073 = vmul.f32 -0.5, %v4011
      %v4074 = vadd.f32 %v4073, 1.0
      %v4075 = vmul.f32 %v4074, %v4011
      %v4076 = vand.u32 2147483647, %v4011
      %vm4077 = vcmp.lt.f32.partialorder %v4076, 0.0004427343
      %v4078 = vsel %vm4077, %v4075, %v4072
      %v4079 = vadd.f32 %v4013, 1.0
      %v4080 = vlog2.pop %v4079
      %v4081 = vmul.f32 %v4080, 0.6931472
      %v4082 = vmul.f32 -0.5, %v4013
      %v4083 = vadd.f32 %v4082, 1.0
      %v4084 = vmul.f32 %v4083, %v4013
      %v4085 = vand.u32 2147483647, %v4013
      %vm4086 = vcmp.lt.f32.partialorder %v4085, 0.0004427343
      %v4087 = vsel %vm4086, %v4084, %v4081
      %v4088 = vadd.f32 %v4015, 1.0
      %v4089 = vlog2.pop %v4088
      %v4090 = vmul.f32 %v4089, 0.6931472
      %v4091 = vmul.f32 -0.5, %v4015
      %v4092 = vadd.f32 %v4091, 1.0
      %v4093 = vmul.f32 %v4092, %v4015
      %v4094 = vand.u32 2147483647, %v4015
      %vm4095 = vcmp.lt.f32.partialorder %v4094, 0.0004427343
      %v4096 = vsel %vm4095, %v4093, %v4090
      %v4097 = vadd.f32 %v4017, 1.0
      %v4098 = vlog2.pop %v4097
      %v4099 = vmul.f32 %v4098, 0.6931472
      %v4100 = vmul.f32 -0.5, %v4017
      %v4101 = vadd.f32 %v4100, 1.0
      %v4102 = vmul.f32 %v4101, %v4017
      %v4103 = vand.u32 2147483647, %v4017
      %vm4104 = vcmp.lt.f32.partialorder %v4103, 0.0004427343
      %v4105 = vsel %vm4104, %v4102, %v4099
      %v4106 = vadd.f32 %v4019, 1.0
      %v4107 = vlog2.pop %v4106
      %v4108 = vmul.f32 %v4107, 0.6931472
      %v4109 = vmul.f32 -0.5, %v4019
      %v4110 = vadd.f32 %v4109, 1.0
      %v4111 = vmul.f32 %v4110, %v4019
      %v4112 = vand.u32 2147483647, %v4019
      %vm4113 = vcmp.lt.f32.partialorder %v4112, 0.0004427343
      %v4114 = vsel %vm4113, %v4111, %v4108
      %v4115 = vadd.f32 %v4021, 1.0
      %v4116 = vlog2.pop %v4115
      %v4117 = vmul.f32 %v4116, 0.6931472
      %v4118 = vmul.f32 -0.5, %v4021
      %v4119 = vadd.f32 %v4118, 1.0
      %v4120 = vmul.f32 %v4119, %v4021
      %v4121 = vand.u32 2147483647, %v4021
      %vm4122 = vcmp.lt.f32.partialorder %v4121, 0.0004427343
      %v4123 = vsel %vm4122, %v4120, %v4117
      %v4124 = vadd.f32 %v4023, 1.0
      %v4125 = vlog2.pop %v4124
      %v4126 = vmul.f32 %v4125, 0.6931472
      %v4127 = vmul.f32 -0.5, %v4023
      %v4128 = vadd.f32 %v4127, 1.0
      %v4129 = vmul.f32 %v4128, %v4023
      %v4130 = vand.u32 2147483647, %v4023
      %vm4131 = vcmp.lt.f32.partialorder %v4130, 0.0004427343
      %v4132 = vsel %vm4131, %v4129, %v4126
      %v4133 = vadd.f32 %v4025, 1.0
      %v4134 = vlog2.pop %v4133
      %v4135 = vmul.f32 %v4134, 0.6931472
      %v4136 = vmul.f32 -0.5, %v4025
      %v4137 = vadd.f32 %v4136, 1.0
      %v4138 = vmul.f32 %v4137, %v4025
      %v4139 = vand.u32 2147483647, %v4025
      %vm4140 = vcmp.lt.f32.partialorder %v4139, 0.0004427343
      %v4141 = vsel %vm4140, %v4138, %v4135
      %v4142 = vadd.f32 %v4027, 1.0
      %v4143 = vlog2.pop %v4142
      %v4144 = vmul.f32 %v4143, 0.6931472
      %v4145 = vmul.f32 -0.5, %v4027
      %v4146 = vadd.f32 %v4145, 1.0
      %v4147 = vmul.f32 %v4146, %v4027
      %v4148 = vand.u32 2147483647, %v4027
      %vm4149 = vcmp.lt.f32.partialorder %v4148, 0.0004427343
      %v4150 = vsel %vm4149, %v4147, %v4144
      %v4151 = vadd.f32 %v4029, 1.0
      %v4152 = vlog2.pop %v4151
      %v4153 = vmul.f32 %v4152, 0.6931472
      %v4154 = vmul.f32 -0.5, %v4029
      %v4155 = vadd.f32 %v4154, 1.0
      %v4156 = vmul.f32 %v4155, %v4029
      %v4157 = vand.u32 2147483647, %v4029
      %vm4158 = vcmp.lt.f32.partialorder %v4157, 0.0004427343
      %v4159 = vsel %vm4158, %v4156, %v4153
      %v4160 = vadd.f32 %v4031, 1.0
      %v4161 = vlog2.pop %v4160
      %v4162 = vmul.f32 %v4161, 0.6931472
      %v4163 = vmul.f32 -0.5, %v4031
      %v4164 = vadd.f32 %v4163, 1.0
      %v4165 = vmul.f32 %v4164, %v4031
      %v4166 = vand.u32 2147483647, %v4031
      %vm4167 = vcmp.lt.f32.partialorder %v4166, 0.0004427343
      %v4168 = vsel %vm4167, %v4165, %v4162
      %v4169 = vadd.f32 %v4033, 1.0
      %v4170 = vlog2.pop %v4169
      %v4171 = vmul.f32 %v4170, 0.6931472
      %v4172 = vmul.f32 -0.5, %v4033
      %v4173 = vadd.f32 %v4172, 1.0
      %v4174 = vmul.f32 %v4173, %v4033
      %v4175 = vand.u32 2147483647, %v4033
      %vm4176 = vcmp.lt.f32.partialorder %v4175, 0.0004427343
      %v4177 = vsel %vm4176, %v4174, %v4171
      %v4178 = vadd.f32 %v3922, %v4042
      %v4179 = vadd.f32 %v3923, %v4051
      %v4180 = vadd.f32 %v3924, %v4060
      %v4181 = vadd.f32 %v3925, %v4069
      %v4182 = vadd.f32 %v3926, %v4078
      %v4183 = vadd.f32 %v3927, %v4087
      %v4184 = vadd.f32 %v3928, %v4096
      %v4185 = vadd.f32 %v3929, %v4105
      %v4186 = vadd.f32 %v3930, %v4114
      %v4187 = vadd.f32 %v3931, %v4123
      %v4188 = vadd.f32 %v3932, %v4132
      %v4189 = vadd.f32 %v3933, %v4141
      %v4190 = vadd.f32 %v3934, %v4150
      %v4191 = vadd.f32 %v3935, %v4159
      %v4192 = vadd.f32 %v3936, %v4168
      %v4193 = vadd.f32 %v3937, %v4177
      %v4194 = vsel %vm3938, %v3954, %v4178
      %v4195 = vsel %vm3939, %v3955, %v4179
      %v4196 = vsel %vm3940, %v3956, %v4180
      %v4197 = vsel %vm3941, %v3957, %v4181
      %v4198 = vsel %vm3942, %v3958, %v4182
      %v4199 = vsel %vm3943, %v3959, %v4183
      %v4200 = vsel %vm3944, %v3960, %v4184
      %v4201 = vsel %vm3945, %v3961, %v4185
      %v4202 = vsel %vm3946, %v3962, %v4186
      %v4203 = vsel %vm3947, %v3963, %v4187
      %v4204 = vsel %vm3948, %v3964, %v4188
      %v4205 = vsel %vm3949, %v3965, %v4189
      %v4206 = vsel %vm3950, %v3966, %v4190
      %v4207 = vsel %vm3951, %v3967, %v4191
      %v4208 = vsel %vm3952, %v3968, %v4192
      %v4209 = vsel %vm3953, %v3969, %v4193
      %v4210 = vadd.f32 %v4194, 1e-07
      %v4211 = vadd.f32 %v4195, 1e-07
      %v4212 = vadd.f32 %v4196, 1e-07
      %v4213 = vadd.f32 %v4197, 1e-07
      %v4214 = vadd.f32 %v4198, 1e-07
      %v4215 = vadd.f32 %v4199, 1e-07
      %v4216 = vadd.f32 %v4200, 1e-07
      %v4217 = vadd.f32 %v4201, 1e-07
      %v4218 = vadd.f32 %v4202, 1e-07
      %v4219 = vadd.f32 %v4203, 1e-07
      %v4220 = vadd.f32 %v4204, 1e-07
      %v4221 = vadd.f32 %v4205, 1e-07
      %v4222 = vadd.f32 %v4206, 1e-07
      %v4223 = vadd.f32 %v4207, 1e-07
      %v4224 = vadd.f32 %v4208, 1e-07
      %v4225 = vadd.f32 %v4209, 1e-07
      %v4226 = vld [vmem:[%s511] sm:$0xff]
      %v4227 = vld [vmem:[%s511 + $0x8] sm:$0xff]
      %v4228 = vld [vmem:[%s511 + $0x10] sm:$0xff]
      %v4229 = vld [vmem:[%s511 + $0x18] sm:$0xff]
      %v4230 = vld [vmem:[%s511 + $0x20] sm:$0xff]
      %v4231 = vld [vmem:[%s511 + $0x28] sm:$0xff]
      %v4232 = vld [vmem:[%s511 + $0x30] sm:$0xff]
      %v4233 = vld [vmem:[%s511 + $0x38] sm:$0xff]
      %v4234 = vld [vmem:[%s511 + $0x40] sm:$0xff]
      %v4235 = vld [vmem:[%s511 + $0x48] sm:$0xff]
      %v4236 = vld [vmem:[%s511 + $0x50] sm:$0xff]
      %v4237 = vld [vmem:[%s511 + $0x58] sm:$0xff]
      %v4238 = vld [vmem:[%s511 + $0x60] sm:$0xff]
      %v4239 = vld [vmem:[%s511 + $0x68] sm:$0xff]
      %v4240 = vld [vmem:[%s511 + $0x70] sm:$0xff]
      %v4241 = vld [vmem:[%s511 + $0x78] sm:$0xff]
      %4258 = vrot.lane.b32.xlu0 %v4226, 2
      %v4259 = vpop.permute.xlu0 %4258
      %4260 = vrot.lane.b32.xlu0 %v4227, 2
      %v4261 = vpop.permute.xlu0 %4260
      %4262 = vrot.lane.b32.xlu0 %v4228, 2
      %v4263 = vpop.permute.xlu0 %4262
      %4264 = vrot.lane.b32.xlu0 %v4229, 2
      %v4265 = vpop.permute.xlu0 %4264
      %4266 = vrot.lane.b32.xlu0 %v4230, 2
      %v4267 = vpop.permute.xlu0 %4266
      %4268 = vrot.lane.b32.xlu0 %v4231, 2
      %v4269 = vpop.permute.xlu0 %4268
      %4270 = vrot.lane.b32.xlu0 %v4232, 2
      %v4271 = vpop.permute.xlu0 %4270
      %4272 = vrot.lane.b32.xlu0 %v4233, 2
      %v4273 = vpop.permute.xlu0 %4272
      %4274 = vrot.lane.b32.xlu0 %v4234, 2
      %v4275 = vpop.permute.xlu0 %4274
      %4276 = vrot.lane.b32.xlu0 %v4235, 2
      %v4277 = vpop.permute.xlu0 %4276
      %4278 = vrot.lane.b32.xlu0 %v4236, 2
      %v4279 = vpop.permute.xlu0 %4278
      %4280 = vrot.lane.b32.xlu0 %v4237, 2
      %v4281 = vpop.permute.xlu0 %4280
      %4282 = vrot.lane.b32.xlu0 %v4238, 2
      %v4283 = vpop.permute.xlu0 %4282
      %4284 = vrot.lane.b32.xlu0 %v4239, 2
      %v4285 = vpop.permute.xlu0 %4284
      %4286 = vrot.lane.b32.xlu0 %v4240, 2
      %v4287 = vpop.permute.xlu0 %4286
      %4288 = vrot.lane.b32.xlu0 %v4241, 2
      %v4289 = vpop.permute.xlu0 %4288
      %v4306 = vmul.f32 %v4210, %v4259
      %v4307 = vmul.f32 %v4211, %v4261
      %v4308 = vmul.f32 %v4212, %v4263
      %v4309 = vmul.f32 %v4213, %v4265
      %v4310 = vmul.f32 %v4214, %v4267
      %v4311 = vmul.f32 %v4215, %v4269
      %v4312 = vmul.f32 %v4216, %v4271
      %v4313 = vmul.f32 %v4217, %v4273
      %v4314 = vmul.f32 %v4218, %v4275
      %v4315 = vmul.f32 %v4219, %v4277
      %v4316 = vmul.f32 %v4220, %v4279
      %v4317 = vmul.f32 %v4221, %v4281
      %v4318 = vmul.f32 %v4222, %v4283
      %v4319 = vmul.f32 %v4223, %v4285
      %v4320 = vmul.f32 %v4224, %v4287
      %v4321 = vmul.f32 %v4225, %v4289
      %4338 = vrot.lane.b32.xlu0 %v4306, 126
      %v4339 = vpop.permute.xlu0 %4338
      %4340 = vrot.lane.b32.xlu0 %v4307, 126
      %v4341 = vpop.permute.xlu0 %4340
      %4342 = vrot.lane.b32.xlu0 %v4308, 126
      %v4343 = vpop.permute.xlu0 %4342
      %4344 = vrot.lane.b32.xlu0 %v4309, 126
      %v4345 = vpop.permute.xlu0 %4344
      %4346 = vrot.lane.b32.xlu0 %v4310, 126
      %v4347 = vpop.permute.xlu0 %4346
      %4348 = vrot.lane.b32.xlu0 %v4311, 126
      %v4349 = vpop.permute.xlu0 %4348
      %4350 = vrot.lane.b32.xlu0 %v4312, 126
      %v4351 = vpop.permute.xlu0 %4350
      %4352 = vrot.lane.b32.xlu0 %v4313, 126
      %v4353 = vpop.permute.xlu0 %4352
      %4354 = vrot.lane.b32.xlu0 %v4314, 126
      %v4355 = vpop.permute.xlu0 %4354
      %4356 = vrot.lane.b32.xlu0 %v4315, 126
      %v4357 = vpop.permute.xlu0 %4356
      %4358 = vrot.lane.b32.xlu0 %v4316, 126
      %v4359 = vpop.permute.xlu0 %4358
      %4360 = vrot.lane.b32.xlu0 %v4317, 126
      %v4361 = vpop.permute.xlu0 %4360
      %4362 = vrot.lane.b32.xlu0 %v4318, 126
      %v4363 = vpop.permute.xlu0 %4362
      %4364 = vrot.lane.b32.xlu0 %v4319, 126
      %v4365 = vpop.permute.xlu0 %4364
      %4366 = vrot.lane.b32.xlu0 %v4320, 126
      %v4367 = vpop.permute.xlu0 %4366
      %4368 = vrot.lane.b32.xlu0 %v4321, 126
      %v4369 = vpop.permute.xlu0 %4368
      %v4386 = vadd.f32 %v3860, %v4339
      %v4387 = vadd.f32 %v3863, %v4341
      %v4388 = vadd.f32 %v3868, %v4343
      %v4389 = vadd.f32 %v3871, %v4345
      %v4390 = vadd.f32 %v3876, %v4347
      %v4391 = vadd.f32 %v3879, %v4349
      %v4392 = vadd.f32 %v3884, %v4351
      %v4393 = vadd.f32 %v3887, %v4353
      %v4394 = vadd.f32 %v3892, %v4355
      %v4395 = vadd.f32 %v3895, %v4357
      %v4396 = vadd.f32 %v3900, %v4359
      %v4397 = vadd.f32 %v3903, %v4361
      %v4398 = vadd.f32 %v3908, %v4363
      %v4399 = vadd.f32 %v3911, %v4365
      %v4400 = vadd.f32 %v3916, %v4367
      %v4401 = vadd.f32 %v3919, %v4369
      %4402 = vrot.lane.b32.xlu0 %v4226, 4
      %v4403 = vpop.permute.xlu0 %4402
      %4404 = vrot.lane.b32.xlu0 %v4227, 4
      %v4405 = vpop.permute.xlu0 %4404
      %4406 = vrot.lane.b32.xlu0 %v4228, 4
      %v4407 = vpop.permute.xlu0 %4406
      %4408 = vrot.lane.b32.xlu0 %v4229, 4
      %v4409 = vpop.permute.xlu0 %4408
      %4410 = vrot.lane.b32.xlu0 %v4230, 4
      %v4411 = vpop.permute.xlu0 %4410
      %4412 = vrot.lane.b32.xlu0 %v4231, 4
      %v4413 = vpop.permute.xlu0 %4412
      %4414 = vrot.lane.b32.xlu0 %v4232, 4
      %v4415 = vpop.permute.xlu0 %4414
      %4416 = vrot.lane.b32.xlu0 %v4233, 4
      %v4417 = vpop.permute.xlu0 %4416
      %4418 = vrot.lane.b32.xlu0 %v4234, 4
      %v4419 = vpop.permute.xlu0 %4418
      %4420 = vrot.lane.b32.xlu0 %v4235, 4
      %v4421 = vpop.permute.xlu0 %4420
      %4422 = vrot.lane.b32.xlu0 %v4236, 4
      %v4423 = vpop.permute.xlu0 %4422
      %4424 = vrot.lane.b32.xlu0 %v4237, 4
      %v4425 = vpop.permute.xlu0 %4424
      %4426 = vrot.lane.b32.xlu0 %v4238, 4
      %v4427 = vpop.permute.xlu0 %4426
      %4428 = vrot.lane.b32.xlu0 %v4239, 4
      %v4429 = vpop.permute.xlu0 %4428
      %4430 = vrot.lane.b32.xlu0 %v4240, 4
      %v4431 = vpop.permute.xlu0 %4430
      %4432 = vrot.lane.b32.xlu0 %v4241, 4
      %v4433 = vpop.permute.xlu0 %4432
      %v4450 = vmul.f32 %v4210, %v4403
      %v4451 = vmul.f32 %v4211, %v4405
      %v4452 = vmul.f32 %v4212, %v4407
      %v4453 = vmul.f32 %v4213, %v4409
      %v4454 = vmul.f32 %v4214, %v4411
      %v4455 = vmul.f32 %v4215, %v4413
      %v4456 = vmul.f32 %v4216, %v4415
      %v4457 = vmul.f32 %v4217, %v4417
      %v4458 = vmul.f32 %v4218, %v4419
      %v4459 = vmul.f32 %v4219, %v4421
      %v4460 = vmul.f32 %v4220, %v4423
      %v4461 = vmul.f32 %v4221, %v4425
      %v4462 = vmul.f32 %v4222, %v4427
      %v4463 = vmul.f32 %v4223, %v4429
      %v4464 = vmul.f32 %v4224, %v4431
      %v4465 = vmul.f32 %v4225, %v4433
      %4482 = vrot.lane.b32.xlu0 %v4450, 126
      %v4483 = vpop.permute.xlu0 %4482
      %4484 = vrot.lane.b32.xlu0 %v4451, 126
      %v4485 = vpop.permute.xlu0 %4484
      %4486 = vrot.lane.b32.xlu0 %v4452, 126
      %v4487 = vpop.permute.xlu0 %4486
      %4488 = vrot.lane.b32.xlu0 %v4453, 126
      %v4489 = vpop.permute.xlu0 %4488
      %4490 = vrot.lane.b32.xlu0 %v4454, 126
      %v4491 = vpop.permute.xlu0 %4490
      %4492 = vrot.lane.b32.xlu0 %v4455, 126
      %v4493 = vpop.permute.xlu0 %4492
      %4494 = vrot.lane.b32.xlu0 %v4456, 126
      %v4495 = vpop.permute.xlu0 %4494
      %4496 = vrot.lane.b32.xlu0 %v4457, 126
      %v4497 = vpop.permute.xlu0 %4496
      %4498 = vrot.lane.b32.xlu0 %v4458, 126
      %v4499 = vpop.permute.xlu0 %4498
      %4500 = vrot.lane.b32.xlu0 %v4459, 126
      %v4501 = vpop.permute.xlu0 %4500
      %4502 = vrot.lane.b32.xlu0 %v4460, 126
      %v4503 = vpop.permute.xlu0 %4502
      %4504 = vrot.lane.b32.xlu0 %v4461, 126
      %v4505 = vpop.permute.xlu0 %4504
      %4506 = vrot.lane.b32.xlu0 %v4462, 126
      %v4507 = vpop.permute.xlu0 %4506
      %4508 = vrot.lane.b32.xlu0 %v4463, 126
      %v4509 = vpop.permute.xlu0 %4508
      %4510 = vrot.lane.b32.xlu0 %v4464, 126
      %v4511 = vpop.permute.xlu0 %4510
      %4512 = vrot.lane.b32.xlu0 %v4465, 126
      %v4513 = vpop.permute.xlu0 %4512
      %v4530 = vadd.f32 %v3860, %v4483
      %v4531 = vadd.f32 %v3863, %v4485
      %v4532 = vadd.f32 %v3868, %v4487
      %v4533 = vadd.f32 %v3871, %v4489
      %v4534 = vadd.f32 %v3876, %v4491
      %v4535 = vadd.f32 %v3879, %v4493
      %v4536 = vadd.f32 %v3884, %v4495
      %v4537 = vadd.f32 %v3887, %v4497
      %v4538 = vadd.f32 %v3892, %v4499
      %v4539 = vadd.f32 %v3895, %v4501
      %v4540 = vadd.f32 %v3900, %v4503
      %v4541 = vadd.f32 %v3903, %v4505
      %v4542 = vadd.f32 %v3908, %v4507
      %v4543 = vadd.f32 %v3911, %v4509
      %v4544 = vadd.f32 %v3916, %v4511
      %v4545 = vadd.f32 %v3919, %v4513
      %v4546 = vsub.f32 %v4386, %v3860
      %v4547 = vsub.f32 %v4387, %v3863
      %v4548 = vsub.f32 %v4388, %v3868
      %v4549 = vsub.f32 %v4389, %v3871
      %v4550 = vsub.f32 %v4390, %v3876
      %v4551 = vsub.f32 %v4391, %v3879
      %v4552 = vsub.f32 %v4392, %v3884
      %v4553 = vsub.f32 %v4393, %v3887
      %v4554 = vsub.f32 %v4394, %v3892
      %v4555 = vsub.f32 %v4395, %v3895
      %v4556 = vsub.f32 %v4396, %v3900
      %v4557 = vsub.f32 %v4397, %v3903
      %v4558 = vsub.f32 %v4398, %v3908
      %v4559 = vsub.f32 %v4399, %v3911
      %v4560 = vsub.f32 %v4400, %v3916
      %v4561 = vsub.f32 %v4401, %v3919
      %4578 = vrot.lane.b32.xlu0 %v4210, 126
      %v4579 = vpop.permute.xlu0 %4578
      %4580 = vrot.lane.b32.xlu0 %v4211, 126
      %v4581 = vpop.permute.xlu0 %4580
      %4582 = vrot.lane.b32.xlu0 %v4212, 126
      %v4583 = vpop.permute.xlu0 %4582
      %4584 = vrot.lane.b32.xlu0 %v4213, 126
      %v4585 = vpop.permute.xlu0 %4584
      %4586 = vrot.lane.b32.xlu0 %v4214, 126
      %v4587 = vpop.permute.xlu0 %4586
      %4588 = vrot.lane.b32.xlu0 %v4215, 126
      %v4589 = vpop.permute.xlu0 %4588
      %4590 = vrot.lane.b32.xlu0 %v4216, 126
      %v4591 = vpop.permute.xlu0 %4590
      %4592 = vrot.lane.b32.xlu0 %v4217, 126
      %v4593 = vpop.permute.xlu0 %4592
      %4594 = vrot.lane.b32.xlu0 %v4218, 126
      %v4595 = vpop.permute.xlu0 %4594
      %4596 = vrot.lane.b32.xlu0 %v4219, 126
      %v4597 = vpop.permute.xlu0 %4596
      %4598 = vrot.lane.b32.xlu0 %v4220, 126
      %v4599 = vpop.permute.xlu0 %4598
      %4600 = vrot.lane.b32.xlu0 %v4221, 126
      %v4601 = vpop.permute.xlu0 %4600
      %4602 = vrot.lane.b32.xlu0 %v4222, 126
      %v4603 = vpop.permute.xlu0 %4602
      %4604 = vrot.lane.b32.xlu0 %v4223, 126
      %v4605 = vpop.permute.xlu0 %4604
      %4606 = vrot.lane.b32.xlu0 %v4224, 126
      %v4607 = vpop.permute.xlu0 %4606
      %4608 = vrot.lane.b32.xlu0 %v4225, 126
      %v4609 = vpop.permute.xlu0 %4608
      %v4626 = vrcp.pop %v4579
      %v4627 = vmul.f32 %v4546, %v4626
      %v4628 = vrcp.pop %v4581
      %v4629 = vmul.f32 %v4547, %v4628
      %v4630 = vrcp.pop %v4583
      %v4631 = vmul.f32 %v4548, %v4630
      %v4632 = vrcp.pop %v4585
      %v4633 = vmul.f32 %v4549, %v4632
      %v4634 = vrcp.pop %v4587
      %v4635 = vmul.f32 %v4550, %v4634
      %v4636 = vrcp.pop %v4589
      %v4637 = vmul.f32 %v4551, %v4636
      %v4638 = vrcp.pop %v4591
      %v4639 = vmul.f32 %v4552, %v4638
      %v4640 = vrcp.pop %v4593
      %v4641 = vmul.f32 %v4553, %v4640
      %v4642 = vrcp.pop %v4595
      %v4643 = vmul.f32 %v4554, %v4642
      %v4644 = vrcp.pop %v4597
      %v4645 = vmul.f32 %v4555, %v4644
      %v4646 = vrcp.pop %v4599
      %v4647 = vmul.f32 %v4556, %v4646
      %v4648 = vrcp.pop %v4601
      %v4649 = vmul.f32 %v4557, %v4648
      %v4650 = vrcp.pop %v4603
      %v4651 = vmul.f32 %v4558, %v4650
      %v4652 = vrcp.pop %v4605
      %v4653 = vmul.f32 %v4559, %v4652
      %v4654 = vrcp.pop %v4607
      %v4655 = vmul.f32 %v4560, %v4654
      %v4656 = vrcp.pop %v4609
      %v4657 = vmul.f32 %v4561, %v4656
      %v4658 = vmul.f32 %v4627, %v4627
      %v4659 = vmul.f32 %v4629, %v4629
      %v4660 = vmul.f32 %v4631, %v4631
      %v4661 = vmul.f32 %v4633, %v4633
      %v4662 = vmul.f32 %v4635, %v4635
      %v4663 = vmul.f32 %v4637, %v4637
      %v4664 = vmul.f32 %v4639, %v4639
      %v4665 = vmul.f32 %v4641, %v4641
      %v4666 = vmul.f32 %v4643, %v4643
      %v4667 = vmul.f32 %v4645, %v4645
      %v4668 = vmul.f32 %v4647, %v4647
      %v4669 = vmul.f32 %v4649, %v4649
      %v4670 = vmul.f32 %v4651, %v4651
      %v4671 = vmul.f32 %v4653, %v4653
      %v4672 = vmul.f32 %v4655, %v4655
      %v4673 = vmul.f32 %v4657, %v4657
      %v4674 = vmul.f32 %v4658, -0.5
      %v4675 = vmul.f32 %v4659, -0.5
      %v4676 = vmul.f32 %v4660, -0.5
      %v4677 = vmul.f32 %v4661, -0.5
      %v4678 = vmul.f32 %v4662, -0.5
      %v4679 = vmul.f32 %v4663, -0.5
      %v4680 = vmul.f32 %v4664, -0.5
      %v4681 = vmul.f32 %v4665, -0.5
      %v4682 = vmul.f32 %v4666, -0.5
      %v4683 = vmul.f32 %v4667, -0.5
      %v4684 = vmul.f32 %v4668, -0.5
      %v4685 = vmul.f32 %v4669, -0.5
      %v4686 = vmul.f32 %v4670, -0.5
      %v4687 = vmul.f32 %v4671, -0.5
      %v4688 = vmul.f32 %v4672, -0.5
      %v4689 = vmul.f32 %v4673, -0.5
      %v4690 = vlog2.pop %v4210
      %v4691 = vmul.f32 %v4690, 0.6931472
      %v4692 = vlog2.pop %v4211
      %v4693 = vmul.f32 %v4692, 0.6931472
      %v4694 = vlog2.pop %v4212
      %v4695 = vmul.f32 %v4694, 0.6931472
      %v4696 = vlog2.pop %v4213
      %v4697 = vmul.f32 %v4696, 0.6931472
      %v4698 = vlog2.pop %v4214
      %v4699 = vmul.f32 %v4698, 0.6931472
      %v4700 = vlog2.pop %v4215
      %v4701 = vmul.f32 %v4700, 0.6931472
      %v4702 = vlog2.pop %v4216
      %v4703 = vmul.f32 %v4702, 0.6931472
      %v4704 = vlog2.pop %v4217
      %v4705 = vmul.f32 %v4704, 0.6931472
      %v4706 = vlog2.pop %v4218
      %v4707 = vmul.f32 %v4706, 0.6931472
      %v4708 = vlog2.pop %v4219
      %v4709 = vmul.f32 %v4708, 0.6931472
      %v4710 = vlog2.pop %v4220
      %v4711 = vmul.f32 %v4710, 0.6931472
      %v4712 = vlog2.pop %v4221
      %v4713 = vmul.f32 %v4712, 0.6931472
      %v4714 = vlog2.pop %v4222
      %v4715 = vmul.f32 %v4714, 0.6931472
      %v4716 = vlog2.pop %v4223
      %v4717 = vmul.f32 %v4716, 0.6931472
      %v4718 = vlog2.pop %v4224
      %v4719 = vmul.f32 %v4718, 0.6931472
      %v4720 = vlog2.pop %v4225
      %v4721 = vmul.f32 %v4720, 0.6931472
      %4738 = vrot.lane.b32.xlu0 %v4691, 126
      %v4739 = vpop.permute.xlu0 %4738
      %4740 = vrot.lane.b32.xlu0 %v4693, 126
      %v4741 = vpop.permute.xlu0 %4740
      %4742 = vrot.lane.b32.xlu0 %v4695, 126
      %v4743 = vpop.permute.xlu0 %4742
      %4744 = vrot.lane.b32.xlu0 %v4697, 126
      %v4745 = vpop.permute.xlu0 %4744
      %4746 = vrot.lane.b32.xlu0 %v4699, 126
      %v4747 = vpop.permute.xlu0 %4746
      %4748 = vrot.lane.b32.xlu0 %v4701, 126
      %v4749 = vpop.permute.xlu0 %4748
      %4750 = vrot.lane.b32.xlu0 %v4703, 126
      %v4751 = vpop.permute.xlu0 %4750
      %4752 = vrot.lane.b32.xlu0 %v4705, 126
      %v4753 = vpop.permute.xlu0 %4752
      %4754 = vrot.lane.b32.xlu0 %v4707, 126
      %v4755 = vpop.permute.xlu0 %4754
      %4756 = vrot.lane.b32.xlu0 %v4709, 126
      %v4757 = vpop.permute.xlu0 %4756
      %4758 = vrot.lane.b32.xlu0 %v4711, 126
      %v4759 = vpop.permute.xlu0 %4758
      %4760 = vrot.lane.b32.xlu0 %v4713, 126
      %v4761 = vpop.permute.xlu0 %4760
      %4762 = vrot.lane.b32.xlu0 %v4715, 126
      %v4763 = vpop.permute.xlu0 %4762
      %4764 = vrot.lane.b32.xlu0 %v4717, 126
      %v4765 = vpop.permute.xlu0 %4764
      %4766 = vrot.lane.b32.xlu0 %v4719, 126
      %v4767 = vpop.permute.xlu0 %4766
      %4768 = vrot.lane.b32.xlu0 %v4721, 126
      %v4769 = vpop.permute.xlu0 %4768
      %v4786 = vsub.f32 %v4674, %v4739
      %v4787 = vsub.f32 %v4675, %v4741
      %v4788 = vsub.f32 %v4676, %v4743
      %v4789 = vsub.f32 %v4677, %v4745
      %v4790 = vsub.f32 %v4678, %v4747
      %v4791 = vsub.f32 %v4679, %v4749
      %v4792 = vsub.f32 %v4680, %v4751
      %v4793 = vsub.f32 %v4681, %v4753
      %v4794 = vsub.f32 %v4682, %v4755
      %v4795 = vsub.f32 %v4683, %v4757
      %v4796 = vsub.f32 %v4684, %v4759
      %v4797 = vsub.f32 %v4685, %v4761
      %v4798 = vsub.f32 %v4686, %v4763
      %v4799 = vsub.f32 %v4687, %v4765
      %v4800 = vsub.f32 %v4688, %v4767
      %v4801 = vsub.f32 %v4689, %v4769
      %v4802 = vsub.f32 %v4786, 0.9189385
      %v4803 = vsub.f32 %v4787, 0.9189385
      %v4804 = vsub.f32 %v4788, 0.9189385
      %v4805 = vsub.f32 %v4789, 0.9189385
      %v4806 = vsub.f32 %v4790, 0.9189385
      %v4807 = vsub.f32 %v4791, 0.9189385
      %v4808 = vsub.f32 %v4792, 0.9189385
      %v4809 = vsub.f32 %v4793, 0.9189385
      %v4810 = vsub.f32 %v4794, 0.9189385
      %v4811 = vsub.f32 %v4795, 0.9189385
      %v4812 = vsub.f32 %v4796, 0.9189385
      %v4813 = vsub.f32 %v4797, 0.9189385
      %v4814 = vsub.f32 %v4798, 0.9189385
      %v4815 = vsub.f32 %v4799, 0.9189385
      %v4816 = vsub.f32 %v4800, 0.9189385
      %v4817 = vsub.f32 %v4801, 0.9189385
      %vm4818 = vcmask 15360
      %v4819 = vsel %vm4818, %v4802, 0.0
      %4820 = vadd.xlane.f32.xlu0 %v4819
      %v4821 = vpop.xlane.xlu0 %4820
      %v4822 = vsel %vm4818, %v4803, 0.0
      %4823 = vadd.xlane.f32.xlu0 %v4822
      %v4824 = vpop.xlane.xlu0 %4823
      %v4825 = vsel %vm4818, %v4804, 0.0
      %4826 = vadd.xlane.f32.xlu0 %v4825
      %v4827 = vpop.xlane.xlu0 %4826
      %v4828 = vsel %vm4818, %v4805, 0.0
      %4829 = vadd.xlane.f32.xlu0 %v4828
      %v4830 = vpop.xlane.xlu0 %4829
      %v4831 = vsel %vm4818, %v4806, 0.0
      %4832 = vadd.xlane.f32.xlu0 %v4831
      %v4833 = vpop.xlane.xlu0 %4832
      %v4834 = vsel %vm4818, %v4807, 0.0
      %4835 = vadd.xlane.f32.xlu0 %v4834
      %v4836 = vpop.xlane.xlu0 %4835
      %v4837 = vsel %vm4818, %v4808, 0.0
      %4838 = vadd.xlane.f32.xlu0 %v4837
      %v4839 = vpop.xlane.xlu0 %4838
      %v4840 = vsel %vm4818, %v4809, 0.0
      %4841 = vadd.xlane.f32.xlu0 %v4840
      %v4842 = vpop.xlane.xlu0 %4841
      %v4843 = vsel %vm4818, %v4810, 0.0
      %4844 = vadd.xlane.f32.xlu0 %v4843
      %v4845 = vpop.xlane.xlu0 %4844
      %v4846 = vsel %vm4818, %v4811, 0.0
      %4847 = vadd.xlane.f32.xlu0 %v4846
      %v4848 = vpop.xlane.xlu0 %4847
      %v4849 = vsel %vm4818, %v4812, 0.0
      %4850 = vadd.xlane.f32.xlu0 %v4849
      %v4851 = vpop.xlane.xlu0 %4850
      %v4852 = vsel %vm4818, %v4813, 0.0
      %4853 = vadd.xlane.f32.xlu0 %v4852
      %v4854 = vpop.xlane.xlu0 %4853
      %v4855 = vsel %vm4818, %v4814, 0.0
      %4856 = vadd.xlane.f32.xlu0 %v4855
      %v4857 = vpop.xlane.xlu0 %4856
      %v4858 = vsel %vm4818, %v4815, 0.0
      %4859 = vadd.xlane.f32.xlu0 %v4858
      %v4860 = vpop.xlane.xlu0 %4859
      %v4861 = vsel %vm4818, %v4816, 0.0
      %4862 = vadd.xlane.f32.xlu0 %v4861
      %v4863 = vpop.xlane.xlu0 %4862
      %v4864 = vsel %vm4818, %v4817, 0.0
      %4865 = vadd.xlane.f32.xlu0 %v4864
      %v4866 = vpop.xlane.xlu0 %4865
      %4883 = vrot.lane.b32.xlu0 %v3860, 124
      %v4884 = vpop.permute.xlu0 %4883
      %4885 = vrot.lane.b32.xlu0 %v3863, 124
      %v4886 = vpop.permute.xlu0 %4885
      %4887 = vrot.lane.b32.xlu0 %v3868, 124
      %v4888 = vpop.permute.xlu0 %4887
      %4889 = vrot.lane.b32.xlu0 %v3871, 124
      %v4890 = vpop.permute.xlu0 %4889
      %4891 = vrot.lane.b32.xlu0 %v3876, 124
      %v4892 = vpop.permute.xlu0 %4891
      %4893 = vrot.lane.b32.xlu0 %v3879, 124
      %v4894 = vpop.permute.xlu0 %4893
      %4895 = vrot.lane.b32.xlu0 %v3884, 124
      %v4896 = vpop.permute.xlu0 %4895
      %4897 = vrot.lane.b32.xlu0 %v3887, 124
      %v4898 = vpop.permute.xlu0 %4897
      %4899 = vrot.lane.b32.xlu0 %v3892, 124
      %v4900 = vpop.permute.xlu0 %4899
      %4901 = vrot.lane.b32.xlu0 %v3895, 124
      %v4902 = vpop.permute.xlu0 %4901
      %4903 = vrot.lane.b32.xlu0 %v3900, 124
      %v4904 = vpop.permute.xlu0 %4903
      %4905 = vrot.lane.b32.xlu0 %v3903, 124
      %v4906 = vpop.permute.xlu0 %4905
      %4907 = vrot.lane.b32.xlu0 %v3908, 124
      %v4908 = vpop.permute.xlu0 %4907
      %4909 = vrot.lane.b32.xlu0 %v3911, 124
      %v4910 = vpop.permute.xlu0 %4909
      %4911 = vrot.lane.b32.xlu0 %v3916, 124
      %v4912 = vpop.permute.xlu0 %4911
      %4913 = vrot.lane.b32.xlu0 %v3919, 124
      %v4914 = vpop.permute.xlu0 %4913
      %v4931 = vsub.f32 %v4386, %v4884
      %v4932 = vsub.f32 %v4387, %v4886
      %v4933 = vsub.f32 %v4388, %v4888
      %v4934 = vsub.f32 %v4389, %v4890
      %v4935 = vsub.f32 %v4390, %v4892
      %v4936 = vsub.f32 %v4391, %v4894
      %v4937 = vsub.f32 %v4392, %v4896
      %v4938 = vsub.f32 %v4393, %v4898
      %v4939 = vsub.f32 %v4394, %v4900
      %v4940 = vsub.f32 %v4395, %v4902
      %v4941 = vsub.f32 %v4396, %v4904
      %v4942 = vsub.f32 %v4397, %v4906
      %v4943 = vsub.f32 %v4398, %v4908
      %v4944 = vsub.f32 %v4399, %v4910
      %v4945 = vsub.f32 %v4400, %v4912
      %v4946 = vsub.f32 %v4401, %v4914
      %4947 = vrot.lane.b32.xlu0 %v4210, 122
      %v4948 = vpop.permute.xlu0 %4947
      %4949 = vrot.lane.b32.xlu0 %v4211, 122
      %v4950 = vpop.permute.xlu0 %4949
      %4951 = vrot.lane.b32.xlu0 %v4212, 122
      %v4952 = vpop.permute.xlu0 %4951
      %4953 = vrot.lane.b32.xlu0 %v4213, 122
      %v4954 = vpop.permute.xlu0 %4953
      %4955 = vrot.lane.b32.xlu0 %v4214, 122
      %v4956 = vpop.permute.xlu0 %4955
      %4957 = vrot.lane.b32.xlu0 %v4215, 122
      %v4958 = vpop.permute.xlu0 %4957
      %4959 = vrot.lane.b32.xlu0 %v4216, 122
      %v4960 = vpop.permute.xlu0 %4959
      %4961 = vrot.lane.b32.xlu0 %v4217, 122
      %v4962 = vpop.permute.xlu0 %4961
      %4963 = vrot.lane.b32.xlu0 %v4218, 122
      %v4964 = vpop.permute.xlu0 %4963
      %4965 = vrot.lane.b32.xlu0 %v4219, 122
      %v4966 = vpop.permute.xlu0 %4965
      %4967 = vrot.lane.b32.xlu0 %v4220, 122
      %v4968 = vpop.permute.xlu0 %4967
      %4969 = vrot.lane.b32.xlu0 %v4221, 122
      %v4970 = vpop.permute.xlu0 %4969
      %4971 = vrot.lane.b32.xlu0 %v4222, 122
      %v4972 = vpop.permute.xlu0 %4971
      %4973 = vrot.lane.b32.xlu0 %v4223, 122
      %v4974 = vpop.permute.xlu0 %4973
      %4975 = vrot.lane.b32.xlu0 %v4224, 122
      %v4976 = vpop.permute.xlu0 %4975
      %4977 = vrot.lane.b32.xlu0 %v4225, 122
      %v4978 = vpop.permute.xlu0 %4977
      %v4995 = vrcp.pop %v4948
      %v4996 = vmul.f32 %v4931, %v4995
      %v4997 = vrcp.pop %v4950
      %v4998 = vmul.f32 %v4932, %v4997
      %v4999 = vrcp.pop %v4952
      %v5000 = vmul.f32 %v4933, %v4999
      %v5001 = vrcp.pop %v4954
      %v5002 = vmul.f32 %v4934, %v5001
      %v5003 = vrcp.pop %v4956
      %v5004 = vmul.f32 %v4935, %v5003
      %v5005 = vrcp.pop %v4958
      %v5006 = vmul.f32 %v4936, %v5005
      %v5007 = vrcp.pop %v4960
      %v5008 = vmul.f32 %v4937, %v5007
      %v5009 = vrcp.pop %v4962
      %v5010 = vmul.f32 %v4938, %v5009
      %v5011 = vrcp.pop %v4964
      %v5012 = vmul.f32 %v4939, %v5011
      %v5013 = vrcp.pop %v4966
      %v5014 = vmul.f32 %v4940, %v5013
      %v5015 = vrcp.pop %v4968
      %v5016 = vmul.f32 %v4941, %v5015
      %v5017 = vrcp.pop %v4970
      %v5018 = vmul.f32 %v4942, %v5017
      %v5019 = vrcp.pop %v4972
      %v5020 = vmul.f32 %v4943, %v5019
      %v5021 = vrcp.pop %v4974
      %v5022 = vmul.f32 %v4944, %v5021
      %v5023 = vrcp.pop %v4976
      %v5024 = vmul.f32 %v4945, %v5023
      %v5025 = vrcp.pop %v4978
      %v5026 = vmul.f32 %v4946, %v5025
      %v5027 = vmul.f32 %v4996, %v4996
      %v5028 = vmul.f32 %v4998, %v4998
      %v5029 = vmul.f32 %v5000, %v5000
      %v5030 = vmul.f32 %v5002, %v5002
      %v5031 = vmul.f32 %v5004, %v5004
      %v5032 = vmul.f32 %v5006, %v5006
      %v5033 = vmul.f32 %v5008, %v5008
      %v5034 = vmul.f32 %v5010, %v5010
      %v5035 = vmul.f32 %v5012, %v5012
      %v5036 = vmul.f32 %v5014, %v5014
      %v5037 = vmul.f32 %v5016, %v5016
      %v5038 = vmul.f32 %v5018, %v5018
      %v5039 = vmul.f32 %v5020, %v5020
      %v5040 = vmul.f32 %v5022, %v5022
      %v5041 = vmul.f32 %v5024, %v5024
      %v5042 = vmul.f32 %v5026, %v5026
      %v5043 = vmul.f32 %v5027, -0.5
      %v5044 = vmul.f32 %v5028, -0.5
      %v5045 = vmul.f32 %v5029, -0.5
      %v5046 = vmul.f32 %v5030, -0.5
      %v5047 = vmul.f32 %v5031, -0.5
      %v5048 = vmul.f32 %v5032, -0.5
      %v5049 = vmul.f32 %v5033, -0.5
      %v5050 = vmul.f32 %v5034, -0.5
      %v5051 = vmul.f32 %v5035, -0.5
      %v5052 = vmul.f32 %v5036, -0.5
      %v5053 = vmul.f32 %v5037, -0.5
      %v5054 = vmul.f32 %v5038, -0.5
      %v5055 = vmul.f32 %v5039, -0.5
      %v5056 = vmul.f32 %v5040, -0.5
      %v5057 = vmul.f32 %v5041, -0.5
      %v5058 = vmul.f32 %v5042, -0.5
      %5059 = vrot.lane.b32.xlu0 %v4691, 122
      %v5060 = vpop.permute.xlu0 %5059
      %5061 = vrot.lane.b32.xlu0 %v4693, 122
      %v5062 = vpop.permute.xlu0 %5061
      %5063 = vrot.lane.b32.xlu0 %v4695, 122
      %v5064 = vpop.permute.xlu0 %5063
      %5065 = vrot.lane.b32.xlu0 %v4697, 122
      %v5066 = vpop.permute.xlu0 %5065
      %5067 = vrot.lane.b32.xlu0 %v4699, 122
      %v5068 = vpop.permute.xlu0 %5067
      %5069 = vrot.lane.b32.xlu0 %v4701, 122
      %v5070 = vpop.permute.xlu0 %5069
      %5071 = vrot.lane.b32.xlu0 %v4703, 122
      %v5072 = vpop.permute.xlu0 %5071
      %5073 = vrot.lane.b32.xlu0 %v4705, 122
      %v5074 = vpop.permute.xlu0 %5073
      %5075 = vrot.lane.b32.xlu0 %v4707, 122
      %v5076 = vpop.permute.xlu0 %5075
      %5077 = vrot.lane.b32.xlu0 %v4709, 122
      %v5078 = vpop.permute.xlu0 %5077
      %5079 = vrot.lane.b32.xlu0 %v4711, 122
      %v5080 = vpop.permute.xlu0 %5079
      %5081 = vrot.lane.b32.xlu0 %v4713, 122
      %v5082 = vpop.permute.xlu0 %5081
      %5083 = vrot.lane.b32.xlu0 %v4715, 122
      %v5084 = vpop.permute.xlu0 %5083
      %5085 = vrot.lane.b32.xlu0 %v4717, 122
      %v5086 = vpop.permute.xlu0 %5085
      %5087 = vrot.lane.b32.xlu0 %v4719, 122
      %v5088 = vpop.permute.xlu0 %5087
      %5089 = vrot.lane.b32.xlu0 %v4721, 122
      %v5090 = vpop.permute.xlu0 %5089
      %v5107 = vsub.f32 %v5043, %v5060
      %v5108 = vsub.f32 %v5044, %v5062
      %v5109 = vsub.f32 %v5045, %v5064
      %v5110 = vsub.f32 %v5046, %v5066
      %v5111 = vsub.f32 %v5047, %v5068
      %v5112 = vsub.f32 %v5048, %v5070
      %v5113 = vsub.f32 %v5049, %v5072
      %v5114 = vsub.f32 %v5050, %v5074
      %v5115 = vsub.f32 %v5051, %v5076
      %v5116 = vsub.f32 %v5052, %v5078
      %v5117 = vsub.f32 %v5053, %v5080
      %v5118 = vsub.f32 %v5054, %v5082
      %v5119 = vsub.f32 %v5055, %v5084
      %v5120 = vsub.f32 %v5056, %v5086
      %v5121 = vsub.f32 %v5057, %v5088
      %v5122 = vsub.f32 %v5058, %v5090
      %v5123 = vsub.f32 %v5107, 0.9189385
      %v5124 = vsub.f32 %v5108, 0.9189385
      %v5125 = vsub.f32 %v5109, 0.9189385
      %v5126 = vsub.f32 %v5110, 0.9189385
      %v5127 = vsub.f32 %v5111, 0.9189385
      %v5128 = vsub.f32 %v5112, 0.9189385
      %v5129 = vsub.f32 %v5113, 0.9189385
      %v5130 = vsub.f32 %v5114, 0.9189385
      %v5131 = vsub.f32 %v5115, 0.9189385
      %v5132 = vsub.f32 %v5116, 0.9189385
      %v5133 = vsub.f32 %v5117, 0.9189385
      %v5134 = vsub.f32 %v5118, 0.9189385
      %v5135 = vsub.f32 %v5119, 0.9189385
      %v5136 = vsub.f32 %v5120, 0.9189385
      %v5137 = vsub.f32 %v5121, 0.9189385
      %v5138 = vsub.f32 %v5122, 0.9189385
      %v5139 = vsel %vm4818, %v5123, 0.0
      %5140 = vadd.xlane.f32.xlu0 %v5139
      %v5141 = vpop.xlane.xlu0 %5140
      %v5142 = vsel %vm4818, %v5124, 0.0
      %5143 = vadd.xlane.f32.xlu0 %v5142
      %v5144 = vpop.xlane.xlu0 %5143
      %v5145 = vsel %vm4818, %v5125, 0.0
      %5146 = vadd.xlane.f32.xlu0 %v5145
      %v5147 = vpop.xlane.xlu0 %5146
      %v5148 = vsel %vm4818, %v5126, 0.0
      %5149 = vadd.xlane.f32.xlu0 %v5148
      %v5150 = vpop.xlane.xlu0 %5149
      %v5151 = vsel %vm4818, %v5127, 0.0
      %5152 = vadd.xlane.f32.xlu0 %v5151
      %v5153 = vpop.xlane.xlu0 %5152
      %v5154 = vsel %vm4818, %v5128, 0.0
      %5155 = vadd.xlane.f32.xlu0 %v5154
      %v5156 = vpop.xlane.xlu0 %5155
      %v5157 = vsel %vm4818, %v5129, 0.0
      %5158 = vadd.xlane.f32.xlu0 %v5157
      %v5159 = vpop.xlane.xlu0 %5158
      %v5160 = vsel %vm4818, %v5130, 0.0
      %5161 = vadd.xlane.f32.xlu0 %v5160
      %v5162 = vpop.xlane.xlu0 %5161
      %v5163 = vsel %vm4818, %v5131, 0.0
      %5164 = vadd.xlane.f32.xlu0 %v5163
      %v5165 = vpop.xlane.xlu0 %5164
      %v5166 = vsel %vm4818, %v5132, 0.0
      %5167 = vadd.xlane.f32.xlu0 %v5166
      %v5168 = vpop.xlane.xlu0 %5167
      %v5169 = vsel %vm4818, %v5133, 0.0
      %5170 = vadd.xlane.f32.xlu0 %v5169
      %v5171 = vpop.xlane.xlu0 %5170
      %v5172 = vsel %vm4818, %v5134, 0.0
      %5173 = vadd.xlane.f32.xlu0 %v5172
      %v5174 = vpop.xlane.xlu0 %5173
      %v5175 = vsel %vm4818, %v5135, 0.0
      %5176 = vadd.xlane.f32.xlu0 %v5175
      %v5177 = vpop.xlane.xlu0 %5176
      %v5178 = vsel %vm4818, %v5136, 0.0
      %5179 = vadd.xlane.f32.xlu0 %v5178
      %v5180 = vpop.xlane.xlu0 %5179
      %v5181 = vsel %vm4818, %v5137, 0.0
      %5182 = vadd.xlane.f32.xlu0 %v5181
      %v5183 = vpop.xlane.xlu0 %5182
      %v5184 = vsel %vm4818, %v5138, 0.0
      %5185 = vadd.xlane.f32.xlu0 %v5184
      %v5186 = vpop.xlane.xlu0 %5185
      %v5187 = vsub.f32 %v4821, %v5141
      %v5188 = vsub.f32 %v4824, %v5144
      %v5189 = vsub.f32 %v4827, %v5147
      %v5190 = vsub.f32 %v4830, %v5150
      %v5191 = vsub.f32 %v4833, %v5153
      %v5192 = vsub.f32 %v4836, %v5156
      %v5193 = vsub.f32 %v4839, %v5159
      %v5194 = vsub.f32 %v4842, %v5162
      %v5195 = vsub.f32 %v4845, %v5165
      %v5196 = vsub.f32 %v4848, %v5168
      %v5197 = vsub.f32 %v4851, %v5171
      %v5198 = vsub.f32 %v4854, %v5174
      %v5199 = vsub.f32 %v4857, %v5177
      %v5200 = vsub.f32 %v4860, %v5180
      %v5201 = vsub.f32 %v4863, %v5183
      %v5202 = vsub.f32 %v4866, %v5186
      %v5203 = vsub.f32 %v4530, %v3860
      %v5204 = vsub.f32 %v4531, %v3863
      %v5205 = vsub.f32 %v4532, %v3868
      %v5206 = vsub.f32 %v4533, %v3871
      %v5207 = vsub.f32 %v4534, %v3876
      %v5208 = vsub.f32 %v4535, %v3879
      %v5209 = vsub.f32 %v4536, %v3884
      %v5210 = vsub.f32 %v4537, %v3887
      %v5211 = vsub.f32 %v4538, %v3892
      %v5212 = vsub.f32 %v4539, %v3895
      %v5213 = vsub.f32 %v4540, %v3900
      %v5214 = vsub.f32 %v4541, %v3903
      %v5215 = vsub.f32 %v4542, %v3908
      %v5216 = vsub.f32 %v4543, %v3911
      %v5217 = vsub.f32 %v4544, %v3916
      %v5218 = vsub.f32 %v4545, %v3919
      %v5219 = vmul.f32 %v5203, %v4626
      %v5220 = vmul.f32 %v5204, %v4628
      %v5221 = vmul.f32 %v5205, %v4630
      %v5222 = vmul.f32 %v5206, %v4632
      %v5223 = vmul.f32 %v5207, %v4634
      %v5224 = vmul.f32 %v5208, %v4636
      %v5225 = vmul.f32 %v5209, %v4638
      %v5226 = vmul.f32 %v5210, %v4640
      %v5227 = vmul.f32 %v5211, %v4642
      %v5228 = vmul.f32 %v5212, %v4644
      %v5229 = vmul.f32 %v5213, %v4646
      %v5230 = vmul.f32 %v5214, %v4648
      %v5231 = vmul.f32 %v5215, %v4650
      %v5232 = vmul.f32 %v5216, %v4652
      %v5233 = vmul.f32 %v5217, %v4654
      %v5234 = vmul.f32 %v5218, %v4656
      %v5235 = vmul.f32 %v5219, %v5219
      %v5236 = vmul.f32 %v5220, %v5220
      %v5237 = vmul.f32 %v5221, %v5221
      %v5238 = vmul.f32 %v5222, %v5222
      %v5239 = vmul.f32 %v5223, %v5223
      %v5240 = vmul.f32 %v5224, %v5224
      %v5241 = vmul.f32 %v5225, %v5225
      %v5242 = vmul.f32 %v5226, %v5226
      %v5243 = vmul.f32 %v5227, %v5227
      %v5244 = vmul.f32 %v5228, %v5228
      %v5245 = vmul.f32 %v5229, %v5229
      %v5246 = vmul.f32 %v5230, %v5230
      %v5247 = vmul.f32 %v5231, %v5231
      %v5248 = vmul.f32 %v5232, %v5232
      %v5249 = vmul.f32 %v5233, %v5233
      %v5250 = vmul.f32 %v5234, %v5234
      %v5251 = vmul.f32 %v5235, -0.5
      %v5252 = vmul.f32 %v5236, -0.5
      %v5253 = vmul.f32 %v5237, -0.5
      %v5254 = vmul.f32 %v5238, -0.5
      %v5255 = vmul.f32 %v5239, -0.5
      %v5256 = vmul.f32 %v5240, -0.5
      %v5257 = vmul.f32 %v5241, -0.5
      %v5258 = vmul.f32 %v5242, -0.5
      %v5259 = vmul.f32 %v5243, -0.5
      %v5260 = vmul.f32 %v5244, -0.5
      %v5261 = vmul.f32 %v5245, -0.5
      %v5262 = vmul.f32 %v5246, -0.5
      %v5263 = vmul.f32 %v5247, -0.5
      %v5264 = vmul.f32 %v5248, -0.5
      %v5265 = vmul.f32 %v5249, -0.5
      %v5266 = vmul.f32 %v5250, -0.5
      %v5267 = vsub.f32 %v5251, %v4739
      %v5268 = vsub.f32 %v5252, %v4741
      %v5269 = vsub.f32 %v5253, %v4743
      %v5270 = vsub.f32 %v5254, %v4745
      %v5271 = vsub.f32 %v5255, %v4747
      %v5272 = vsub.f32 %v5256, %v4749
      %v5273 = vsub.f32 %v5257, %v4751
      %v5274 = vsub.f32 %v5258, %v4753
      %v5275 = vsub.f32 %v5259, %v4755
      %v5276 = vsub.f32 %v5260, %v4757
      %v5277 = vsub.f32 %v5261, %v4759
      %v5278 = vsub.f32 %v5262, %v4761
      %v5279 = vsub.f32 %v5263, %v4763
      %v5280 = vsub.f32 %v5264, %v4765
      %v5281 = vsub.f32 %v5265, %v4767
      %v5282 = vsub.f32 %v5266, %v4769
      %v5283 = vsub.f32 %v5267, 0.9189385
      %v5284 = vsub.f32 %v5268, 0.9189385
      %v5285 = vsub.f32 %v5269, 0.9189385
      %v5286 = vsub.f32 %v5270, 0.9189385
      %v5287 = vsub.f32 %v5271, 0.9189385
      %v5288 = vsub.f32 %v5272, 0.9189385
      %v5289 = vsub.f32 %v5273, 0.9189385
      %v5290 = vsub.f32 %v5274, 0.9189385
      %v5291 = vsub.f32 %v5275, 0.9189385
      %v5292 = vsub.f32 %v5276, 0.9189385
      %v5293 = vsub.f32 %v5277, 0.9189385
      %v5294 = vsub.f32 %v5278, 0.9189385
      %v5295 = vsub.f32 %v5279, 0.9189385
      %v5296 = vsub.f32 %v5280, 0.9189385
      %v5297 = vsub.f32 %v5281, 0.9189385
      %v5298 = vsub.f32 %v5282, 0.9189385
      %5315 = vrot.lane.b32.xlu0 %v5283, 124
      %v5316 = vpop.permute.xlu0 %5315
      %5317 = vrot.lane.b32.xlu0 %v5284, 124
      %v5318 = vpop.permute.xlu0 %5317
      %5319 = vrot.lane.b32.xlu0 %v5285, 124
      %v5320 = vpop.permute.xlu0 %5319
      %5321 = vrot.lane.b32.xlu0 %v5286, 124
      %v5322 = vpop.permute.xlu0 %5321
      %5323 = vrot.lane.b32.xlu0 %v5287, 124
      %v5324 = vpop.permute.xlu0 %5323
      %5325 = vrot.lane.b32.xlu0 %v5288, 124
      %v5326 = vpop.permute.xlu0 %5325
      %5327 = vrot.lane.b32.xlu0 %v5289, 124
      %v5328 = vpop.permute.xlu0 %5327
      %5329 = vrot.lane.b32.xlu0 %v5290, 124
      %v5330 = vpop.permute.xlu0 %5329
      %5331 = vrot.lane.b32.xlu0 %v5291, 124
      %v5332 = vpop.permute.xlu0 %5331
      %5333 = vrot.lane.b32.xlu0 %v5292, 124
      %v5334 = vpop.permute.xlu0 %5333
      %5335 = vrot.lane.b32.xlu0 %v5293, 124
      %v5336 = vpop.permute.xlu0 %5335
      %5337 = vrot.lane.b32.xlu0 %v5294, 124
      %v5338 = vpop.permute.xlu0 %5337
      %5339 = vrot.lane.b32.xlu0 %v5295, 124
      %v5340 = vpop.permute.xlu0 %5339
      %5341 = vrot.lane.b32.xlu0 %v5296, 124
      %v5342 = vpop.permute.xlu0 %5341
      %5343 = vrot.lane.b32.xlu0 %v5297, 124
      %v5344 = vpop.permute.xlu0 %5343
      %5345 = vrot.lane.b32.xlu0 %v5298, 124
      %v5346 = vpop.permute.xlu0 %5345
      %v5363 = vsel %vm4818, %v5316, 0.0
      %5364 = vadd.xlane.f32.xlu0 %v5363
      %v5365 = vpop.xlane.xlu0 %5364
      %v5366 = vsel %vm4818, %v5318, 0.0
      %5367 = vadd.xlane.f32.xlu0 %v5366
      %v5368 = vpop.xlane.xlu0 %5367
      %v5369 = vsel %vm4818, %v5320, 0.0
      %5370 = vadd.xlane.f32.xlu0 %v5369
      %v5371 = vpop.xlane.xlu0 %5370
      %v5372 = vsel %vm4818, %v5322, 0.0
      %5373 = vadd.xlane.f32.xlu0 %v5372
      %v5374 = vpop.xlane.xlu0 %5373
      %v5375 = vsel %vm4818, %v5324, 0.0
      %5376 = vadd.xlane.f32.xlu0 %v5375
      %v5377 = vpop.xlane.xlu0 %5376
      %v5378 = vsel %vm4818, %v5326, 0.0
      %5379 = vadd.xlane.f32.xlu0 %v5378
      %v5380 = vpop.xlane.xlu0 %5379
      %v5381 = vsel %vm4818, %v5328, 0.0
      %5382 = vadd.xlane.f32.xlu0 %v5381
      %v5383 = vpop.xlane.xlu0 %5382
      %v5384 = vsel %vm4818, %v5330, 0.0
      %5385 = vadd.xlane.f32.xlu0 %v5384
      %v5386 = vpop.xlane.xlu0 %5385
      %v5387 = vsel %vm4818, %v5332, 0.0
      %5388 = vadd.xlane.f32.xlu0 %v5387
      %v5389 = vpop.xlane.xlu0 %5388
      %v5390 = vsel %vm4818, %v5334, 0.0
      %5391 = vadd.xlane.f32.xlu0 %v5390
      %v5392 = vpop.xlane.xlu0 %5391
      %v5393 = vsel %vm4818, %v5336, 0.0
      %5394 = vadd.xlane.f32.xlu0 %v5393
      %v5395 = vpop.xlane.xlu0 %5394
      %v5396 = vsel %vm4818, %v5338, 0.0
      %5397 = vadd.xlane.f32.xlu0 %v5396
      %v5398 = vpop.xlane.xlu0 %5397
      %v5399 = vsel %vm4818, %v5340, 0.0
      %5400 = vadd.xlane.f32.xlu0 %v5399
      %v5401 = vpop.xlane.xlu0 %5400
      %v5402 = vsel %vm4818, %v5342, 0.0
      %5403 = vadd.xlane.f32.xlu0 %v5402
      %v5404 = vpop.xlane.xlu0 %5403
      %v5405 = vsel %vm4818, %v5344, 0.0
      %5406 = vadd.xlane.f32.xlu0 %v5405
      %v5407 = vpop.xlane.xlu0 %5406
      %v5408 = vsel %vm4818, %v5346, 0.0
      %5409 = vadd.xlane.f32.xlu0 %v5408
      %v5410 = vpop.xlane.xlu0 %5409
      %5411 = vrot.lane.b32.xlu0 %v3860, 4
      %v5412 = vpop.permute.xlu0 %5411
      %5413 = vrot.lane.b32.xlu0 %v3863, 4
      %v5414 = vpop.permute.xlu0 %5413
      %5415 = vrot.lane.b32.xlu0 %v3868, 4
      %v5416 = vpop.permute.xlu0 %5415
      %5417 = vrot.lane.b32.xlu0 %v3871, 4
      %v5418 = vpop.permute.xlu0 %5417
      %5419 = vrot.lane.b32.xlu0 %v3876, 4
      %v5420 = vpop.permute.xlu0 %5419
      %5421 = vrot.lane.b32.xlu0 %v3879, 4
      %v5422 = vpop.permute.xlu0 %5421
      %5423 = vrot.lane.b32.xlu0 %v3884, 4
      %v5424 = vpop.permute.xlu0 %5423
      %5425 = vrot.lane.b32.xlu0 %v3887, 4
      %v5426 = vpop.permute.xlu0 %5425
      %5427 = vrot.lane.b32.xlu0 %v3892, 4
      %v5428 = vpop.permute.xlu0 %5427
      %5429 = vrot.lane.b32.xlu0 %v3895, 4
      %v5430 = vpop.permute.xlu0 %5429
      %5431 = vrot.lane.b32.xlu0 %v3900, 4
      %v5432 = vpop.permute.xlu0 %5431
      %5433 = vrot.lane.b32.xlu0 %v3903, 4
      %v5434 = vpop.permute.xlu0 %5433
      %5435 = vrot.lane.b32.xlu0 %v3908, 4
      %v5436 = vpop.permute.xlu0 %5435
      %5437 = vrot.lane.b32.xlu0 %v3911, 4
      %v5438 = vpop.permute.xlu0 %5437
      %5439 = vrot.lane.b32.xlu0 %v3916, 4
      %v5440 = vpop.permute.xlu0 %5439
      %5441 = vrot.lane.b32.xlu0 %v3919, 4
      %v5442 = vpop.permute.xlu0 %5441
      %v5459 = vsub.f32 %v4530, %v5412
      %v5460 = vsub.f32 %v4531, %v5414
      %v5461 = vsub.f32 %v4532, %v5416
      %v5462 = vsub.f32 %v4533, %v5418
      %v5463 = vsub.f32 %v4534, %v5420
      %v5464 = vsub.f32 %v4535, %v5422
      %v5465 = vsub.f32 %v4536, %v5424
      %v5466 = vsub.f32 %v4537, %v5426
      %v5467 = vsub.f32 %v4538, %v5428
      %v5468 = vsub.f32 %v4539, %v5430
      %v5469 = vsub.f32 %v4540, %v5432
      %v5470 = vsub.f32 %v4541, %v5434
      %v5471 = vsub.f32 %v4542, %v5436
      %v5472 = vsub.f32 %v4543, %v5438
      %v5473 = vsub.f32 %v4544, %v5440
      %v5474 = vsub.f32 %v4545, %v5442
      %5475 = vrot.lane.b32.xlu0 %v4210, 2
      %v5476 = vpop.permute.xlu0 %5475
      %5477 = vrot.lane.b32.xlu0 %v4211, 2
      %v5478 = vpop.permute.xlu0 %5477
      %5479 = vrot.lane.b32.xlu0 %v4212, 2
      %v5480 = vpop.permute.xlu0 %5479
      %5481 = vrot.lane.b32.xlu0 %v4213, 2
      %v5482 = vpop.permute.xlu0 %5481
      %5483 = vrot.lane.b32.xlu0 %v4214, 2
      %v5484 = vpop.permute.xlu0 %5483
      %5485 = vrot.lane.b32.xlu0 %v4215, 2
      %v5486 = vpop.permute.xlu0 %5485
      %5487 = vrot.lane.b32.xlu0 %v4216, 2
      %v5488 = vpop.permute.xlu0 %5487
      %5489 = vrot.lane.b32.xlu0 %v4217, 2
      %v5490 = vpop.permute.xlu0 %5489
      %5491 = vrot.lane.b32.xlu0 %v4218, 2
      %v5492 = vpop.permute.xlu0 %5491
      %5493 = vrot.lane.b32.xlu0 %v4219, 2
      %v5494 = vpop.permute.xlu0 %5493
      %5495 = vrot.lane.b32.xlu0 %v4220, 2
      %v5496 = vpop.permute.xlu0 %5495
      %5497 = vrot.lane.b32.xlu0 %v4221, 2
      %v5498 = vpop.permute.xlu0 %5497
      %5499 = vrot.lane.b32.xlu0 %v4222, 2
      %v5500 = vpop.permute.xlu0 %5499
      %5501 = vrot.lane.b32.xlu0 %v4223, 2
      %v5502 = vpop.permute.xlu0 %5501
      %5503 = vrot.lane.b32.xlu0 %v4224, 2
      %v5504 = vpop.permute.xlu0 %5503
      %5505 = vrot.lane.b32.xlu0 %v4225, 2
      %v5506 = vpop.permute.xlu0 %5505
      %v5523 = vrcp.pop %v5476
      %v5524 = vmul.f32 %v5459, %v5523
      %v5525 = vrcp.pop %v5478
      %v5526 = vmul.f32 %v5460, %v5525
      %v5527 = vrcp.pop %v5480
      %v5528 = vmul.f32 %v5461, %v5527
      %v5529 = vrcp.pop %v5482
      %v5530 = vmul.f32 %v5462, %v5529
      %v5531 = vrcp.pop %v5484
      %v5532 = vmul.f32 %v5463, %v5531
      %v5533 = vrcp.pop %v5486
      %v5534 = vmul.f32 %v5464, %v5533
      %v5535 = vrcp.pop %v5488
      %v5536 = vmul.f32 %v5465, %v5535
      %v5537 = vrcp.pop %v5490
      %v5538 = vmul.f32 %v5466, %v5537
      %v5539 = vrcp.pop %v5492
      %v5540 = vmul.f32 %v5467, %v5539
      %v5541 = vrcp.pop %v5494
      %v5542 = vmul.f32 %v5468, %v5541
      %v5543 = vrcp.pop %v5496
      %v5544 = vmul.f32 %v5469, %v5543
      %v5545 = vrcp.pop %v5498
      %v5546 = vmul.f32 %v5470, %v5545
      %v5547 = vrcp.pop %v5500
      %v5548 = vmul.f32 %v5471, %v5547
      %v5549 = vrcp.pop %v5502
      %v5550 = vmul.f32 %v5472, %v5549
      %v5551 = vrcp.pop %v5504
      %v5552 = vmul.f32 %v5473, %v5551
      %v5553 = vrcp.pop %v5506
      %v5554 = vmul.f32 %v5474, %v5553
      %v5555 = vmul.f32 %v5524, %v5524
      %v5556 = vmul.f32 %v5526, %v5526
      %v5557 = vmul.f32 %v5528, %v5528
      %v5558 = vmul.f32 %v5530, %v5530
      %v5559 = vmul.f32 %v5532, %v5532
      %v5560 = vmul.f32 %v5534, %v5534
      %v5561 = vmul.f32 %v5536, %v5536
      %v5562 = vmul.f32 %v5538, %v5538
      %v5563 = vmul.f32 %v5540, %v5540
      %v5564 = vmul.f32 %v5542, %v5542
      %v5565 = vmul.f32 %v5544, %v5544
      %v5566 = vmul.f32 %v5546, %v5546
      %v5567 = vmul.f32 %v5548, %v5548
      %v5568 = vmul.f32 %v5550, %v5550
      %v5569 = vmul.f32 %v5552, %v5552
      %v5570 = vmul.f32 %v5554, %v5554
      %v5571 = vmul.f32 %v5555, -0.5
      %v5572 = vmul.f32 %v5556, -0.5
      %v5573 = vmul.f32 %v5557, -0.5
      %v5574 = vmul.f32 %v5558, -0.5
      %v5575 = vmul.f32 %v5559, -0.5
      %v5576 = vmul.f32 %v5560, -0.5
      %v5577 = vmul.f32 %v5561, -0.5
      %v5578 = vmul.f32 %v5562, -0.5
      %v5579 = vmul.f32 %v5563, -0.5
      %v5580 = vmul.f32 %v5564, -0.5
      %v5581 = vmul.f32 %v5565, -0.5
      %v5582 = vmul.f32 %v5566, -0.5
      %v5583 = vmul.f32 %v5567, -0.5
      %v5584 = vmul.f32 %v5568, -0.5
      %v5585 = vmul.f32 %v5569, -0.5
      %v5586 = vmul.f32 %v5570, -0.5
      %5587 = vrot.lane.b32.xlu0 %v4691, 2
      %v5588 = vpop.permute.xlu0 %5587
      %5589 = vrot.lane.b32.xlu0 %v4693, 2
      %v5590 = vpop.permute.xlu0 %5589
      %5591 = vrot.lane.b32.xlu0 %v4695, 2
      %v5592 = vpop.permute.xlu0 %5591
      %5593 = vrot.lane.b32.xlu0 %v4697, 2
      %v5594 = vpop.permute.xlu0 %5593
      %5595 = vrot.lane.b32.xlu0 %v4699, 2
      %v5596 = vpop.permute.xlu0 %5595
      %5597 = vrot.lane.b32.xlu0 %v4701, 2
      %v5598 = vpop.permute.xlu0 %5597
      %5599 = vrot.lane.b32.xlu0 %v4703, 2
      %v5600 = vpop.permute.xlu0 %5599
      %5601 = vrot.lane.b32.xlu0 %v4705, 2
      %v5602 = vpop.permute.xlu0 %5601
      %5603 = vrot.lane.b32.xlu0 %v4707, 2
      %v5604 = vpop.permute.xlu0 %5603
      %5605 = vrot.lane.b32.xlu0 %v4709, 2
      %v5606 = vpop.permute.xlu0 %5605
      %5607 = vrot.lane.b32.xlu0 %v4711, 2
      %v5608 = vpop.permute.xlu0 %5607
      %5609 = vrot.lane.b32.xlu0 %v4713, 2
      %v5610 = vpop.permute.xlu0 %5609
      %5611 = vrot.lane.b32.xlu0 %v4715, 2
      %v5612 = vpop.permute.xlu0 %5611
      %5613 = vrot.lane.b32.xlu0 %v4717, 2
      %v5614 = vpop.permute.xlu0 %5613
      %5615 = vrot.lane.b32.xlu0 %v4719, 2
      %v5616 = vpop.permute.xlu0 %5615
      %5617 = vrot.lane.b32.xlu0 %v4721, 2
      %v5618 = vpop.permute.xlu0 %5617
      %v5635 = vsub.f32 %v5571, %v5588
      %v5636 = vsub.f32 %v5572, %v5590
      %v5637 = vsub.f32 %v5573, %v5592
      %v5638 = vsub.f32 %v5574, %v5594
      %v5639 = vsub.f32 %v5575, %v5596
      %v5640 = vsub.f32 %v5576, %v5598
      %v5641 = vsub.f32 %v5577, %v5600
      %v5642 = vsub.f32 %v5578, %v5602
      %v5643 = vsub.f32 %v5579, %v5604
      %v5644 = vsub.f32 %v5580, %v5606
      %v5645 = vsub.f32 %v5581, %v5608
      %v5646 = vsub.f32 %v5582, %v5610
      %v5647 = vsub.f32 %v5583, %v5612
      %v5648 = vsub.f32 %v5584, %v5614
      %v5649 = vsub.f32 %v5585, %v5616
      %v5650 = vsub.f32 %v5586, %v5618
      %v5651 = vsub.f32 %v5635, 0.9189385
      %v5652 = vsub.f32 %v5636, 0.9189385
      %v5653 = vsub.f32 %v5637, 0.9189385
      %v5654 = vsub.f32 %v5638, 0.9189385
      %v5655 = vsub.f32 %v5639, 0.9189385
      %v5656 = vsub.f32 %v5640, 0.9189385
      %v5657 = vsub.f32 %v5641, 0.9189385
      %v5658 = vsub.f32 %v5642, 0.9189385
      %v5659 = vsub.f32 %v5643, 0.9189385
      %v5660 = vsub.f32 %v5644, 0.9189385
      %v5661 = vsub.f32 %v5645, 0.9189385
      %v5662 = vsub.f32 %v5646, 0.9189385
      %v5663 = vsub.f32 %v5647, 0.9189385
      %v5664 = vsub.f32 %v5648, 0.9189385
      %v5665 = vsub.f32 %v5649, 0.9189385
      %v5666 = vsub.f32 %v5650, 0.9189385
      %5683 = vrot.lane.b32.xlu0 %v5651, 124
      %v5684 = vpop.permute.xlu0 %5683
      %5685 = vrot.lane.b32.xlu0 %v5652, 124
      %v5686 = vpop.permute.xlu0 %5685
      %5687 = vrot.lane.b32.xlu0 %v5653, 124
      %v5688 = vpop.permute.xlu0 %5687
      %5689 = vrot.lane.b32.xlu0 %v5654, 124
      %v5690 = vpop.permute.xlu0 %5689
      %5691 = vrot.lane.b32.xlu0 %v5655, 124
      %v5692 = vpop.permute.xlu0 %5691
      %5693 = vrot.lane.b32.xlu0 %v5656, 124
      %v5694 = vpop.permute.xlu0 %5693
      %5695 = vrot.lane.b32.xlu0 %v5657, 124
      %v5696 = vpop.permute.xlu0 %5695
      %5697 = vrot.lane.b32.xlu0 %v5658, 124
      %v5698 = vpop.permute.xlu0 %5697
      %5699 = vrot.lane.b32.xlu0 %v5659, 124
      %v5700 = vpop.permute.xlu0 %5699
      %5701 = vrot.lane.b32.xlu0 %v5660, 124
      %v5702 = vpop.permute.xlu0 %5701
      %5703 = vrot.lane.b32.xlu0 %v5661, 124
      %v5704 = vpop.permute.xlu0 %5703
      %5705 = vrot.lane.b32.xlu0 %v5662, 124
      %v5706 = vpop.permute.xlu0 %5705
      %5707 = vrot.lane.b32.xlu0 %v5663, 124
      %v5708 = vpop.permute.xlu0 %5707
      %5709 = vrot.lane.b32.xlu0 %v5664, 124
      %v5710 = vpop.permute.xlu0 %5709
      %5711 = vrot.lane.b32.xlu0 %v5665, 124
      %v5712 = vpop.permute.xlu0 %5711
      %5713 = vrot.lane.b32.xlu0 %v5666, 124
      %v5714 = vpop.permute.xlu0 %5713
      %v5731 = vsel %vm4818, %v5684, 0.0
      %5732 = vadd.xlane.f32.xlu0 %v5731
      %v5733 = vpop.xlane.xlu0 %5732
      %v5734 = vsel %vm4818, %v5686, 0.0
      %5735 = vadd.xlane.f32.xlu0 %v5734
      %v5736 = vpop.xlane.xlu0 %5735
      %v5737 = vsel %vm4818, %v5688, 0.0
      %5738 = vadd.xlane.f32.xlu0 %v5737
      %v5739 = vpop.xlane.xlu0 %5738
      %v5740 = vsel %vm4818, %v5690, 0.0
      %5741 = vadd.xlane.f32.xlu0 %v5740
      %v5742 = vpop.xlane.xlu0 %5741
      %v5743 = vsel %vm4818, %v5692, 0.0
      %5744 = vadd.xlane.f32.xlu0 %v5743
      %v5745 = vpop.xlane.xlu0 %5744
      %v5746 = vsel %vm4818, %v5694, 0.0
      %5747 = vadd.xlane.f32.xlu0 %v5746
      %v5748 = vpop.xlane.xlu0 %5747
      %v5749 = vsel %vm4818, %v5696, 0.0
      %5750 = vadd.xlane.f32.xlu0 %v5749
      %v5751 = vpop.xlane.xlu0 %5750
      %v5752 = vsel %vm4818, %v5698, 0.0
      %5753 = vadd.xlane.f32.xlu0 %v5752
      %v5754 = vpop.xlane.xlu0 %5753
      %v5755 = vsel %vm4818, %v5700, 0.0
      %5756 = vadd.xlane.f32.xlu0 %v5755
      %v5757 = vpop.xlane.xlu0 %5756
      %v5758 = vsel %vm4818, %v5702, 0.0
      %5759 = vadd.xlane.f32.xlu0 %v5758
      %v5760 = vpop.xlane.xlu0 %5759
      %v5761 = vsel %vm4818, %v5704, 0.0
      %5762 = vadd.xlane.f32.xlu0 %v5761
      %v5763 = vpop.xlane.xlu0 %5762
      %v5764 = vsel %vm4818, %v5706, 0.0
      %5765 = vadd.xlane.f32.xlu0 %v5764
      %v5766 = vpop.xlane.xlu0 %5765
      %v5767 = vsel %vm4818, %v5708, 0.0
      %5768 = vadd.xlane.f32.xlu0 %v5767
      %v5769 = vpop.xlane.xlu0 %5768
      %v5770 = vsel %vm4818, %v5710, 0.0
      %5771 = vadd.xlane.f32.xlu0 %v5770
      %v5772 = vpop.xlane.xlu0 %5771
      %v5773 = vsel %vm4818, %v5712, 0.0
      %5774 = vadd.xlane.f32.xlu0 %v5773
      %v5775 = vpop.xlane.xlu0 %5774
      %v5776 = vsel %vm4818, %v5714, 0.0
      %5777 = vadd.xlane.f32.xlu0 %v5776
      %v5778 = vpop.xlane.xlu0 %5777
      %v5779 = vsub.f32 %v5365, %v5733
      %v5780 = vsub.f32 %v5368, %v5736
      %v5781 = vsub.f32 %v5371, %v5739
      %v5782 = vsub.f32 %v5374, %v5742
      %v5783 = vsub.f32 %v5377, %v5745
      %v5784 = vsub.f32 %v5380, %v5748
      %v5785 = vsub.f32 %v5383, %v5751
      %v5786 = vsub.f32 %v5386, %v5754
      %v5787 = vsub.f32 %v5389, %v5757
      %v5788 = vsub.f32 %v5392, %v5760
      %v5789 = vsub.f32 %v5395, %v5763
      %v5790 = vsub.f32 %v5398, %v5766
      %v5791 = vsub.f32 %v5401, %v5769
      %v5792 = vsub.f32 %v5404, %v5772
      %v5793 = vsub.f32 %v5407, %v5775
      %v5794 = vsub.f32 %v5410, %v5778
      %v5795 = vadd.f32 %v5187, %v5779
      %v5796 = vadd.f32 %v5188, %v5780
      %v5797 = vadd.f32 %v5189, %v5781
      %v5798 = vadd.f32 %v5190, %v5782
      %v5799 = vadd.f32 %v5191, %v5783
      %v5800 = vadd.f32 %v5192, %v5784
      %v5801 = vadd.f32 %v5193, %v5785
      %v5802 = vadd.f32 %v5194, %v5786
      %v5803 = vadd.f32 %v5195, %v5787
      %v5804 = vadd.f32 %v5196, %v5788
      %v5805 = vadd.f32 %v5197, %v5789
      %v5806 = vadd.f32 %v5198, %v5790
      %v5807 = vadd.f32 %v5199, %v5791
      %v5808 = vadd.f32 %v5200, %v5792
      %v5809 = vadd.f32 %v5201, %v5793
      %v5810 = vadd.f32 %v5202, %v5794
      %v5811 = vmul.f32 %v5795, 0.5
      %v5812 = vmul.f32 %v5796, 0.5
      %v5813 = vmul.f32 %v5797, 0.5
      %v5814 = vmul.f32 %v5798, 0.5
      %v5815 = vmul.f32 %v5799, 0.5
      %v5816 = vmul.f32 %v5800, 0.5
      %v5817 = vmul.f32 %v5801, 0.5
      %v5818 = vmul.f32 %v5802, 0.5
      %v5819 = vmul.f32 %v5803, 0.5
      %v5820 = vmul.f32 %v5804, 0.5
      %v5821 = vmul.f32 %v5805, 0.5
      %v5822 = vmul.f32 %v5806, 0.5
      %v5823 = vmul.f32 %v5807, 0.5
      %v5824 = vmul.f32 %v5808, 0.5
      %v5825 = vmul.f32 %v5809, 0.5
      %v5826 = vmul.f32 %v5810, 0.5
      %v5827 = vxor.u32 %v5811, 2147483648
      %v5828 = vxor.u32 %v5812, 2147483648
      %v5829 = vxor.u32 %v5813, 2147483648
      %v5830 = vxor.u32 %v5814, 2147483648
      %v5831 = vxor.u32 %v5815, 2147483648
      %v5832 = vxor.u32 %v5816, 2147483648
      %v5833 = vxor.u32 %v5817, 2147483648
      %v5834 = vxor.u32 %v5818, 2147483648
      %v5835 = vxor.u32 %v5819, 2147483648
      %v5836 = vxor.u32 %v5820, 2147483648
      %v5837 = vxor.u32 %v5821, 2147483648
      %v5838 = vxor.u32 %v5822, 2147483648
      %v5839 = vxor.u32 %v5823, 2147483648
      %v5840 = vxor.u32 %v5824, 2147483648
      %v5841 = vxor.u32 %v5825, 2147483648
      %v5842 = vxor.u32 %v5826, 2147483648
      %v5843 = vmul.f32 %v5827, 1.442695
      %v5844 = vpow.pop %v5843
      %v5845 = vmul.f32 %v5828, 1.442695
      %v5846 = vpow.pop %v5845
      %v5847 = vmul.f32 %v5829, 1.442695
      %v5848 = vpow.pop %v5847
      %v5849 = vmul.f32 %v5830, 1.442695
      %v5850 = vpow.pop %v5849
      %v5851 = vmul.f32 %v5831, 1.442695
      %v5852 = vpow.pop %v5851
      %v5853 = vmul.f32 %v5832, 1.442695
      %v5854 = vpow.pop %v5853
      %v5855 = vmul.f32 %v5833, 1.442695
      %v5856 = vpow.pop %v5855
      %v5857 = vmul.f32 %v5834, 1.442695
      %v5858 = vpow.pop %v5857
      %v5859 = vmul.f32 %v5835, 1.442695
      %v5860 = vpow.pop %v5859
      %v5861 = vmul.f32 %v5836, 1.442695
      %v5862 = vpow.pop %v5861
      %v5863 = vmul.f32 %v5837, 1.442695
      %v5864 = vpow.pop %v5863
      %v5865 = vmul.f32 %v5838, 1.442695
      %v5866 = vpow.pop %v5865
      %v5867 = vmul.f32 %v5839, 1.442695
      %v5868 = vpow.pop %v5867
      %v5869 = vmul.f32 %v5840, 1.442695
      %v5870 = vpow.pop %v5869
      %v5871 = vmul.f32 %v5841, 1.442695
      %v5872 = vpow.pop %v5871
      %v5873 = vmul.f32 %v5842, 1.442695
      %v5874 = vpow.pop %v5873
      %v5875 = vadd.f32 %v5844, 1.0
      %v5876 = vadd.f32 %v5846, 1.0
      %v5877 = vadd.f32 %v5848, 1.0
      %v5878 = vadd.f32 %v5850, 1.0
      %v5879 = vadd.f32 %v5852, 1.0
      %v5880 = vadd.f32 %v5854, 1.0
      %v5881 = vadd.f32 %v5856, 1.0
      %v5882 = vadd.f32 %v5858, 1.0
      %v5883 = vadd.f32 %v5860, 1.0
      %v5884 = vadd.f32 %v5862, 1.0
      %v5885 = vadd.f32 %v5864, 1.0
      %v5886 = vadd.f32 %v5866, 1.0
      %v5887 = vadd.f32 %v5868, 1.0
      %v5888 = vadd.f32 %v5870, 1.0
      %v5889 = vadd.f32 %v5872, 1.0
      %v5890 = vadd.f32 %v5874, 1.0
      %v5891 = vrcp.pop %v5875
      %v5892 = vmul.f32 1.0, %v5891
      %v5893 = vrcp.pop %v5876
      %v5894 = vmul.f32 1.0, %v5893
      %v5895 = vrcp.pop %v5877
      %v5896 = vmul.f32 1.0, %v5895
      %v5897 = vrcp.pop %v5878
      %v5898 = vmul.f32 1.0, %v5897
      %v5899 = vrcp.pop %v5879
      %v5900 = vmul.f32 1.0, %v5899
      %v5901 = vrcp.pop %v5880
      %v5902 = vmul.f32 1.0, %v5901
      %v5903 = vrcp.pop %v5881
      %v5904 = vmul.f32 1.0, %v5903
      %v5905 = vrcp.pop %v5882
      %v5906 = vmul.f32 1.0, %v5905
      %v5907 = vrcp.pop %v5883
      %v5908 = vmul.f32 1.0, %v5907
      %v5909 = vrcp.pop %v5884
      %v5910 = vmul.f32 1.0, %v5909
      %v5911 = vrcp.pop %v5885
      %v5912 = vmul.f32 1.0, %v5911
      %v5913 = vrcp.pop %v5886
      %v5914 = vmul.f32 1.0, %v5913
      %v5915 = vrcp.pop %v5887
      %v5916 = vmul.f32 1.0, %v5915
      %v5917 = vrcp.pop %v5888
      %v5918 = vmul.f32 1.0, %v5917
      %v5919 = vrcp.pop %v5889
      %v5920 = vmul.f32 1.0, %v5919
      %v5921 = vrcp.pop %v5890
      %v5922 = vmul.f32 1.0, %v5921
      %v5923 = vmax.f32 %v5892, 0.25
      %v5924 = vmax.f32 %v5894, 0.25
      %v5925 = vmax.f32 %v5896, 0.25
      %v5926 = vmax.f32 %v5898, 0.25
      %v5927 = vmax.f32 %v5900, 0.25
      %v5928 = vmax.f32 %v5902, 0.25
      %v5929 = vmax.f32 %v5904, 0.25
      %v5930 = vmax.f32 %v5906, 0.25
      %v5931 = vmax.f32 %v5908, 0.25
      %v5932 = vmax.f32 %v5910, 0.25
      %v5933 = vmax.f32 %v5912, 0.25
      %v5934 = vmax.f32 %v5914, 0.25
      %v5935 = vmax.f32 %v5916, 0.25
      %v5936 = vmax.f32 %v5918, 0.25
      %v5937 = vmax.f32 %v5920, 0.25
      %v5938 = vmax.f32 %v5922, 0.25
      %v5939 = vmin.f32 %v5923, 0.75
      %v5940 = vmin.f32 %v5924, 0.75
      %v5941 = vmin.f32 %v5925, 0.75
      %v5942 = vmin.f32 %v5926, 0.75
      %v5943 = vmin.f32 %v5927, 0.75
      %v5944 = vmin.f32 %v5928, 0.75
      %v5945 = vmin.f32 %v5929, 0.75
      %v5946 = vmin.f32 %v5930, 0.75
      %v5947 = vmin.f32 %v5931, 0.75
      %v5948 = vmin.f32 %v5932, 0.75
      %v5949 = vmin.f32 %v5933, 0.75
      %v5950 = vmin.f32 %v5934, 0.75
      %v5951 = vmin.f32 %v5935, 0.75
      %v5952 = vmin.f32 %v5936, 0.75
      %v5953 = vmin.f32 %v5937, 0.75
      %v5954 = vmin.f32 %v5938, 0.75
      %v5955 = vld [vmem:[%s9] sm:$0xf]
      %v5956 = vld [vmem:[%s9 + $0x4] sm:$0xf]
      %v5957 = vld [vmem:[%s9 + $0x8] sm:$0xf]
      %v5958 = vld [vmem:[%s9 + $0xc] sm:$0xf]
      %v5959 = vld [vmem:[%s9 + $0x10] sm:$0xf]
      %v5960 = vld [vmem:[%s9 + $0x14] sm:$0xf]
      %v5961 = vld [vmem:[%s9 + $0x18] sm:$0xf]
      %v5962 = vld [vmem:[%s9 + $0x1c] sm:$0xf]
      %v5963 = vld [vmem:[%s9 + $0x20] sm:$0xf]
      %v5964 = vld [vmem:[%s9 + $0x24] sm:$0xf]
      %v5965 = vld [vmem:[%s9 + $0x28] sm:$0xf]
      %v5966 = vld [vmem:[%s9 + $0x2c] sm:$0xf]
      %v5967 = vld [vmem:[%s9 + $0x30] sm:$0xf]
      %v5968 = vld [vmem:[%s9 + $0x34] sm:$0xf]
      %v5969 = vld [vmem:[%s9 + $0x38] sm:$0xf]
      %v5970 = vld [vmem:[%s9 + $0x3c] sm:$0xf]
      %v5971 = vld [vmem:[%s3 + $0x9] sm:$0x1]
      %v5973 = vlaneseq
      %v5974 = vshrl.u32 %v5973, 7
      %v5975 = vsub.s32 0, %v5974
      %v5976 = vrot.slane %v5971, %v5975
      %v5994 = vunpack.c.l.b16 %v5955
      %v5995 = vunpack.c.l.b16 %v5956
      %v5996 = vunpack.c.l.b16 %v5957
      %v5997 = vunpack.c.l.b16 %v5958
      %v5998 = vunpack.c.l.b16 %v5959
      %v5999 = vunpack.c.l.b16 %v5960
      %v6000 = vunpack.c.l.b16 %v5961
      %v6001 = vunpack.c.l.b16 %v5962
      %v6002 = vunpack.c.l.b16 %v5963
      %v6003 = vunpack.c.l.b16 %v5964
      %v6004 = vunpack.c.l.b16 %v5965
      %v6005 = vunpack.c.l.b16 %v5966
      %v6006 = vunpack.c.l.b16 %v5967
      %v6007 = vunpack.c.l.b16 %v5968
      %v6008 = vunpack.c.l.b16 %v5969
      %v6009 = vunpack.c.l.b16 %v5970
      %v6010 = vpack.c.b16 %v5995, %v5994
      %v6011 = vpack.c.b16 %v5997, %v5996
      %v6012 = vpack.c.b16 %v5999, %v5998
      %v6013 = vpack.c.b16 %v6001, %v6000
      %v6014 = vpack.c.b16 %v6003, %v6002
      %v6015 = vpack.c.b16 %v6005, %v6004
      %v6016 = vpack.c.b16 %v6007, %v6006
      %v6017 = vpack.c.b16 %v6009, %v6008
      %6026 = vmatprep.subr.bf16.mxu0 0
      %6027 = vmatpush1.bf16.msra.mxu0 %v6010
      %6028 = vmatprep.subr.bf16.mxu0 0
      %6029 = vmatpush1.bf16.msra.mxu0 %v6011
      %6030 = vmatprep.subr.bf16.mxu0 0
      %6031 = vmatpush1.bf16.msra.mxu0 %v6012
      %6032 = vmatprep.subr.bf16.mxu0 0
      %6033 = vmatpush1.bf16.msra.mxu0 %v6013
      %6034 = vmatprep.subr.bf16.mxu0 0
      %6035 = vmatpush1.bf16.msra.mxu0 %v6014
      %6036 = vmatprep.subr.bf16.mxu0 0
      %6037 = vmatpush1.bf16.msra.mxu0 %v6015
      %6038 = vmatprep.subr.bf16.mxu0 0
      %6039 = vmatpush1.bf16.msra.mxu0 %v6016
      %6040 = vmatprep.subr.bf16.mxu0 0
      %6041 = vmatpush1.bf16.msra.mxu0 %v6017
      %6042 = vmatprep.subr.bf16.mxu0 0
      %6043 = vmatpush1.bf16.msra.mxu0 0
      %6044 = vmatprep.subr.bf16.mxu0 0
      %6045 = vmatpush1.bf16.msra.mxu0 0
      %6046 = vmatprep.subr.bf16.mxu0 0
      %6047 = vmatpush1.bf16.msra.mxu0 0
      %6048 = vmatprep.subr.bf16.mxu0 0
      %6049 = vmatpush1.bf16.msra.mxu0 0
      %6050 = vmatprep.subr.bf16.mxu0 0
      %6051 = vmatpush1.bf16.msra.mxu0 0
      %6052 = vmatprep.subr.bf16.mxu0 0
      %6053 = vmatpush1.bf16.msra.mxu0 0
      %6054 = vmatprep.subr.bf16.mxu0 0
      %6055 = vmatpush1.bf16.msra.mxu0 0
      %6056 = vmatprep.subr.bf16.mxu0 0
      %6057 = vmatpush1.bf16.msra.mxu0 0
      %6058 = vmatprep.mubr.bf16.mxu0 0
      %6059 = vmatmul.mubr.bf16.gmra.mrb[0].mxu0 %v3538
      %v6060 = vpop.f32.mrb[0].mxu0
      %v6061 = vadd.f32 %v5976, %v6060
      %v6062 = vpop.f32.mrb[0].mxu0
      %v6063 = vpop.f32.mrb[0].mxu0
      %v6064 = vadd.f32 %v5976, %v6063
      %v6065 = vpop.f32.mrb[0].mxu0
      %6066 = vmatprep.mubr.bf16.mxu0 0
      %6067 = vmatmul.mubr.bf16.gmra.mrb[0].mxu0 %v3539
      %v6068 = vpop.f32.mrb[0].mxu0
      %v6069 = vadd.f32 %v5976, %v6068
      %v6070 = vpop.f32.mrb[0].mxu0
      %v6071 = vpop.f32.mrb[0].mxu0
      %v6072 = vadd.f32 %v5976, %v6071
      %v6073 = vpop.f32.mrb[0].mxu0
      %6074 = vmatprep.mubr.bf16.mxu0 0
      %6075 = vmatmul.mubr.bf16.gmra.mrb[0].mxu0 %v3540
      %v6076 = vpop.f32.mrb[0].mxu0
      %v6077 = vadd.f32 %v5976, %v6076
      %v6078 = vpop.f32.mrb[0].mxu0
      %v6079 = vpop.f32.mrb[0].mxu0
      %v6080 = vadd.f32 %v5976, %v6079
      %v6081 = vpop.f32.mrb[0].mxu0
      %6082 = vmatprep.mubr.bf16.mxu0 0
      %6083 = vmatmul.mubr.bf16.gmra.mrb[0].mxu0 %v3541
      %v6084 = vpop.f32.mrb[0].mxu0
      %v6085 = vadd.f32 %v5976, %v6084
      %v6086 = vpop.f32.mrb[0].mxu0
      %v6087 = vpop.f32.mrb[0].mxu0
      %v6088 = vadd.f32 %v5976, %v6087
      %v6089 = vpop.f32.mrb[0].mxu0
      %6090 = vmatprep.mubr.bf16.mxu0 0
      %6091 = vmatmul.mubr.bf16.gmra.mrb[0].mxu0 %v3542
      %v6092 = vpop.f32.mrb[0].mxu0
      %v6093 = vadd.f32 %v5976, %v6092
      %v6094 = vpop.f32.mrb[0].mxu0
      %v6095 = vpop.f32.mrb[0].mxu0
      %v6096 = vadd.f32 %v5976, %v6095
      %v6097 = vpop.f32.mrb[0].mxu0
      %6098 = vmatprep.mubr.bf16.mxu0 0
      %6099 = vmatmul.mubr.bf16.gmra.mrb[0].mxu0 %v3543
      %v6100 = vpop.f32.mrb[0].mxu0
      %v6101 = vadd.f32 %v5976, %v6100
      %v6102 = vpop.f32.mrb[0].mxu0
      %v6103 = vpop.f32.mrb[0].mxu0
      %v6104 = vadd.f32 %v5976, %v6103
      %v6105 = vpop.f32.mrb[0].mxu0
      %6106 = vmatprep.mubr.bf16.mxu0 0
      %6107 = vmatmul.mubr.bf16.gmra.mrb[0].mxu0 %v3544
      %v6108 = vpop.f32.mrb[0].mxu0
      %v6109 = vadd.f32 %v5976, %v6108
      %v6110 = vpop.f32.mrb[0].mxu0
      %v6111 = vpop.f32.mrb[0].mxu0
      %v6112 = vadd.f32 %v5976, %v6111
      %v6113 = vpop.f32.mrb[0].mxu0
      %6114 = vmatprep.mubr.bf16.mxu0 0
      %6115 = vmatmul.mubr.bf16.gmra.mrb[0].mxu0 %v3545
      %v6116 = vpop.f32.mrb[0].mxu0
      %v6117 = vadd.f32 %v5976, %v6116
      %v6118 = vpop.f32.mrb[0].mxu0
      %v6119 = vpop.f32.mrb[0].mxu0
      %v6120 = vadd.f32 %v5976, %v6119
      %v6121 = vpop.f32.mrb[0].mxu0
      %6122 = vdwg.mxu0
      %v6123 = vmax.f32 %v6061, 0.0
      %v6124 = vmax.f32 %v6064, 0.0
      %v6125 = vmax.f32 %v6069, 0.0
      %v6126 = vmax.f32 %v6072, 0.0
      %v6127 = vmax.f32 %v6077, 0.0
      %v6128 = vmax.f32 %v6080, 0.0
      %v6129 = vmax.f32 %v6085, 0.0
      %v6130 = vmax.f32 %v6088, 0.0
      %v6131 = vmax.f32 %v6093, 0.0
      %v6132 = vmax.f32 %v6096, 0.0
      %v6133 = vmax.f32 %v6101, 0.0
      %v6134 = vmax.f32 %v6104, 0.0
      %v6135 = vmax.f32 %v6109, 0.0
      %v6136 = vmax.f32 %v6112, 0.0
      %v6137 = vmax.f32 %v6117, 0.0
      %v6138 = vmax.f32 %v6120, 0.0
      %v6139 = vld [vmem:[%s10] sm:$0xf]
      %v6140 = vld [vmem:[%s10 + $0x4] sm:$0xf]
      %v6141 = vld [vmem:[%s10 + $0x8] sm:$0xf]
      %v6142 = vld [vmem:[%s10 + $0xc] sm:$0xf]
      %v6143 = vld [vmem:[%s10 + $0x10] sm:$0xf]
      %v6144 = vld [vmem:[%s10 + $0x14] sm:$0xf]
      %v6145 = vld [vmem:[%s10 + $0x18] sm:$0xf]
      %v6146 = vld [vmem:[%s10 + $0x1c] sm:$0xf]
      %v6147 = vld [vmem:[%s10 + $0x20] sm:$0xf]
      %v6148 = vld [vmem:[%s10 + $0x24] sm:$0xf]
      %v6149 = vld [vmem:[%s10 + $0x28] sm:$0xf]
      %v6150 = vld [vmem:[%s10 + $0x2c] sm:$0xf]
      %v6151 = vld [vmem:[%s10 + $0x30] sm:$0xf]
      %v6152 = vld [vmem:[%s10 + $0x34] sm:$0xf]
      %v6153 = vld [vmem:[%s10 + $0x38] sm:$0xf]
      %v6154 = vld [vmem:[%s10 + $0x3c] sm:$0xf]
      %v6155 = vpack.c.bf16 %v6124, %v6123
      %v6156 = vpack.c.bf16 %v6126, %v6125
      %v6157 = vpack.c.bf16 %v6128, %v6127
      %v6158 = vpack.c.bf16 %v6130, %v6129
      %v6159 = vpack.c.bf16 %v6132, %v6131
      %v6160 = vpack.c.bf16 %v6134, %v6133
      %v6161 = vpack.c.bf16 %v6136, %v6135
      %v6162 = vpack.c.bf16 %v6138, %v6137
      %v6163 = vld [vmem:[%s3 + $0xa] sm:$0x1]
      %v6165 = vlaneseq
      %v6166 = vshrl.u32 %v6165, 7
      %v6167 = vsub.s32 0, %v6166
      %v6168 = vrot.slane %v6163, %v6167
      %v6186 = vunpack.c.l.b16 %v6139
      %v6187 = vunpack.c.l.b16 %v6140
      %v6188 = vunpack.c.l.b16 %v6141
      %v6189 = vunpack.c.l.b16 %v6142
      %v6190 = vunpack.c.l.b16 %v6143
      %v6191 = vunpack.c.l.b16 %v6144
      %v6192 = vunpack.c.l.b16 %v6145
      %v6193 = vunpack.c.l.b16 %v6146
      %v6194 = vunpack.c.l.b16 %v6147
      %v6195 = vunpack.c.l.b16 %v6148
      %v6196 = vunpack.c.l.b16 %v6149
      %v6197 = vunpack.c.l.b16 %v6150
      %v6198 = vunpack.c.l.b16 %v6151
      %v6199 = vunpack.c.l.b16 %v6152
      %v6200 = vunpack.c.l.b16 %v6153
      %v6201 = vunpack.c.l.b16 %v6154
      %v6202 = vpack.c.b16 %v6187, %v6186
      %v6203 = vpack.c.b16 %v6189, %v6188
      %v6204 = vpack.c.b16 %v6191, %v6190
      %v6205 = vpack.c.b16 %v6193, %v6192
      %v6206 = vpack.c.b16 %v6195, %v6194
      %v6207 = vpack.c.b16 %v6197, %v6196
      %v6208 = vpack.c.b16 %v6199, %v6198
      %v6209 = vpack.c.b16 %v6201, %v6200
      %6218 = vmatprep.subr.bf16.mxu0 0
      %6219 = vmatpush1.bf16.msra.mxu0 %v6202
      %6220 = vmatprep.subr.bf16.mxu0 0
      %6221 = vmatpush1.bf16.msra.mxu0 %v6203
      %6222 = vmatprep.subr.bf16.mxu0 0
      %6223 = vmatpush1.bf16.msra.mxu0 %v6204
      %6224 = vmatprep.subr.bf16.mxu0 0
      %6225 = vmatpush1.bf16.msra.mxu0 %v6205
      %6226 = vmatprep.subr.bf16.mxu0 0
      %6227 = vmatpush1.bf16.msra.mxu0 %v6206
      %6228 = vmatprep.subr.bf16.mxu0 0
      %6229 = vmatpush1.bf16.msra.mxu0 %v6207
      %6230 = vmatprep.subr.bf16.mxu0 0
      %6231 = vmatpush1.bf16.msra.mxu0 %v6208
      %6232 = vmatprep.subr.bf16.mxu0 0
      %6233 = vmatpush1.bf16.msra.mxu0 %v6209
      %6234 = vmatprep.subr.bf16.mxu0 0
      %6235 = vmatpush1.bf16.msra.mxu0 0
      %6236 = vmatprep.subr.bf16.mxu0 0
      %6237 = vmatpush1.bf16.msra.mxu0 0
      %6238 = vmatprep.subr.bf16.mxu0 0
      %6239 = vmatpush1.bf16.msra.mxu0 0
      %6240 = vmatprep.subr.bf16.mxu0 0
      %6241 = vmatpush1.bf16.msra.mxu0 0
      %6242 = vmatprep.subr.bf16.mxu0 0
      %6243 = vmatpush1.bf16.msra.mxu0 0
      %6244 = vmatprep.subr.bf16.mxu0 0
      %6245 = vmatpush1.bf16.msra.mxu0 0
      %6246 = vmatprep.subr.bf16.mxu0 0
      %6247 = vmatpush1.bf16.msra.mxu0 0
      %6248 = vmatprep.subr.bf16.mxu0 0
      %6249 = vmatpush1.bf16.msra.mxu0 0
      %6250 = vmatprep.mubr.bf16.mxu0 0
      %6251 = vmatmul.mubr.bf16.gmra.mrb[0].mxu0 %v6155
      %v6252 = vpop.f32.mrb[0].mxu0
      %v6253 = vadd.f32 %v6168, %v6252
      %v6254 = vpop.f32.mrb[0].mxu0
      %v6255 = vpop.f32.mrb[0].mxu0
      %v6256 = vadd.f32 %v6168, %v6255
      %v6257 = vpop.f32.mrb[0].mxu0
      %6258 = vmatprep.mubr.bf16.mxu0 0
      %6259 = vmatmul.mubr.bf16.gmra.mrb[0].mxu0 %v6156
      %v6260 = vpop.f32.mrb[0].mxu0
      %v6261 = vadd.f32 %v6168, %v6260
      %v6262 = vpop.f32.mrb[0].mxu0
      %v6263 = vpop.f32.mrb[0].mxu0
      %v6264 = vadd.f32 %v6168, %v6263
      %v6265 = vpop.f32.mrb[0].mxu0
      %6266 = vmatprep.mubr.bf16.mxu0 0
      %6267 = vmatmul.mubr.bf16.gmra.mrb[0].mxu0 %v6157
      %v6268 = vpop.f32.mrb[0].mxu0
      %v6269 = vadd.f32 %v6168, %v6268
      %v6270 = vpop.f32.mrb[0].mxu0
      %v6271 = vpop.f32.mrb[0].mxu0
      %v6272 = vadd.f32 %v6168, %v6271
      %v6273 = vpop.f32.mrb[0].mxu0
      %6274 = vmatprep.mubr.bf16.mxu0 0
      %6275 = vmatmul.mubr.bf16.gmra.mrb[0].mxu0 %v6158
      %v6276 = vpop.f32.mrb[0].mxu0
      %v6277 = vadd.f32 %v6168, %v6276
      %v6278 = vpop.f32.mrb[0].mxu0
      %v6279 = vpop.f32.mrb[0].mxu0
      %v6280 = vadd.f32 %v6168, %v6279
      %v6281 = vpop.f32.mrb[0].mxu0
      %6282 = vmatprep.mubr.bf16.mxu0 0
      %6283 = vmatmul.mubr.bf16.gmra.mrb[0].mxu0 %v6159
      %v6284 = vpop.f32.mrb[0].mxu0
      %v6285 = vadd.f32 %v6168, %v6284
      %v6286 = vpop.f32.mrb[0].mxu0
      %v6287 = vpop.f32.mrb[0].mxu0
      %v6288 = vadd.f32 %v6168, %v6287
      %v6289 = vpop.f32.mrb[0].mxu0
      %6290 = vmatprep.mubr.bf16.mxu0 0
      %6291 = vmatmul.mubr.bf16.gmra.mrb[0].mxu0 %v6160
      %v6292 = vpop.f32.mrb[0].mxu0
      %v6293 = vadd.f32 %v6168, %v6292
      %v6294 = vpop.f32.mrb[0].mxu0
      %v6295 = vpop.f32.mrb[0].mxu0
      %v6296 = vadd.f32 %v6168, %v6295
      %v6297 = vpop.f32.mrb[0].mxu0
      %6298 = vmatprep.mubr.bf16.mxu0 0
      %6299 = vmatmul.mubr.bf16.gmra.mrb[0].mxu0 %v6161
      %v6300 = vpop.f32.mrb[0].mxu0
      %v6301 = vadd.f32 %v6168, %v6300
      %v6302 = vpop.f32.mrb[0].mxu0
      %v6303 = vpop.f32.mrb[0].mxu0
      %v6304 = vadd.f32 %v6168, %v6303
      %v6305 = vpop.f32.mrb[0].mxu0
      %6306 = vmatprep.mubr.bf16.mxu0 0
      %6307 = vmatmul.mubr.bf16.gmra.mrb[0].mxu0 %v6162
      %v6308 = vpop.f32.mrb[0].mxu0
      %v6309 = vadd.f32 %v6168, %v6308
      %v6310 = vpop.f32.mrb[0].mxu0
      %v6311 = vpop.f32.mrb[0].mxu0
      %v6312 = vadd.f32 %v6168, %v6311
      %v6313 = vpop.f32.mrb[0].mxu0
      %6314 = vdwg.mxu0
      %v6315 = vmax.f32 %v6253, 0.0
      %v6316 = vmax.f32 %v6256, 0.0
      %v6317 = vmax.f32 %v6261, 0.0
      %v6318 = vmax.f32 %v6264, 0.0
      %v6319 = vmax.f32 %v6269, 0.0
      %v6320 = vmax.f32 %v6272, 0.0
      %v6321 = vmax.f32 %v6277, 0.0
      %v6322 = vmax.f32 %v6280, 0.0
      %v6323 = vmax.f32 %v6285, 0.0
      %v6324 = vmax.f32 %v6288, 0.0
      %v6325 = vmax.f32 %v6293, 0.0
      %v6326 = vmax.f32 %v6296, 0.0
      %v6327 = vmax.f32 %v6301, 0.0
      %v6328 = vmax.f32 %v6304, 0.0
      %v6329 = vmax.f32 %v6309, 0.0
      %v6330 = vmax.f32 %v6312, 0.0
      %v6331 = vsub.f32 1.0, %v5939
      %v6332 = vsub.f32 1.0, %v5940
      %v6333 = vsub.f32 1.0, %v5941
      %v6334 = vsub.f32 1.0, %v5942
      %v6335 = vsub.f32 1.0, %v5943
      %v6336 = vsub.f32 1.0, %v5944
      %v6337 = vsub.f32 1.0, %v5945
      %v6338 = vsub.f32 1.0, %v5946
      %v6339 = vsub.f32 1.0, %v5947
      %v6340 = vsub.f32 1.0, %v5948
      %v6341 = vsub.f32 1.0, %v5949
      %v6342 = vsub.f32 1.0, %v5950
      %v6343 = vsub.f32 1.0, %v5951
      %v6344 = vsub.f32 1.0, %v5952
      %v6345 = vsub.f32 1.0, %v5953
      %v6346 = vsub.f32 1.0, %v5954
      %v6347 = vmul.f32 %v6331, %v3506
      %v6348 = vmul.f32 %v6332, %v3507
      %v6349 = vmul.f32 %v6333, %v3508
      %v6350 = vmul.f32 %v6334, %v3509
      %v6351 = vmul.f32 %v6335, %v3510
      %v6352 = vmul.f32 %v6336, %v3511
      %v6353 = vmul.f32 %v6337, %v3512
      %v6354 = vmul.f32 %v6338, %v3513
      %v6355 = vmul.f32 %v6339, %v3514
      %v6356 = vmul.f32 %v6340, %v3515
      %v6357 = vmul.f32 %v6341, %v3516
      %v6358 = vmul.f32 %v6342, %v3517
      %v6359 = vmul.f32 %v6343, %v3518
      %v6360 = vmul.f32 %v6344, %v3519
      %v6361 = vmul.f32 %v6345, %v3520
      %v6362 = vmul.f32 %v6346, %v3521
      %v6363 = vmul.f32 %v5939, %v6315
      %v6364 = vmul.f32 %v5940, %v6316
      %v6365 = vmul.f32 %v5941, %v6317
      %v6366 = vmul.f32 %v5942, %v6318
      %v6367 = vmul.f32 %v5943, %v6319
      %v6368 = vmul.f32 %v5944, %v6320
      %v6369 = vmul.f32 %v5945, %v6321
      %v6370 = vmul.f32 %v5946, %v6322
      %v6371 = vmul.f32 %v5947, %v6323
      %v6372 = vmul.f32 %v5948, %v6324
      %v6373 = vmul.f32 %v5949, %v6325
      %v6374 = vmul.f32 %v5950, %v6326
      %v6375 = vmul.f32 %v5951, %v6327
      %v6376 = vmul.f32 %v5952, %v6328
      %v6377 = vmul.f32 %v5953, %v6329
      %v6378 = vmul.f32 %v5954, %v6330
      %v6379 = vld [vmem:[%s13 + $0x40] sm:$0xf]
      %v6380 = vld [vmem:[%s13 + $0x44] sm:$0xf]
      %v6381 = vld [vmem:[%s13 + $0x48] sm:$0xf]
      %v6382 = vld [vmem:[%s13 + $0x4c] sm:$0xf]
      %v6383 = vld [vmem:[%s13 + $0x50] sm:$0xf]
      %v6384 = vld [vmem:[%s13 + $0x54] sm:$0xf]
      %v6385 = vld [vmem:[%s13 + $0x58] sm:$0xf]
      %v6386 = vld [vmem:[%s13 + $0x5c] sm:$0xf]
      %v6387 = vld [vmem:[%s13 + $0x60] sm:$0xf]
      %v6388 = vld [vmem:[%s13 + $0x64] sm:$0xf]
      %v6389 = vld [vmem:[%s13 + $0x68] sm:$0xf]
      %v6390 = vld [vmem:[%s13 + $0x6c] sm:$0xf]
      %v6391 = vld [vmem:[%s13 + $0x70] sm:$0xf]
      %v6392 = vld [vmem:[%s13 + $0x74] sm:$0xf]
      %v6393 = vld [vmem:[%s13 + $0x78] sm:$0xf]
      %v6394 = vld [vmem:[%s13 + $0x7c] sm:$0xf]
      %v6395 = vld [vmem:[%s13 + $0x80] sm:$0xf]
      %v6396 = vld [vmem:[%s13 + $0x84] sm:$0xf]
      %v6397 = vld [vmem:[%s13 + $0x88] sm:$0xf]
      %v6398 = vld [vmem:[%s13 + $0x8c] sm:$0xf]
      %v6399 = vld [vmem:[%s13 + $0x90] sm:$0xf]
      %v6400 = vld [vmem:[%s13 + $0x94] sm:$0xf]
      %v6401 = vld [vmem:[%s13 + $0x98] sm:$0xf]
      %v6402 = vld [vmem:[%s13 + $0x9c] sm:$0xf]
      %v6403 = vpack.c.bf16 %v6348, %v6347
      %v6404 = vpack.c.bf16 %v6364, %v6363
      %v6405 = vpack.c.bf16 %v6350, %v6349
      %v6406 = vpack.c.bf16 %v6366, %v6365
      %v6407 = vpack.c.bf16 %v6352, %v6351
      %v6408 = vpack.c.bf16 %v6368, %v6367
      %v6409 = vpack.c.bf16 %v6354, %v6353
      %v6410 = vpack.c.bf16 %v6370, %v6369
      %v6411 = vpack.c.bf16 %v6356, %v6355
      %v6412 = vpack.c.bf16 %v6372, %v6371
      %v6413 = vpack.c.bf16 %v6358, %v6357
      %v6414 = vpack.c.bf16 %v6374, %v6373
      %v6415 = vpack.c.bf16 %v6360, %v6359
      %v6416 = vpack.c.bf16 %v6376, %v6375
      %v6417 = vpack.c.bf16 %v6362, %v6361
      %v6418 = vpack.c.bf16 %v6378, %v6377
      %v6419 = vld [vmem:[%s3 + $0xf] sm:$0x1]
      %v6421 = vlaneseq
      %v6422 = vshrl.u32 %v6421, 7
      %v6423 = vsub.s32 0, %v6422
      %v6424 = vrot.slane %v6419, %v6423
      %v6450 = vunpack.c.l.b16 %v6379
      %v6451 = vunpack.c.l.b16 %v6380
      %v6452 = vunpack.c.l.b16 %v6381
      %v6453 = vunpack.c.l.b16 %v6382
      %v6454 = vunpack.c.l.b16 %v6383
      %v6455 = vunpack.c.l.b16 %v6384
      %v6456 = vunpack.c.l.b16 %v6385
      %v6457 = vunpack.c.l.b16 %v6386
      %v6458 = vunpack.c.l.b16 %v6387
      %v6459 = vunpack.c.l.b16 %v6388
      %v6460 = vunpack.c.l.b16 %v6389
      %v6461 = vunpack.c.l.b16 %v6390
      %v6462 = vunpack.c.l.b16 %v6391
      %v6463 = vunpack.c.l.b16 %v6392
      %v6464 = vunpack.c.l.b16 %v6393
      %v6465 = vunpack.c.l.b16 %v6394
      %v6466 = vunpack.c.l.b16 %v6395
      %v6467 = vunpack.c.l.b16 %v6396
      %v6468 = vunpack.c.l.b16 %v6397
      %v6469 = vunpack.c.l.b16 %v6398
      %v6470 = vunpack.c.l.b16 %v6399
      %v6471 = vunpack.c.l.b16 %v6400
      %v6472 = vunpack.c.l.b16 %v6401
      %v6473 = vunpack.c.l.b16 %v6402
      %v6474 = vpack.c.b16 %v6451, %v6450
      %v6475 = vpack.c.b16 %v6453, %v6452
      %v6476 = vpack.c.b16 %v6455, %v6454
      %v6477 = vpack.c.b16 %v6457, %v6456
      %v6478 = vpack.c.b16 %v6459, %v6458
      %v6479 = vpack.c.b16 %v6461, %v6460
      %v6480 = vpack.c.b16 %v6463, %v6462
      %v6481 = vpack.c.b16 %v6465, %v6464
      %v6482 = vpack.c.b16 %v6467, %v6466
      %v6483 = vpack.c.b16 %v6469, %v6468
      %v6484 = vpack.c.b16 %v6471, %v6470
      %v6485 = vpack.c.b16 %v6473, %v6472
      %vm6498 = vcmask 523264
      %v6500 = vsel %vm6498, %v6404, 0
      %v6503 = vsel %vm6498, %v6406, 0
      %v6506 = vsel %vm6498, %v6408, 0
      %v6509 = vsel %vm6498, %v6410, 0
      %v6512 = vsel %vm6498, %v6412, 0
      %v6515 = vsel %vm6498, %v6414, 0
      %v6518 = vsel %vm6498, %v6416, 0
      %v6521 = vsel %vm6498, %v6418, 0
      %6523 = vmatprep.subr.bf16.mxu0 0
      %6524 = vmatpush1.bf16.msra.mxu0 %v6474
      %6525 = vmatprep.subr.bf16.mxu0 0
      %6526 = vmatpush1.bf16.msra.mxu0 %v6475
      %6527 = vmatprep.subr.bf16.mxu0 0
      %6528 = vmatpush1.bf16.msra.mxu0 %v6476
      %6529 = vmatprep.subr.bf16.mxu0 0
      %6530 = vmatpush1.bf16.msra.mxu0 %v6477
      %6531 = vmatprep.subr.bf16.mxu0 0
      %6532 = vmatpush1.bf16.msra.mxu0 %v6478
      %6533 = vmatprep.subr.bf16.mxu0 0
      %6534 = vmatpush1.bf16.msra.mxu0 %v6479
      %6535 = vmatprep.subr.bf16.mxu0 0
      %6536 = vmatpush1.bf16.msra.mxu0 %v6480
      %6537 = vmatprep.subr.bf16.mxu0 0
      %6538 = vmatpush1.bf16.msra.mxu0 %v6481
      %6539 = vmatprep.subr.bf16.mxu0 0
      %6540 = vmatpush1.bf16.msra.mxu0 %v6482
      %6541 = vmatprep.subr.bf16.mxu0 0
      %6542 = vmatpush1.bf16.msra.mxu0 %v6483
      %6543 = vmatprep.subr.bf16.mxu0 0
      %6544 = vmatpush1.bf16.msra.mxu0 %v6484
      %6545 = vmatprep.subr.bf16.mxu0 0
      %6546 = vmatpush1.bf16.msra.mxu0 %v6485
      %6547 = vmatprep.subr.bf16.mxu0 0
      %6548 = vmatpush1.bf16.msra.mxu0 0
      %6549 = vmatprep.subr.bf16.mxu0 0
      %6550 = vmatpush1.bf16.msra.mxu0 0
      %6551 = vmatprep.subr.bf16.mxu0 0
      %6552 = vmatpush1.bf16.msra.mxu0 0
      %6553 = vmatprep.subr.bf16.mxu0 0
      %6554 = vmatpush1.bf16.msra.mxu0 0
      %6555 = vmatprep.mubr.bf16.mxu0 %v6500
      %6556 = vmatmul.mubr.bf16.gmra.mrb[0].mxu0 %v6403
      %v6557 = vpop.f32.mrb[0].mxu0
      %v6558 = vadd.f32 %v6424, %v6557
      %v6559 = vpop.f32.mrb[0].mxu0
      %v6560 = vpop.f32.mrb[0].mxu0
      %v6561 = vadd.f32 %v6424, %v6560
      %v6562 = vpop.f32.mrb[0].mxu0
      %6563 = vmatprep.mubr.bf16.mxu0 %v6503
      %6564 = vmatmul.mubr.bf16.gmra.mrb[0].mxu0 %v6405
      %v6565 = vpop.f32.mrb[0].mxu0
      %v6566 = vadd.f32 %v6424, %v6565
      %v6567 = vpop.f32.mrb[0].mxu0
      %v6568 = vpop.f32.mrb[0].mxu0
      %v6569 = vadd.f32 %v6424, %v6568
      %v6570 = vpop.f32.mrb[0].mxu0
      %6571 = vmatprep.mubr.bf16.mxu0 %v6506
      %6572 = vmatmul.mubr.bf16.gmra.mrb[0].mxu0 %v6407
      %v6573 = vpop.f32.mrb[0].mxu0
      %v6574 = vadd.f32 %v6424, %v6573
      %v6575 = vpop.f32.mrb[0].mxu0
      %v6576 = vpop.f32.mrb[0].mxu0
      %v6577 = vadd.f32 %v6424, %v6576
      %v6578 = vpop.f32.mrb[0].mxu0
      %6579 = vmatprep.mubr.bf16.mxu0 %v6509
      %6580 = vmatmul.mubr.bf16.gmra.mrb[0].mxu0 %v6409
      %v6581 = vpop.f32.mrb[0].mxu0
      %v6582 = vadd.f32 %v6424, %v6581
      %v6583 = vpop.f32.mrb[0].mxu0
      %v6584 = vpop.f32.mrb[0].mxu0
      %v6585 = vadd.f32 %v6424, %v6584
      %v6586 = vpop.f32.mrb[0].mxu0
      %6587 = vmatprep.mubr.bf16.mxu0 %v6512
      %6588 = vmatmul.mubr.bf16.gmra.mrb[0].mxu0 %v6411
      %v6589 = vpop.f32.mrb[0].mxu0
      %v6590 = vadd.f32 %v6424, %v6589
      %v6591 = vpop.f32.mrb[0].mxu0
      %v6592 = vpop.f32.mrb[0].mxu0
      %v6593 = vadd.f32 %v6424, %v6592
      %v6594 = vpop.f32.mrb[0].mxu0
      %6595 = vmatprep.mubr.bf16.mxu0 %v6515
      %6596 = vmatmul.mubr.bf16.gmra.mrb[0].mxu0 %v6413
      %v6597 = vpop.f32.mrb[0].mxu0
      %v6598 = vadd.f32 %v6424, %v6597
      %v6599 = vpop.f32.mrb[0].mxu0
      %v6600 = vpop.f32.mrb[0].mxu0
      %v6601 = vadd.f32 %v6424, %v6600
      %v6602 = vpop.f32.mrb[0].mxu0
      %6603 = vmatprep.mubr.bf16.mxu0 %v6518
      %6604 = vmatmul.mubr.bf16.gmra.mrb[0].mxu0 %v6415
      %v6605 = vpop.f32.mrb[0].mxu0
      %v6606 = vadd.f32 %v6424, %v6605
      %v6607 = vpop.f32.mrb[0].mxu0
      %v6608 = vpop.f32.mrb[0].mxu0
      %v6609 = vadd.f32 %v6424, %v6608
      %v6610 = vpop.f32.mrb[0].mxu0
      %6611 = vmatprep.mubr.bf16.mxu0 %v6521
      %6612 = vmatmul.mubr.bf16.gmra.mrb[0].mxu0 %v6417
      %v6613 = vpop.f32.mrb[0].mxu0
      %v6614 = vadd.f32 %v6424, %v6613
      %v6615 = vpop.f32.mrb[0].mxu0
      %v6616 = vpop.f32.mrb[0].mxu0
      %v6617 = vadd.f32 %v6424, %v6616
      %v6618 = vpop.f32.mrb[0].mxu0
      %6619 = vdwg.mxu0
      %vm6620 = vcmask 31744
      %v6621 = vsel %vm6620, %v6558, -inf
      %6622 = vmax.xlane.f32.xlu0 %v6621
      %v6623 = vpop.xlane.xlu0 %6622
      %v6624 = vsel %vm6620, %v6561, -inf
      %6625 = vmax.xlane.f32.xlu0 %v6624
      %v6626 = vpop.xlane.xlu0 %6625
      %v6627 = vsel %vm6620, %v6566, -inf
      %6628 = vmax.xlane.f32.xlu0 %v6627
      %v6629 = vpop.xlane.xlu0 %6628
      %v6630 = vsel %vm6620, %v6569, -inf
      %6631 = vmax.xlane.f32.xlu0 %v6630
      %v6632 = vpop.xlane.xlu0 %6631
      %v6633 = vsel %vm6620, %v6574, -inf
      %6634 = vmax.xlane.f32.xlu0 %v6633
      %v6635 = vpop.xlane.xlu0 %6634
      %v6636 = vsel %vm6620, %v6577, -inf
      %6637 = vmax.xlane.f32.xlu0 %v6636
      %v6638 = vpop.xlane.xlu0 %6637
      %v6639 = vsel %vm6620, %v6582, -inf
      %6640 = vmax.xlane.f32.xlu0 %v6639
      %v6641 = vpop.xlane.xlu0 %6640
      %v6642 = vsel %vm6620, %v6585, -inf
      %6643 = vmax.xlane.f32.xlu0 %v6642
      %v6644 = vpop.xlane.xlu0 %6643
      %v6645 = vsel %vm6620, %v6590, -inf
      %6646 = vmax.xlane.f32.xlu0 %v6645
      %v6647 = vpop.xlane.xlu0 %6646
      %v6648 = vsel %vm6620, %v6593, -inf
      %6649 = vmax.xlane.f32.xlu0 %v6648
      %v6650 = vpop.xlane.xlu0 %6649
      %v6651 = vsel %vm6620, %v6598, -inf
      %6652 = vmax.xlane.f32.xlu0 %v6651
      %v6653 = vpop.xlane.xlu0 %6652
      %v6654 = vsel %vm6620, %v6601, -inf
      %6655 = vmax.xlane.f32.xlu0 %v6654
      %v6656 = vpop.xlane.xlu0 %6655
      %v6657 = vsel %vm6620, %v6606, -inf
      %6658 = vmax.xlane.f32.xlu0 %v6657
      %v6659 = vpop.xlane.xlu0 %6658
      %v6660 = vsel %vm6620, %v6609, -inf
      %6661 = vmax.xlane.f32.xlu0 %v6660
      %v6662 = vpop.xlane.xlu0 %6661
      %v6663 = vsel %vm6620, %v6614, -inf
      %6664 = vmax.xlane.f32.xlu0 %v6663
      %v6665 = vpop.xlane.xlu0 %6664
      %v6666 = vsel %vm6620, %v6617, -inf
      %6667 = vmax.xlane.f32.xlu0 %v6666
      %v6668 = vpop.xlane.xlu0 %6667
      %v6669 = vsub.f32 %v6558, %v6623
      %v6670 = vsub.f32 %v6561, %v6626
      %v6671 = vsub.f32 %v6566, %v6629
      %v6672 = vsub.f32 %v6569, %v6632
      %v6673 = vsub.f32 %v6574, %v6635
      %v6674 = vsub.f32 %v6577, %v6638
      %v6675 = vsub.f32 %v6582, %v6641
      %v6676 = vsub.f32 %v6585, %v6644
      %v6677 = vsub.f32 %v6590, %v6647
      %v6678 = vsub.f32 %v6593, %v6650
      %v6679 = vsub.f32 %v6598, %v6653
      %v6680 = vsub.f32 %v6601, %v6656
      %v6681 = vsub.f32 %v6606, %v6659
      %v6682 = vsub.f32 %v6609, %v6662
      %v6683 = vsub.f32 %v6614, %v6665
      %v6684 = vsub.f32 %v6617, %v6668
      %v6685 = vmul.f32 %v6669, 1.442695
      %v6686 = vpow.pop %v6685
      %v6687 = vmul.f32 %v6670, 1.442695
      %v6688 = vpow.pop %v6687
      %v6689 = vmul.f32 %v6671, 1.442695
      %v6690 = vpow.pop %v6689
      %v6691 = vmul.f32 %v6672, 1.442695
      %v6692 = vpow.pop %v6691
      %v6693 = vmul.f32 %v6673, 1.442695
      %v6694 = vpow.pop %v6693
      %v6695 = vmul.f32 %v6674, 1.442695
      %v6696 = vpow.pop %v6695
      %v6697 = vmul.f32 %v6675, 1.442695
      %v6698 = vpow.pop %v6697
      %v6699 = vmul.f32 %v6676, 1.442695
      %v6700 = vpow.pop %v6699
      %v6701 = vmul.f32 %v6677, 1.442695
      %v6702 = vpow.pop %v6701
      %v6703 = vmul.f32 %v6678, 1.442695
      %v6704 = vpow.pop %v6703
      %v6705 = vmul.f32 %v6679, 1.442695
      %v6706 = vpow.pop %v6705
      %v6707 = vmul.f32 %v6680, 1.442695
      %v6708 = vpow.pop %v6707
      %v6709 = vmul.f32 %v6681, 1.442695
      %v6710 = vpow.pop %v6709
      %v6711 = vmul.f32 %v6682, 1.442695
      %v6712 = vpow.pop %v6711
      %v6713 = vmul.f32 %v6683, 1.442695
      %v6714 = vpow.pop %v6713
      %v6715 = vmul.f32 %v6684, 1.442695
      %v6716 = vpow.pop %v6715
      %v6717 = vsel %vm6620, %v6686, 0.0
      %6718 = vadd.xlane.f32.xlu0 %v6717
      %v6719 = vpop.xlane.xlu0 %6718
      %v6720 = vsel %vm6620, %v6688, 0.0
      %6721 = vadd.xlane.f32.xlu0 %v6720
      %v6722 = vpop.xlane.xlu0 %6721
      %v6723 = vsel %vm6620, %v6690, 0.0
      %6724 = vadd.xlane.f32.xlu0 %v6723
      %v6725 = vpop.xlane.xlu0 %6724
      %v6726 = vsel %vm6620, %v6692, 0.0
      %6727 = vadd.xlane.f32.xlu0 %v6726
      %v6728 = vpop.xlane.xlu0 %6727
      %v6729 = vsel %vm6620, %v6694, 0.0
      %6730 = vadd.xlane.f32.xlu0 %v6729
      %v6731 = vpop.xlane.xlu0 %6730
      %v6732 = vsel %vm6620, %v6696, 0.0
      %6733 = vadd.xlane.f32.xlu0 %v6732
      %v6734 = vpop.xlane.xlu0 %6733
      %v6735 = vsel %vm6620, %v6698, 0.0
      %6736 = vadd.xlane.f32.xlu0 %v6735
      %v6737 = vpop.xlane.xlu0 %6736
      %v6738 = vsel %vm6620, %v6700, 0.0
      %6739 = vadd.xlane.f32.xlu0 %v6738
      %v6740 = vpop.xlane.xlu0 %6739
      %v6741 = vsel %vm6620, %v6702, 0.0
      %6742 = vadd.xlane.f32.xlu0 %v6741
      %v6743 = vpop.xlane.xlu0 %6742
      %v6744 = vsel %vm6620, %v6704, 0.0
      %6745 = vadd.xlane.f32.xlu0 %v6744
      %v6746 = vpop.xlane.xlu0 %6745
      %v6747 = vsel %vm6620, %v6706, 0.0
      %6748 = vadd.xlane.f32.xlu0 %v6747
      %v6749 = vpop.xlane.xlu0 %6748
      %v6750 = vsel %vm6620, %v6708, 0.0
      %6751 = vadd.xlane.f32.xlu0 %v6750
      %v6752 = vpop.xlane.xlu0 %6751
      %v6753 = vsel %vm6620, %v6710, 0.0
      %6754 = vadd.xlane.f32.xlu0 %v6753
      %v6755 = vpop.xlane.xlu0 %6754
      %v6756 = vsel %vm6620, %v6712, 0.0
      %6757 = vadd.xlane.f32.xlu0 %v6756
      %v6758 = vpop.xlane.xlu0 %6757
      %v6759 = vsel %vm6620, %v6714, 0.0
      %6760 = vadd.xlane.f32.xlu0 %v6759
      %v6761 = vpop.xlane.xlu0 %6760
      %v6762 = vsel %vm6620, %v6716, 0.0
      %6763 = vadd.xlane.f32.xlu0 %v6762
      %v6764 = vpop.xlane.xlu0 %6763
      %v6765 = vrcp.pop %v6719
      %v6766 = vmul.f32 %v6686, %v6765
      %v6767 = vrcp.pop %v6722
      %v6768 = vmul.f32 %v6688, %v6767
      %v6769 = vrcp.pop %v6725
      %v6770 = vmul.f32 %v6690, %v6769
      %v6771 = vrcp.pop %v6728
      %v6772 = vmul.f32 %v6692, %v6771
      %v6773 = vrcp.pop %v6731
      %v6774 = vmul.f32 %v6694, %v6773
      %v6775 = vrcp.pop %v6734
      %v6776 = vmul.f32 %v6696, %v6775
      %v6777 = vrcp.pop %v6737
      %v6778 = vmul.f32 %v6698, %v6777
      %v6779 = vrcp.pop %v6740
      %v6780 = vmul.f32 %v6700, %v6779
      %v6781 = vrcp.pop %v6743
      %v6782 = vmul.f32 %v6702, %v6781
      %v6783 = vrcp.pop %v6746
      %v6784 = vmul.f32 %v6704, %v6783
      %v6785 = vrcp.pop %v6749
      %v6786 = vmul.f32 %v6706, %v6785
      %v6787 = vrcp.pop %v6752
      %v6788 = vmul.f32 %v6708, %v6787
      %v6789 = vrcp.pop %v6755
      %v6790 = vmul.f32 %v6710, %v6789
      %v6791 = vrcp.pop %v6758
      %v6792 = vmul.f32 %v6712, %v6791
      %v6793 = vrcp.pop %v6761
      %v6794 = vmul.f32 %v6714, %v6793
      %v6795 = vrcp.pop %v6764
      %v6796 = vmul.f32 %v6716, %v6795
      %v6797 = vmax.f32 %v6558, 0.0
      %v6798 = vmax.f32 %v6561, 0.0
      %v6799 = vmax.f32 %v6566, 0.0
      %v6800 = vmax.f32 %v6569, 0.0
      %v6801 = vmax.f32 %v6574, 0.0
      %v6802 = vmax.f32 %v6577, 0.0
      %v6803 = vmax.f32 %v6582, 0.0
      %v6804 = vmax.f32 %v6585, 0.0
      %v6805 = vmax.f32 %v6590, 0.0
      %v6806 = vmax.f32 %v6593, 0.0
      %v6807 = vmax.f32 %v6598, 0.0
      %v6808 = vmax.f32 %v6601, 0.0
      %v6809 = vmax.f32 %v6606, 0.0
      %v6810 = vmax.f32 %v6609, 0.0
      %v6811 = vmax.f32 %v6614, 0.0
      %v6812 = vmax.f32 %v6617, 0.0
      %v6813 = vld [vmem:[%s13 + $0xb0] sm:$0x3]
      %v6814 = vpack.c.bf16 %v6768, %v6766
      %v6815 = vpack.c.bf16 %v6772, %v6770
      %v6816 = vpack.c.bf16 %v6776, %v6774
      %v6817 = vpack.c.bf16 %v6780, %v6778
      %v6818 = vpack.c.bf16 %v6784, %v6782
      %v6819 = vpack.c.bf16 %v6788, %v6786
      %v6820 = vpack.c.bf16 %v6792, %v6790
      %v6821 = vpack.c.bf16 %v6796, %v6794
      %v6823 = vsel %vm6620, %v6814, 0
      %v6826 = vsel %vm6620, %v6815, 0
      %v6829 = vsel %vm6620, %v6816, 0
      %v6832 = vsel %vm6620, %v6817, 0
      %v6835 = vsel %vm6620, %v6818, 0
      %v6838 = vsel %vm6620, %v6819, 0
      %v6841 = vsel %vm6620, %v6820, 0
      %v6844 = vsel %vm6620, %v6821, 0
      %vm6846 = vcmask 1041408
      %v6848 = vsel %vm6846, %v6813, 0
      %6850 = vmatprep.subr.bf16.mxu0 0
      %6851 = vmatpush1.bf16.msra.mxu0 %v6848
      %6852 = vmatprep.subr.bf16.mxu0 0
      %6853 = vmatpush1.bf16.msra.mxu0 0
      %6854 = vmatprep.subr.bf16.mxu0 0
      %6855 = vmatpush1.bf16.msra.mxu0 0
      %6856 = vmatprep.subr.bf16.mxu0 0
      %6857 = vmatpush1.bf16.msra.mxu0 0
      %6858 = vmatprep.subr.bf16.mxu0 0
      %6859 = vmatpush1.bf16.msra.mxu0 0
      %6860 = vmatprep.subr.bf16.mxu0 0
      %6861 = vmatpush1.bf16.msra.mxu0 0
      %6862 = vmatprep.subr.bf16.mxu0 0
      %6863 = vmatpush1.bf16.msra.mxu0 0
      %6864 = vmatprep.subr.bf16.mxu0 0
      %6865 = vmatpush1.bf16.msra.mxu0 0
      %6866 = vmatprep.subr.bf16.mxu0 0
      %6867 = vmatpush1.bf16.msra.mxu0 0
      %6868 = vmatprep.subr.bf16.mxu0 0
      %6869 = vmatpush1.bf16.msra.mxu0 0
      %6870 = vmatprep.subr.bf16.mxu0 0
      %6871 = vmatpush1.bf16.msra.mxu0 0
      %6872 = vmatprep.subr.bf16.mxu0 0
      %6873 = vmatpush1.bf16.msra.mxu0 0
      %6874 = vmatprep.subr.bf16.mxu0 0
      %6875 = vmatpush1.bf16.msra.mxu0 0
      %6876 = vmatprep.subr.bf16.mxu0 0
      %6877 = vmatpush1.bf16.msra.mxu0 0
      %6878 = vmatprep.subr.bf16.mxu0 0
      %6879 = vmatpush1.bf16.msra.mxu0 0
      %6880 = vmatprep.subr.bf16.mxu0 0
      %6881 = vmatpush1.bf16.msra.mxu0 0
      %6882 = vmatprep.mubr.bf16.mxu0 0
      %6883 = vmatmul.mubr.bf16.gmra.mrb[0].mxu0 %v6823
      %v6884 = vpop.f32.mrb[0].mxu0
      %v6885 = vadd.f32 0.0, %v6884
      %v6886 = vpop.f32.mrb[0].mxu0
      %v6887 = vpop.f32.mrb[0].mxu0
      %v6888 = vadd.f32 0.0, %v6887
      %v6889 = vpop.f32.mrb[0].mxu0
      %6890 = vmatprep.mubr.bf16.mxu0 0
      %6891 = vmatmul.mubr.bf16.gmra.mrb[0].mxu0 %v6826
      %v6892 = vpop.f32.mrb[0].mxu0
      %v6893 = vadd.f32 0.0, %v6892
      %v6894 = vpop.f32.mrb[0].mxu0
      %v6895 = vpop.f32.mrb[0].mxu0
      %v6896 = vadd.f32 0.0, %v6895
      %v6897 = vpop.f32.mrb[0].mxu0
      %6898 = vmatprep.mubr.bf16.mxu0 0
      %6899 = vmatmul.mubr.bf16.gmra.mrb[0].mxu0 %v6829
      %v6900 = vpop.f32.mrb[0].mxu0
      %v6901 = vadd.f32 0.0, %v6900
      %v6902 = vpop.f32.mrb[0].mxu0
      %v6903 = vpop.f32.mrb[0].mxu0
      %v6904 = vadd.f32 0.0, %v6903
      %v6905 = vpop.f32.mrb[0].mxu0
      %6906 = vmatprep.mubr.bf16.mxu0 0
      %6907 = vmatmul.mubr.bf16.gmra.mrb[0].mxu0 %v6832
      %v6908 = vpop.f32.mrb[0].mxu0
      %v6909 = vadd.f32 0.0, %v6908
      %v6910 = vpop.f32.mrb[0].mxu0
      %v6911 = vpop.f32.mrb[0].mxu0
      %v6912 = vadd.f32 0.0, %v6911
      %v6913 = vpop.f32.mrb[0].mxu0
      %6914 = vmatprep.mubr.bf16.mxu0 0
      %6915 = vmatmul.mubr.bf16.gmra.mrb[0].mxu0 %v6835
      %v6916 = vpop.f32.mrb[0].mxu0
      %v6917 = vadd.f32 0.0, %v6916
      %v6918 = vpop.f32.mrb[0].mxu0
      %v6919 = vpop.f32.mrb[0].mxu0
      %v6920 = vadd.f32 0.0, %v6919
      %v6921 = vpop.f32.mrb[0].mxu0
      %6922 = vmatprep.mubr.bf16.mxu0 0
      %6923 = vmatmul.mubr.bf16.gmra.mrb[0].mxu0 %v6838
      %v6924 = vpop.f32.mrb[0].mxu0
      %v6925 = vadd.f32 0.0, %v6924
      %v6926 = vpop.f32.mrb[0].mxu0
      %v6927 = vpop.f32.mrb[0].mxu0
      %v6928 = vadd.f32 0.0, %v6927
      %v6929 = vpop.f32.mrb[0].mxu0
      %6930 = vmatprep.mubr.bf16.mxu0 0
      %6931 = vmatmul.mubr.bf16.gmra.mrb[0].mxu0 %v6841
      %v6932 = vpop.f32.mrb[0].mxu0
      %v6933 = vadd.f32 0.0, %v6932
      %v6934 = vpop.f32.mrb[0].mxu0
      %v6935 = vpop.f32.mrb[0].mxu0
      %v6936 = vadd.f32 0.0, %v6935
      %v6937 = vpop.f32.mrb[0].mxu0
      %6938 = vmatprep.mubr.bf16.mxu0 0
      %6939 = vmatmul.mubr.bf16.gmra.mrb[0].mxu0 %v6844
      %v6940 = vpop.f32.mrb[0].mxu0
      %v6941 = vadd.f32 0.0, %v6940
      %v6942 = vpop.f32.mrb[0].mxu0
      %v6943 = vpop.f32.mrb[0].mxu0
      %v6944 = vadd.f32 0.0, %v6943
      %v6945 = vpop.f32.mrb[0].mxu0
      %6946 = vdwg.mxu0
      %6963 = vrot.lane.b32.xlu0 %v6885, 4
      %v6964 = vpop.permute.xlu0 %6963
      %6965 = vrot.lane.b32.xlu0 %v6888, 4
      %v6966 = vpop.permute.xlu0 %6965
      %6967 = vrot.lane.b32.xlu0 %v6893, 4
      %v6968 = vpop.permute.xlu0 %6967
      %6969 = vrot.lane.b32.xlu0 %v6896, 4
      %v6970 = vpop.permute.xlu0 %6969
      %6971 = vrot.lane.b32.xlu0 %v6901, 4
      %v6972 = vpop.permute.xlu0 %6971
      %6973 = vrot.lane.b32.xlu0 %v6904, 4
      %v6974 = vpop.permute.xlu0 %6973
      %6975 = vrot.lane.b32.xlu0 %v6909, 4
      %v6976 = vpop.permute.xlu0 %6975
      %6977 = vrot.lane.b32.xlu0 %v6912, 4
      %v6978 = vpop.permute.xlu0 %6977
      %6979 = vrot.lane.b32.xlu0 %v6917, 4
      %v6980 = vpop.permute.xlu0 %6979
      %6981 = vrot.lane.b32.xlu0 %v6920, 4
      %v6982 = vpop.permute.xlu0 %6981
      %6983 = vrot.lane.b32.xlu0 %v6925, 4
      %v6984 = vpop.permute.xlu0 %6983
      %6985 = vrot.lane.b32.xlu0 %v6928, 4
      %v6986 = vpop.permute.xlu0 %6985
      %6987 = vrot.lane.b32.xlu0 %v6933, 4
      %v6988 = vpop.permute.xlu0 %6987
      %6989 = vrot.lane.b32.xlu0 %v6936, 4
      %v6990 = vpop.permute.xlu0 %6989
      %6991 = vrot.lane.b32.xlu0 %v6941, 4
      %v6992 = vpop.permute.xlu0 %6991
      %6993 = vrot.lane.b32.xlu0 %v6944, 4
      %v6994 = vpop.permute.xlu0 %6993
      %v7011 = vmul.f32 %v6797, %v6964
      %v7012 = vmul.f32 %v6798, %v6966
      %v7013 = vmul.f32 %v6799, %v6968
      %v7014 = vmul.f32 %v6800, %v6970
      %v7015 = vmul.f32 %v6801, %v6972
      %v7016 = vmul.f32 %v6802, %v6974
      %v7017 = vmul.f32 %v6803, %v6976
      %v7018 = vmul.f32 %v6804, %v6978
      %v7019 = vmul.f32 %v6805, %v6980
      %v7020 = vmul.f32 %v6806, %v6982
      %v7021 = vmul.f32 %v6807, %v6984
      %v7022 = vmul.f32 %v6808, %v6986
      %v7023 = vmul.f32 %v6809, %v6988
      %v7024 = vmul.f32 %v6810, %v6990
      %v7025 = vmul.f32 %v6811, %v6992
      %v7026 = vmul.f32 %v6812, %v6994
      %v7027 = vld [vmem:[%s13 + $0xa0] sm:$0xf]
      %v7028 = vld [vmem:[%s13 + $0xa4] sm:$0xf]
      %v7029 = vld [vmem:[%s13 + $0xa8] sm:$0xf]
      %v7030 = vld [vmem:[%s13 + $0xac] sm:$0xf]
      %v7031 = vpack.c.bf16 %v7012, %v7011
      %v7032 = vpack.c.bf16 %v7014, %v7013
      %v7033 = vpack.c.bf16 %v7016, %v7015
      %v7034 = vpack.c.bf16 %v7018, %v7017
      %v7035 = vpack.c.bf16 %v7020, %v7019
      %v7036 = vpack.c.bf16 %v7022, %v7021
      %v7037 = vpack.c.bf16 %v7024, %v7023
      %v7038 = vpack.c.bf16 %v7026, %v7025
      %7047 = vrot.lane.b32.xlu0 %v7031, 124
      %v7048 = vpop.permute.xlu0 %7047
      %7049 = vrot.lane.b32.xlu0 %v7032, 124
      %v7050 = vpop.permute.xlu0 %7049
      %7051 = vrot.lane.b32.xlu0 %v7033, 124
      %v7052 = vpop.permute.xlu0 %7051
      %7053 = vrot.lane.b32.xlu0 %v7034, 124
      %v7054 = vpop.permute.xlu0 %7053
      %7055 = vrot.lane.b32.xlu0 %v7035, 124
      %v7056 = vpop.permute.xlu0 %7055
      %7057 = vrot.lane.b32.xlu0 %v7036, 124
      %v7058 = vpop.permute.xlu0 %7057
      %7059 = vrot.lane.b32.xlu0 %v7037, 124
      %v7060 = vpop.permute.xlu0 %7059
      %7061 = vrot.lane.b32.xlu0 %v7038, 124
      %v7062 = vpop.permute.xlu0 %7061
      %v7067 = vunpack.c.l.b16 %v7027
      %v7068 = vunpack.c.l.b16 %v7028
      %v7069 = vunpack.c.l.b16 %v7029
      %v7070 = vunpack.c.l.b16 %v7030
      %v7071 = vpack.c.b16 %v7068, %v7067
      %v7072 = vpack.c.b16 %v7070, %v7069
      %7075 = vrot.lane.b32.xlu0 %v6885, 96
      %v7076 = vpop.permute.xlu0 %7075
      %7077 = vrot.lane.b32.xlu0 %v6888, 96
      %v7078 = vpop.permute.xlu0 %7077
      %7079 = vrot.lane.b32.xlu0 %v6893, 96
      %v7080 = vpop.permute.xlu0 %7079
      %7081 = vrot.lane.b32.xlu0 %v6896, 96
      %v7082 = vpop.permute.xlu0 %7081
      %7083 = vrot.lane.b32.xlu0 %v6901, 96
      %v7084 = vpop.permute.xlu0 %7083
      %7085 = vrot.lane.b32.xlu0 %v6904, 96
      %v7086 = vpop.permute.xlu0 %7085
      %7087 = vrot.lane.b32.xlu0 %v6909, 96
      %v7088 = vpop.permute.xlu0 %7087
      %7089 = vrot.lane.b32.xlu0 %v6912, 96
      %v7090 = vpop.permute.xlu0 %7089
      %7091 = vrot.lane.b32.xlu0 %v6917, 96
      %v7092 = vpop.permute.xlu0 %7091
      %7093 = vrot.lane.b32.xlu0 %v6920, 96
      %v7094 = vpop.permute.xlu0 %7093
      %7095 = vrot.lane.b32.xlu0 %v6925, 96
      %v7096 = vpop.permute.xlu0 %7095
      %7097 = vrot.lane.b32.xlu0 %v6928, 96
      %v7098 = vpop.permute.xlu0 %7097
      %7099 = vrot.lane.b32.xlu0 %v6933, 96
      %v7100 = vpop.permute.xlu0 %7099
      %7101 = vrot.lane.b32.xlu0 %v6936, 96
      %v7102 = vpop.permute.xlu0 %7101
      %7103 = vrot.lane.b32.xlu0 %v6941, 96
      %v7104 = vpop.permute.xlu0 %7103
      %7105 = vrot.lane.b32.xlu0 %v6944, 96
      %v7106 = vpop.permute.xlu0 %7105
      %v7124 = vsel %vm581, %v7048, 0
      %v7127 = vsel %vm581, %v7050, 0
      %v7130 = vsel %vm581, %v7052, 0
      %v7133 = vsel %vm581, %v7054, 0
      %v7136 = vsel %vm581, %v7056, 0
      %v7139 = vsel %vm581, %v7058, 0
      %v7142 = vsel %vm581, %v7060, 0
      %v7145 = vsel %vm581, %v7062, 0
      %7147 = vmatprep.subr.bf16.mxu0 0
      %7148 = vmatpush1.bf16.msra.mxu0 %v7071
      %7149 = vmatprep.subr.bf16.mxu0 0
      %7150 = vmatpush1.bf16.msra.mxu0 %v7072
      %7151 = vmatprep.subr.bf16.mxu0 0
      %7152 = vmatpush1.bf16.msra.mxu0 0
      %7153 = vmatprep.subr.bf16.mxu0 0
      %7154 = vmatpush1.bf16.msra.mxu0 0
      %7155 = vmatprep.subr.bf16.mxu0 0
      %7156 = vmatpush1.bf16.msra.mxu0 0
      %7157 = vmatprep.subr.bf16.mxu0 0
      %7158 = vmatpush1.bf16.msra.mxu0 0
      %7159 = vmatprep.subr.bf16.mxu0 0
      %7160 = vmatpush1.bf16.msra.mxu0 0
      %7161 = vmatprep.subr.bf16.mxu0 0
      %7162 = vmatpush1.bf16.msra.mxu0 0
      %7163 = vmatprep.subr.bf16.mxu0 0
      %7164 = vmatpush1.bf16.msra.mxu0 0
      %7165 = vmatprep.subr.bf16.mxu0 0
      %7166 = vmatpush1.bf16.msra.mxu0 0
      %7167 = vmatprep.subr.bf16.mxu0 0
      %7168 = vmatpush1.bf16.msra.mxu0 0
      %7169 = vmatprep.subr.bf16.mxu0 0
      %7170 = vmatpush1.bf16.msra.mxu0 0
      %7171 = vmatprep.subr.bf16.mxu0 0
      %7172 = vmatpush1.bf16.msra.mxu0 0
      %7173 = vmatprep.subr.bf16.mxu0 0
      %7174 = vmatpush1.bf16.msra.mxu0 0
      %7175 = vmatprep.subr.bf16.mxu0 0
      %7176 = vmatpush1.bf16.msra.mxu0 0
      %7177 = vmatprep.subr.bf16.mxu0 0
      %7178 = vmatpush1.bf16.msra.mxu0 0
      %7179 = vmatprep.mubr.bf16.mxu0 0
      %7180 = vmatmul.mubr.bf16.gmra.mrb[0].mxu0 %v7124
      %v7181 = vpop.f32.mrb[0].mxu0
      %v7182 = vadd.f32 %v7076, %v7181
      %v7183 = vpop.f32.mrb[0].mxu0
      %v7184 = vpop.f32.mrb[0].mxu0
      %v7185 = vadd.f32 %v7078, %v7184
      %v7186 = vpop.f32.mrb[0].mxu0
      %7187 = vmatprep.mubr.bf16.mxu0 0
      %7188 = vmatmul.mubr.bf16.gmra.mrb[0].mxu0 %v7127
      %v7189 = vpop.f32.mrb[0].mxu0
      %v7190 = vadd.f32 %v7080, %v7189
      %v7191 = vpop.f32.mrb[0].mxu0
      %v7192 = vpop.f32.mrb[0].mxu0
      %v7193 = vadd.f32 %v7082, %v7192
      %v7194 = vpop.f32.mrb[0].mxu0
      %7195 = vmatprep.mubr.bf16.mxu0 0
      %7196 = vmatmul.mubr.bf16.gmra.mrb[0].mxu0 %v7130
      %v7197 = vpop.f32.mrb[0].mxu0
      %v7198 = vadd.f32 %v7084, %v7197
      %v7199 = vpop.f32.mrb[0].mxu0
      %v7200 = vpop.f32.mrb[0].mxu0
      %v7201 = vadd.f32 %v7086, %v7200
      %v7202 = vpop.f32.mrb[0].mxu0
      %7203 = vmatprep.mubr.bf16.mxu0 0
      %7204 = vmatmul.mubr.bf16.gmra.mrb[0].mxu0 %v7133
      %v7205 = vpop.f32.mrb[0].mxu0
      %v7206 = vadd.f32 %v7088, %v7205
      %v7207 = vpop.f32.mrb[0].mxu0
      %v7208 = vpop.f32.mrb[0].mxu0
      %v7209 = vadd.f32 %v7090, %v7208
      %v7210 = vpop.f32.mrb[0].mxu0
      %7211 = vmatprep.mubr.bf16.mxu0 0
      %7212 = vmatmul.mubr.bf16.gmra.mrb[0].mxu0 %v7136
      %v7213 = vpop.f32.mrb[0].mxu0
      %v7214 = vadd.f32 %v7092, %v7213
      %v7215 = vpop.f32.mrb[0].mxu0
      %v7216 = vpop.f32.mrb[0].mxu0
      %v7217 = vadd.f32 %v7094, %v7216
      %v7218 = vpop.f32.mrb[0].mxu0
      %7219 = vmatprep.mubr.bf16.mxu0 0
      %7220 = vmatmul.mubr.bf16.gmra.mrb[0].mxu0 %v7139
      %v7221 = vpop.f32.mrb[0].mxu0
      %v7222 = vadd.f32 %v7096, %v7221
      %v7223 = vpop.f32.mrb[0].mxu0
      %v7224 = vpop.f32.mrb[0].mxu0
      %v7225 = vadd.f32 %v7098, %v7224
      %v7226 = vpop.f32.mrb[0].mxu0
      %7227 = vmatprep.mubr.bf16.mxu0 0
      %7228 = vmatmul.mubr.bf16.gmra.mrb[0].mxu0 %v7142
      %v7229 = vpop.f32.mrb[0].mxu0
      %v7230 = vadd.f32 %v7100, %v7229
      %v7231 = vpop.f32.mrb[0].mxu0
      %v7232 = vpop.f32.mrb[0].mxu0
      %v7233 = vadd.f32 %v7102, %v7232
      %v7234 = vpop.f32.mrb[0].mxu0
      %7235 = vmatprep.mubr.bf16.mxu0 0
      %7236 = vmatmul.mubr.bf16.gmra.mrb[0].mxu0 %v7145
      %v7237 = vpop.f32.mrb[0].mxu0
      %v7238 = vadd.f32 %v7104, %v7237
      %v7239 = vpop.f32.mrb[0].mxu0
      %v7240 = vpop.f32.mrb[0].mxu0
      %v7241 = vadd.f32 %v7106, %v7240
      %v7242 = vpop.f32.mrb[0].mxu0
      %7243 = vdwg.mxu0
      %v7244 = vld [vmem:[%s12] sm:$0xf]
      %v7245 = vld [vmem:[%s12 + $0x4] sm:$0xf]
      %v7246 = vld [vmem:[%s12 + $0x8] sm:$0xf]
      %v7247 = vld [vmem:[%s12 + $0xc] sm:$0xf]
      %v7248 = vld [vmem:[%s12 + $0x10] sm:$0xf]
      %v7249 = vld [vmem:[%s12 + $0x14] sm:$0xf]
      %v7250 = vld [vmem:[%s12 + $0x18] sm:$0xf]
      %v7251 = vld [vmem:[%s12 + $0x1c] sm:$0xf]
      %v7252 = vpack.c.bf16 %v7185, %v7182
      %v7253 = vpack.c.bf16 %v7193, %v7190
      %v7254 = vpack.c.bf16 %v7201, %v7198
      %v7255 = vpack.c.bf16 %v7209, %v7206
      %v7256 = vpack.c.bf16 %v7217, %v7214
      %v7257 = vpack.c.bf16 %v7225, %v7222
      %v7258 = vpack.c.bf16 %v7233, %v7230
      %v7259 = vpack.c.bf16 %v7241, %v7238
      %v7260 = vld [vmem:[%s3 + $0xb] sm:$0x1]
      %v7262 = vlaneseq
      %v7263 = vshrl.u32 %v7262, 7
      %v7264 = vsub.s32 0, %v7263
      %v7265 = vrot.slane %v7260, %v7264
      %v7275 = vunpack.c.l.b16 %v7244
      %v7276 = vunpack.c.l.b16 %v7245
      %v7277 = vunpack.c.l.b16 %v7246
      %v7278 = vunpack.c.l.b16 %v7247
      %v7279 = vunpack.c.l.b16 %v7248
      %v7280 = vunpack.c.l.b16 %v7249
      %v7281 = vunpack.c.l.b16 %v7250
      %v7282 = vunpack.c.l.b16 %v7251
      %v7283 = vpack.c.b16 %v7276, %v7275
      %v7284 = vpack.c.b16 %v7278, %v7277
      %v7285 = vpack.c.b16 %v7280, %v7279
      %v7286 = vpack.c.b16 %v7282, %v7281
      %v7292 = vsel %vm6498, %v7252, 0
      %v7295 = vsel %vm6498, %v7253, 0
      %v7298 = vsel %vm6498, %v7254, 0
      %v7301 = vsel %vm6498, %v7255, 0
      %v7304 = vsel %vm6498, %v7256, 0
      %v7307 = vsel %vm6498, %v7257, 0
      %v7310 = vsel %vm6498, %v7258, 0
      %v7313 = vsel %vm6498, %v7259, 0
      %7315 = vmatprep.subr.bf16.mxu0 0
      %7316 = vmatpush1.bf16.msra.mxu0 %v7283
      %7317 = vmatprep.subr.bf16.mxu0 0
      %7318 = vmatpush1.bf16.msra.mxu0 %v7284
      %7319 = vmatprep.subr.bf16.mxu0 0
      %7320 = vmatpush1.bf16.msra.mxu0 %v7285
      %7321 = vmatprep.subr.bf16.mxu0 0
      %7322 = vmatpush1.bf16.msra.mxu0 %v7286
      %7323 = vmatprep.subr.bf16.mxu0 0
      %7324 = vmatpush1.bf16.msra.mxu0 0
      %7325 = vmatprep.subr.bf16.mxu0 0
      %7326 = vmatpush1.bf16.msra.mxu0 0
      %7327 = vmatprep.subr.bf16.mxu0 0
      %7328 = vmatpush1.bf16.msra.mxu0 0
      %7329 = vmatprep.subr.bf16.mxu0 0
      %7330 = vmatpush1.bf16.msra.mxu0 0
      %7331 = vmatprep.subr.bf16.mxu0 0
      %7332 = vmatpush1.bf16.msra.mxu0 0
      %7333 = vmatprep.subr.bf16.mxu0 0
      %7334 = vmatpush1.bf16.msra.mxu0 0
      %7335 = vmatprep.subr.bf16.mxu0 0
      %7336 = vmatpush1.bf16.msra.mxu0 0
      %7337 = vmatprep.subr.bf16.mxu0 0
      %7338 = vmatpush1.bf16.msra.mxu0 0
      %7339 = vmatprep.subr.bf16.mxu0 0
      %7340 = vmatpush1.bf16.msra.mxu0 0
      %7341 = vmatprep.subr.bf16.mxu0 0
      %7342 = vmatpush1.bf16.msra.mxu0 0
      %7343 = vmatprep.subr.bf16.mxu0 0
      %7344 = vmatpush1.bf16.msra.mxu0 0
      %7345 = vmatprep.subr.bf16.mxu0 0
      %7346 = vmatpush1.bf16.msra.mxu0 0
      %7347 = vmatprep.mubr.bf16.mxu0 0
      %7348 = vmatmul.mubr.bf16.gmra.mrb[0].mxu0 %v7292
      %v7349 = vpop.f32.mrb[0].mxu0
      %v7350 = vadd.f32 %v7265, %v7349
      %v7351 = vpop.f32.mrb[0].mxu0
      %v7352 = vpop.f32.mrb[0].mxu0
      %v7353 = vadd.f32 %v7265, %v7352
      %v7354 = vpop.f32.mrb[0].mxu0
      %7355 = vmatprep.mubr.bf16.mxu0 0
      %7356 = vmatmul.mubr.bf16.gmra.mrb[0].mxu0 %v7295
      %v7357 = vpop.f32.mrb[0].mxu0
      %v7358 = vadd.f32 %v7265, %v7357
      %v7359 = vpop.f32.mrb[0].mxu0
      %v7360 = vpop.f32.mrb[0].mxu0
      %v7361 = vadd.f32 %v7265, %v7360
      %v7362 = vpop.f32.mrb[0].mxu0
      %7363 = vmatprep.mubr.bf16.mxu0 0
      %7364 = vmatmul.mubr.bf16.gmra.mrb[0].mxu0 %v7298
      %v7365 = vpop.f32.mrb[0].mxu0
      %v7366 = vadd.f32 %v7265, %v7365
      %v7367 = vpop.f32.mrb[0].mxu0
      %v7368 = vpop.f32.mrb[0].mxu0
      %v7369 = vadd.f32 %v7265, %v7368
      %v7370 = vpop.f32.mrb[0].mxu0
      %7371 = vmatprep.mubr.bf16.mxu0 0
      %7372 = vmatmul.mubr.bf16.gmra.mrb[0].mxu0 %v7301
      %v7373 = vpop.f32.mrb[0].mxu0
      %v7374 = vadd.f32 %v7265, %v7373
      %v7375 = vpop.f32.mrb[0].mxu0
      %v7376 = vpop.f32.mrb[0].mxu0
      %v7377 = vadd.f32 %v7265, %v7376
      %v7378 = vpop.f32.mrb[0].mxu0
      %7379 = vmatprep.mubr.bf16.mxu0 0
      %7380 = vmatmul.mubr.bf16.gmra.mrb[0].mxu0 %v7304
      %v7381 = vpop.f32.mrb[0].mxu0
      %v7382 = vadd.f32 %v7265, %v7381
      %v7383 = vpop.f32.mrb[0].mxu0
      %v7384 = vpop.f32.mrb[0].mxu0
      %v7385 = vadd.f32 %v7265, %v7384
      %v7386 = vpop.f32.mrb[0].mxu0
      %7387 = vmatprep.mubr.bf16.mxu0 0
      %7388 = vmatmul.mubr.bf16.gmra.mrb[0].mxu0 %v7307
      %v7389 = vpop.f32.mrb[0].mxu0
      %v7390 = vadd.f32 %v7265, %v7389
      %v7391 = vpop.f32.mrb[0].mxu0
      %v7392 = vpop.f32.mrb[0].mxu0
      %v7393 = vadd.f32 %v7265, %v7392
      %v7394 = vpop.f32.mrb[0].mxu0
      %7395 = vmatprep.mubr.bf16.mxu0 0
      %7396 = vmatmul.mubr.bf16.gmra.mrb[0].mxu0 %v7310
      %v7397 = vpop.f32.mrb[0].mxu0
      %v7398 = vadd.f32 %v7265, %v7397
      %v7399 = vpop.f32.mrb[0].mxu0
      %v7400 = vpop.f32.mrb[0].mxu0
      %v7401 = vadd.f32 %v7265, %v7400
      %v7402 = vpop.f32.mrb[0].mxu0
      %7403 = vmatprep.mubr.bf16.mxu0 0
      %7404 = vmatmul.mubr.bf16.gmra.mrb[0].mxu0 %v7313
      %v7405 = vpop.f32.mrb[0].mxu0
      %v7406 = vadd.f32 %v7265, %v7405
      %v7407 = vpop.f32.mrb[0].mxu0
      %v7408 = vpop.f32.mrb[0].mxu0
      %v7409 = vadd.f32 %v7265, %v7408
      %v7410 = vpop.f32.mrb[0].mxu0
      %7411 = vdwg.mxu0
      %v7412 = vmax.f32 %v7350, 0.0
      %v7413 = vmax.f32 %v7353, 0.0
      %v7414 = vmax.f32 %v7358, 0.0
      %v7415 = vmax.f32 %v7361, 0.0
      %v7416 = vmax.f32 %v7366, 0.0
      %v7417 = vmax.f32 %v7369, 0.0
      %v7418 = vmax.f32 %v7374, 0.0
      %v7419 = vmax.f32 %v7377, 0.0
      %v7420 = vmax.f32 %v7382, 0.0
      %v7421 = vmax.f32 %v7385, 0.0
      %v7422 = vmax.f32 %v7390, 0.0
      %v7423 = vmax.f32 %v7393, 0.0
      %v7424 = vmax.f32 %v7398, 0.0
      %v7425 = vmax.f32 %v7401, 0.0
      %v7426 = vmax.f32 %v7406, 0.0
      %v7427 = vmax.f32 %v7409, 0.0
      %v7428 = vld [vmem:[%s13 + $0xb8] sm:$0xf]
      %v7429 = vld [vmem:[%s13 + $0xbc] sm:$0xf]
      %v7430 = vld [vmem:[%s13 + $0xc0] sm:$0xf]
      %v7431 = vld [vmem:[%s13 + $0xc4] sm:$0xf]
      %v7432 = vld [vmem:[%s13 + $0xc8] sm:$0xf]
      %v7433 = vld [vmem:[%s13 + $0xcc] sm:$0xf]
      %v7434 = vld [vmem:[%s13 + $0xd0] sm:$0xf]
      %v7435 = vld [vmem:[%s13 + $0xd4] sm:$0xf]
      %v7436 = vpack.c.bf16 %v7413, %v7412
      %v7437 = vpack.c.bf16 %v7415, %v7414
      %v7438 = vpack.c.bf16 %v7417, %v7416
      %v7439 = vpack.c.bf16 %v7419, %v7418
      %v7440 = vpack.c.bf16 %v7421, %v7420
      %v7441 = vpack.c.bf16 %v7423, %v7422
      %v7442 = vpack.c.bf16 %v7425, %v7424
      %v7443 = vpack.c.bf16 %v7427, %v7426
      %v7444 = vld [vmem:[%s3 + $0xc] sm:$0x1]
      %v7446 = vlaneseq
      %v7447 = vshrl.u32 %v7446, 7
      %v7448 = vsub.s32 0, %v7447
      %v7449 = vrot.slane %v7444, %v7448
      %v7459 = vunpack.c.l.b16 %v7428
      %v7460 = vunpack.c.l.b16 %v7429
      %v7461 = vunpack.c.l.b16 %v7430
      %v7462 = vunpack.c.l.b16 %v7431
      %v7463 = vunpack.c.l.b16 %v7432
      %v7464 = vunpack.c.l.b16 %v7433
      %v7465 = vunpack.c.l.b16 %v7434
      %v7466 = vunpack.c.l.b16 %v7435
      %v7467 = vpack.c.b16 %v7460, %v7459
      %v7468 = vpack.c.b16 %v7462, %v7461
      %v7469 = vpack.c.b16 %v7464, %v7463
      %v7470 = vpack.c.b16 %v7466, %v7465
      %v7476 = vsel %vm6498, %v7436, 0
      %v7479 = vsel %vm6498, %v7437, 0
      %v7482 = vsel %vm6498, %v7438, 0
      %v7485 = vsel %vm6498, %v7439, 0
      %v7488 = vsel %vm6498, %v7440, 0
      %v7491 = vsel %vm6498, %v7441, 0
      %v7494 = vsel %vm6498, %v7442, 0
      %v7497 = vsel %vm6498, %v7443, 0
      %7499 = vmatprep.subr.bf16.mxu0 0
      %7500 = vmatpush1.bf16.msra.mxu0 %v7467
      %7501 = vmatprep.subr.bf16.mxu0 0
      %7502 = vmatpush1.bf16.msra.mxu0 %v7468
      %7503 = vmatprep.subr.bf16.mxu0 0
      %7504 = vmatpush1.bf16.msra.mxu0 %v7469
      %7505 = vmatprep.subr.bf16.mxu0 0
      %7506 = vmatpush1.bf16.msra.mxu0 %v7470
      %7507 = vmatprep.subr.bf16.mxu0 0
      %7508 = vmatpush1.bf16.msra.mxu0 0
      %7509 = vmatprep.subr.bf16.mxu0 0
      %7510 = vmatpush1.bf16.msra.mxu0 0
      %7511 = vmatprep.subr.bf16.mxu0 0
      %7512 = vmatpush1.bf16.msra.mxu0 0
      %7513 = vmatprep.subr.bf16.mxu0 0
      %7514 = vmatpush1.bf16.msra.mxu0 0
      %7515 = vmatprep.subr.bf16.mxu0 0
      %7516 = vmatpush1.bf16.msra.mxu0 0
      %7517 = vmatprep.subr.bf16.mxu0 0
      %7518 = vmatpush1.bf16.msra.mxu0 0
      %7519 = vmatprep.subr.bf16.mxu0 0
      %7520 = vmatpush1.bf16.msra.mxu0 0
      %7521 = vmatprep.subr.bf16.mxu0 0
      %7522 = vmatpush1.bf16.msra.mxu0 0
      %7523 = vmatprep.subr.bf16.mxu0 0
      %7524 = vmatpush1.bf16.msra.mxu0 0
      %7525 = vmatprep.subr.bf16.mxu0 0
      %7526 = vmatpush1.bf16.msra.mxu0 0
      %7527 = vmatprep.subr.bf16.mxu0 0
      %7528 = vmatpush1.bf16.msra.mxu0 0
      %7529 = vmatprep.subr.bf16.mxu0 0
      %7530 = vmatpush1.bf16.msra.mxu0 0
      %7531 = vmatprep.mubr.bf16.mxu0 0
      %7532 = vmatmul.mubr.bf16.gmra.mrb[0].mxu0 %v7476
      %v7533 = vpop.f32.mrb[0].mxu0
      %v7534 = vadd.f32 %v7449, %v7533
      %v7535 = vpop.f32.mrb[0].mxu0
      %v7536 = vpop.f32.mrb[0].mxu0
      %v7537 = vadd.f32 %v7449, %v7536
      %v7538 = vpop.f32.mrb[0].mxu0
      %7539 = vmatprep.mubr.bf16.mxu0 0
      %7540 = vmatmul.mubr.bf16.gmra.mrb[0].mxu0 %v7479
      %v7541 = vpop.f32.mrb[0].mxu0
      %v7542 = vadd.f32 %v7449, %v7541
      %v7543 = vpop.f32.mrb[0].mxu0
      %v7544 = vpop.f32.mrb[0].mxu0
      %v7545 = vadd.f32 %v7449, %v7544
      %v7546 = vpop.f32.mrb[0].mxu0
      %7547 = vmatprep.mubr.bf16.mxu0 0
      %7548 = vmatmul.mubr.bf16.gmra.mrb[0].mxu0 %v7482
      %v7549 = vpop.f32.mrb[0].mxu0
      %v7550 = vadd.f32 %v7449, %v7549
      %v7551 = vpop.f32.mrb[0].mxu0
      %v7552 = vpop.f32.mrb[0].mxu0
      %v7553 = vadd.f32 %v7449, %v7552
      %v7554 = vpop.f32.mrb[0].mxu0
      %7555 = vmatprep.mubr.bf16.mxu0 0
      %7556 = vmatmul.mubr.bf16.gmra.mrb[0].mxu0 %v7485
      %v7557 = vpop.f32.mrb[0].mxu0
      %v7558 = vadd.f32 %v7449, %v7557
      %v7559 = vpop.f32.mrb[0].mxu0
      %v7560 = vpop.f32.mrb[0].mxu0
      %v7561 = vadd.f32 %v7449, %v7560
      %v7562 = vpop.f32.mrb[0].mxu0
      %7563 = vmatprep.mubr.bf16.mxu0 0
      %7564 = vmatmul.mubr.bf16.gmra.mrb[0].mxu0 %v7488
      %v7565 = vpop.f32.mrb[0].mxu0
      %v7566 = vadd.f32 %v7449, %v7565
      %v7567 = vpop.f32.mrb[0].mxu0
      %v7568 = vpop.f32.mrb[0].mxu0
      %v7569 = vadd.f32 %v7449, %v7568
      %v7570 = vpop.f32.mrb[0].mxu0
      %7571 = vmatprep.mubr.bf16.mxu0 0
      %7572 = vmatmul.mubr.bf16.gmra.mrb[0].mxu0 %v7491
      %v7573 = vpop.f32.mrb[0].mxu0
      %v7574 = vadd.f32 %v7449, %v7573
      %v7575 = vpop.f32.mrb[0].mxu0
      %v7576 = vpop.f32.mrb[0].mxu0
      %v7577 = vadd.f32 %v7449, %v7576
      %v7578 = vpop.f32.mrb[0].mxu0
      %7579 = vmatprep.mubr.bf16.mxu0 0
      %7580 = vmatmul.mubr.bf16.gmra.mrb[0].mxu0 %v7494
      %v7581 = vpop.f32.mrb[0].mxu0
      %v7582 = vadd.f32 %v7449, %v7581
      %v7583 = vpop.f32.mrb[0].mxu0
      %v7584 = vpop.f32.mrb[0].mxu0
      %v7585 = vadd.f32 %v7449, %v7584
      %v7586 = vpop.f32.mrb[0].mxu0
      %7587 = vmatprep.mubr.bf16.mxu0 0
      %7588 = vmatmul.mubr.bf16.gmra.mrb[0].mxu0 %v7497
      %v7589 = vpop.f32.mrb[0].mxu0
      %v7590 = vadd.f32 %v7449, %v7589
      %v7591 = vpop.f32.mrb[0].mxu0
      %v7592 = vpop.f32.mrb[0].mxu0
      %v7593 = vadd.f32 %v7449, %v7592
      %v7594 = vpop.f32.mrb[0].mxu0
      %7595 = vdwg.mxu0
      %7612 = vrot.lane.b32.xlu0 %v7534, 64
      %v7613 = vpop.permute.xlu0 %7612
      %7614 = vrot.lane.b32.xlu0 %v7537, 64
      %v7615 = vpop.permute.xlu0 %7614
      %7616 = vrot.lane.b32.xlu0 %v7542, 64
      %v7617 = vpop.permute.xlu0 %7616
      %7618 = vrot.lane.b32.xlu0 %v7545, 64
      %v7619 = vpop.permute.xlu0 %7618
      %7620 = vrot.lane.b32.xlu0 %v7550, 64
      %v7621 = vpop.permute.xlu0 %7620
      %7622 = vrot.lane.b32.xlu0 %v7553, 64
      %v7623 = vpop.permute.xlu0 %7622
      %7624 = vrot.lane.b32.xlu0 %v7558, 64
      %v7625 = vpop.permute.xlu0 %7624
      %7626 = vrot.lane.b32.xlu0 %v7561, 64
      %v7627 = vpop.permute.xlu0 %7626
      %7628 = vrot.lane.b32.xlu0 %v7566, 64
      %v7629 = vpop.permute.xlu0 %7628
      %7630 = vrot.lane.b32.xlu0 %v7569, 64
      %v7631 = vpop.permute.xlu0 %7630
      %7632 = vrot.lane.b32.xlu0 %v7574, 64
      %v7633 = vpop.permute.xlu0 %7632
      %7634 = vrot.lane.b32.xlu0 %v7577, 64
      %v7635 = vpop.permute.xlu0 %7634
      %7636 = vrot.lane.b32.xlu0 %v7582, 64
      %v7637 = vpop.permute.xlu0 %7636
      %7638 = vrot.lane.b32.xlu0 %v7585, 64
      %v7639 = vpop.permute.xlu0 %7638
      %7640 = vrot.lane.b32.xlu0 %v7590, 64
      %v7641 = vpop.permute.xlu0 %7640
      %7642 = vrot.lane.b32.xlu0 %v7593, 64
      %v7643 = vpop.permute.xlu0 %7642
      %v7660 = vsel %vm6498, %v6363, %v3506
      %v7661 = vsel %vm6498, %v6364, %v3507
      %v7662 = vsel %vm6498, %v6365, %v3508
      %v7663 = vsel %vm6498, %v6366, %v3509
      %v7664 = vsel %vm6498, %v6367, %v3510
      %v7665 = vsel %vm6498, %v6368, %v3511
      %v7666 = vsel %vm6498, %v6369, %v3512
      %v7667 = vsel %vm6498, %v6370, %v3513
      %v7668 = vsel %vm6498, %v6371, %v3514
      %v7669 = vsel %vm6498, %v6372, %v3515
      %v7670 = vsel %vm6498, %v6373, %v3516
      %v7671 = vsel %vm6498, %v6374, %v3517
      %v7672 = vsel %vm6498, %v6375, %v3518
      %v7673 = vsel %vm6498, %v6376, %v3519
      %v7674 = vsel %vm6498, %v6377, %v3520
      %v7675 = vsel %vm6498, %v6378, %v3521
      %v7676 = vsel %vm6498, %v3506, %v7613
      %v7677 = vsel %vm6498, %v3507, %v7615
      %v7678 = vsel %vm6498, %v3508, %v7617
      %v7679 = vsel %vm6498, %v3509, %v7619
      %v7680 = vsel %vm6498, %v3510, %v7621
      %v7681 = vsel %vm6498, %v3511, %v7623
      %v7682 = vsel %vm6498, %v3512, %v7625
      %v7683 = vsel %vm6498, %v3513, %v7627
      %v7684 = vsel %vm6498, %v3514, %v7629
      %v7685 = vsel %vm6498, %v3515, %v7631
      %v7686 = vsel %vm6498, %v3516, %v7633
      %v7687 = vsel %vm6498, %v3517, %v7635
      %v7688 = vsel %vm6498, %v3518, %v7637
      %v7689 = vsel %vm6498, %v3519, %v7639
      %v7690 = vsel %vm6498, %v3520, %v7641
      %v7691 = vsel %vm6498, %v3521, %v7643
      %vm7692 = vcmask 539648
      %v7693 = vsel %vm7692, %v7676, 0.0
      %v7694 = vsel %vm7692, %v7677, 0.0
      %v7695 = vsel %vm7692, %v7678, 0.0
      %v7696 = vsel %vm7692, %v7679, 0.0
      %v7697 = vsel %vm7692, %v7680, 0.0
      %v7698 = vsel %vm7692, %v7681, 0.0
      %v7699 = vsel %vm7692, %v7682, 0.0
      %v7700 = vsel %vm7692, %v7683, 0.0
      %v7701 = vsel %vm7692, %v7684, 0.0
      %v7702 = vsel %vm7692, %v7685, 0.0
      %v7703 = vsel %vm7692, %v7686, 0.0
      %v7704 = vsel %vm7692, %v7687, 0.0
      %v7705 = vsel %vm7692, %v7688, 0.0
      %v7706 = vsel %vm7692, %v7689, 0.0
      %v7707 = vsel %vm7692, %v7690, 0.0
      %v7708 = vsel %vm7692, %v7691, 0.0
      %7709 = vst [vmem:[%s518] sm:$0xff] %v6347
      %7710 = vst [vmem:[%s518 + $0x8] sm:$0xff] %v7660
      %7711 = vst [vmem:[%s518 + $0x10] sm:$0xff] %v7693
      %7712 = vst [vmem:[%s518 + $0x18] sm:$0xff] %v6348
      %7713 = vst [vmem:[%s518 + $0x20] sm:$0xff] %v7661
      %7714 = vst [vmem:[%s518 + $0x28] sm:$0xff] %v7694
      %7715 = vst [vmem:[%s518 + $0x30] sm:$0xff] %v6349
      %7716 = vst [vmem:[%s518 + $0x38] sm:$0xff] %v7662
      %7717 = vst [vmem:[%s518 + $0x40] sm:$0xff] %v7695
      %7718 = vst [vmem:[%s518 + $0x48] sm:$0xff] %v6350
      %7719 = vst [vmem:[%s518 + $0x50] sm:$0xff] %v7663
      %7720 = vst [vmem:[%s518 + $0x58] sm:$0xff] %v7696
      %7721 = vst [vmem:[%s518 + $0x60] sm:$0xff] %v6351
      %7722 = vst [vmem:[%s518 + $0x68] sm:$0xff] %v7664
      %7723 = vst [vmem:[%s518 + $0x70] sm:$0xff] %v7697
      %7724 = vst [vmem:[%s518 + $0x78] sm:$0xff] %v6352
      %7725 = vst [vmem:[%s518 + $0x80] sm:$0xff] %v7665
      %7726 = vst [vmem:[%s518 + $0x88] sm:$0xff] %v7698
      %7727 = vst [vmem:[%s518 + $0x90] sm:$0xff] %v6353
      %7728 = vst [vmem:[%s518 + $0x98] sm:$0xff] %v7666
      %7729 = vst [vmem:[%s518 + $0xa0] sm:$0xff] %v7699
      %7730 = vst [vmem:[%s518 + $0xa8] sm:$0xff] %v6354
      %7731 = vst [vmem:[%s518 + $0xb0] sm:$0xff] %v7667
      %7732 = vst [vmem:[%s518 + $0xb8] sm:$0xff] %v7700
      %7733 = vst [vmem:[%s518 + $0xc0] sm:$0xff] %v6355
      %7734 = vst [vmem:[%s518 + $0xc8] sm:$0xff] %v7668
      %7735 = vst [vmem:[%s518 + $0xd0] sm:$0xff] %v7701
      %7736 = vst [vmem:[%s518 + $0xd8] sm:$0xff] %v6356
      %7737 = vst [vmem:[%s518 + $0xe0] sm:$0xff] %v7669
      %7738 = vst [vmem:[%s518 + $0xe8] sm:$0xff] %v7702
      %7739 = vst [vmem:[%s518 + $0xf0] sm:$0xff] %v6357
      %7740 = vst [vmem:[%s518 + $0xf8] sm:$0xff] %v7670
      %7741 = vst [vmem:[%s518 + $0x100] sm:$0xff] %v7703
      %7742 = vst [vmem:[%s518 + $0x108] sm:$0xff] %v6358
      %7743 = vst [vmem:[%s518 + $0x110] sm:$0xff] %v7671
      %7744 = vst [vmem:[%s518 + $0x118] sm:$0xff] %v7704
      %7745 = vst [vmem:[%s518 + $0x120] sm:$0xff] %v6359
      %7746 = vst [vmem:[%s518 + $0x128] sm:$0xff] %v7672
      %7747 = vst [vmem:[%s518 + $0x130] sm:$0xff] %v7705
      %7748 = vst [vmem:[%s518 + $0x138] sm:$0xff] %v6360
      %7749 = vst [vmem:[%s518 + $0x140] sm:$0xff] %v7673
      %7750 = vst [vmem:[%s518 + $0x148] sm:$0xff] %v7706
      %7751 = vst [vmem:[%s518 + $0x150] sm:$0xff] %v6361
      %7752 = vst [vmem:[%s518 + $0x158] sm:$0xff] %v7674
      %7753 = vst [vmem:[%s518 + $0x160] sm:$0xff] %v7707
      %7754 = vst [vmem:[%s518 + $0x168] sm:$0xff] %v6362
      %7755 = vst [vmem:[%s518 + $0x170] sm:$0xff] %v7675
      %7756 = vst [vmem:[%s518 + $0x178] sm:$0xff] %v7708
      %s7757 = smul.u32 16, %s25
      %p7758 = scmp.lt.s32.totalorder %s7757, 31
      %s7759 = scalar_select %p7758, %s7757, 31
      %s7760 = smul.addr %s7759, 3
      %s7761 = smul.addr %s7760, 8
      %s7762 = scalar_lea.vmem %s14, %s7761
      // Predicated region
      $region77: #{cafe_forward.1} parent=75 // pred_check
        %p7763 = pneg %p352
      $region78: #{cafe_forward.1} parent=75 // pred_check_branch
        %7765 = sbr.rel (%p7763) target = $region80
      $region79: #{cafe_forward.1} parent=75 // pred_region
        %s7766 = smul.u32 16, %s25
      $region80: #{cafe_forward.1} parent=75 // pred_fallthru
        _
    $region76: #{cafe_forward.1} parent=5 // pred_fallthru
      _
    %p7767 = scmp.le.s32.totalorder 2, %s20
    // Predicated region
    $region81: #{cafe_forward.1} parent=5 // pred_check
      %p7768 = pneg %p7767
    $region82: #{cafe_forward.1} parent=5 // pred_check_branch
      %7770 = sbr.rel (%p7768) target = $region84
    $region83: #{cafe_forward.1} parent=5 // pred_region
      %s7771 = ssub.s32 %s20, 2
      // Predicated region
      $region85: #{cafe_forward.1} parent=83 // pred_check
        %p7772 = pneg %p358
      $region86: #{cafe_forward.1} parent=83 // pred_check_branch
        %7774 = sbr.rel (%p7772) target = $region88
      $region87: #{cafe_forward.1} parent=83 // pred_region
        %s7775 = smul.u32 16, %s26
        %p7776 = scmp.lt.s32.totalorder %s7775, 31
        %s7777 = scalar_select %p7776, %s7775, 31
        %s7778 = smul.addr %s7777, 3
        %s7779 = smul.addr %s7778, 8
        %s7780 = scalar_lea.vmem %s14, %s7779
      $region88: #{cafe_forward.1} parent=83 // pred_fallthru
        _
    $region84: #{cafe_forward.1} parent=5 // pred_fallthru
      _
  $region6: #{cafe_forward.1} parent=0 // loop_footer
    %s24 = sadd.s32 1, %s20
  $region7: #{cafe_forward.1} parent=0 // loop_footer_branch
    %19 = sbr.rel target = $region3
  $region8: #{cafe_forward.1} parent=0 // loop_exit
    _

</llo_original>
